<compile_context>
chip_gen: v7x
topology: tpu7x:2x2x1
jax: 0.10.0
libtpu: 0.0.40
codegen_flags: <defaults>
</compile_context>

<pallas_src>
import functools
import math

import jax
import jax.numpy as jnp
from jax.experimental import pallas as pl
from jax.experimental.pallas import tpu as pltpu


def coattn_layer_kernel(f1_ref, f2_ref,
                        wq_ref, wk_ref, wv_ref, bq_ref, bk_ref, bv_ref,
                        wo_ref, bo_ref,
                        w1_ref, b1_ref, w2_ref, b2_ref,
                        g1_ref, be1_ref, g2_ref, be2_ref,
                        out_ref, *, nhead, eps):
    bb, L, D = f1_ref.shape            # (block_b, seq, d_model)
    hd = D // nhead
    M = bb * L

    # Token-major 2-D views (rows = b*L + l). Leading-dim reshape only: no relayout.
    f1 = f1_ref[...].reshape(M, D)                     # f32, kept for the residual
    f2 = f2_ref[...].reshape(M, D)
    f1b = f1.astype(jnp.bfloat16)                      # bf16 MXU operands, f32 accumulation
    f2b = f2.astype(jnp.bfloat16)

    # ---- multi-head cross attention -------------------------------------------------
    # Per head: Q/K/V projections from pre-split (D, hd) weight tiles (scale already folded
    # into Wq/bq on the host), batched flash-style einsums over the block_b batch elements,
    # head concat folded into per-head Wo slices.
    attn = jnp.zeros((M, D), jnp.float32)
    for h in range(nhead):
        q = jnp.dot(f1b, wq_ref[h], preferred_element_type=jnp.float32) + bq_ref[h]
        k = jnp.dot(f2b, wk_ref[h], preferred_element_type=jnp.float32) + bk_ref[h]
        v = jnp.dot(f2b, wv_ref[h], preferred_element_type=jnp.float32) + bv_ref[h]
        qb = q.astype(jnp.bfloat16).reshape(bb, L, hd)
        kb = k.astype(jnp.bfloat16).reshape(bb, L, hd)
        vb = v.astype(jnp.bfloat16).reshape(bb, L, hd)

        s = jnp.einsum('bqd,bkd->bqk', qb, kb,
                       preferred_element_type=jnp.float32)            # (bb, L, L) f32
        s = s - jnp.max(s, axis=-1, keepdims=True)
        p = jnp.exp(s)
        p = p * pl.reciprocal(jnp.sum(p, axis=-1, keepdims=True), approx=True)

        o = jnp.einsum('bqk,bkd->bqd', p.astype(jnp.bfloat16), vb,
                       preferred_element_type=jnp.float32)            # (bb, L, hd)
        attn = attn + jnp.dot(o.reshape(M, hd).astype(jnp.bfloat16), wo_ref[h],
                              preferred_element_type=jnp.float32)
    attn = attn + bo_ref[...]

    # ---- residual + LayerNorm1 (f32, biased variance, eps inside rsqrt) --------------
    x = f1 + attn
    mu = jnp.mean(x, axis=-1, keepdims=True)
    xc = x - mu
    var = jnp.mean(xc * xc, axis=-1, keepdims=True)
    x = xc * jax.lax.rsqrt(var + eps) * g1_ref[...] + be1_ref[...]

    # ---- feed-forward (relu; dropouts identity) ---------------------------------------
    h1 = jnp.dot(x.astype(jnp.bfloat16), w1_ref[...],
                 preferred_element_type=jnp.float32) + b1_ref[...]
    h1 = jnp.maximum(h1, 0.0)
    ff = jnp.dot(h1.astype(jnp.bfloat16), w2_ref[...],
                 preferred_element_type=jnp.float32) + b2_ref[...]

    # ---- residual + LayerNorm2 ----------------------------------------------------------
    y = x + ff
    mu2 = jnp.mean(y, axis=-1, keepdims=True)
    yc = y - mu2
    var2 = jnp.mean(yc * yc, axis=-1, keepdims=True)
    y = yc * jax.lax.rsqrt(var2 + eps) * g2_ref[...] + be2_ref[...]

    out_ref[...] = y.reshape(bb, L, D)


def _pick_block_batch(batch, seq, max_rows=1024):
    """Largest divisor of batch with block_b*seq <= max_rows, preferring >= 2 grid steps."""
    divisors = [d for d in range(batch, 0, -1) if batch % d == 0]
    for d in divisors:
        if d * seq <= max_rows and batch // d >= 2:
            return d
    for d in divisors:
        if d * seq <= max_rows:
            return d
    return 1


def coattention_encoder_layer(feat1, feat2, params, *, nhead, eps=1e-5, block_b=None):
    """feat1, feat2: (L, B, D) float32 (PyTorch batch_first=False convention)."""
    L, B, D = feat1.shape
    if D % nhead != 0:
        raise ValueError(f"d_model={D} must be divisible by nhead={nhead}")
    hd = D // nhead
    ff_dim = params["w1"].shape[0]
    scale = 1.0 / math.sqrt(hd)

    if block_b is None:
        block_b = _pick_block_batch(B, L)
    if B % block_b != 0:
        raise ValueError(f"block_b={block_b} must divide batch={B}")

    # One-time host-side transpose to batch-major so every in-kernel reshape is a safe
    # leading-dim merge/split (lane dim untouched).
    f1 = jnp.transpose(feat1, (1, 0, 2))     # (B, L, D)
    f2 = jnp.transpose(feat2, (1, 0, 2))

    bf = lambda w: w.astype(jnp.bfloat16)
    # Pre-transposed (in, out), per-head split; 1/sqrt(hd) folded into Wq/bq; bf16 weights.
    wq_h = bf((params["wq"].T * scale).reshape(D, nhead, hd).transpose(1, 0, 2))   # (H, D, hd)
    wk_h = bf(params["wk"].T.reshape(D, nhead, hd).transpose(1, 0, 2))             # (H, D, hd)
    wv_h = bf(params["wv"].T.reshape(D, nhead, hd).transpose(1, 0, 2))             # (H, D, hd)
    bq_h = (params["bq"] * scale).reshape(1, nhead, hd).transpose(1, 0, 2)         # (H, 1, hd) f32
    bk_h = params["bk"].reshape(1, nhead, hd).transpose(1, 0, 2)
    bv_h = params["bv"].reshape(1, nhead, hd).transpose(1, 0, 2)
    wo_h = bf(params["wo"].T.reshape(nhead, hd, D))                                # (H, hd, D)
    w1_t = bf(params["w1"].T)                                                      # (D, FF)
    w2_t = bf(params["w2"].T)                                                      # (FF, D)

    param_list = [wq_h, wk_h, wv_h, bq_h, bk_h, bv_h, wo_h, params["bo"],
                  w1_t, params["b1"], w2_t, params["b2"],
                  params["g1"], params["be1"], params["g2"], params["be2"]]

    io_spec = pl.BlockSpec((block_b, L, D), lambda i: (i, 0, 0))

    def _full_spec(p):
        # Grid-invariant block: Pallas skips the re-DMA on later steps (weights stay resident).
        return pl.BlockSpec(p.shape, lambda i, _nd=p.ndim: (0,) * _nd)

    kernel = functools.partial(coattn_layer_kernel, nhead=nhead, eps=eps)

    flops = (2 * B * L * D * D * 4            # q/k/v/out projections
             + 2 * B * L * L * D * 2          # QK^T + PV over all heads
             + 2 * B * L * D * ff_dim * 2)    # feed-forward
    transcendentals = B * nhead * L * L + 4 * B * L
    bytes_accessed = (4 * 3 * B * L * D
                      + 2 * (4 * D * D + 2 * D * ff_dim)
                      + 4 * (6 * D + 2 * ff_dim))

    out_bld = pl.pallas_call(
        kernel,
        out_shape=jax.ShapeDtypeStruct((B, L, D), jnp.float32),
        grid=(B // block_b,),
        in_specs=[io_spec, io_spec] + [_full_spec(p) for p in param_list],
        out_specs=io_spec,
        compiler_params=pltpu.CompilerParams(
            dimension_semantics=("parallel",),
            vmem_limit_bytes=48 * 1024 * 1024),
        cost_estimate=pl.CostEstimate(flops=flops,
                                      transcendentals=transcendentals,
                                      bytes_accessed=bytes_accessed),
    )(f1, f2, *param_list)

    return jnp.transpose(out_bld, (1, 0, 2))   # back to (L, B, D)


def init_params(key, d_model, nhead, dim_feedforward):
    ks = jax.random.split(key, 12)
    s = 0.1
    p = {
        # MultiheadAttention in_proj (split into q/k/v) + out_proj (PyTorch (out, in) layout)
        "wq": s * jax.random.normal(ks[0], (d_model, d_model), jnp.float32),
        "wk": s * jax.random.normal(ks[1], (d_model, d_model), jnp.float32),
        "wv": s * jax.random.normal(ks[2], (d_model, d_model), jnp.float32),
        "bq": s * jax.random.normal(ks[3], (1, d_model), jnp.float32),
        "bk": s * jax.random.normal(ks[4], (1, d_model), jnp.float32),
        "bv": s * jax.random.normal(ks[5], (1, d_model), jnp.float32),
        "wo": s * jax.random.normal(ks[6], (d_model, d_model), jnp.float32),
        "bo": s * jax.random.normal(ks[7], (1, d_model), jnp.float32),
        # feed-forward
        "w1": s * jax.random.normal(ks[8], (dim_feedforward, d_model), jnp.float32),
        "b1": s * jax.random.normal(ks[9], (1, dim_feedforward), jnp.float32),
        "w2": s * jax.random.normal(ks[10], (d_model, dim_feedforward), jnp.float32),
        "b2": s * jax.random.normal(ks[11], (1, d_model), jnp.float32),
        # LayerNorms (PyTorch default init: weight=1, bias=0)
        "g1": jnp.ones((1, d_model), jnp.float32),
        "be1": jnp.zeros((1, d_model), jnp.float32),
        "g2": jnp.ones((1, d_model), jnp.float32),
        "be2": jnp.zeros((1, d_model), jnp.float32),
    }
    return p


if __name__ == "__main__":
    # small, TPU-aligned shapes: seq=16, batch=16, d_model=128, nhead=4, dim_feedforward=256
    L, B, D, H, FF = 16, 16, 128, 4, 256
    key = jax.random.PRNGKey(0)
    k1, k2, k3 = jax.random.split(key, 3)
    feat1 = jax.random.normal(k1, (L, B, D), jnp.float32)
    feat2 = jax.random.normal(k2, (L, B, D), jnp.float32)
    params = init_params(k3, D, H, FF)

    out = coattention_encoder_layer(feat1, feat2, params, nhead=H)
    jax.block_until_ready(out)
    assert out.shape == (L, B, D)
    print("KERNEL_OK")
</pallas_src>

<mosaic_0001>
module attributes {stable_mosaic.version = 11 : i64} {
  func.func @coattn_layer_kernel(%arg0: i32, %arg1: memref<8x16x128xf32, #tpu.memory_space<vmem>>, %arg2: memref<8x16x128xf32, #tpu.memory_space<vmem>>, %arg3: memref<4x128x32xbf16, #tpu.memory_space<vmem>>, %arg4: memref<4x128x32xbf16, #tpu.memory_space<vmem>>, %arg5: memref<4x128x32xbf16, #tpu.memory_space<vmem>>, %arg6: memref<4x1x32xf32, #tpu.memory_space<vmem>>, %arg7: memref<4x1x32xf32, #tpu.memory_space<vmem>>, %arg8: memref<4x1x32xf32, #tpu.memory_space<vmem>>, %arg9: memref<4x32x128xbf16, #tpu.memory_space<vmem>>, %arg10: memref<1x128xf32, #tpu.memory_space<vmem>>, %arg11: memref<128x256xbf16, #tpu.memory_space<vmem>>, %arg12: memref<1x256xf32, #tpu.memory_space<vmem>>, %arg13: memref<256x128xbf16, #tpu.memory_space<vmem>>, %arg14: memref<1x128xf32, #tpu.memory_space<vmem>>, %arg15: memref<1x128xf32, #tpu.memory_space<vmem>>, %arg16: memref<1x128xf32, #tpu.memory_space<vmem>>, %arg17: memref<1x128xf32, #tpu.memory_space<vmem>>, %arg18: memref<1x128xf32, #tpu.memory_space<vmem>>, %arg19: memref<8x16x128xf32, #tpu.memory_space<vmem>>) attributes {dimension_semantics = [#tpu.dimension_semantics<parallel>], iteration_bounds = array<i64: 2>, scalar_prefetch = 0 : i64, scratch_operands = 0 : i64, tpu.core_type = #tpu.core_type<tc>, window_params = [{transform_indices = @transform_0, window_bounds = array<i64: 8, 16, 128>}, {transform_indices = @transform_1, window_bounds = array<i64: 8, 16, 128>}, {pipeline_mode = #tpu.pipeline_mode<synchronous>, transform_indices = @transform_2, window_bounds = array<i64: 4, 128, 32>}, {pipeline_mode = #tpu.pipeline_mode<synchronous>, transform_indices = @transform_3, window_bounds = array<i64: 4, 128, 32>}, {pipeline_mode = #tpu.pipeline_mode<synchronous>, transform_indices = @transform_4, window_bounds = array<i64: 4, 128, 32>}, {pipeline_mode = #tpu.pipeline_mode<synchronous>, transform_indices = @transform_5, window_bounds = array<i64: 4, 1, 32>}, {pipeline_mode = #tpu.pipeline_mode<synchronous>, transform_indices = @transform_6, window_bounds = array<i64: 4, 1, 32>}, {pipeline_mode = #tpu.pipeline_mode<synchronous>, transform_indices = @transform_7, window_bounds = array<i64: 4, 1, 32>}, {pipeline_mode = #tpu.pipeline_mode<synchronous>, transform_indices = @transform_8, window_bounds = array<i64: 4, 32, 128>}, {pipeline_mode = #tpu.pipeline_mode<synchronous>, transform_indices = @transform_9, window_bounds = array<i64: 1, 128>}, {pipeline_mode = #tpu.pipeline_mode<synchronous>, transform_indices = @transform_10, window_bounds = array<i64: 128, 256>}, {pipeline_mode = #tpu.pipeline_mode<synchronous>, transform_indices = @transform_11, window_bounds = array<i64: 1, 256>}, {pipeline_mode = #tpu.pipeline_mode<synchronous>, transform_indices = @transform_12, window_bounds = array<i64: 256, 128>}, {pipeline_mode = #tpu.pipeline_mode<synchronous>, transform_indices = @transform_13, window_bounds = array<i64: 1, 128>}, {pipeline_mode = #tpu.pipeline_mode<synchronous>, transform_indices = @transform_14, window_bounds = array<i64: 1, 128>}, {pipeline_mode = #tpu.pipeline_mode<synchronous>, transform_indices = @transform_15, window_bounds = array<i64: 1, 128>}, {pipeline_mode = #tpu.pipeline_mode<synchronous>, transform_indices = @transform_16, window_bounds = array<i64: 1, 128>}, {pipeline_mode = #tpu.pipeline_mode<synchronous>, transform_indices = @transform_17, window_bounds = array<i64: 1, 128>}, {transform_indices = @transform_18, window_bounds = array<i64: 8, 16, 128>}]} {
    %c0 = arith.constant 0 : index
    %c0_0 = arith.constant 0 : index
    %c0_1 = arith.constant 0 : index
    %0 = vector.load %arg1[%c0, %c0_0, %c0_1] : memref<8x16x128xf32, #tpu.memory_space<vmem>>, vector<8x16x128xf32>
    %1 = vector.shape_cast %0 : vector<8x16x128xf32> to vector<128x128xf32>
    %c0_2 = arith.constant 0 : index
    %c0_3 = arith.constant 0 : index
    %c0_4 = arith.constant 0 : index
    %2 = vector.load %arg2[%c0_2, %c0_3, %c0_4] : memref<8x16x128xf32, #tpu.memory_space<vmem>>, vector<8x16x128xf32>
    %3 = vector.shape_cast %2 : vector<8x16x128xf32> to vector<128x128xf32>
    %4 = arith.truncf %1 : vector<128x128xf32> to vector<128x128xbf16>
    %5 = arith.truncf %3 : vector<128x128xf32> to vector<128x128xbf16>
    %cst = arith.constant 0.000000e+00 : f32
    %6 = vector.broadcast %cst : f32 to vector<128x128xf32>
    %c0_5 = arith.constant 0 : index
    %c0_6 = arith.constant 0 : index
    %c0_7 = arith.constant 0 : index
    %7 = vector.load %arg3[%c0_5, %c0_6, %c0_7] : memref<4x128x32xbf16, #tpu.memory_space<vmem>>, vector<1x128x32xbf16>
    %8 = vector.shape_cast %7 : vector<1x128x32xbf16> to vector<128x32xbf16>
    %cst_8 = arith.constant dense<0.000000e+00> : vector<128x32xf32>
    %9 = tpu.matmul %4, %8, %cst_8 {dimension_numbers = #tpu.dot_dimension_numbers<[1], [0], [0], [1], [0, 0, 1, 1], [], []>} : vector<128x128xbf16>, vector<128x32xbf16>, vector<128x32xf32> -> vector<128x32xf32>
    %c0_9 = arith.constant 0 : index
    %c0_10 = arith.constant 0 : index
    %c0_11 = arith.constant 0 : index
    %10 = vector.load %arg6[%c0_9, %c0_10, %c0_11] : memref<4x1x32xf32, #tpu.memory_space<vmem>>, vector<1x1x32xf32>
    %11 = vector.shape_cast %10 : vector<1x1x32xf32> to vector<1x32xf32>
    %12 = vector.broadcast %11 : vector<1x32xf32> to vector<128x32xf32>
    %13 = arith.addf %9, %12 : vector<128x32xf32>
    %c0_12 = arith.constant 0 : index
    %c0_13 = arith.constant 0 : index
    %c0_14 = arith.constant 0 : index
    %14 = vector.load %arg4[%c0_12, %c0_13, %c0_14] : memref<4x128x32xbf16, #tpu.memory_space<vmem>>, vector<1x128x32xbf16>
    %15 = vector.shape_cast %14 : vector<1x128x32xbf16> to vector<128x32xbf16>
    %cst_15 = arith.constant dense<0.000000e+00> : vector<128x32xf32>
    %16 = tpu.matmul %5, %15, %cst_15 {dimension_numbers = #tpu.dot_dimension_numbers<[1], [0], [0], [1], [0, 0, 1, 1], [], []>} : vector<128x128xbf16>, vector<128x32xbf16>, vector<128x32xf32> -> vector<128x32xf32>
    %c0_16 = arith.constant 0 : index
    %c0_17 = arith.constant 0 : index
    %c0_18 = arith.constant 0 : index
    %17 = vector.load %arg7[%c0_16, %c0_17, %c0_18] : memref<4x1x32xf32, #tpu.memory_space<vmem>>, vector<1x1x32xf32>
    %18 = vector.shape_cast %17 : vector<1x1x32xf32> to vector<1x32xf32>
    %19 = vector.broadcast %18 : vector<1x32xf32> to vector<128x32xf32>
    %20 = arith.addf %16, %19 : vector<128x32xf32>
    %c0_19 = arith.constant 0 : index
    %c0_20 = arith.constant 0 : index
    %c0_21 = arith.constant 0 : index
    %21 = vector.load %arg5[%c0_19, %c0_20, %c0_21] : memref<4x128x32xbf16, #tpu.memory_space<vmem>>, vector<1x128x32xbf16>
    %22 = vector.shape_cast %21 : vector<1x128x32xbf16> to vector<128x32xbf16>
    %cst_22 = arith.constant dense<0.000000e+00> : vector<128x32xf32>
    %23 = tpu.matmul %5, %22, %cst_22 {dimension_numbers = #tpu.dot_dimension_numbers<[1], [0], [0], [1], [0, 0, 1, 1], [], []>} : vector<128x128xbf16>, vector<128x32xbf16>, vector<128x32xf32> -> vector<128x32xf32>
    %c0_23 = arith.constant 0 : index
    %c0_24 = arith.constant 0 : index
    %c0_25 = arith.constant 0 : index
    %24 = vector.load %arg8[%c0_23, %c0_24, %c0_25] : memref<4x1x32xf32, #tpu.memory_space<vmem>>, vector<1x1x32xf32>
    %25 = vector.shape_cast %24 : vector<1x1x32xf32> to vector<1x32xf32>
    %26 = vector.broadcast %25 : vector<1x32xf32> to vector<128x32xf32>
    %27 = arith.addf %23, %26 : vector<128x32xf32>
    %28 = arith.truncf %13 : vector<128x32xf32> to vector<128x32xbf16>
    %29 = vector.shape_cast %28 : vector<128x32xbf16> to vector<8x16x32xbf16>
    %30 = arith.truncf %20 : vector<128x32xf32> to vector<128x32xbf16>
    %31 = vector.shape_cast %30 : vector<128x32xbf16> to vector<8x16x32xbf16>
    %32 = arith.truncf %27 : vector<128x32xf32> to vector<128x32xbf16>
    %33 = vector.shape_cast %32 : vector<128x32xbf16> to vector<8x16x32xbf16>
    "tpu.trace_start"() <{level = 10 : i32, message = "bqd,bkd->bqk"}> : () -> ()
    %cst_26 = arith.constant dense<0.000000e+00> : vector<8x16x16xf32>
    %34 = tpu.matmul %29, %31, %cst_26 {dimension_numbers = #tpu.dot_dimension_numbers<[2], [2], [1], [1], [0, 0, 0, 1, 1, 1], [0], [0]>} : vector<8x16x32xbf16>, vector<8x16x32xbf16>, vector<8x16x16xf32> -> vector<8x16x16xf32>
    "tpu.trace_stop"() : () -> ()
    %cst_27 = arith.constant dense<0xFF800000> : vector<8x16xf32>
    %35 = vector.multi_reduction <maximumf>, %34, %cst_27 [2] : vector<8x16x16xf32> to vector<8x16xf32>
    %36 = vector.shape_cast %35 : vector<8x16xf32> to vector<8x16x1xf32>
    %37 = vector.broadcast %36 : vector<8x16x1xf32> to vector<8x16x16xf32>
    %38 = arith.subf %34, %37 : vector<8x16x16xf32>
    %39 = math.exp %38 : vector<8x16x16xf32>
    %cst_28 = arith.constant dense<0.000000e+00> : vector<8x16xf32>
    %40 = vector.multi_reduction <add>, %39, %cst_28 [2] : vector<8x16x16xf32> to vector<8x16xf32>
    %41 = vector.shape_cast %40 : vector<8x16xf32> to vector<8x16x1xf32>
    %42 = tpu.reciprocal %41 {approx = true} : vector<8x16x1xf32> -> vector<8x16x1xf32>
    %43 = vector.broadcast %42 : vector<8x16x1xf32> to vector<8x16x16xf32>
    %44 = arith.mulf %39, %43 : vector<8x16x16xf32>
    %45 = arith.truncf %44 : vector<8x16x16xf32> to vector<8x16x16xbf16>
    "tpu.trace_start"() <{level = 10 : i32, message = "bqk,bkd->bqd"}> : () -> ()
    %cst_29 = arith.constant dense<0.000000e+00> : vector<8x16x32xf32>
    %46 = tpu.matmul %45, %33, %cst_29 {dimension_numbers = #tpu.dot_dimension_numbers<[2], [1], [1], [2], [0, 0, 0, 1, 1, 2], [0], [0]>} : vector<8x16x16xbf16>, vector<8x16x32xbf16>, vector<8x16x32xf32> -> vector<8x16x32xf32>
    "tpu.trace_stop"() : () -> ()
    %47 = vector.shape_cast %46 : vector<8x16x32xf32> to vector<128x32xf32>
    %48 = arith.truncf %47 : vector<128x32xf32> to vector<128x32xbf16>
    %c0_30 = arith.constant 0 : index
    %c0_31 = arith.constant 0 : index
    %c0_32 = arith.constant 0 : index
    %49 = vector.load %arg9[%c0_30, %c0_31, %c0_32] : memref<4x32x128xbf16, #tpu.memory_space<vmem>>, vector<1x32x128xbf16>
    %50 = vector.shape_cast %49 : vector<1x32x128xbf16> to vector<32x128xbf16>
    %cst_33 = arith.constant dense<0.000000e+00> : vector<128x128xf32>
    %51 = tpu.matmul %48, %50, %cst_33 {dimension_numbers = #tpu.dot_dimension_numbers<[1], [0], [0], [1], [0, 0, 1, 1], [], []>} : vector<128x32xbf16>, vector<32x128xbf16>, vector<128x128xf32> -> vector<128x128xf32>
    %52 = arith.addf %6, %51 : vector<128x128xf32>
    %c1 = arith.constant 1 : index
    %c0_34 = arith.constant 0 : index
    %c0_35 = arith.constant 0 : index
    %53 = vector.load %arg3[%c1, %c0_34, %c0_35] : memref<4x128x32xbf16, #tpu.memory_space<vmem>>, vector<1x128x32xbf16>
    %54 = vector.shape_cast %53 : vector<1x128x32xbf16> to vector<128x32xbf16>
    %cst_36 = arith.constant dense<0.000000e+00> : vector<128x32xf32>
    %55 = tpu.matmul %4, %54, %cst_36 {dimension_numbers = #tpu.dot_dimension_numbers<[1], [0], [0], [1], [0, 0, 1, 1], [], []>} : vector<128x128xbf16>, vector<128x32xbf16>, vector<128x32xf32> -> vector<128x32xf32>
    %c1_37 = arith.constant 1 : index
    %c0_38 = arith.constant 0 : index
    %c0_39 = arith.constant 0 : index
    %56 = vector.load %arg6[%c1_37, %c0_38, %c0_39] : memref<4x1x32xf32, #tpu.memory_space<vmem>>, vector<1x1x32xf32>
    %57 = vector.shape_cast %56 : vector<1x1x32xf32> to vector<1x32xf32>
    %58 = vector.broadcast %57 : vector<1x32xf32> to vector<128x32xf32>
    %59 = arith.addf %55, %58 : vector<128x32xf32>
    %c1_40 = arith.constant 1 : index
    %c0_41 = arith.constant 0 : index
    %c0_42 = arith.constant 0 : index
    %60 = vector.load %arg4[%c1_40, %c0_41, %c0_42] : memref<4x128x32xbf16, #tpu.memory_space<vmem>>, vector<1x128x32xbf16>
    %61 = vector.shape_cast %60 : vector<1x128x32xbf16> to vector<128x32xbf16>
    %cst_43 = arith.constant dense<0.000000e+00> : vector<128x32xf32>
    %62 = tpu.matmul %5, %61, %cst_43 {dimension_numbers = #tpu.dot_dimension_numbers<[1], [0], [0], [1], [0, 0, 1, 1], [], []>} : vector<128x128xbf16>, vector<128x32xbf16>, vector<128x32xf32> -> vector<128x32xf32>
    %c1_44 = arith.constant 1 : index
    %c0_45 = arith.constant 0 : index
    %c0_46 = arith.constant 0 : index
    %63 = vector.load %arg7[%c1_44, %c0_45, %c0_46] : memref<4x1x32xf32, #tpu.memory_space<vmem>>, vector<1x1x32xf32>
    %64 = vector.shape_cast %63 : vector<1x1x32xf32> to vector<1x32xf32>
    %65 = vector.broadcast %64 : vector<1x32xf32> to vector<128x32xf32>
    %66 = arith.addf %62, %65 : vector<128x32xf32>
    %c1_47 = arith.constant 1 : index
    %c0_48 = arith.constant 0 : index
    %c0_49 = arith.constant 0 : index
    %67 = vector.load %arg5[%c1_47, %c0_48, %c0_49] : memref<4x128x32xbf16, #tpu.memory_space<vmem>>, vector<1x128x32xbf16>
    %68 = vector.shape_cast %67 : vector<1x128x32xbf16> to vector<128x32xbf16>
    %cst_50 = arith.constant dense<0.000000e+00> : vector<128x32xf32>
    %69 = tpu.matmul %5, %68, %cst_50 {dimension_numbers = #tpu.dot_dimension_numbers<[1], [0], [0], [1], [0, 0, 1, 1], [], []>} : vector<128x128xbf16>, vector<128x32xbf16>, vector<128x32xf32> -> vector<128x32xf32>
    %c1_51 = arith.constant 1 : index
    %c0_52 = arith.constant 0 : index
    %c0_53 = arith.constant 0 : index
    %70 = vector.load %arg8[%c1_51, %c0_52, %c0_53] : memref<4x1x32xf32, #tpu.memory_space<vmem>>, vector<1x1x32xf32>
    %71 = vector.shape_cast %70 : vector<1x1x32xf32> to vector<1x32xf32>
    %72 = vector.broadcast %71 : vector<1x32xf32> to vector<128x32xf32>
    %73 = arith.addf %69, %72 : vector<128x32xf32>
    %74 = arith.truncf %59 : vector<128x32xf32> to vector<128x32xbf16>
    %75 = vector.shape_cast %74 : vector<128x32xbf16> to vector<8x16x32xbf16>
    %76 = arith.truncf %66 : vector<128x32xf32> to vector<128x32xbf16>
    %77 = vector.shape_cast %76 : vector<128x32xbf16> to vector<8x16x32xbf16>
    %78 = arith.truncf %73 : vector<128x32xf32> to vector<128x32xbf16>
    %79 = vector.shape_cast %78 : vector<128x32xbf16> to vector<8x16x32xbf16>
    "tpu.trace_start"() <{level = 10 : i32, message = "bqd,bkd->bqk"}> : () -> ()
    %cst_54 = arith.constant dense<0.000000e+00> : vector<8x16x16xf32>
    %80 = tpu.matmul %75, %77, %cst_54 {dimension_numbers = #tpu.dot_dimension_numbers<[2], [2], [1], [1], [0, 0, 0, 1, 1, 1], [0], [0]>} : vector<8x16x32xbf16>, vector<8x16x32xbf16>, vector<8x16x16xf32> -> vector<8x16x16xf32>
    "tpu.trace_stop"() : () -> ()
    %cst_55 = arith.constant dense<0xFF800000> : vector<8x16xf32>
    %81 = vector.multi_reduction <maximumf>, %80, %cst_55 [2] : vector<8x16x16xf32> to vector<8x16xf32>
    %82 = vector.shape_cast %81 : vector<8x16xf32> to vector<8x16x1xf32>
    %83 = vector.broadcast %82 : vector<8x16x1xf32> to vector<8x16x16xf32>
    %84 = arith.subf %80, %83 : vector<8x16x16xf32>
    %85 = math.exp %84 : vector<8x16x16xf32>
    %cst_56 = arith.constant dense<0.000000e+00> : vector<8x16xf32>
    %86 = vector.multi_reduction <add>, %85, %cst_56 [2] : vector<8x16x16xf32> to vector<8x16xf32>
    %87 = vector.shape_cast %86 : vector<8x16xf32> to vector<8x16x1xf32>
    %88 = tpu.reciprocal %87 {approx = true} : vector<8x16x1xf32> -> vector<8x16x1xf32>
    %89 = vector.broadcast %88 : vector<8x16x1xf32> to vector<8x16x16xf32>
    %90 = arith.mulf %85, %89 : vector<8x16x16xf32>
    %91 = arith.truncf %90 : vector<8x16x16xf32> to vector<8x16x16xbf16>
    "tpu.trace_start"() <{level = 10 : i32, message = "bqk,bkd->bqd"}> : () -> ()
    %cst_57 = arith.constant dense<0.000000e+00> : vector<8x16x32xf32>
    %92 = tpu.matmul %91, %79, %cst_57 {dimension_numbers = #tpu.dot_dimension_numbers<[2], [1], [1], [2], [0, 0, 0, 1, 1, 2], [0], [0]>} : vector<8x16x16xbf16>, vector<8x16x32xbf16>, vector<8x16x32xf32> -> vector<8x16x32xf32>
    "tpu.trace_stop"() : () -> ()
    %93 = vector.shape_cast %92 : vector<8x16x32xf32> to vector<128x32xf32>
    %94 = arith.truncf %93 : vector<128x32xf32> to vector<128x32xbf16>
    %c1_58 = arith.constant 1 : index
    %c0_59 = arith.constant 0 : index
    %c0_60 = arith.constant 0 : index
    %95 = vector.load %arg9[%c1_58, %c0_59, %c0_60] : memref<4x32x128xbf16, #tpu.memory_space<vmem>>, vector<1x32x128xbf16>
    %96 = vector.shape_cast %95 : vector<1x32x128xbf16> to vector<32x128xbf16>
    %cst_61 = arith.constant dense<0.000000e+00> : vector<128x128xf32>
    %97 = tpu.matmul %94, %96, %cst_61 {dimension_numbers = #tpu.dot_dimension_numbers<[1], [0], [0], [1], [0, 0, 1, 1], [], []>} : vector<128x32xbf16>, vector<32x128xbf16>, vector<128x128xf32> -> vector<128x128xf32>
    %98 = arith.addf %52, %97 : vector<128x128xf32>
    %c2 = arith.constant 2 : index
    %c0_62 = arith.constant 0 : index
    %c0_63 = arith.constant 0 : index
    %99 = vector.load %arg3[%c2, %c0_62, %c0_63] : memref<4x128x32xbf16, #tpu.memory_space<vmem>>, vector<1x128x32xbf16>
    %100 = vector.shape_cast %99 : vector<1x128x32xbf16> to vector<128x32xbf16>
    %cst_64 = arith.constant dense<0.000000e+00> : vector<128x32xf32>
    %101 = tpu.matmul %4, %100, %cst_64 {dimension_numbers = #tpu.dot_dimension_numbers<[1], [0], [0], [1], [0, 0, 1, 1], [], []>} : vector<128x128xbf16>, vector<128x32xbf16>, vector<128x32xf32> -> vector<128x32xf32>
    %c2_65 = arith.constant 2 : index
    %c0_66 = arith.constant 0 : index
    %c0_67 = arith.constant 0 : index
    %102 = vector.load %arg6[%c2_65, %c0_66, %c0_67] : memref<4x1x32xf32, #tpu.memory_space<vmem>>, vector<1x1x32xf32>
    %103 = vector.shape_cast %102 : vector<1x1x32xf32> to vector<1x32xf32>
    %104 = vector.broadcast %103 : vector<1x32xf32> to vector<128x32xf32>
    %105 = arith.addf %101, %104 : vector<128x32xf32>
    %c2_68 = arith.constant 2 : index
    %c0_69 = arith.constant 0 : index
    %c0_70 = arith.constant 0 : index
    %106 = vector.load %arg4[%c2_68, %c0_69, %c0_70] : memref<4x128x32xbf16, #tpu.memory_space<vmem>>, vector<1x128x32xbf16>
    %107 = vector.shape_cast %106 : vector<1x128x32xbf16> to vector<128x32xbf16>
    %cst_71 = arith.constant dense<0.000000e+00> : vector<128x32xf32>
    %108 = tpu.matmul %5, %107, %cst_71 {dimension_numbers = #tpu.dot_dimension_numbers<[1], [0], [0], [1], [0, 0, 1, 1], [], []>} : vector<128x128xbf16>, vector<128x32xbf16>, vector<128x32xf32> -> vector<128x32xf32>
    %c2_72 = arith.constant 2 : index
    %c0_73 = arith.constant 0 : index
    %c0_74 = arith.constant 0 : index
    %109 = vector.load %arg7[%c2_72, %c0_73, %c0_74] : memref<4x1x32xf32, #tpu.memory_space<vmem>>, vector<1x1x32xf32>
    %110 = vector.shape_cast %109 : vector<1x1x32xf32> to vector<1x32xf32>
    %111 = vector.broadcast %110 : vector<1x32xf32> to vector<128x32xf32>
    %112 = arith.addf %108, %111 : vector<128x32xf32>
    %c2_75 = arith.constant 2 : index
    %c0_76 = arith.constant 0 : index
    %c0_77 = arith.constant 0 : index
    %113 = vector.load %arg5[%c2_75, %c0_76, %c0_77] : memref<4x128x32xbf16, #tpu.memory_space<vmem>>, vector<1x128x32xbf16>
    %114 = vector.shape_cast %113 : vector<1x128x32xbf16> to vector<128x32xbf16>
    %cst_78 = arith.constant dense<0.000000e+00> : vector<128x32xf32>
    %115 = tpu.matmul %5, %114, %cst_78 {dimension_numbers = #tpu.dot_dimension_numbers<[1], [0], [0], [1], [0, 0, 1, 1], [], []>} : vector<128x128xbf16>, vector<128x32xbf16>, vector<128x32xf32> -> vector<128x32xf32>
    %c2_79 = arith.constant 2 : index
    %c0_80 = arith.constant 0 : index
    %c0_81 = arith.constant 0 : index
    %116 = vector.load %arg8[%c2_79, %c0_80, %c0_81] : memref<4x1x32xf32, #tpu.memory_space<vmem>>, vector<1x1x32xf32>
    %117 = vector.shape_cast %116 : vector<1x1x32xf32> to vector<1x32xf32>
    %118 = vector.broadcast %117 : vector<1x32xf32> to vector<128x32xf32>
    %119 = arith.addf %115, %118 : vector<128x32xf32>
    %120 = arith.truncf %105 : vector<128x32xf32> to vector<128x32xbf16>
    %121 = vector.shape_cast %120 : vector<128x32xbf16> to vector<8x16x32xbf16>
    %122 = arith.truncf %112 : vector<128x32xf32> to vector<128x32xbf16>
    %123 = vector.shape_cast %122 : vector<128x32xbf16> to vector<8x16x32xbf16>
    %124 = arith.truncf %119 : vector<128x32xf32> to vector<128x32xbf16>
    %125 = vector.shape_cast %124 : vector<128x32xbf16> to vector<8x16x32xbf16>
    "tpu.trace_start"() <{level = 10 : i32, message = "bqd,bkd->bqk"}> : () -> ()
    %cst_82 = arith.constant dense<0.000000e+00> : vector<8x16x16xf32>
    %126 = tpu.matmul %121, %123, %cst_82 {dimension_numbers = #tpu.dot_dimension_numbers<[2], [2], [1], [1], [0, 0, 0, 1, 1, 1], [0], [0]>} : vector<8x16x32xbf16>, vector<8x16x32xbf16>, vector<8x16x16xf32> -> vector<8x16x16xf32>
    "tpu.trace_stop"() : () -> ()
    %cst_83 = arith.constant dense<0xFF800000> : vector<8x16xf32>
    %127 = vector.multi_reduction <maximumf>, %126, %cst_83 [2] : vector<8x16x16xf32> to vector<8x16xf32>
    %128 = vector.shape_cast %127 : vector<8x16xf32> to vector<8x16x1xf32>
    %129 = vector.broadcast %128 : vector<8x16x1xf32> to vector<8x16x16xf32>
    %130 = arith.subf %126, %129 : vector<8x16x16xf32>
    %131 = math.exp %130 : vector<8x16x16xf32>
    %cst_84 = arith.constant dense<0.000000e+00> : vector<8x16xf32>
    %132 = vector.multi_reduction <add>, %131, %cst_84 [2] : vector<8x16x16xf32> to vector<8x16xf32>
    %133 = vector.shape_cast %132 : vector<8x16xf32> to vector<8x16x1xf32>
    %134 = tpu.reciprocal %133 {approx = true} : vector<8x16x1xf32> -> vector<8x16x1xf32>
    %135 = vector.broadcast %134 : vector<8x16x1xf32> to vector<8x16x16xf32>
    %136 = arith.mulf %131, %135 : vector<8x16x16xf32>
    %137 = arith.truncf %136 : vector<8x16x16xf32> to vector<8x16x16xbf16>
    "tpu.trace_start"() <{level = 10 : i32, message = "bqk,bkd->bqd"}> : () -> ()
    %cst_85 = arith.constant dense<0.000000e+00> : vector<8x16x32xf32>
    %138 = tpu.matmul %137, %125, %cst_85 {dimension_numbers = #tpu.dot_dimension_numbers<[2], [1], [1], [2], [0, 0, 0, 1, 1, 2], [0], [0]>} : vector<8x16x16xbf16>, vector<8x16x32xbf16>, vector<8x16x32xf32> -> vector<8x16x32xf32>
    "tpu.trace_stop"() : () -> ()
    %139 = vector.shape_cast %138 : vector<8x16x32xf32> to vector<128x32xf32>
    %140 = arith.truncf %139 : vector<128x32xf32> to vector<128x32xbf16>
    %c2_86 = arith.constant 2 : index
    %c0_87 = arith.constant 0 : index
    %c0_88 = arith.constant 0 : index
    %141 = vector.load %arg9[%c2_86, %c0_87, %c0_88] : memref<4x32x128xbf16, #tpu.memory_space<vmem>>, vector<1x32x128xbf16>
    %142 = vector.shape_cast %141 : vector<1x32x128xbf16> to vector<32x128xbf16>
    %cst_89 = arith.constant dense<0.000000e+00> : vector<128x128xf32>
    %143 = tpu.matmul %140, %142, %cst_89 {dimension_numbers = #tpu.dot_dimension_numbers<[1], [0], [0], [1], [0, 0, 1, 1], [], []>} : vector<128x32xbf16>, vector<32x128xbf16>, vector<128x128xf32> -> vector<128x128xf32>
    %144 = arith.addf %98, %143 : vector<128x128xf32>
    %c3 = arith.constant 3 : index
    %c0_90 = arith.constant 0 : index
    %c0_91 = arith.constant 0 : index
    %145 = vector.load %arg3[%c3, %c0_90, %c0_91] : memref<4x128x32xbf16, #tpu.memory_space<vmem>>, vector<1x128x32xbf16>
    %146 = vector.shape_cast %145 : vector<1x128x32xbf16> to vector<128x32xbf16>
    %cst_92 = arith.constant dense<0.000000e+00> : vector<128x32xf32>
    %147 = tpu.matmul %4, %146, %cst_92 {dimension_numbers = #tpu.dot_dimension_numbers<[1], [0], [0], [1], [0, 0, 1, 1], [], []>} : vector<128x128xbf16>, vector<128x32xbf16>, vector<128x32xf32> -> vector<128x32xf32>
    %c3_93 = arith.constant 3 : index
    %c0_94 = arith.constant 0 : index
    %c0_95 = arith.constant 0 : index
    %148 = vector.load %arg6[%c3_93, %c0_94, %c0_95] : memref<4x1x32xf32, #tpu.memory_space<vmem>>, vector<1x1x32xf32>
    %149 = vector.shape_cast %148 : vector<1x1x32xf32> to vector<1x32xf32>
    %150 = vector.broadcast %149 : vector<1x32xf32> to vector<128x32xf32>
    %151 = arith.addf %147, %150 : vector<128x32xf32>
    %c3_96 = arith.constant 3 : index
    %c0_97 = arith.constant 0 : index
    %c0_98 = arith.constant 0 : index
    %152 = vector.load %arg4[%c3_96, %c0_97, %c0_98] : memref<4x128x32xbf16, #tpu.memory_space<vmem>>, vector<1x128x32xbf16>
    %153 = vector.shape_cast %152 : vector<1x128x32xbf16> to vector<128x32xbf16>
    %cst_99 = arith.constant dense<0.000000e+00> : vector<128x32xf32>
    %154 = tpu.matmul %5, %153, %cst_99 {dimension_numbers = #tpu.dot_dimension_numbers<[1], [0], [0], [1], [0, 0, 1, 1], [], []>} : vector<128x128xbf16>, vector<128x32xbf16>, vector<128x32xf32> -> vector<128x32xf32>
    %c3_100 = arith.constant 3 : index
    %c0_101 = arith.constant 0 : index
    %c0_102 = arith.constant 0 : index
    %155 = vector.load %arg7[%c3_100, %c0_101, %c0_102] : memref<4x1x32xf32, #tpu.memory_space<vmem>>, vector<1x1x32xf32>
    %156 = vector.shape_cast %155 : vector<1x1x32xf32> to vector<1x32xf32>
    %157 = vector.broadcast %156 : vector<1x32xf32> to vector<128x32xf32>
    %158 = arith.addf %154, %157 : vector<128x32xf32>
    %c3_103 = arith.constant 3 : index
    %c0_104 = arith.constant 0 : index
    %c0_105 = arith.constant 0 : index
    %159 = vector.load %arg5[%c3_103, %c0_104, %c0_105] : memref<4x128x32xbf16, #tpu.memory_space<vmem>>, vector<1x128x32xbf16>
    %160 = vector.shape_cast %159 : vector<1x128x32xbf16> to vector<128x32xbf16>
    %cst_106 = arith.constant dense<0.000000e+00> : vector<128x32xf32>
    %161 = tpu.matmul %5, %160, %cst_106 {dimension_numbers = #tpu.dot_dimension_numbers<[1], [0], [0], [1], [0, 0, 1, 1], [], []>} : vector<128x128xbf16>, vector<128x32xbf16>, vector<128x32xf32> -> vector<128x32xf32>
    %c3_107 = arith.constant 3 : index
    %c0_108 = arith.constant 0 : index
    %c0_109 = arith.constant 0 : index
    %162 = vector.load %arg8[%c3_107, %c0_108, %c0_109] : memref<4x1x32xf32, #tpu.memory_space<vmem>>, vector<1x1x32xf32>
    %163 = vector.shape_cast %162 : vector<1x1x32xf32> to vector<1x32xf32>
    %164 = vector.broadcast %163 : vector<1x32xf32> to vector<128x32xf32>
    %165 = arith.addf %161, %164 : vector<128x32xf32>
    %166 = arith.truncf %151 : vector<128x32xf32> to vector<128x32xbf16>
    %167 = vector.shape_cast %166 : vector<128x32xbf16> to vector<8x16x32xbf16>
    %168 = arith.truncf %158 : vector<128x32xf32> to vector<128x32xbf16>
    %169 = vector.shape_cast %168 : vector<128x32xbf16> to vector<8x16x32xbf16>
    %170 = arith.truncf %165 : vector<128x32xf32> to vector<128x32xbf16>
    %171 = vector.shape_cast %170 : vector<128x32xbf16> to vector<8x16x32xbf16>
    "tpu.trace_start"() <{level = 10 : i32, message = "bqd,bkd->bqk"}> : () -> ()
    %cst_110 = arith.constant dense<0.000000e+00> : vector<8x16x16xf32>
    %172 = tpu.matmul %167, %169, %cst_110 {dimension_numbers = #tpu.dot_dimension_numbers<[2], [2], [1], [1], [0, 0, 0, 1, 1, 1], [0], [0]>} : vector<8x16x32xbf16>, vector<8x16x32xbf16>, vector<8x16x16xf32> -> vector<8x16x16xf32>
    "tpu.trace_stop"() : () -> ()
    %cst_111 = arith.constant dense<0xFF800000> : vector<8x16xf32>
    %173 = vector.multi_reduction <maximumf>, %172, %cst_111 [2] : vector<8x16x16xf32> to vector<8x16xf32>
    %174 = vector.shape_cast %173 : vector<8x16xf32> to vector<8x16x1xf32>
    %175 = vector.broadcast %174 : vector<8x16x1xf32> to vector<8x16x16xf32>
    %176 = arith.subf %172, %175 : vector<8x16x16xf32>
    %177 = math.exp %176 : vector<8x16x16xf32>
    %cst_112 = arith.constant dense<0.000000e+00> : vector<8x16xf32>
    %178 = vector.multi_reduction <add>, %177, %cst_112 [2] : vector<8x16x16xf32> to vector<8x16xf32>
    %179 = vector.shape_cast %178 : vector<8x16xf32> to vector<8x16x1xf32>
    %180 = tpu.reciprocal %179 {approx = true} : vector<8x16x1xf32> -> vector<8x16x1xf32>
    %181 = vector.broadcast %180 : vector<8x16x1xf32> to vector<8x16x16xf32>
    %182 = arith.mulf %177, %181 : vector<8x16x16xf32>
    %183 = arith.truncf %182 : vector<8x16x16xf32> to vector<8x16x16xbf16>
    "tpu.trace_start"() <{level = 10 : i32, message = "bqk,bkd->bqd"}> : () -> ()
    %cst_113 = arith.constant dense<0.000000e+00> : vector<8x16x32xf32>
    %184 = tpu.matmul %183, %171, %cst_113 {dimension_numbers = #tpu.dot_dimension_numbers<[2], [1], [1], [2], [0, 0, 0, 1, 1, 2], [0], [0]>} : vector<8x16x16xbf16>, vector<8x16x32xbf16>, vector<8x16x32xf32> -> vector<8x16x32xf32>
    "tpu.trace_stop"() : () -> ()
    %185 = vector.shape_cast %184 : vector<8x16x32xf32> to vector<128x32xf32>
    %186 = arith.truncf %185 : vector<128x32xf32> to vector<128x32xbf16>
    %c3_114 = arith.constant 3 : index
    %c0_115 = arith.constant 0 : index
    %c0_116 = arith.constant 0 : index
    %187 = vector.load %arg9[%c3_114, %c0_115, %c0_116] : memref<4x32x128xbf16, #tpu.memory_space<vmem>>, vector<1x32x128xbf16>
    %188 = vector.shape_cast %187 : vector<1x32x128xbf16> to vector<32x128xbf16>
    %cst_117 = arith.constant dense<0.000000e+00> : vector<128x128xf32>
    %189 = tpu.matmul %186, %188, %cst_117 {dimension_numbers = #tpu.dot_dimension_numbers<[1], [0], [0], [1], [0, 0, 1, 1], [], []>} : vector<128x32xbf16>, vector<32x128xbf16>, vector<128x128xf32> -> vector<128x128xf32>
    %190 = arith.addf %144, %189 : vector<128x128xf32>
    %c0_118 = arith.constant 0 : index
    %c0_119 = arith.constant 0 : index
    %191 = vector.load %arg10[%c0_118, %c0_119] : memref<1x128xf32, #tpu.memory_space<vmem>>, vector<1x128xf32>
    %192 = vector.broadcast %191 : vector<1x128xf32> to vector<128x128xf32>
    %193 = arith.addf %190, %192 : vector<128x128xf32>
    %194 = arith.addf %1, %193 : vector<128x128xf32>
    %cst_120 = arith.constant dense<0.000000e+00> : vector<128xf32>
    %195 = vector.multi_reduction <add>, %194, %cst_120 [1] : vector<128x128xf32> to vector<128xf32>
    %196 = vector.shape_cast %195 : vector<128xf32> to vector<128x1xf32>
    %cst_121 = arith.constant 1.280000e+02 : f32
    %197 = vector.broadcast %cst_121 : f32 to vector<128x1xf32>
    %198 = arith.divf %196, %197 : vector<128x1xf32>
    %199 = vector.broadcast %198 : vector<128x1xf32> to vector<128x128xf32>
    %200 = arith.subf %194, %199 : vector<128x128xf32>
    %201 = arith.mulf %200, %200 : vector<128x128xf32>
    %cst_122 = arith.constant dense<0.000000e+00> : vector<128xf32>
    %202 = vector.multi_reduction <add>, %201, %cst_122 [1] : vector<128x128xf32> to vector<128xf32>
    %203 = vector.shape_cast %202 : vector<128xf32> to vector<128x1xf32>
    %cst_123 = arith.constant 1.280000e+02 : f32
    %204 = vector.broadcast %cst_123 : f32 to vector<128x1xf32>
    %205 = arith.divf %203, %204 : vector<128x1xf32>
    %cst_124 = arith.constant 9.99999974E-6 : f32
    %206 = vector.broadcast %cst_124 : f32 to vector<128x1xf32>
    %207 = arith.addf %205, %206 : vector<128x1xf32>
    %208 = math.rsqrt %207 : vector<128x1xf32>
    %209 = vector.broadcast %208 : vector<128x1xf32> to vector<128x128xf32>
    %210 = arith.mulf %200, %209 : vector<128x128xf32>
    %c0_125 = arith.constant 0 : index
    %c0_126 = arith.constant 0 : index
    %211 = vector.load %arg15[%c0_125, %c0_126] : memref<1x128xf32, #tpu.memory_space<vmem>>, vector<1x128xf32>
    %212 = vector.broadcast %211 : vector<1x128xf32> to vector<128x128xf32>
    %213 = arith.mulf %210, %212 : vector<128x128xf32>
    %c0_127 = arith.constant 0 : index
    %c0_128 = arith.constant 0 : index
    %214 = vector.load %arg16[%c0_127, %c0_128] : memref<1x128xf32, #tpu.memory_space<vmem>>, vector<1x128xf32>
    %215 = vector.broadcast %214 : vector<1x128xf32> to vector<128x128xf32>
    %216 = arith.addf %213, %215 : vector<128x128xf32>
    %217 = arith.truncf %216 : vector<128x128xf32> to vector<128x128xbf16>
    %c0_129 = arith.constant 0 : index
    %c0_130 = arith.constant 0 : index
    %218 = vector.load %arg11[%c0_129, %c0_130] : memref<128x256xbf16, #tpu.memory_space<vmem>>, vector<128x256xbf16>
    %cst_131 = arith.constant dense<0.000000e+00> : vector<128x256xf32>
    %219 = tpu.matmul %217, %218, %cst_131 {dimension_numbers = #tpu.dot_dimension_numbers<[1], [0], [0], [1], [0, 0, 1, 1], [], []>} : vector<128x128xbf16>, vector<128x256xbf16>, vector<128x256xf32> -> vector<128x256xf32>
    %c0_132 = arith.constant 0 : index
    %c0_133 = arith.constant 0 : index
    %220 = vector.load %arg12[%c0_132, %c0_133] : memref<1x256xf32, #tpu.memory_space<vmem>>, vector<1x256xf32>
    %221 = vector.broadcast %220 : vector<1x256xf32> to vector<128x256xf32>
    %222 = arith.addf %219, %221 : vector<128x256xf32>
    %cst_134 = arith.constant 0.000000e+00 : f32
    %223 = vector.broadcast %cst_134 : f32 to vector<128x256xf32>
    %224 = arith.maximumf %222, %223 : vector<128x256xf32>
    %225 = arith.truncf %224 : vector<128x256xf32> to vector<128x256xbf16>
    %c0_135 = arith.constant 0 : index
    %c0_136 = arith.constant 0 : index
    %226 = vector.load %arg13[%c0_135, %c0_136] : memref<256x128xbf16, #tpu.memory_space<vmem>>, vector<256x128xbf16>
    %cst_137 = arith.constant dense<0.000000e+00> : vector<128x128xf32>
    %227 = tpu.matmul %225, %226, %cst_137 {dimension_numbers = #tpu.dot_dimension_numbers<[1], [0], [0], [1], [0, 0, 1, 1], [], []>} : vector<128x256xbf16>, vector<256x128xbf16>, vector<128x128xf32> -> vector<128x128xf32>
    %c0_138 = arith.constant 0 : index
    %c0_139 = arith.constant 0 : index
    %228 = vector.load %arg14[%c0_138, %c0_139] : memref<1x128xf32, #tpu.memory_space<vmem>>, vector<1x128xf32>
    %229 = vector.broadcast %228 : vector<1x128xf32> to vector<128x128xf32>
    %230 = arith.addf %227, %229 : vector<128x128xf32>
    %231 = arith.addf %216, %230 : vector<128x128xf32>
    %cst_140 = arith.constant dense<0.000000e+00> : vector<128xf32>
    %232 = vector.multi_reduction <add>, %231, %cst_140 [1] : vector<128x128xf32> to vector<128xf32>
    %233 = vector.shape_cast %232 : vector<128xf32> to vector<128x1xf32>
    %cst_141 = arith.constant 1.280000e+02 : f32
    %234 = vector.broadcast %cst_141 : f32 to vector<128x1xf32>
    %235 = arith.divf %233, %234 : vector<128x1xf32>
    %236 = vector.broadcast %235 : vector<128x1xf32> to vector<128x128xf32>
    %237 = arith.subf %231, %236 : vector<128x128xf32>
    %238 = arith.mulf %237, %237 : vector<128x128xf32>
    %cst_142 = arith.constant dense<0.000000e+00> : vector<128xf32>
    %239 = vector.multi_reduction <add>, %238, %cst_142 [1] : vector<128x128xf32> to vector<128xf32>
    %240 = vector.shape_cast %239 : vector<128xf32> to vector<128x1xf32>
    %cst_143 = arith.constant 1.280000e+02 : f32
    %241 = vector.broadcast %cst_143 : f32 to vector<128x1xf32>
    %242 = arith.divf %240, %241 : vector<128x1xf32>
    %cst_144 = arith.constant 9.99999974E-6 : f32
    %243 = vector.broadcast %cst_144 : f32 to vector<128x1xf32>
    %244 = arith.addf %242, %243 : vector<128x1xf32>
    %245 = math.rsqrt %244 : vector<128x1xf32>
    %246 = vector.broadcast %245 : vector<128x1xf32> to vector<128x128xf32>
    %247 = arith.mulf %237, %246 : vector<128x128xf32>
    %c0_145 = arith.constant 0 : index
    %c0_146 = arith.constant 0 : index
    %248 = vector.load %arg17[%c0_145, %c0_146] : memref<1x128xf32, #tpu.memory_space<vmem>>, vector<1x128xf32>
    %249 = vector.broadcast %248 : vector<1x128xf32> to vector<128x128xf32>
    %250 = arith.mulf %247, %249 : vector<128x128xf32>
    %c0_147 = arith.constant 0 : index
    %c0_148 = arith.constant 0 : index
    %251 = vector.load %arg18[%c0_147, %c0_148] : memref<1x128xf32, #tpu.memory_space<vmem>>, vector<1x128xf32>
    %252 = vector.broadcast %251 : vector<1x128xf32> to vector<128x128xf32>
    %253 = arith.addf %250, %252 : vector<128x128xf32>
    %254 = vector.shape_cast %253 : vector<128x128xf32> to vector<8x16x128xf32>
    %c0_149 = arith.constant 0 : index
    %c0_150 = arith.constant 0 : index
    %c0_151 = arith.constant 0 : index
    %255 = vector.load %arg19[%c0_149, %c0_150, %c0_151] : memref<8x16x128xf32, #tpu.memory_space<vmem>>, vector<8x16x128xf32>
    tpu.vector_store %arg19[%c0_149, %c0_150, %c0_151], %254 {strides = array<i32>} : memref<8x16x128xf32, #tpu.memory_space<vmem>>, vector<8x16x128xf32>,
    return
  }
  func.func @transform_0(%arg0: i32) -> (i32, i32, i32) {
    %c0_i32 = arith.constant 0 : i32
    %c0_i32_0 = arith.constant 0 : i32
    %c0_i32_1 = arith.constant 0 : i32
    return %arg0, %c0_i32, %c0_i32_0 : i32, i32, i32
  }
  func.func @transform_1(%arg0: i32) -> (i32, i32, i32) {
    %c0_i32 = arith.constant 0 : i32
    %c0_i32_0 = arith.constant 0 : i32
    %c0_i32_1 = arith.constant 0 : i32
    return %arg0, %c0_i32, %c0_i32_0 : i32, i32, i32
  }
  func.func @transform_2(%arg0: i32) -> (i32, i32, i32) {
    %c0_i32 = arith.constant 0 : i32
    %c0_i32_0 = arith.constant 0 : i32
    %c0_i32_1 = arith.constant 0 : i32
    %c0_i32_2 = arith.constant 0 : i32
    return %c0_i32, %c0_i32_0, %c0_i32_1 : i32, i32, i32
  }
  func.func @transform_3(%arg0: i32) -> (i32, i32, i32) {
    %c0_i32 = arith.constant 0 : i32
    %c0_i32_0 = arith.constant 0 : i32
    %c0_i32_1 = arith.constant 0 : i32
    %c0_i32_2 = arith.constant 0 : i32
    return %c0_i32, %c0_i32_0, %c0_i32_1 : i32, i32, i32
  }
  func.func @transform_4(%arg0: i32) -> (i32, i32, i32) {
    %c0_i32 = arith.constant 0 : i32
    %c0_i32_0 = arith.constant 0 : i32
    %c0_i32_1 = arith.constant 0 : i32
    %c0_i32_2 = arith.constant 0 : i32
    return %c0_i32, %c0_i32_0, %c0_i32_1 : i32, i32, i32
  }
  func.func @transform_5(%arg0: i32) -> (i32, i32, i32) {
    %c0_i32 = arith.constant 0 : i32
    %c0_i32_0 = arith.constant 0 : i32
    %c0_i32_1 = arith.constant 0 : i32
    %c0_i32_2 = arith.constant 0 : i32
    return %c0_i32, %c0_i32_0, %c0_i32_1 : i32, i32, i32
  }
  func.func @transform_6(%arg0: i32) -> (i32, i32, i32) {
    %c0_i32 = arith.constant 0 : i32
    %c0_i32_0 = arith.constant 0 : i32
    %c0_i32_1 = arith.constant 0 : i32
    %c0_i32_2 = arith.constant 0 : i32
    return %c0_i32, %c0_i32_0, %c0_i32_1 : i32, i32, i32
  }
  func.func @transform_7(%arg0: i32) -> (i32, i32, i32) {
    %c0_i32 = arith.constant 0 : i32
    %c0_i32_0 = arith.constant 0 : i32
    %c0_i32_1 = arith.constant 0 : i32
    %c0_i32_2 = arith.constant 0 : i32
    return %c0_i32, %c0_i32_0, %c0_i32_1 : i32, i32, i32
  }
  func.func @transform_8(%arg0: i32) -> (i32, i32, i32) {
    %c0_i32 = arith.constant 0 : i32
    %c0_i32_0 = arith.constant 0 : i32
    %c0_i32_1 = arith.constant 0 : i32
    %c0_i32_2 = arith.constant 0 : i32
    return %c0_i32, %c0_i32_0, %c0_i32_1 : i32, i32, i32
  }
  func.func @transform_9(%arg0: i32) -> (i32, i32) {
    %c0_i32 = arith.constant 0 : i32
    %c0_i32_0 = arith.constant 0 : i32
    %c0_i32_1 = arith.constant 0 : i32
    return %c0_i32, %c0_i32_0 : i32, i32
  }
  func.func @transform_10(%arg0: i32) -> (i32, i32) {
    %c0_i32 = arith.constant 0 : i32
    %c0_i32_0 = arith.constant 0 : i32
    %c0_i32_1 = arith.constant 0 : i32
    return %c0_i32, %c0_i32_0 : i32, i32
  }
  func.func @transform_11(%arg0: i32) -> (i32, i32) {
    %c0_i32 = arith.constant 0 : i32
    %c0_i32_0 = arith.constant 0 : i32
    %c0_i32_1 = arith.constant 0 : i32
    return %c0_i32, %c0_i32_0 : i32, i32
  }
  func.func @transform_12(%arg0: i32) -> (i32, i32) {
    %c0_i32 = arith.constant 0 : i32
    %c0_i32_0 = arith.constant 0 : i32
    %c0_i32_1 = arith.constant 0 : i32
    return %c0_i32, %c0_i32_0 : i32, i32
  }
  func.func @transform_13(%arg0: i32) -> (i32, i32) {
    %c0_i32 = arith.constant 0 : i32
    %c0_i32_0 = arith.constant 0 : i32
    %c0_i32_1 = arith.constant 0 : i32
    return %c0_i32, %c0_i32_0 : i32, i32
  }
  func.func @transform_14(%arg0: i32) -> (i32, i32) {
    %c0_i32 = arith.constant 0 : i32
    %c0_i32_0 = arith.constant 0 : i32
    %c0_i32_1 = arith.constant 0 : i32
    return %c0_i32, %c0_i32_0 : i32, i32
  }
  func.func @transform_15(%arg0: i32) -> (i32, i32) {
    %c0_i32 = arith.constant 0 : i32
    %c0_i32_0 = arith.constant 0 : i32
    %c0_i32_1 = arith.constant 0 : i32
    return %c0_i32, %c0_i32_0 : i32, i32
  }
  func.func @transform_16(%arg0: i32) -> (i32, i32) {
    %c0_i32 = arith.constant 0 : i32
    %c0_i32_0 = arith.constant 0 : i32
    %c0_i32_1 = arith.constant 0 : i32
    return %c0_i32, %c0_i32_0 : i32, i32
  }
  func.func @transform_17(%arg0: i32) -> (i32, i32) {
    %c0_i32 = arith.constant 0 : i32
    %c0_i32_0 = arith.constant 0 : i32
    %c0_i32_1 = arith.constant 0 : i32
    return %c0_i32, %c0_i32_0 : i32, i32
  }
  func.func @transform_18(%arg0: i32) -> (i32, i32, i32) {
    %c0_i32 = arith.constant 0 : i32
    %c0_i32_0 = arith.constant 0 : i32
    %c0_i32_1 = arith.constant 0 : i32
    return %arg0, %c0_i32, %c0_i32_0 : i32, i32, i32
  }
}

</mosaic_0001>

<llo_original>
// kernel: tpu_custom_call.1
$region0: #{tpu_custom_call.1}
  #allocation0 [shape = 'u32[]', space=smem, size = 0x4, offset = 0x4, fixed_abs, tag = 'smem constant byte address 0x4 - core index']
  #allocation1 [shape = 'u32[144,128]{1,0:T(1,128)}', space=vmem, size = 0x12000, scoped, tag = 'internal scratch']
  %s0 = inlined_call_operand.vmem [shape: f32[16,16,128], index: 0, kind: input, shape index: {}]
  %s1 = inlined_call_operand.vmem [shape: f32[16,16,128], index: 1, kind: input, shape index: {}]
  %s2 = inlined_call_operand.vmem [shape: bf16[4,128,32], index: 2, kind: input, shape index: {}]
  %s3 = inlined_call_operand.vmem [shape: bf16[4,128,32], index: 3, kind: input, shape index: {}]
  %s4 = inlined_call_operand.vmem [shape: bf16[4,128,32], index: 4, kind: input, shape index: {}]
  %s5 = inlined_call_operand.vmem [shape: f32[4,1,32], index: 5, kind: input, shape index: {}]
  %s6 = inlined_call_operand.vmem [shape: f32[4,1,32], index: 6, kind: input, shape index: {}]
  %s7 = inlined_call_operand.vmem [shape: f32[4,1,32], index: 7, kind: input, shape index: {}]
  %s8 = inlined_call_operand.vmem [shape: bf16[4,32,128], index: 8, kind: input, shape index: {}]
  %s9 = inlined_call_operand.vmem [shape: f32[1,128], index: 9, kind: input, shape index: {}]
  %s10 = inlined_call_operand.vmem [shape: bf16[128,256], index: 10, kind: input, shape index: {}]
  %s11 = inlined_call_operand.vmem [shape: f32[1,256], index: 11, kind: input, shape index: {}]
  %s12 = inlined_call_operand.vmem [shape: bf16[256,128], index: 12, kind: input, shape index: {}]
  %s13 = inlined_call_operand.vmem [shape: f32[1,128], index: 13, kind: input, shape index: {}]
  %s14 = inlined_call_operand.vmem [shape: f32[1,128], index: 14, kind: input, shape index: {}]
  %s15 = inlined_call_operand.vmem [shape: f32[1,128], index: 15, kind: input, shape index: {}]
  %s16 = inlined_call_operand.vmem [shape: f32[1,128], index: 16, kind: input, shape index: {}]
  %s17 = inlined_call_operand.vmem [shape: f32[1,128], index: 17, kind: input, shape index: {}]
  %s18 = inlined_call_operand.hbm [shape: f32[16,16,128], index: 18, kind: output, shape index: {}]
  %s19 = sld [smem:[#allocation0]]
  $region105: #{tpu_custom_call.1} parent=0
    _
  %s21 = ssub.s32 1, %s19
  %s22 = scalar_select 0, %s21, %s19
  $region1: #{tpu_custom_call.1} parent=0
    #allocation2 [shape = 'u8[131072]{0}', space=vmem, size = 0x20000, scoped, tag = 'output window, operand 0']
    #allocation3 [shape = 's32[2]{0}', space=sflag, size = 0x8, scoped, tag = 'scoped memory for tpu_custom_call.1']
    %23 = vsyncpa [#allocation3], 0
    %s24 = scalar_lea.sflag [#allocation3], 1
    %25 = vsyncpa %s24, 0
    loop: start=0, step=1, limit=4
    $region2: #{tpu_custom_call.1} parent=1 // loop_pre_header
      _
    $region3: #{tpu_custom_call.1} parent=1 // loop_header
      %s27 = sphi 0, %s31
      %p28 = scmp.ge.s32.totalorder %s27, 4
      %s37 = sphi 0, %s39
      %s40 = sphi 0, %s37
      %s41 = sphi 0, %s40
      %s57 = sphi 0, %s41
      %s63 = sphi 0, %s65
      %s66 = sphi 0, %s63
      %s67 = sphi 0, %s66
      %s83 = sphi 0, %s67
      %s87 = sphi 0, %s87
      %s89 = sphi 0, %s87
      %s90 = sphi 0, %s89
      %s104 = sphi 0, %s90
      %s108 = sphi 0, %s108
      %s110 = sphi 0, %s108
      %s111 = sphi 0, %s110
      %s125 = sphi 0, %s111
      %s129 = sphi 0, %s129
      %s131 = sphi 0, %s129
      %s132 = sphi 0, %s131
      %s146 = sphi 0, %s132
      %s150 = sphi 0, %s150
      %s152 = sphi 0, %s150
      %s153 = sphi 0, %s152
      %s167 = sphi 0, %s153
      %s171 = sphi 0, %s171
      %s173 = sphi 0, %s171
      %s174 = sphi 0, %s173
      %s188 = sphi 0, %s174
      %s192 = sphi 0, %s192
      %s194 = sphi 0, %s192
      %s195 = sphi 0, %s194
      %s209 = sphi 0, %s195
      %s213 = sphi 0, %s213
      %s215 = sphi 0, %s213
      %s216 = sphi 0, %s215
      %s230 = sphi 0, %s216
      %s234 = sphi 0, %s234
      %s236 = sphi 0, %s234
      %s237 = sphi 0, %s236
      %s251 = sphi 0, %s237
      %s255 = sphi 0, %s255
      %s257 = sphi 0, %s255
      %s258 = sphi 0, %s257
      %s272 = sphi 0, %s258
      %s276 = sphi 0, %s276
      %s278 = sphi 0, %s276
      %s279 = sphi 0, %s278
      %s293 = sphi 0, %s279
      %s297 = sphi 0, %s297
      %s299 = sphi 0, %s297
      %s300 = sphi 0, %s299
      %s314 = sphi 0, %s300
      %s318 = sphi 0, %s318
      %s320 = sphi 0, %s318
      %s321 = sphi 0, %s320
      %s335 = sphi 0, %s321
      %s339 = sphi 0, %s339
      %s341 = sphi 0, %s339
      %s342 = sphi 0, %s341
      %s356 = sphi 0, %s342
      %s360 = sphi 0, %s360
      %s362 = sphi 0, %s360
      %s363 = sphi 0, %s362
      %s377 = sphi 0, %s363
      %s381 = sphi 0, %s381
      %s383 = sphi 0, %s381
      %s384 = sphi 0, %s383
      %s398 = sphi 0, %s384
      %s402 = sphi 0, %s402
      %s404 = sphi 0, %s402
      %s405 = sphi 0, %s404
      %s419 = sphi 0, %s405
      %s425 = sphi 0, %s427
      %s428 = sphi 0, %s425
      %s429 = sphi 0, %s428
      %s445 = sphi 0, %s429
    $region4: #{tpu_custom_call.1} parent=1 // loop_header_branch
      %30 = sbr.rel (%p28) target = $region8
    $region5: #{tpu_custom_call.1} parent=1 // loop_body
      %s32 = ssub.s32 %s27, 1
      %s33 = ssub.s32 %s27, 2
      %s34 = sadd.s32 %s27, 1
      %s35 = ssub.s32 %s27, %s34
      %p36 = scmp.eq.s32.totalorder %s35, 0
      %s38 = sadd.s32 %s37, 1
      %s39 = scalar_select %p36, %s37, %s38
      %p42 = pneg %p36
      %p43 = scmp.eq.s32.totalorder %s27, 1
      %p44 = por %p42, %p43
      %p45 = scmp.ne.s32.totalorder %s37, %s40
      %p46 = scmp.eq.s32.totalorder %s27, 0
      %p47 = por %p45, %p46
      %p48 = scmp.ne.s32.totalorder %s37, %s40
      %p49 = scmp.eq.s32.totalorder %s32, 1
      %p50 = por %p48, %p49
      %p51 = scmp.ne.s32.totalorder %s40, %s41
      %p52 = scmp.eq.s32.totalorder %s32, 0
      %p53 = por %p51, %p52
      %p54 = scmp.ne.s32.totalorder %s40, %s41
      %p55 = scmp.eq.s32.totalorder %s33, 1
      %p56 = por %p54, %p55
      %p58 = scmp.ne.s32.totalorder %s41, %s57
      %p59 = scmp.eq.s32.totalorder %s33, 0
      %p60 = por %p58, %p59
      %s61 = ssub.s32 %s27, %s34
      %p62 = scmp.eq.s32.totalorder %s61, 0
      %s64 = sadd.s32 %s63, 1
      %s65 = scalar_select %p62, %s63, %s64
      %p68 = pneg %p62
      %p69 = scmp.eq.s32.totalorder %s27, 1
      %p70 = por %p68, %p69
      %p71 = scmp.ne.s32.totalorder %s63, %s66
      %p72 = scmp.eq.s32.totalorder %s27, 0
      %p73 = por %p71, %p72
      %p74 = scmp.ne.s32.totalorder %s63, %s66
      %p75 = scmp.eq.s32.totalorder %s32, 1
      %p76 = por %p74, %p75
      %p77 = scmp.ne.s32.totalorder %s66, %s67
      %p78 = scmp.eq.s32.totalorder %s32, 0
      %p79 = por %p77, %p78
      %p80 = scmp.ne.s32.totalorder %s66, %s67
      %p81 = scmp.eq.s32.totalorder %s33, 1
      %p82 = por %p80, %p81
      %p84 = scmp.ne.s32.totalorder %s67, %s83
      %p85 = scmp.eq.s32.totalorder %s33, 0
      %p86 = por %p84, %p85
      %s88 = sadd.s32 %s87, 1
      %p91 = scmp.eq.s32.totalorder %s27, 1
      %p92 = scmp.ne.s32.totalorder %s87, %s89
      %p93 = scmp.eq.s32.totalorder %s27, 0
      %p94 = por %p92, %p93
      %p95 = scmp.ne.s32.totalorder %s87, %s89
      %p96 = scmp.eq.s32.totalorder %s32, 1
      %p97 = por %p95, %p96
      %p98 = scmp.ne.s32.totalorder %s89, %s90
      %p99 = scmp.eq.s32.totalorder %s32, 0
      %p100 = por %p98, %p99
      %p101 = scmp.ne.s32.totalorder %s89, %s90
      %p102 = scmp.eq.s32.totalorder %s33, 1
      %p103 = por %p101, %p102
      %p105 = scmp.ne.s32.totalorder %s90, %s104
      %p106 = scmp.eq.s32.totalorder %s33, 0
      %p107 = por %p105, %p106
      %s109 = sadd.s32 %s108, 1
      %p112 = scmp.eq.s32.totalorder %s27, 1
      %p113 = scmp.ne.s32.totalorder %s108, %s110
      %p114 = scmp.eq.s32.totalorder %s27, 0
      %p115 = por %p113, %p114
      %p116 = scmp.ne.s32.totalorder %s108, %s110
      %p117 = scmp.eq.s32.totalorder %s32, 1
      %p118 = por %p116, %p117
      %p119 = scmp.ne.s32.totalorder %s110, %s111
      %p120 = scmp.eq.s32.totalorder %s32, 0
      %p121 = por %p119, %p120
      %p122 = scmp.ne.s32.totalorder %s110, %s111
      %p123 = scmp.eq.s32.totalorder %s33, 1
      %p124 = por %p122, %p123
      %p126 = scmp.ne.s32.totalorder %s111, %s125
      %p127 = scmp.eq.s32.totalorder %s33, 0
      %p128 = por %p126, %p127
      %s130 = sadd.s32 %s129, 1
      %p133 = scmp.eq.s32.totalorder %s27, 1
      %p134 = scmp.ne.s32.totalorder %s129, %s131
      %p135 = scmp.eq.s32.totalorder %s27, 0
      %p136 = por %p134, %p135
      %p137 = scmp.ne.s32.totalorder %s129, %s131
      %p138 = scmp.eq.s32.totalorder %s32, 1
      %p139 = por %p137, %p138
      %p140 = scmp.ne.s32.totalorder %s131, %s132
      %p141 = scmp.eq.s32.totalorder %s32, 0
      %p142 = por %p140, %p141
      %p143 = scmp.ne.s32.totalorder %s131, %s132
      %p144 = scmp.eq.s32.totalorder %s33, 1
      %p145 = por %p143, %p144
      %p147 = scmp.ne.s32.totalorder %s132, %s146
      %p148 = scmp.eq.s32.totalorder %s33, 0
      %p149 = por %p147, %p148
      %s151 = sadd.s32 %s150, 1
      %p154 = scmp.eq.s32.totalorder %s27, 1
      %p155 = scmp.ne.s32.totalorder %s150, %s152
      %p156 = scmp.eq.s32.totalorder %s27, 0
      %p157 = por %p155, %p156
      %p158 = scmp.ne.s32.totalorder %s150, %s152
      %p159 = scmp.eq.s32.totalorder %s32, 1
      %p160 = por %p158, %p159
      %p161 = scmp.ne.s32.totalorder %s152, %s153
      %p162 = scmp.eq.s32.totalorder %s32, 0
      %p163 = por %p161, %p162
      %p164 = scmp.ne.s32.totalorder %s152, %s153
      %p165 = scmp.eq.s32.totalorder %s33, 1
      %p166 = por %p164, %p165
      %p168 = scmp.ne.s32.totalorder %s153, %s167
      %p169 = scmp.eq.s32.totalorder %s33, 0
      %p170 = por %p168, %p169
      %s172 = sadd.s32 %s171, 1
      %p175 = scmp.eq.s32.totalorder %s27, 1
      %p176 = scmp.ne.s32.totalorder %s171, %s173
      %p177 = scmp.eq.s32.totalorder %s27, 0
      %p178 = por %p176, %p177
      %p179 = scmp.ne.s32.totalorder %s171, %s173
      %p180 = scmp.eq.s32.totalorder %s32, 1
      %p181 = por %p179, %p180
      %p182 = scmp.ne.s32.totalorder %s173, %s174
      %p183 = scmp.eq.s32.totalorder %s32, 0
      %p184 = por %p182, %p183
      %p185 = scmp.ne.s32.totalorder %s173, %s174
      %p186 = scmp.eq.s32.totalorder %s33, 1
      %p187 = por %p185, %p186
      %p189 = scmp.ne.s32.totalorder %s174, %s188
      %p190 = scmp.eq.s32.totalorder %s33, 0
      %p191 = por %p189, %p190
      %s193 = sadd.s32 %s192, 1
      %p196 = scmp.eq.s32.totalorder %s27, 1
      %p197 = scmp.ne.s32.totalorder %s192, %s194
      %p198 = scmp.eq.s32.totalorder %s27, 0
      %p199 = por %p197, %p198
      %p200 = scmp.ne.s32.totalorder %s192, %s194
      %p201 = scmp.eq.s32.totalorder %s32, 1
      %p202 = por %p200, %p201
      %p203 = scmp.ne.s32.totalorder %s194, %s195
      %p204 = scmp.eq.s32.totalorder %s32, 0
      %p205 = por %p203, %p204
      %p206 = scmp.ne.s32.totalorder %s194, %s195
      %p207 = scmp.eq.s32.totalorder %s33, 1
      %p208 = por %p206, %p207
      %p210 = scmp.ne.s32.totalorder %s195, %s209
      %p211 = scmp.eq.s32.totalorder %s33, 0
      %p212 = por %p210, %p211
      %s214 = sadd.s32 %s213, 1
      %p217 = scmp.eq.s32.totalorder %s27, 1
      %p218 = scmp.ne.s32.totalorder %s213, %s215
      %p219 = scmp.eq.s32.totalorder %s27, 0
      %p220 = por %p218, %p219
      %p221 = scmp.ne.s32.totalorder %s213, %s215
      %p222 = scmp.eq.s32.totalorder %s32, 1
      %p223 = por %p221, %p222
      %p224 = scmp.ne.s32.totalorder %s215, %s216
      %p225 = scmp.eq.s32.totalorder %s32, 0
      %p226 = por %p224, %p225
      %p227 = scmp.ne.s32.totalorder %s215, %s216
      %p228 = scmp.eq.s32.totalorder %s33, 1
      %p229 = por %p227, %p228
      %p231 = scmp.ne.s32.totalorder %s216, %s230
      %p232 = scmp.eq.s32.totalorder %s33, 0
      %p233 = por %p231, %p232
      %s235 = sadd.s32 %s234, 1
      %p238 = scmp.eq.s32.totalorder %s27, 1
      %p239 = scmp.ne.s32.totalorder %s234, %s236
      %p240 = scmp.eq.s32.totalorder %s27, 0
      %p241 = por %p239, %p240
      %p242 = scmp.ne.s32.totalorder %s234, %s236
      %p243 = scmp.eq.s32.totalorder %s32, 1
      %p244 = por %p242, %p243
      %p245 = scmp.ne.s32.totalorder %s236, %s237
      %p246 = scmp.eq.s32.totalorder %s32, 0
      %p247 = por %p245, %p246
      %p248 = scmp.ne.s32.totalorder %s236, %s237
      %p249 = scmp.eq.s32.totalorder %s33, 1
      %p250 = por %p248, %p249
      %p252 = scmp.ne.s32.totalorder %s237, %s251
      %p253 = scmp.eq.s32.totalorder %s33, 0
      %p254 = por %p252, %p253
      %s256 = sadd.s32 %s255, 1
      %p259 = scmp.eq.s32.totalorder %s27, 1
      %p260 = scmp.ne.s32.totalorder %s255, %s257
      %p261 = scmp.eq.s32.totalorder %s27, 0
      %p262 = por %p260, %p261
      %p263 = scmp.ne.s32.totalorder %s255, %s257
      %p264 = scmp.eq.s32.totalorder %s32, 1
      %p265 = por %p263, %p264
      %p266 = scmp.ne.s32.totalorder %s257, %s258
      %p267 = scmp.eq.s32.totalorder %s32, 0
      %p268 = por %p266, %p267
      %p269 = scmp.ne.s32.totalorder %s257, %s258
      %p270 = scmp.eq.s32.totalorder %s33, 1
      %p271 = por %p269, %p270
      %p273 = scmp.ne.s32.totalorder %s258, %s272
      %p274 = scmp.eq.s32.totalorder %s33, 0
      %p275 = por %p273, %p274
      %s277 = sadd.s32 %s276, 1
      %p280 = scmp.eq.s32.totalorder %s27, 1
      %p281 = scmp.ne.s32.totalorder %s276, %s278
      %p282 = scmp.eq.s32.totalorder %s27, 0
      %p283 = por %p281, %p282
      %p284 = scmp.ne.s32.totalorder %s276, %s278
      %p285 = scmp.eq.s32.totalorder %s32, 1
      %p286 = por %p284, %p285
      %p287 = scmp.ne.s32.totalorder %s278, %s279
      %p288 = scmp.eq.s32.totalorder %s32, 0
      %p289 = por %p287, %p288
      %p290 = scmp.ne.s32.totalorder %s278, %s279
      %p291 = scmp.eq.s32.totalorder %s33, 1
      %p292 = por %p290, %p291
      %p294 = scmp.ne.s32.totalorder %s279, %s293
      %p295 = scmp.eq.s32.totalorder %s33, 0
      %p296 = por %p294, %p295
      %s298 = sadd.s32 %s297, 1
      %p301 = scmp.eq.s32.totalorder %s27, 1
      %p302 = scmp.ne.s32.totalorder %s297, %s299
      %p303 = scmp.eq.s32.totalorder %s27, 0
      %p304 = por %p302, %p303
      %p305 = scmp.ne.s32.totalorder %s297, %s299
      %p306 = scmp.eq.s32.totalorder %s32, 1
      %p307 = por %p305, %p306
      %p308 = scmp.ne.s32.totalorder %s299, %s300
      %p309 = scmp.eq.s32.totalorder %s32, 0
      %p310 = por %p308, %p309
      %p311 = scmp.ne.s32.totalorder %s299, %s300
      %p312 = scmp.eq.s32.totalorder %s33, 1
      %p313 = por %p311, %p312
      %p315 = scmp.ne.s32.totalorder %s300, %s314
      %p316 = scmp.eq.s32.totalorder %s33, 0
      %p317 = por %p315, %p316
      %s319 = sadd.s32 %s318, 1
      %p322 = scmp.eq.s32.totalorder %s27, 1
      %p323 = scmp.ne.s32.totalorder %s318, %s320
      %p324 = scmp.eq.s32.totalorder %s27, 0
      %p325 = por %p323, %p324
      %p326 = scmp.ne.s32.totalorder %s318, %s320
      %p327 = scmp.eq.s32.totalorder %s32, 1
      %p328 = por %p326, %p327
      %p329 = scmp.ne.s32.totalorder %s320, %s321
      %p330 = scmp.eq.s32.totalorder %s32, 0
      %p331 = por %p329, %p330
      %p332 = scmp.ne.s32.totalorder %s320, %s321
      %p333 = scmp.eq.s32.totalorder %s33, 1
      %p334 = por %p332, %p333
      %p336 = scmp.ne.s32.totalorder %s321, %s335
      %p337 = scmp.eq.s32.totalorder %s33, 0
      %p338 = por %p336, %p337
      %s340 = sadd.s32 %s339, 1
      %p343 = scmp.eq.s32.totalorder %s27, 1
      %p344 = scmp.ne.s32.totalorder %s339, %s341
      %p345 = scmp.eq.s32.totalorder %s27, 0
      %p346 = por %p344, %p345
      %p347 = scmp.ne.s32.totalorder %s339, %s341
      %p348 = scmp.eq.s32.totalorder %s32, 1
      %p349 = por %p347, %p348
      %p350 = scmp.ne.s32.totalorder %s341, %s342
      %p351 = scmp.eq.s32.totalorder %s32, 0
      %p352 = por %p350, %p351
      %p353 = scmp.ne.s32.totalorder %s341, %s342
      %p354 = scmp.eq.s32.totalorder %s33, 1
      %p355 = por %p353, %p354
      %p357 = scmp.ne.s32.totalorder %s342, %s356
      %p358 = scmp.eq.s32.totalorder %s33, 0
      %p359 = por %p357, %p358
      %s361 = sadd.s32 %s360, 1
      %p364 = scmp.eq.s32.totalorder %s27, 1
      %p365 = scmp.ne.s32.totalorder %s360, %s362
      %p366 = scmp.eq.s32.totalorder %s27, 0
      %p367 = por %p365, %p366
      %p368 = scmp.ne.s32.totalorder %s360, %s362
      %p369 = scmp.eq.s32.totalorder %s32, 1
      %p370 = por %p368, %p369
      %p371 = scmp.ne.s32.totalorder %s362, %s363
      %p372 = scmp.eq.s32.totalorder %s32, 0
      %p373 = por %p371, %p372
      %p374 = scmp.ne.s32.totalorder %s362, %s363
      %p375 = scmp.eq.s32.totalorder %s33, 1
      %p376 = por %p374, %p375
      %p378 = scmp.ne.s32.totalorder %s363, %s377
      %p379 = scmp.eq.s32.totalorder %s33, 0
      %p380 = por %p378, %p379
      %s382 = sadd.s32 %s381, 1
      %p385 = scmp.eq.s32.totalorder %s27, 1
      %p386 = scmp.ne.s32.totalorder %s381, %s383
      %p387 = scmp.eq.s32.totalorder %s27, 0
      %p388 = por %p386, %p387
      %p389 = scmp.ne.s32.totalorder %s381, %s383
      %p390 = scmp.eq.s32.totalorder %s32, 1
      %p391 = por %p389, %p390
      %p392 = scmp.ne.s32.totalorder %s383, %s384
      %p393 = scmp.eq.s32.totalorder %s32, 0
      %p394 = por %p392, %p393
      %p395 = scmp.ne.s32.totalorder %s383, %s384
      %p396 = scmp.eq.s32.totalorder %s33, 1
      %p397 = por %p395, %p396
      %p399 = scmp.ne.s32.totalorder %s384, %s398
      %p400 = scmp.eq.s32.totalorder %s33, 0
      %p401 = por %p399, %p400
      %s403 = sadd.s32 %s402, 1
      %p406 = scmp.eq.s32.totalorder %s27, 1
      %p407 = scmp.ne.s32.totalorder %s402, %s404
      %p408 = scmp.eq.s32.totalorder %s27, 0
      %p409 = por %p407, %p408
      %p410 = scmp.ne.s32.totalorder %s402, %s404
      %p411 = scmp.eq.s32.totalorder %s32, 1
      %p412 = por %p410, %p411
      %p413 = scmp.ne.s32.totalorder %s404, %s405
      %p414 = scmp.eq.s32.totalorder %s32, 0
      %p415 = por %p413, %p414
      %p416 = scmp.ne.s32.totalorder %s404, %s405
      %p417 = scmp.eq.s32.totalorder %s33, 1
      %p418 = por %p416, %p417
      %p420 = scmp.ne.s32.totalorder %s405, %s419
      %p421 = scmp.eq.s32.totalorder %s33, 0
      %p422 = por %p420, %p421
      %s423 = ssub.s32 %s27, %s34
      %p424 = scmp.eq.s32.totalorder %s423, 0
      %s426 = sadd.s32 %s425, 1
      %s427 = scalar_select %p424, %s425, %s426
      %p430 = pneg %p424
      %p431 = scmp.eq.s32.totalorder %s27, 1
      %p432 = por %p430, %p431
      %p433 = scmp.ne.s32.totalorder %s425, %s428
      %p434 = scmp.eq.s32.totalorder %s27, 0
      %p435 = por %p433, %p434
      %p436 = scmp.ne.s32.totalorder %s425, %s428
      %p437 = scmp.eq.s32.totalorder %s32, 1
      %p438 = por %p436, %p437
      %p439 = scmp.ne.s32.totalorder %s428, %s429
      %p440 = scmp.eq.s32.totalorder %s32, 0
      %p441 = por %p439, %p440
      %p442 = scmp.ne.s32.totalorder %s428, %s429
      %p443 = scmp.eq.s32.totalorder %s33, 1
      %p444 = por %p442, %p443
      %p446 = scmp.ne.s32.totalorder %s429, %s445
      %p447 = scmp.eq.s32.totalorder %s33, 0
      %p448 = por %p446, %p447
      %p449 = scmp.le.s32.totalorder 1, %s27
      %p450 = scmp.lt.s32.totalorder %s27, 3
      %p451 = pnand %p449, %p450
      %p452 = pneg %p451
      // Predicated region
      $region9: #{tpu_custom_call.1} parent=5 // pred_check
        _
      $region10: #{tpu_custom_call.1} parent=5 // pred_check_branch
        %454 = sbr.rel (%p451) target = $region12
      $region11: #{tpu_custom_call.1} parent=5 // pred_region
        %s455 = ssub.s32 %s27, 1
        // Predicated region
        $region13: #{tpu_custom_call.1} parent=11 // pred_check
          %p456 = pneg %p100
        $region14: #{tpu_custom_call.1} parent=11 // pred_check_branch
          %458 = sbr.rel (%p456) target = $region16
        $region15: #{tpu_custom_call.1} parent=11 // pred_region
          _
        $region16: #{tpu_custom_call.1} parent=11 // pred_fallthru
          _
        // Predicated region
        $region17: #{tpu_custom_call.1} parent=11 // pred_check
          %p459 = pneg %p121
        $region18: #{tpu_custom_call.1} parent=11 // pred_check_branch
          %461 = sbr.rel (%p459) target = $region20
        $region19: #{tpu_custom_call.1} parent=11 // pred_region
          _
        $region20: #{tpu_custom_call.1} parent=11 // pred_fallthru
          _
        // Predicated region
        $region21: #{tpu_custom_call.1} parent=11 // pred_check
          %p462 = pneg %p142
        $region22: #{tpu_custom_call.1} parent=11 // pred_check_branch
          %464 = sbr.rel (%p462) target = $region24
        $region23: #{tpu_custom_call.1} parent=11 // pred_region
          _
        $region24: #{tpu_custom_call.1} parent=11 // pred_fallthru
          _
        // Predicated region
        $region25: #{tpu_custom_call.1} parent=11 // pred_check
          %p465 = pneg %p163
        $region26: #{tpu_custom_call.1} parent=11 // pred_check_branch
          %467 = sbr.rel (%p465) target = $region28
        $region27: #{tpu_custom_call.1} parent=11 // pred_region
          _
        $region28: #{tpu_custom_call.1} parent=11 // pred_fallthru
          _
        // Predicated region
        $region29: #{tpu_custom_call.1} parent=11 // pred_check
          %p468 = pneg %p184
        $region30: #{tpu_custom_call.1} parent=11 // pred_check_branch
          %470 = sbr.rel (%p468) target = $region32
        $region31: #{tpu_custom_call.1} parent=11 // pred_region
          _
        $region32: #{tpu_custom_call.1} parent=11 // pred_fallthru
          _
        // Predicated region
        $region33: #{tpu_custom_call.1} parent=11 // pred_check
          %p471 = pneg %p205
        $region34: #{tpu_custom_call.1} parent=11 // pred_check_branch
          %473 = sbr.rel (%p471) target = $region36
        $region35: #{tpu_custom_call.1} parent=11 // pred_region
          _
        $region36: #{tpu_custom_call.1} parent=11 // pred_fallthru
          _
        // Predicated region
        $region37: #{tpu_custom_call.1} parent=11 // pred_check
          %p474 = pneg %p226
        $region38: #{tpu_custom_call.1} parent=11 // pred_check_branch
          %476 = sbr.rel (%p474) target = $region40
        $region39: #{tpu_custom_call.1} parent=11 // pred_region
          _
        $region40: #{tpu_custom_call.1} parent=11 // pred_fallthru
          _
        // Predicated region
        $region41: #{tpu_custom_call.1} parent=11 // pred_check
          %p477 = pneg %p247
        $region42: #{tpu_custom_call.1} parent=11 // pred_check_branch
          %479 = sbr.rel (%p477) target = $region44
        $region43: #{tpu_custom_call.1} parent=11 // pred_region
          _
        $region44: #{tpu_custom_call.1} parent=11 // pred_fallthru
          _
        // Predicated region
        $region45: #{tpu_custom_call.1} parent=11 // pred_check
          %p480 = pneg %p268
        $region46: #{tpu_custom_call.1} parent=11 // pred_check_branch
          %482 = sbr.rel (%p480) target = $region48
        $region47: #{tpu_custom_call.1} parent=11 // pred_region
          _
        $region48: #{tpu_custom_call.1} parent=11 // pred_fallthru
          _
        // Predicated region
        $region49: #{tpu_custom_call.1} parent=11 // pred_check
          %p483 = pneg %p289
        $region50: #{tpu_custom_call.1} parent=11 // pred_check_branch
          %485 = sbr.rel (%p483) target = $region52
        $region51: #{tpu_custom_call.1} parent=11 // pred_region
          _
        $region52: #{tpu_custom_call.1} parent=11 // pred_fallthru
          _
        // Predicated region
        $region53: #{tpu_custom_call.1} parent=11 // pred_check
          %p486 = pneg %p310
        $region54: #{tpu_custom_call.1} parent=11 // pred_check_branch
          %488 = sbr.rel (%p486) target = $region56
        $region55: #{tpu_custom_call.1} parent=11 // pred_region
          _
        $region56: #{tpu_custom_call.1} parent=11 // pred_fallthru
          _
        // Predicated region
        $region57: #{tpu_custom_call.1} parent=11 // pred_check
          %p489 = pneg %p331
        $region58: #{tpu_custom_call.1} parent=11 // pred_check_branch
          %491 = sbr.rel (%p489) target = $region60
        $region59: #{tpu_custom_call.1} parent=11 // pred_region
          _
        $region60: #{tpu_custom_call.1} parent=11 // pred_fallthru
          _
        // Predicated region
        $region61: #{tpu_custom_call.1} parent=11 // pred_check
          %p492 = pneg %p352
        $region62: #{tpu_custom_call.1} parent=11 // pred_check_branch
          %494 = sbr.rel (%p492) target = $region64
        $region63: #{tpu_custom_call.1} parent=11 // pred_region
          _
        $region64: #{tpu_custom_call.1} parent=11 // pred_fallthru
          _
        // Predicated region
        $region65: #{tpu_custom_call.1} parent=11 // pred_check
          %p495 = pneg %p373
        $region66: #{tpu_custom_call.1} parent=11 // pred_check_branch
          %497 = sbr.rel (%p495) target = $region68
        $region67: #{tpu_custom_call.1} parent=11 // pred_region
          _
        $region68: #{tpu_custom_call.1} parent=11 // pred_fallthru
          _
        // Predicated region
        $region69: #{tpu_custom_call.1} parent=11 // pred_check
          %p498 = pneg %p394
        $region70: #{tpu_custom_call.1} parent=11 // pred_check_branch
          %500 = sbr.rel (%p498) target = $region72
        $region71: #{tpu_custom_call.1} parent=11 // pred_region
          _
        $region72: #{tpu_custom_call.1} parent=11 // pred_fallthru
          _
        // Predicated region
        $region73: #{tpu_custom_call.1} parent=11 // pred_check
          %p501 = pneg %p415
        $region74: #{tpu_custom_call.1} parent=11 // pred_check_branch
          %503 = sbr.rel (%p501) target = $region76
        $region75: #{tpu_custom_call.1} parent=11 // pred_region
          _
        $region76: #{tpu_custom_call.1} parent=11 // pred_fallthru
          _
      $region12: #{tpu_custom_call.1} parent=5 // pred_fallthru
        _
      %p504 = scmp.lt.s32.totalorder %s27, 2
      // Predicated region
      $region77: #{tpu_custom_call.1} parent=5 // pred_check
        %p505 = pneg %p504
      $region78: #{tpu_custom_call.1} parent=5 // pred_check_branch
        %507 = sbr.rel (%p505) target = $region80
      $region79: #{tpu_custom_call.1} parent=5 // pred_region
        // Predicated region
        $region81: #{tpu_custom_call.1} parent=79 // pred_check
          %p508 = pneg %p47
        $region82: #{tpu_custom_call.1} parent=79 // pred_check_branch
          %510 = sbr.rel (%p508) target = $region84
        $region83: #{tpu_custom_call.1} parent=79 // pred_region
          %s511 = smul.u32 8, %s27
          %p512 = scmp.lt.s32.totalorder %s511, 15
          %s513 = scalar_select %p512, %s511, 15
          %s514 = smul.addr %s513, 2
          %s515 = smul.addr %s514, 8
          %s516 = scalar_lea.vmem %s0, %s515
          %s517 = smul.u32 8, %s27
        $region84: #{tpu_custom_call.1} parent=79 // pred_fallthru
          _
        // Predicated region
        $region85: #{tpu_custom_call.1} parent=79 // pred_check
          %p518 = pneg %p73
        $region86: #{tpu_custom_call.1} parent=79 // pred_check_branch
          %520 = sbr.rel (%p518) target = $region88
        $region87: #{tpu_custom_call.1} parent=79 // pred_region
          %s521 = smul.u32 8, %s27
          %p522 = scmp.lt.s32.totalorder %s521, 15
          %s523 = scalar_select %p522, %s521, 15
          %s524 = smul.addr %s523, 2
          %s525 = smul.addr %s524, 8
          %s526 = scalar_lea.vmem %s1, %s525
          %s527 = smul.u32 8, %s27
        $region88: #{tpu_custom_call.1} parent=79 // pred_fallthru
          _
      $region80: #{tpu_custom_call.1} parent=5 // pred_fallthru
        _
      %p528 = scmp.le.s32.totalorder 1, %s27
      %p529 = scmp.lt.s32.totalorder %s27, 3
      %p530 = pnand %p528, %p529
      %p531 = pneg %p530
      // Predicated region
      $region89: #{tpu_custom_call.1} parent=5 // pred_check
        _
      $region90: #{tpu_custom_call.1} parent=5 // pred_check_branch
        %533 = sbr.rel (%p530) target = $region92
      $region91: #{tpu_custom_call.1} parent=5 // pred_region
        %s534 = ssub.s32 %s27, 1
        %s535 = smul.u32 8, %s32
        %p536 = scmp.lt.s32.totalorder %s535, 15
        %s537 = scalar_select %p536, %s535, 15
        %s538 = smul.addr %s537, 2
        %s539 = smul.addr %s538, 8
        %s540 = scalar_lea.vmem %s0, %s539
        %p541 = pneg %p53
        %p542 = pneg %p50
        %s543 = smul.u32 8, %s32
        %p544 = scmp.lt.s32.totalorder %s543, 15
        %s545 = scalar_select %p544, %s543, 15
        %s546 = smul.addr %s545, 2
        %s547 = smul.addr %s546, 8
        %s548 = scalar_lea.vmem %s1, %s547
        %p549 = pneg %p79
        %p550 = pneg %p76
        %p551 = pneg %p100
        %p552 = pneg %p97
        %p553 = pneg %p121
        %p554 = pneg %p118
        %p555 = pneg %p142
        %p556 = pneg %p139
        %p557 = pneg %p163
        %p558 = pneg %p160
        %p559 = pneg %p184
        %p560 = pneg %p181
        %p561 = pneg %p205
        %p562 = pneg %p202
        %p563 = pneg %p226
        %p564 = pneg %p223
        %p565 = pneg %p247
        %p566 = pneg %p244
        %p567 = pneg %p268
        %p568 = pneg %p265
        %p569 = pneg %p289
        %p570 = pneg %p286
        %p571 = pneg %p310
        %p572 = pneg %p307
        %p573 = pneg %p331
        %p574 = pneg %p328
        %p575 = pneg %p352
        %p576 = pneg %p349
        %p577 = pneg %p373
        %p578 = pneg %p370
        %p579 = pneg %p394
        %p580 = pneg %p391
        %p581 = pneg %p415
        %p582 = pneg %p412
        %p583 = pneg %p441
        %p584 = pneg %p438
        %s585 = sand.u32 %s428, 1
        %s586 = scalar_lea.sflag [#allocation3], %s585
        %s587 = sand.u32 %s428, 1
        %s588 = smul.addr %s587, 128
        %s589 = scalar_lea.vmem [#allocation2], %s588
        %s590 = smul.u32 8, %s32
        %p591 = scmp.lt.s32.totalorder %s590, 15
        %s592 = scalar_select %p591, %s590, 15
        %s593 = smul.addr %s592, 2
        %s594 = smul.addr %s593, 8
        %s595 = scalar_lea.vmem %s0, %s594
        %s596 = smul.u32 8, %s32
        %s597 = smul.u32 8, %s32
        %p598 = scmp.lt.s32.totalorder %s597, 15
        %s599 = scalar_select %p598, %s597, 15
        %s600 = smul.addr %s599, 2
        %s601 = smul.addr %s600, 8
        %s602 = scalar_lea.vmem %s1, %s601
        %s603 = smul.u32 8, %s32
        %s604 = smul.u32 8, %s32
        %v606 = vld [vmem:[%s595] sm:$0xff]
        %v607 = vld [vmem:[%s595 + $0x8] sm:$0xff]
        %v608 = vld [vmem:[%s595 + $0x10] sm:$0xff]
        %v609 = vld [vmem:[%s595 + $0x18] sm:$0xff]
        %v610 = vld [vmem:[%s595 + $0x20] sm:$0xff]
        %v611 = vld [vmem:[%s595 + $0x28] sm:$0xff]
        %v612 = vld [vmem:[%s595 + $0x30] sm:$0xff]
        %v613 = vld [vmem:[%s595 + $0x38] sm:$0xff]
        %v614 = vld [vmem:[%s595 + $0x40] sm:$0xff]
        %v615 = vld [vmem:[%s595 + $0x48] sm:$0xff]
        %v616 = vld [vmem:[%s595 + $0x50] sm:$0xff]
        %v617 = vld [vmem:[%s595 + $0x58] sm:$0xff]
        %v618 = vld [vmem:[%s595 + $0x60] sm:$0xff]
        %v619 = vld [vmem:[%s595 + $0x68] sm:$0xff]
        %v620 = vld [vmem:[%s595 + $0x70] sm:$0xff]
        %v621 = vld [vmem:[%s595 + $0x78] sm:$0xff]
        %v622 = vld [vmem:[%s602] sm:$0xff]
        %v623 = vld [vmem:[%s602 + $0x8] sm:$0xff]
        %v624 = vld [vmem:[%s602 + $0x10] sm:$0xff]
        %v625 = vld [vmem:[%s602 + $0x18] sm:$0xff]
        %v626 = vld [vmem:[%s602 + $0x20] sm:$0xff]
        %v627 = vld [vmem:[%s602 + $0x28] sm:$0xff]
        %v628 = vld [vmem:[%s602 + $0x30] sm:$0xff]
        %v629 = vld [vmem:[%s602 + $0x38] sm:$0xff]
        %v630 = vld [vmem:[%s602 + $0x40] sm:$0xff]
        %v631 = vld [vmem:[%s602 + $0x48] sm:$0xff]
        %v632 = vld [vmem:[%s602 + $0x50] sm:$0xff]
        %v633 = vld [vmem:[%s602 + $0x58] sm:$0xff]
        %v634 = vld [vmem:[%s602 + $0x60] sm:$0xff]
        %v635 = vld [vmem:[%s602 + $0x68] sm:$0xff]
        %v636 = vld [vmem:[%s602 + $0x70] sm:$0xff]
        %v637 = vld [vmem:[%s602 + $0x78] sm:$0xff]
        %v638 = vpack.c.bf16 %v607, %v606
        %v639 = vpack.c.bf16 %v609, %v608
        %v640 = vpack.c.bf16 %v611, %v610
        %v641 = vpack.c.bf16 %v613, %v612
        %v642 = vpack.c.bf16 %v615, %v614
        %v643 = vpack.c.bf16 %v617, %v616
        %v644 = vpack.c.bf16 %v619, %v618
        %v645 = vpack.c.bf16 %v621, %v620
        %v646 = vpack.c.bf16 %v623, %v622
        %v647 = vpack.c.bf16 %v625, %v624
        %v648 = vpack.c.bf16 %v627, %v626
        %v649 = vpack.c.bf16 %v629, %v628
        %v650 = vpack.c.bf16 %v631, %v630
        %v651 = vpack.c.bf16 %v633, %v632
        %v652 = vpack.c.bf16 %v635, %v634
        %v653 = vpack.c.bf16 %v637, %v636
        %v654 = vld [vmem:[%s2] sm:$0xf]
        %v655 = vld [vmem:[%s2 + $0x4] sm:$0xf]
        %v656 = vld [vmem:[%s2 + $0x8] sm:$0xf]
        %v657 = vld [vmem:[%s2 + $0xc] sm:$0xf]
        %v658 = vld [vmem:[%s2 + $0x10] sm:$0xf]
        %v659 = vld [vmem:[%s2 + $0x14] sm:$0xf]
        %v660 = vld [vmem:[%s2 + $0x18] sm:$0xf]
        %v661 = vld [vmem:[%s2 + $0x1c] sm:$0xf]
        %v662 = vld [vmem:[%s2 + $0x20] sm:$0xf]
        %v663 = vld [vmem:[%s2 + $0x24] sm:$0xf]
        %v664 = vld [vmem:[%s2 + $0x28] sm:$0xf]
        %v665 = vld [vmem:[%s2 + $0x2c] sm:$0xf]
        %v666 = vld [vmem:[%s2 + $0x30] sm:$0xf]
        %v667 = vld [vmem:[%s2 + $0x34] sm:$0xf]
        %v668 = vld [vmem:[%s2 + $0x38] sm:$0xf]
        %v669 = vld [vmem:[%s2 + $0x3c] sm:$0xf]
        %v670 = vld [vmem:[%s5] sm:$0x1]
        %v672 = vlaneseq
        %v673 = vshrl.u32 %v672, 7
        %v674 = vsub.s32 0, %v673
        %v675 = vrot.slane %v670, %v674
        %v693 = vunpack.c.l.b16 %v654
        %v694 = vunpack.c.l.b16 %v655
        %v695 = vunpack.c.l.b16 %v656
        %v696 = vunpack.c.l.b16 %v657
        %v697 = vunpack.c.l.b16 %v658
        %v698 = vunpack.c.l.b16 %v659
        %v699 = vunpack.c.l.b16 %v660
        %v700 = vunpack.c.l.b16 %v661
        %v701 = vunpack.c.l.b16 %v662
        %v702 = vunpack.c.l.b16 %v663
        %v703 = vunpack.c.l.b16 %v664
        %v704 = vunpack.c.l.b16 %v665
        %v705 = vunpack.c.l.b16 %v666
        %v706 = vunpack.c.l.b16 %v667
        %v707 = vunpack.c.l.b16 %v668
        %v708 = vunpack.c.l.b16 %v669
        %v709 = vpack.c.b16 %v694, %v693
        %v710 = vpack.c.b16 %v696, %v695
        %v711 = vpack.c.b16 %v698, %v697
        %v712 = vpack.c.b16 %v700, %v699
        %v713 = vpack.c.b16 %v702, %v701
        %v714 = vpack.c.b16 %v704, %v703
        %v715 = vpack.c.b16 %v706, %v705
        %v716 = vpack.c.b16 %v708, %v707
        %725 = vmatprep.subr.bf16.mxu0 0
        %726 = vmatpush1.bf16.msra.mxu0 %v709
        %727 = vmatprep.subr.bf16.mxu0 0
        %728 = vmatpush1.bf16.msra.mxu0 %v710
        %729 = vmatprep.subr.bf16.mxu0 0
        %730 = vmatpush1.bf16.msra.mxu0 %v711
        %731 = vmatprep.subr.bf16.mxu0 0
        %732 = vmatpush1.bf16.msra.mxu0 %v712
        %733 = vmatprep.subr.bf16.mxu0 0
        %734 = vmatpush1.bf16.msra.mxu0 %v713
        %735 = vmatprep.subr.bf16.mxu0 0
        %736 = vmatpush1.bf16.msra.mxu0 %v714
        %737 = vmatprep.subr.bf16.mxu0 0
        %738 = vmatpush1.bf16.msra.mxu0 %v715
        %739 = vmatprep.subr.bf16.mxu0 0
        %740 = vmatpush1.bf16.msra.mxu0 %v716
        %741 = vmatprep.subr.bf16.mxu0 0
        %742 = vmatpush1.bf16.msra.mxu0 0
        %743 = vmatprep.subr.bf16.mxu0 0
        %744 = vmatpush1.bf16.msra.mxu0 0
        %745 = vmatprep.subr.bf16.mxu0 0
        %746 = vmatpush1.bf16.msra.mxu0 0
        %747 = vmatprep.subr.bf16.mxu0 0
        %748 = vmatpush1.bf16.msra.mxu0 0
        %749 = vmatprep.subr.bf16.mxu0 0
        %750 = vmatpush1.bf16.msra.mxu0 0
        %751 = vmatprep.subr.bf16.mxu0 0
        %752 = vmatpush1.bf16.msra.mxu0 0
        %753 = vmatprep.subr.bf16.mxu0 0
        %754 = vmatpush1.bf16.msra.mxu0 0
        %755 = vmatprep.subr.bf16.mxu0 0
        %756 = vmatpush1.bf16.msra.mxu0 0
        %757 = vmatprep.mubr.bf16.mxu0 0
        %758 = vmatmul.mubr.bf16.gmra.mrb[0].mxu0 %v638
        %v759 = vpop.f32.mrb[0].mxu0
        %v760 = vadd.f32 %v675, %v759
        %v761 = vpop.f32.mrb[0].mxu0
        %v762 = vpop.f32.mrb[0].mxu0
        %v763 = vadd.f32 %v675, %v762
        %v764 = vpop.f32.mrb[0].mxu0
        %765 = vmatprep.mubr.bf16.mxu0 0
        %766 = vmatmul.mubr.bf16.gmra.mrb[0].mxu0 %v639
        %v767 = vpop.f32.mrb[0].mxu0
        %v768 = vadd.f32 %v675, %v767
        %v769 = vpop.f32.mrb[0].mxu0
        %v770 = vpop.f32.mrb[0].mxu0
        %v771 = vadd.f32 %v675, %v770
        %v772 = vpop.f32.mrb[0].mxu0
        %773 = vmatprep.mubr.bf16.mxu0 0
        %774 = vmatmul.mubr.bf16.gmra.mrb[0].mxu0 %v640
        %v775 = vpop.f32.mrb[0].mxu0
        %v776 = vadd.f32 %v675, %v775
        %v777 = vpop.f32.mrb[0].mxu0
        %v778 = vpop.f32.mrb[0].mxu0
        %v779 = vadd.f32 %v675, %v778
        %v780 = vpop.f32.mrb[0].mxu0
        %781 = vmatprep.mubr.bf16.mxu0 0
        %782 = vmatmul.mubr.bf16.gmra.mrb[0].mxu0 %v641
        %v783 = vpop.f32.mrb[0].mxu0
        %v784 = vadd.f32 %v675, %v783
        %v785 = vpop.f32.mrb[0].mxu0
        %v786 = vpop.f32.mrb[0].mxu0
        %v787 = vadd.f32 %v675, %v786
        %v788 = vpop.f32.mrb[0].mxu0
        %789 = vmatprep.mubr.bf16.mxu0 0
        %790 = vmatmul.mubr.bf16.gmra.mrb[0].mxu0 %v642
        %v791 = vpop.f32.mrb[0].mxu0
        %v792 = vadd.f32 %v675, %v791
        %v793 = vpop.f32.mrb[0].mxu0
        %v794 = vpop.f32.mrb[0].mxu0
        %v795 = vadd.f32 %v675, %v794
        %v796 = vpop.f32.mrb[0].mxu0
        %797 = vmatprep.mubr.bf16.mxu0 0
        %798 = vmatmul.mubr.bf16.gmra.mrb[0].mxu0 %v643
        %v799 = vpop.f32.mrb[0].mxu0
        %v800 = vadd.f32 %v675, %v799
        %v801 = vpop.f32.mrb[0].mxu0
        %v802 = vpop.f32.mrb[0].mxu0
        %v803 = vadd.f32 %v675, %v802
        %v804 = vpop.f32.mrb[0].mxu0
        %805 = vmatprep.mubr.bf16.mxu0 0
        %806 = vmatmul.mubr.bf16.gmra.mrb[0].mxu0 %v644
        %v807 = vpop.f32.mrb[0].mxu0
        %v808 = vadd.f32 %v675, %v807
        %v809 = vpop.f32.mrb[0].mxu0
        %v810 = vpop.f32.mrb[0].mxu0
        %v811 = vadd.f32 %v675, %v810
        %v812 = vpop.f32.mrb[0].mxu0
        %813 = vmatprep.mubr.bf16.mxu0 0
        %814 = vmatmul.mubr.bf16.gmra.mrb[0].mxu0 %v645
        %v815 = vpop.f32.mrb[0].mxu0
        %v816 = vadd.f32 %v675, %v815
        %v817 = vpop.f32.mrb[0].mxu0
        %v818 = vpop.f32.mrb[0].mxu0
        %v819 = vadd.f32 %v675, %v818
        %v820 = vpop.f32.mrb[0].mxu0
        %821 = vdwg.mxu0
        %v822 = vld [vmem:[%s3] sm:$0xf]
        %v823 = vld [vmem:[%s3 + $0x4] sm:$0xf]
        %v824 = vld [vmem:[%s3 + $0x8] sm:$0xf]
        %v825 = vld [vmem:[%s3 + $0xc] sm:$0xf]
        %v826 = vld [vmem:[%s3 + $0x10] sm:$0xf]
        %v827 = vld [vmem:[%s3 + $0x14] sm:$0xf]
        %v828 = vld [vmem:[%s3 + $0x18] sm:$0xf]
        %v829 = vld [vmem:[%s3 + $0x1c] sm:$0xf]
        %v830 = vld [vmem:[%s3 + $0x20] sm:$0xf]
        %v831 = vld [vmem:[%s3 + $0x24] sm:$0xf]
        %v832 = vld [vmem:[%s3 + $0x28] sm:$0xf]
        %v833 = vld [vmem:[%s3 + $0x2c] sm:$0xf]
        %v834 = vld [vmem:[%s3 + $0x30] sm:$0xf]
        %v835 = vld [vmem:[%s3 + $0x34] sm:$0xf]
        %v836 = vld [vmem:[%s3 + $0x38] sm:$0xf]
        %v837 = vld [vmem:[%s3 + $0x3c] sm:$0xf]
        %v838 = vld [vmem:[%s6] sm:$0x1]
        %v840 = vlaneseq
        %v841 = vshrl.u32 %v840, 7
        %v842 = vsub.s32 0, %v841
        %v843 = vrot.slane %v838, %v842
        %v861 = vunpack.c.l.b16 %v822
        %v862 = vunpack.c.l.b16 %v823
        %v863 = vunpack.c.l.b16 %v824
        %v864 = vunpack.c.l.b16 %v825
        %v865 = vunpack.c.l.b16 %v826
        %v866 = vunpack.c.l.b16 %v827
        %v867 = vunpack.c.l.b16 %v828
        %v868 = vunpack.c.l.b16 %v829
        %v869 = vunpack.c.l.b16 %v830
        %v870 = vunpack.c.l.b16 %v831
        %v871 = vunpack.c.l.b16 %v832
        %v872 = vunpack.c.l.b16 %v833
        %v873 = vunpack.c.l.b16 %v834
        %v874 = vunpack.c.l.b16 %v835
        %v875 = vunpack.c.l.b16 %v836
        %v876 = vunpack.c.l.b16 %v837
        %v877 = vpack.c.b16 %v862, %v861
        %v878 = vpack.c.b16 %v864, %v863
        %v879 = vpack.c.b16 %v866, %v865
        %v880 = vpack.c.b16 %v868, %v867
        %v881 = vpack.c.b16 %v870, %v869
        %v882 = vpack.c.b16 %v872, %v871
        %v883 = vpack.c.b16 %v874, %v873
        %v884 = vpack.c.b16 %v876, %v875
        %893 = vmatprep.subr.bf16.mxu0 0
        %894 = vmatpush1.bf16.msra.mxu0 %v877
        %895 = vmatprep.subr.bf16.mxu0 0
        %896 = vmatpush1.bf16.msra.mxu0 %v878
        %897 = vmatprep.subr.bf16.mxu0 0
        %898 = vmatpush1.bf16.msra.mxu0 %v879
        %899 = vmatprep.subr.bf16.mxu0 0
        %900 = vmatpush1.bf16.msra.mxu0 %v880
        %901 = vmatprep.subr.bf16.mxu0 0
        %902 = vmatpush1.bf16.msra.mxu0 %v881
        %903 = vmatprep.subr.bf16.mxu0 0
        %904 = vmatpush1.bf16.msra.mxu0 %v882
        %905 = vmatprep.subr.bf16.mxu0 0
        %906 = vmatpush1.bf16.msra.mxu0 %v883
        %907 = vmatprep.subr.bf16.mxu0 0
        %908 = vmatpush1.bf16.msra.mxu0 %v884
        %909 = vmatprep.subr.bf16.mxu0 0
        %910 = vmatpush1.bf16.msra.mxu0 0
        %911 = vmatprep.subr.bf16.mxu0 0
        %912 = vmatpush1.bf16.msra.mxu0 0
        %913 = vmatprep.subr.bf16.mxu0 0
        %914 = vmatpush1.bf16.msra.mxu0 0
        %915 = vmatprep.subr.bf16.mxu0 0
        %916 = vmatpush1.bf16.msra.mxu0 0
        %917 = vmatprep.subr.bf16.mxu0 0
        %918 = vmatpush1.bf16.msra.mxu0 0
        %919 = vmatprep.subr.bf16.mxu0 0
        %920 = vmatpush1.bf16.msra.mxu0 0
        %921 = vmatprep.subr.bf16.mxu0 0
        %922 = vmatpush1.bf16.msra.mxu0 0
        %923 = vmatprep.subr.bf16.mxu0 0
        %924 = vmatpush1.bf16.msra.mxu0 0
        %925 = vmatprep.mubr.bf16.mxu0 0
        %926 = vmatmul.mubr.bf16.gmra.mrb[0].mxu0 %v646
        %v927 = vpop.f32.mrb[0].mxu0
        %v928 = vadd.f32 %v843, %v927
        %v929 = vpop.f32.mrb[0].mxu0
        %v930 = vpop.f32.mrb[0].mxu0
        %v931 = vadd.f32 %v843, %v930
        %v932 = vpop.f32.mrb[0].mxu0
        %933 = vmatprep.mubr.bf16.mxu0 0
        %934 = vmatmul.mubr.bf16.gmra.mrb[0].mxu0 %v647
        %v935 = vpop.f32.mrb[0].mxu0
        %v936 = vadd.f32 %v843, %v935
        %v937 = vpop.f32.mrb[0].mxu0
        %v938 = vpop.f32.mrb[0].mxu0
        %v939 = vadd.f32 %v843, %v938
        %v940 = vpop.f32.mrb[0].mxu0
        %941 = vmatprep.mubr.bf16.mxu0 0
        %942 = vmatmul.mubr.bf16.gmra.mrb[0].mxu0 %v648
        %v943 = vpop.f32.mrb[0].mxu0
        %v944 = vadd.f32 %v843, %v943
        %v945 = vpop.f32.mrb[0].mxu0
        %v946 = vpop.f32.mrb[0].mxu0
        %v947 = vadd.f32 %v843, %v946
        %v948 = vpop.f32.mrb[0].mxu0
        %949 = vmatprep.mubr.bf16.mxu0 0
        %950 = vmatmul.mubr.bf16.gmra.mrb[0].mxu0 %v649
        %v951 = vpop.f32.mrb[0].mxu0
        %v952 = vadd.f32 %v843, %v951
        %v953 = vpop.f32.mrb[0].mxu0
        %v954 = vpop.f32.mrb[0].mxu0
        %v955 = vadd.f32 %v843, %v954
        %v956 = vpop.f32.mrb[0].mxu0
        %957 = vmatprep.mubr.bf16.mxu0 0
        %958 = vmatmul.mubr.bf16.gmra.mrb[0].mxu0 %v650
        %v959 = vpop.f32.mrb[0].mxu0
        %v960 = vadd.f32 %v843, %v959
        %v961 = vpop.f32.mrb[0].mxu0
        %v962 = vpop.f32.mrb[0].mxu0
        %v963 = vadd.f32 %v843, %v962
        %v964 = vpop.f32.mrb[0].mxu0
        %965 = vmatprep.mubr.bf16.mxu0 0
        %966 = vmatmul.mubr.bf16.gmra.mrb[0].mxu0 %v651
        %v967 = vpop.f32.mrb[0].mxu0
        %v968 = vadd.f32 %v843, %v967
        %v969 = vpop.f32.mrb[0].mxu0
        %v970 = vpop.f32.mrb[0].mxu0
        %v971 = vadd.f32 %v843, %v970
        %v972 = vpop.f32.mrb[0].mxu0
        %973 = vmatprep.mubr.bf16.mxu0 0
        %974 = vmatmul.mubr.bf16.gmra.mrb[0].mxu0 %v652
        %v975 = vpop.f32.mrb[0].mxu0
        %v976 = vadd.f32 %v843, %v975
        %v977 = vpop.f32.mrb[0].mxu0
        %v978 = vpop.f32.mrb[0].mxu0
        %v979 = vadd.f32 %v843, %v978
        %v980 = vpop.f32.mrb[0].mxu0
        %981 = vmatprep.mubr.bf16.mxu0 0
        %982 = vmatmul.mubr.bf16.gmra.mrb[0].mxu0 %v653
        %v983 = vpop.f32.mrb[0].mxu0
        %v984 = vadd.f32 %v843, %v983
        %v985 = vpop.f32.mrb[0].mxu0
        %v986 = vpop.f32.mrb[0].mxu0
        %v987 = vadd.f32 %v843, %v986
        %v988 = vpop.f32.mrb[0].mxu0
        %989 = vdwg.mxu0
        %v990 = vld [vmem:[%s4] sm:$0xf]
        %v991 = vld [vmem:[%s4 + $0x4] sm:$0xf]
        %v992 = vld [vmem:[%s4 + $0x8] sm:$0xf]
        %v993 = vld [vmem:[%s4 + $0xc] sm:$0xf]
        %v994 = vld [vmem:[%s4 + $0x10] sm:$0xf]
        %v995 = vld [vmem:[%s4 + $0x14] sm:$0xf]
        %v996 = vld [vmem:[%s4 + $0x18] sm:$0xf]
        %v997 = vld [vmem:[%s4 + $0x1c] sm:$0xf]
        %v998 = vld [vmem:[%s4 + $0x20] sm:$0xf]
        %v999 = vld [vmem:[%s4 + $0x24] sm:$0xf]
        %v1000 = vld [vmem:[%s4 + $0x28] sm:$0xf]
        %v1001 = vld [vmem:[%s4 + $0x2c] sm:$0xf]
        %v1002 = vld [vmem:[%s4 + $0x30] sm:$0xf]
        %v1003 = vld [vmem:[%s4 + $0x34] sm:$0xf]
        %v1004 = vld [vmem:[%s4 + $0x38] sm:$0xf]
        %v1005 = vld [vmem:[%s4 + $0x3c] sm:$0xf]
        %v1006 = vld [vmem:[%s7] sm:$0x1]
        %v1008 = vlaneseq
        %v1009 = vshrl.u32 %v1008, 7
        %v1010 = vsub.s32 0, %v1009
        %v1011 = vrot.slane %v1006, %v1010
        %v1029 = vunpack.c.l.b16 %v990
        %v1030 = vunpack.c.l.b16 %v991
        %v1031 = vunpack.c.l.b16 %v992
        %v1032 = vunpack.c.l.b16 %v993
        %v1033 = vunpack.c.l.b16 %v994
        %v1034 = vunpack.c.l.b16 %v995
        %v1035 = vunpack.c.l.b16 %v996
        %v1036 = vunpack.c.l.b16 %v997
        %v1037 = vunpack.c.l.b16 %v998
        %v1038 = vunpack.c.l.b16 %v999
        %v1039 = vunpack.c.l.b16 %v1000
        %v1040 = vunpack.c.l.b16 %v1001
        %v1041 = vunpack.c.l.b16 %v1002
        %v1042 = vunpack.c.l.b16 %v1003
        %v1043 = vunpack.c.l.b16 %v1004
        %v1044 = vunpack.c.l.b16 %v1005
        %v1045 = vpack.c.b16 %v1030, %v1029
        %v1046 = vpack.c.b16 %v1032, %v1031
        %v1047 = vpack.c.b16 %v1034, %v1033
        %v1048 = vpack.c.b16 %v1036, %v1035
        %v1049 = vpack.c.b16 %v1038, %v1037
        %v1050 = vpack.c.b16 %v1040, %v1039
        %v1051 = vpack.c.b16 %v1042, %v1041
        %v1052 = vpack.c.b16 %v1044, %v1043
        %1061 = vmatprep.subr.bf16.mxu0 0
        %1062 = vmatpush1.bf16.msra.mxu0 %v1045
        %1063 = vmatprep.subr.bf16.mxu0 0
        %1064 = vmatpush1.bf16.msra.mxu0 %v1046
        %1065 = vmatprep.subr.bf16.mxu0 0
        %1066 = vmatpush1.bf16.msra.mxu0 %v1047
        %1067 = vmatprep.subr.bf16.mxu0 0
        %1068 = vmatpush1.bf16.msra.mxu0 %v1048
        %1069 = vmatprep.subr.bf16.mxu0 0
        %1070 = vmatpush1.bf16.msra.mxu0 %v1049
        %1071 = vmatprep.subr.bf16.mxu0 0
        %1072 = vmatpush1.bf16.msra.mxu0 %v1050
        %1073 = vmatprep.subr.bf16.mxu0 0
        %1074 = vmatpush1.bf16.msra.mxu0 %v1051
        %1075 = vmatprep.subr.bf16.mxu0 0
        %1076 = vmatpush1.bf16.msra.mxu0 %v1052
        %1077 = vmatprep.subr.bf16.mxu0 0
        %1078 = vmatpush1.bf16.msra.mxu0 0
        %1079 = vmatprep.subr.bf16.mxu0 0
        %1080 = vmatpush1.bf16.msra.mxu0 0
        %1081 = vmatprep.subr.bf16.mxu0 0
        %1082 = vmatpush1.bf16.msra.mxu0 0
        %1083 = vmatprep.subr.bf16.mxu0 0
        %1084 = vmatpush1.bf16.msra.mxu0 0
        %1085 = vmatprep.subr.bf16.mxu0 0
        %1086 = vmatpush1.bf16.msra.mxu0 0
        %1087 = vmatprep.subr.bf16.mxu0 0
        %1088 = vmatpush1.bf16.msra.mxu0 0
        %1089 = vmatprep.subr.bf16.mxu0 0
        %1090 = vmatpush1.bf16.msra.mxu0 0
        %1091 = vmatprep.subr.bf16.mxu0 0
        %1092 = vmatpush1.bf16.msra.mxu0 0
        %1093 = vmatprep.mubr.bf16.mxu0 0
        %1094 = vmatmul.mubr.bf16.gmra.mrb[0].mxu0 %v646
        %v1095 = vpop.f32.mrb[0].mxu0
        %v1096 = vadd.f32 %v1011, %v1095
        %v1097 = vpop.f32.mrb[0].mxu0
        %v1098 = vpop.f32.mrb[0].mxu0
        %v1099 = vadd.f32 %v1011, %v1098
        %v1100 = vpop.f32.mrb[0].mxu0
        %1101 = vmatprep.mubr.bf16.mxu0 0
        %1102 = vmatmul.mubr.bf16.gmra.mrb[0].mxu0 %v647
        %v1103 = vpop.f32.mrb[0].mxu0
        %v1104 = vadd.f32 %v1011, %v1103
        %v1105 = vpop.f32.mrb[0].mxu0
        %v1106 = vpop.f32.mrb[0].mxu0
        %v1107 = vadd.f32 %v1011, %v1106
        %v1108 = vpop.f32.mrb[0].mxu0
        %1109 = vmatprep.mubr.bf16.mxu0 0
        %1110 = vmatmul.mubr.bf16.gmra.mrb[0].mxu0 %v648
        %v1111 = vpop.f32.mrb[0].mxu0
        %v1112 = vadd.f32 %v1011, %v1111
        %v1113 = vpop.f32.mrb[0].mxu0
        %v1114 = vpop.f32.mrb[0].mxu0
        %v1115 = vadd.f32 %v1011, %v1114
        %v1116 = vpop.f32.mrb[0].mxu0
        %1117 = vmatprep.mubr.bf16.mxu0 0
        %1118 = vmatmul.mubr.bf16.gmra.mrb[0].mxu0 %v649
        %v1119 = vpop.f32.mrb[0].mxu0
        %v1120 = vadd.f32 %v1011, %v1119
        %v1121 = vpop.f32.mrb[0].mxu0
        %v1122 = vpop.f32.mrb[0].mxu0
        %v1123 = vadd.f32 %v1011, %v1122
        %v1124 = vpop.f32.mrb[0].mxu0
        %1125 = vmatprep.mubr.bf16.mxu0 0
        %1126 = vmatmul.mubr.bf16.gmra.mrb[0].mxu0 %v650
        %v1127 = vpop.f32.mrb[0].mxu0
        %v1128 = vadd.f32 %v1011, %v1127
        %v1129 = vpop.f32.mrb[0].mxu0
        %v1130 = vpop.f32.mrb[0].mxu0
        %v1131 = vadd.f32 %v1011, %v1130
        %v1132 = vpop.f32.mrb[0].mxu0
        %1133 = vmatprep.mubr.bf16.mxu0 0
        %1134 = vmatmul.mubr.bf16.gmra.mrb[0].mxu0 %v651
        %v1135 = vpop.f32.mrb[0].mxu0
        %v1136 = vadd.f32 %v1011, %v1135
        %v1137 = vpop.f32.mrb[0].mxu0
        %v1138 = vpop.f32.mrb[0].mxu0
        %v1139 = vadd.f32 %v1011, %v1138
        %v1140 = vpop.f32.mrb[0].mxu0
        %1141 = vmatprep.mubr.bf16.mxu0 0
        %1142 = vmatmul.mubr.bf16.gmra.mrb[0].mxu0 %v652
        %v1143 = vpop.f32.mrb[0].mxu0
        %v1144 = vadd.f32 %v1011, %v1143
        %v1145 = vpop.f32.mrb[0].mxu0
        %v1146 = vpop.f32.mrb[0].mxu0
        %v1147 = vadd.f32 %v1011, %v1146
        %v1148 = vpop.f32.mrb[0].mxu0
        %1149 = vmatprep.mubr.bf16.mxu0 0
        %1150 = vmatmul.mubr.bf16.gmra.mrb[0].mxu0 %v653
        %v1151 = vpop.f32.mrb[0].mxu0
        %v1152 = vadd.f32 %v1011, %v1151
        %v1153 = vpop.f32.mrb[0].mxu0
        %v1154 = vpop.f32.mrb[0].mxu0
        %v1155 = vadd.f32 %v1011, %v1154
        %v1156 = vpop.f32.mrb[0].mxu0
        %1157 = vdwg.mxu0
        %v1158 = vpack.c.bf16 %v763, %v760
        %v1159 = vpack.c.bf16 %v771, %v768
        %v1160 = vpack.c.bf16 %v779, %v776
        %v1161 = vpack.c.bf16 %v787, %v784
        %v1162 = vpack.c.bf16 %v795, %v792
        %v1163 = vpack.c.bf16 %v803, %v800
        %v1164 = vpack.c.bf16 %v811, %v808
        %v1165 = vpack.c.bf16 %v819, %v816
        %v1166 = vpack.c.bf16 %v931, %v928
        %v1167 = vpack.c.bf16 %v939, %v936
        %v1168 = vpack.c.bf16 %v947, %v944
        %v1169 = vpack.c.bf16 %v955, %v952
        %v1170 = vpack.c.bf16 %v963, %v960
        %v1171 = vpack.c.bf16 %v971, %v968
        %v1172 = vpack.c.bf16 %v979, %v976
        %v1173 = vpack.c.bf16 %v987, %v984
        %v1174 = vpack.c.bf16 %v1099, %v1096
        %v1175 = vpack.c.bf16 %v1107, %v1104
        %v1176 = vpack.c.bf16 %v1115, %v1112
        %v1177 = vpack.c.bf16 %v1123, %v1120
        %v1178 = vpack.c.bf16 %v1131, %v1128
        %v1179 = vpack.c.bf16 %v1139, %v1136
        %v1180 = vpack.c.bf16 %v1147, %v1144
        %v1181 = vpack.c.bf16 %v1155, %v1152
        %vm1182 = vcmask 261120
        %v1184 = vsel %vm1182, %v1158, 0
        %v1187 = vsel %vm1182, %v1166, 0
        %1189 = vmatprep.subr.bf16.mxu0 0
        %1190 = vmatpush1.bf16.xpose.msra.mxu0 %v1187
        %1191 = vmatprep.subr.bf16.mxu0 0
        %1192 = vmatpush1.bf16.xpose.msra.mxu0 0
        %1193 = vmatprep.subr.bf16.mxu0 0
        %1194 = vmatpush1.bf16.xpose.msra.mxu0 0
        %1195 = vmatprep.subr.bf16.mxu0 0
        %1196 = vmatpush1.bf16.xpose.msra.mxu0 0
        %1197 = vmatprep.subr.bf16.mxu0 0
        %1198 = vmatpush1.bf16.xpose.msra.mxu0 0
        %1199 = vmatprep.subr.bf16.mxu0 0
        %1200 = vmatpush1.bf16.xpose.msra.mxu0 0
        %1201 = vmatprep.subr.bf16.mxu0 0
        %1202 = vmatpush1.bf16.xpose.msra.mxu0 0
        %1203 = vmatprep.subr.bf16.mxu0 0
        %1204 = vmatpush1.bf16.xpose.msra.mxu0 0
        %1205 = vmatprep.subr.bf16.mxu0 0
        %1206 = vmatpush1.bf16.xpose.msra.mxu0 0
        %1207 = vmatprep.subr.bf16.mxu0 0
        %1208 = vmatpush1.bf16.xpose.msra.mxu0 0
        %1209 = vmatprep.subr.bf16.mxu0 0
        %1210 = vmatpush1.bf16.xpose.msra.mxu0 0
        %1211 = vmatprep.subr.bf16.mxu0 0
        %1212 = vmatpush1.bf16.xpose.msra.mxu0 0
        %1213 = vmatprep.subr.bf16.mxu0 0
        %1214 = vmatpush1.bf16.xpose.msra.mxu0 0
        %1215 = vmatprep.subr.bf16.mxu0 0
        %1216 = vmatpush1.bf16.xpose.msra.mxu0 0
        %1217 = vmatprep.subr.bf16.mxu0 0
        %1218 = vmatpush1.bf16.xpose.msra.mxu0 0
        %1219 = vmatprep.subr.bf16.mxu0 0
        %1220 = vmatpush1.bf16.xpose.msra.mxu0 0
        %1221 = vmatprep.mubr.bf16.mxu0 0
        %1222 = vmatmul.mubr.bf16.gmra.mrb[0].mxu0 %v1184
        %v1223 = vpop.f32.mrb[0].mxu0
        %v1224 = vadd.f32 0.0, %v1223
        %v1225 = vpop.f32.mrb[0].mxu0
        %v1226 = vpop.f32.mrb[0].mxu0
        %v1227 = vadd.f32 0.0, %v1226
        %v1228 = vpop.f32.mrb[0].mxu0
        %1229 = vdwg.mxu0
        %v1231 = vsel %vm1182, %v1159, 0
        %v1234 = vsel %vm1182, %v1167, 0
        %1236 = vmatprep.subr.bf16.mxu0 0
        %1237 = vmatpush1.bf16.xpose.msra.mxu0 %v1234
        %1238 = vmatprep.subr.bf16.mxu0 0
        %1239 = vmatpush1.bf16.xpose.msra.mxu0 0
        %1240 = vmatprep.subr.bf16.mxu0 0
        %1241 = vmatpush1.bf16.xpose.msra.mxu0 0
        %1242 = vmatprep.subr.bf16.mxu0 0
        %1243 = vmatpush1.bf16.xpose.msra.mxu0 0
        %1244 = vmatprep.subr.bf16.mxu0 0
        %1245 = vmatpush1.bf16.xpose.msra.mxu0 0
        %1246 = vmatprep.subr.bf16.mxu0 0
        %1247 = vmatpush1.bf16.xpose.msra.mxu0 0
        %1248 = vmatprep.subr.bf16.mxu0 0
        %1249 = vmatpush1.bf16.xpose.msra.mxu0 0
        %1250 = vmatprep.subr.bf16.mxu0 0
        %1251 = vmatpush1.bf16.xpose.msra.mxu0 0
        %1252 = vmatprep.subr.bf16.mxu0 0
        %1253 = vmatpush1.bf16.xpose.msra.mxu0 0
        %1254 = vmatprep.subr.bf16.mxu0 0
        %1255 = vmatpush1.bf16.xpose.msra.mxu0 0
        %1256 = vmatprep.subr.bf16.mxu0 0
        %1257 = vmatpush1.bf16.xpose.msra.mxu0 0
        %1258 = vmatprep.subr.bf16.mxu0 0
        %1259 = vmatpush1.bf16.xpose.msra.mxu0 0
        %1260 = vmatprep.subr.bf16.mxu0 0
        %1261 = vmatpush1.bf16.xpose.msra.mxu0 0
        %1262 = vmatprep.subr.bf16.mxu0 0
        %1263 = vmatpush1.bf16.xpose.msra.mxu0 0
        %1264 = vmatprep.subr.bf16.mxu0 0
        %1265 = vmatpush1.bf16.xpose.msra.mxu0 0
        %1266 = vmatprep.subr.bf16.mxu0 0
        %1267 = vmatpush1.bf16.xpose.msra.mxu0 0
        %1268 = vmatprep.mubr.bf16.mxu0 0
        %1269 = vmatmul.mubr.bf16.gmra.mrb[0].mxu0 %v1231
        %v1270 = vpop.f32.mrb[0].mxu0
        %v1271 = vadd.f32 0.0, %v1270
        %v1272 = vpop.f32.mrb[0].mxu0
        %v1273 = vpop.f32.mrb[0].mxu0
        %v1274 = vadd.f32 0.0, %v1273
        %v1275 = vpop.f32.mrb[0].mxu0
        %1276 = vdwg.mxu0
        %v1278 = vsel %vm1182, %v1160, 0
        %v1281 = vsel %vm1182, %v1168, 0
        %1283 = vmatprep.subr.bf16.mxu0 0
        %1284 = vmatpush1.bf16.xpose.msra.mxu0 %v1281
        %1285 = vmatprep.subr.bf16.mxu0 0
        %1286 = vmatpush1.bf16.xpose.msra.mxu0 0
        %1287 = vmatprep.subr.bf16.mxu0 0
        %1288 = vmatpush1.bf16.xpose.msra.mxu0 0
        %1289 = vmatprep.subr.bf16.mxu0 0
        %1290 = vmatpush1.bf16.xpose.msra.mxu0 0
        %1291 = vmatprep.subr.bf16.mxu0 0
        %1292 = vmatpush1.bf16.xpose.msra.mxu0 0
        %1293 = vmatprep.subr.bf16.mxu0 0
        %1294 = vmatpush1.bf16.xpose.msra.mxu0 0
        %1295 = vmatprep.subr.bf16.mxu0 0
        %1296 = vmatpush1.bf16.xpose.msra.mxu0 0
        %1297 = vmatprep.subr.bf16.mxu0 0
        %1298 = vmatpush1.bf16.xpose.msra.mxu0 0
        %1299 = vmatprep.subr.bf16.mxu0 0
        %1300 = vmatpush1.bf16.xpose.msra.mxu0 0
        %1301 = vmatprep.subr.bf16.mxu0 0
        %1302 = vmatpush1.bf16.xpose.msra.mxu0 0
        %1303 = vmatprep.subr.bf16.mxu0 0
        %1304 = vmatpush1.bf16.xpose.msra.mxu0 0
        %1305 = vmatprep.subr.bf16.mxu0 0
        %1306 = vmatpush1.bf16.xpose.msra.mxu0 0
        %1307 = vmatprep.subr.bf16.mxu0 0
        %1308 = vmatpush1.bf16.xpose.msra.mxu0 0
        %1309 = vmatprep.subr.bf16.mxu0 0
        %1310 = vmatpush1.bf16.xpose.msra.mxu0 0
        %1311 = vmatprep.subr.bf16.mxu0 0
        %1312 = vmatpush1.bf16.xpose.msra.mxu0 0
        %1313 = vmatprep.subr.bf16.mxu0 0
        %1314 = vmatpush1.bf16.xpose.msra.mxu0 0
        %1315 = vmatprep.mubr.bf16.mxu0 0
        %1316 = vmatmul.mubr.bf16.gmra.mrb[0].mxu0 %v1278
        %v1317 = vpop.f32.mrb[0].mxu0
        %v1318 = vadd.f32 0.0, %v1317
        %v1319 = vpop.f32.mrb[0].mxu0
        %v1320 = vpop.f32.mrb[0].mxu0
        %v1321 = vadd.f32 0.0, %v1320
        %v1322 = vpop.f32.mrb[0].mxu0
        %1323 = vdwg.mxu0
        %v1325 = vsel %vm1182, %v1161, 0
        %v1328 = vsel %vm1182, %v1169, 0
        %1330 = vmatprep.subr.bf16.mxu0 0
        %1331 = vmatpush1.bf16.xpose.msra.mxu0 %v1328
        %1332 = vmatprep.subr.bf16.mxu0 0
        %1333 = vmatpush1.bf16.xpose.msra.mxu0 0
        %1334 = vmatprep.subr.bf16.mxu0 0
        %1335 = vmatpush1.bf16.xpose.msra.mxu0 0
        %1336 = vmatprep.subr.bf16.mxu0 0
        %1337 = vmatpush1.bf16.xpose.msra.mxu0 0
        %1338 = vmatprep.subr.bf16.mxu0 0
        %1339 = vmatpush1.bf16.xpose.msra.mxu0 0
        %1340 = vmatprep.subr.bf16.mxu0 0
        %1341 = vmatpush1.bf16.xpose.msra.mxu0 0
        %1342 = vmatprep.subr.bf16.mxu0 0
        %1343 = vmatpush1.bf16.xpose.msra.mxu0 0
        %1344 = vmatprep.subr.bf16.mxu0 0
        %1345 = vmatpush1.bf16.xpose.msra.mxu0 0
        %1346 = vmatprep.subr.bf16.mxu0 0
        %1347 = vmatpush1.bf16.xpose.msra.mxu0 0
        %1348 = vmatprep.subr.bf16.mxu0 0
        %1349 = vmatpush1.bf16.xpose.msra.mxu0 0
        %1350 = vmatprep.subr.bf16.mxu0 0
        %1351 = vmatpush1.bf16.xpose.msra.mxu0 0
        %1352 = vmatprep.subr.bf16.mxu0 0
        %1353 = vmatpush1.bf16.xpose.msra.mxu0 0
        %1354 = vmatprep.subr.bf16.mxu0 0
        %1355 = vmatpush1.bf16.xpose.msra.mxu0 0
        %1356 = vmatprep.subr.bf16.mxu0 0
        %1357 = vmatpush1.bf16.xpose.msra.mxu0 0
        %1358 = vmatprep.subr.bf16.mxu0 0
        %1359 = vmatpush1.bf16.xpose.msra.mxu0 0
        %1360 = vmatprep.subr.bf16.mxu0 0
        %1361 = vmatpush1.bf16.xpose.msra.mxu0 0
        %1362 = vmatprep.mubr.bf16.mxu0 0
        %1363 = vmatmul.mubr.bf16.gmra.mrb[0].mxu0 %v1325
        %v1364 = vpop.f32.mrb[0].mxu0
        %v1365 = vadd.f32 0.0, %v1364
        %v1366 = vpop.f32.mrb[0].mxu0
        %v1367 = vpop.f32.mrb[0].mxu0
        %v1368 = vadd.f32 0.0, %v1367
        %v1369 = vpop.f32.mrb[0].mxu0
        %1370 = vdwg.mxu0
        %v1372 = vsel %vm1182, %v1162, 0
        %v1375 = vsel %vm1182, %v1170, 0
        %1377 = vmatprep.subr.bf16.mxu0 0
        %1378 = vmatpush1.bf16.xpose.msra.mxu0 %v1375
        %1379 = vmatprep.subr.bf16.mxu0 0
        %1380 = vmatpush1.bf16.xpose.msra.mxu0 0
        %1381 = vmatprep.subr.bf16.mxu0 0
        %1382 = vmatpush1.bf16.xpose.msra.mxu0 0
        %1383 = vmatprep.subr.bf16.mxu0 0
        %1384 = vmatpush1.bf16.xpose.msra.mxu0 0
        %1385 = vmatprep.subr.bf16.mxu0 0
        %1386 = vmatpush1.bf16.xpose.msra.mxu0 0
        %1387 = vmatprep.subr.bf16.mxu0 0
        %1388 = vmatpush1.bf16.xpose.msra.mxu0 0
        %1389 = vmatprep.subr.bf16.mxu0 0
        %1390 = vmatpush1.bf16.xpose.msra.mxu0 0
        %1391 = vmatprep.subr.bf16.mxu0 0
        %1392 = vmatpush1.bf16.xpose.msra.mxu0 0
        %1393 = vmatprep.subr.bf16.mxu0 0
        %1394 = vmatpush1.bf16.xpose.msra.mxu0 0
        %1395 = vmatprep.subr.bf16.mxu0 0
        %1396 = vmatpush1.bf16.xpose.msra.mxu0 0
        %1397 = vmatprep.subr.bf16.mxu0 0
        %1398 = vmatpush1.bf16.xpose.msra.mxu0 0
        %1399 = vmatprep.subr.bf16.mxu0 0
        %1400 = vmatpush1.bf16.xpose.msra.mxu0 0
        %1401 = vmatprep.subr.bf16.mxu0 0
        %1402 = vmatpush1.bf16.xpose.msra.mxu0 0
        %1403 = vmatprep.subr.bf16.mxu0 0
        %1404 = vmatpush1.bf16.xpose.msra.mxu0 0
        %1405 = vmatprep.subr.bf16.mxu0 0
        %1406 = vmatpush1.bf16.xpose.msra.mxu0 0
        %1407 = vmatprep.subr.bf16.mxu0 0
        %1408 = vmatpush1.bf16.xpose.msra.mxu0 0
        %1409 = vmatprep.mubr.bf16.mxu0 0
        %1410 = vmatmul.mubr.bf16.gmra.mrb[0].mxu0 %v1372
        %v1411 = vpop.f32.mrb[0].mxu0
        %v1412 = vadd.f32 0.0, %v1411
        %v1413 = vpop.f32.mrb[0].mxu0
        %v1414 = vpop.f32.mrb[0].mxu0
        %v1415 = vadd.f32 0.0, %v1414
        %v1416 = vpop.f32.mrb[0].mxu0
        %1417 = vdwg.mxu0
        %v1419 = vsel %vm1182, %v1163, 0
        %v1422 = vsel %vm1182, %v1171, 0
        %1424 = vmatprep.subr.bf16.mxu0 0
        %1425 = vmatpush1.bf16.xpose.msra.mxu0 %v1422
        %1426 = vmatprep.subr.bf16.mxu0 0
        %1427 = vmatpush1.bf16.xpose.msra.mxu0 0
        %1428 = vmatprep.subr.bf16.mxu0 0
        %1429 = vmatpush1.bf16.xpose.msra.mxu0 0
        %1430 = vmatprep.subr.bf16.mxu0 0
        %1431 = vmatpush1.bf16.xpose.msra.mxu0 0
        %1432 = vmatprep.subr.bf16.mxu0 0
        %1433 = vmatpush1.bf16.xpose.msra.mxu0 0
        %1434 = vmatprep.subr.bf16.mxu0 0
        %1435 = vmatpush1.bf16.xpose.msra.mxu0 0
        %1436 = vmatprep.subr.bf16.mxu0 0
        %1437 = vmatpush1.bf16.xpose.msra.mxu0 0
        %1438 = vmatprep.subr.bf16.mxu0 0
        %1439 = vmatpush1.bf16.xpose.msra.mxu0 0
        %1440 = vmatprep.subr.bf16.mxu0 0
        %1441 = vmatpush1.bf16.xpose.msra.mxu0 0
        %1442 = vmatprep.subr.bf16.mxu0 0
        %1443 = vmatpush1.bf16.xpose.msra.mxu0 0
        %1444 = vmatprep.subr.bf16.mxu0 0
        %1445 = vmatpush1.bf16.xpose.msra.mxu0 0
        %1446 = vmatprep.subr.bf16.mxu0 0
        %1447 = vmatpush1.bf16.xpose.msra.mxu0 0
        %1448 = vmatprep.subr.bf16.mxu0 0
        %1449 = vmatpush1.bf16.xpose.msra.mxu0 0
        %1450 = vmatprep.subr.bf16.mxu0 0
        %1451 = vmatpush1.bf16.xpose.msra.mxu0 0
        %1452 = vmatprep.subr.bf16.mxu0 0
        %1453 = vmatpush1.bf16.xpose.msra.mxu0 0
        %1454 = vmatprep.subr.bf16.mxu0 0
        %1455 = vmatpush1.bf16.xpose.msra.mxu0 0
        %1456 = vmatprep.mubr.bf16.mxu0 0
        %1457 = vmatmul.mubr.bf16.gmra.mrb[0].mxu0 %v1419
        %v1458 = vpop.f32.mrb[0].mxu0
        %v1459 = vadd.f32 0.0, %v1458
        %v1460 = vpop.f32.mrb[0].mxu0
        %v1461 = vpop.f32.mrb[0].mxu0
        %v1462 = vadd.f32 0.0, %v1461
        %v1463 = vpop.f32.mrb[0].mxu0
        %1464 = vdwg.mxu0
        %v1466 = vsel %vm1182, %v1164, 0
        %v1469 = vsel %vm1182, %v1172, 0
        %1471 = vmatprep.subr.bf16.mxu0 0
        %1472 = vmatpush1.bf16.xpose.msra.mxu0 %v1469
        %1473 = vmatprep.subr.bf16.mxu0 0
        %1474 = vmatpush1.bf16.xpose.msra.mxu0 0
        %1475 = vmatprep.subr.bf16.mxu0 0
        %1476 = vmatpush1.bf16.xpose.msra.mxu0 0
        %1477 = vmatprep.subr.bf16.mxu0 0
        %1478 = vmatpush1.bf16.xpose.msra.mxu0 0
        %1479 = vmatprep.subr.bf16.mxu0 0
        %1480 = vmatpush1.bf16.xpose.msra.mxu0 0
        %1481 = vmatprep.subr.bf16.mxu0 0
        %1482 = vmatpush1.bf16.xpose.msra.mxu0 0
        %1483 = vmatprep.subr.bf16.mxu0 0
        %1484 = vmatpush1.bf16.xpose.msra.mxu0 0
        %1485 = vmatprep.subr.bf16.mxu0 0
        %1486 = vmatpush1.bf16.xpose.msra.mxu0 0
        %1487 = vmatprep.subr.bf16.mxu0 0
        %1488 = vmatpush1.bf16.xpose.msra.mxu0 0
        %1489 = vmatprep.subr.bf16.mxu0 0
        %1490 = vmatpush1.bf16.xpose.msra.mxu0 0
        %1491 = vmatprep.subr.bf16.mxu0 0
        %1492 = vmatpush1.bf16.xpose.msra.mxu0 0
        %1493 = vmatprep.subr.bf16.mxu0 0
        %1494 = vmatpush1.bf16.xpose.msra.mxu0 0
        %1495 = vmatprep.subr.bf16.mxu0 0
        %1496 = vmatpush1.bf16.xpose.msra.mxu0 0
        %1497 = vmatprep.subr.bf16.mxu0 0
        %1498 = vmatpush1.bf16.xpose.msra.mxu0 0
        %1499 = vmatprep.subr.bf16.mxu0 0
        %1500 = vmatpush1.bf16.xpose.msra.mxu0 0
        %1501 = vmatprep.subr.bf16.mxu0 0
        %1502 = vmatpush1.bf16.xpose.msra.mxu0 0
        %1503 = vmatprep.mubr.bf16.mxu0 0
        %1504 = vmatmul.mubr.bf16.gmra.mrb[0].mxu0 %v1466
        %v1505 = vpop.f32.mrb[0].mxu0
        %v1506 = vadd.f32 0.0, %v1505
        %v1507 = vpop.f32.mrb[0].mxu0
        %v1508 = vpop.f32.mrb[0].mxu0
        %v1509 = vadd.f32 0.0, %v1508
        %v1510 = vpop.f32.mrb[0].mxu0
        %1511 = vdwg.mxu0
        %v1513 = vsel %vm1182, %v1165, 0
        %v1516 = vsel %vm1182, %v1173, 0
        %1518 = vmatprep.subr.bf16.mxu0 0
        %1519 = vmatpush1.bf16.xpose.msra.mxu0 %v1516
        %1520 = vmatprep.subr.bf16.mxu0 0
        %1521 = vmatpush1.bf16.xpose.msra.mxu0 0
        %1522 = vmatprep.subr.bf16.mxu0 0
        %1523 = vmatpush1.bf16.xpose.msra.mxu0 0
        %1524 = vmatprep.subr.bf16.mxu0 0
        %1525 = vmatpush1.bf16.xpose.msra.mxu0 0
        %1526 = vmatprep.subr.bf16.mxu0 0
        %1527 = vmatpush1.bf16.xpose.msra.mxu0 0
        %1528 = vmatprep.subr.bf16.mxu0 0
        %1529 = vmatpush1.bf16.xpose.msra.mxu0 0
        %1530 = vmatprep.subr.bf16.mxu0 0
        %1531 = vmatpush1.bf16.xpose.msra.mxu0 0
        %1532 = vmatprep.subr.bf16.mxu0 0
        %1533 = vmatpush1.bf16.xpose.msra.mxu0 0
        %1534 = vmatprep.subr.bf16.mxu0 0
        %1535 = vmatpush1.bf16.xpose.msra.mxu0 0
        %1536 = vmatprep.subr.bf16.mxu0 0
        %1537 = vmatpush1.bf16.xpose.msra.mxu0 0
        %1538 = vmatprep.subr.bf16.mxu0 0
        %1539 = vmatpush1.bf16.xpose.msra.mxu0 0
        %1540 = vmatprep.subr.bf16.mxu0 0
        %1541 = vmatpush1.bf16.xpose.msra.mxu0 0
        %1542 = vmatprep.subr.bf16.mxu0 0
        %1543 = vmatpush1.bf16.xpose.msra.mxu0 0
        %1544 = vmatprep.subr.bf16.mxu0 0
        %1545 = vmatpush1.bf16.xpose.msra.mxu0 0
        %1546 = vmatprep.subr.bf16.mxu0 0
        %1547 = vmatpush1.bf16.xpose.msra.mxu0 0
        %1548 = vmatprep.subr.bf16.mxu0 0
        %1549 = vmatpush1.bf16.xpose.msra.mxu0 0
        %1550 = vmatprep.mubr.bf16.mxu0 0
        %1551 = vmatmul.mubr.bf16.gmra.mrb[0].mxu0 %v1513
        %v1552 = vpop.f32.mrb[0].mxu0
        %v1553 = vadd.f32 0.0, %v1552
        %v1554 = vpop.f32.mrb[0].mxu0
        %v1555 = vpop.f32.mrb[0].mxu0
        %v1556 = vadd.f32 0.0, %v1555
        %v1557 = vpop.f32.mrb[0].mxu0
        %1558 = vdwg.mxu0
        %vm1559 = vcmask 130048
        %v1560 = vsel %vm1559, %v1224, -inf
        %1561 = vmax.xlane.f32.xlu0 %v1560
        %v1562 = vpop.xlane.xlu0 %1561
        %v1563 = vsel %vm1559, %v1227, -inf
        %1564 = vmax.xlane.f32.xlu0 %v1563
        %v1565 = vpop.xlane.xlu0 %1564
        %v1566 = vsel %vm1559, %v1271, -inf
        %1567 = vmax.xlane.f32.xlu0 %v1566
        %v1568 = vpop.xlane.xlu0 %1567
        %v1569 = vsel %vm1559, %v1274, -inf
        %1570 = vmax.xlane.f32.xlu0 %v1569
        %v1571 = vpop.xlane.xlu0 %1570
        %v1572 = vsel %vm1559, %v1318, -inf
        %1573 = vmax.xlane.f32.xlu0 %v1572
        %v1574 = vpop.xlane.xlu0 %1573
        %v1575 = vsel %vm1559, %v1321, -inf
        %1576 = vmax.xlane.f32.xlu0 %v1575
        %v1577 = vpop.xlane.xlu0 %1576
        %v1578 = vsel %vm1559, %v1365, -inf
        %1579 = vmax.xlane.f32.xlu0 %v1578
        %v1580 = vpop.xlane.xlu0 %1579
        %v1581 = vsel %vm1559, %v1368, -inf
        %1582 = vmax.xlane.f32.xlu0 %v1581
        %v1583 = vpop.xlane.xlu0 %1582
        %v1584 = vsel %vm1559, %v1412, -inf
        %1585 = vmax.xlane.f32.xlu0 %v1584
        %v1586 = vpop.xlane.xlu0 %1585
        %v1587 = vsel %vm1559, %v1415, -inf
        %1588 = vmax.xlane.f32.xlu0 %v1587
        %v1589 = vpop.xlane.xlu0 %1588
        %v1590 = vsel %vm1559, %v1459, -inf
        %1591 = vmax.xlane.f32.xlu0 %v1590
        %v1592 = vpop.xlane.xlu0 %1591
        %v1593 = vsel %vm1559, %v1462, -inf
        %1594 = vmax.xlane.f32.xlu0 %v1593
        %v1595 = vpop.xlane.xlu0 %1594
        %v1596 = vsel %vm1559, %v1506, -inf
        %1597 = vmax.xlane.f32.xlu0 %v1596
        %v1598 = vpop.xlane.xlu0 %1597
        %v1599 = vsel %vm1559, %v1509, -inf
        %1600 = vmax.xlane.f32.xlu0 %v1599
        %v1601 = vpop.xlane.xlu0 %1600
        %v1602 = vsel %vm1559, %v1553, -inf
        %1603 = vmax.xlane.f32.xlu0 %v1602
        %v1604 = vpop.xlane.xlu0 %1603
        %v1605 = vsel %vm1559, %v1556, -inf
        %1606 = vmax.xlane.f32.xlu0 %v1605
        %v1607 = vpop.xlane.xlu0 %1606
        %v1608 = vsub.f32 %v1224, %v1562
        %v1609 = vsub.f32 %v1227, %v1565
        %v1610 = vsub.f32 %v1271, %v1568
        %v1611 = vsub.f32 %v1274, %v1571
        %v1612 = vsub.f32 %v1318, %v1574
        %v1613 = vsub.f32 %v1321, %v1577
        %v1614 = vsub.f32 %v1365, %v1580
        %v1615 = vsub.f32 %v1368, %v1583
        %v1616 = vsub.f32 %v1412, %v1586
        %v1617 = vsub.f32 %v1415, %v1589
        %v1618 = vsub.f32 %v1459, %v1592
        %v1619 = vsub.f32 %v1462, %v1595
        %v1620 = vsub.f32 %v1506, %v1598
        %v1621 = vsub.f32 %v1509, %v1601
        %v1622 = vsub.f32 %v1553, %v1604
        %v1623 = vsub.f32 %v1556, %v1607
        %v1624 = vmul.f32 %v1608, 1.442695
        %v1625 = vpow.pop %v1624
        %v1626 = vmul.f32 %v1609, 1.442695
        %v1627 = vpow.pop %v1626
        %v1628 = vmul.f32 %v1610, 1.442695
        %v1629 = vpow.pop %v1628
        %v1630 = vmul.f32 %v1611, 1.442695
        %v1631 = vpow.pop %v1630
        %v1632 = vmul.f32 %v1612, 1.442695
        %v1633 = vpow.pop %v1632
        %v1634 = vmul.f32 %v1613, 1.442695
        %v1635 = vpow.pop %v1634
        %v1636 = vmul.f32 %v1614, 1.442695
        %v1637 = vpow.pop %v1636
        %v1638 = vmul.f32 %v1615, 1.442695
        %v1639 = vpow.pop %v1638
        %v1640 = vmul.f32 %v1616, 1.442695
        %v1641 = vpow.pop %v1640
        %v1642 = vmul.f32 %v1617, 1.442695
        %v1643 = vpow.pop %v1642
        %v1644 = vmul.f32 %v1618, 1.442695
        %v1645 = vpow.pop %v1644
        %v1646 = vmul.f32 %v1619, 1.442695
        %v1647 = vpow.pop %v1646
        %v1648 = vmul.f32 %v1620, 1.442695
        %v1649 = vpow.pop %v1648
        %v1650 = vmul.f32 %v1621, 1.442695
        %v1651 = vpow.pop %v1650
        %v1652 = vmul.f32 %v1622, 1.442695
        %v1653 = vpow.pop %v1652
        %v1654 = vmul.f32 %v1623, 1.442695
        %v1655 = vpow.pop %v1654
        %v1656 = vsel %vm1559, %v1625, 0.0
        %1657 = vadd.xlane.f32.xlu0 %v1656
        %v1658 = vpop.xlane.xlu0 %1657
        %v1659 = vsel %vm1559, %v1627, 0.0
        %1660 = vadd.xlane.f32.xlu0 %v1659
        %v1661 = vpop.xlane.xlu0 %1660
        %v1662 = vsel %vm1559, %v1629, 0.0
        %1663 = vadd.xlane.f32.xlu0 %v1662
        %v1664 = vpop.xlane.xlu0 %1663
        %v1665 = vsel %vm1559, %v1631, 0.0
        %1666 = vadd.xlane.f32.xlu0 %v1665
        %v1667 = vpop.xlane.xlu0 %1666
        %v1668 = vsel %vm1559, %v1633, 0.0
        %1669 = vadd.xlane.f32.xlu0 %v1668
        %v1670 = vpop.xlane.xlu0 %1669
        %v1671 = vsel %vm1559, %v1635, 0.0
        %1672 = vadd.xlane.f32.xlu0 %v1671
        %v1673 = vpop.xlane.xlu0 %1672
        %v1674 = vsel %vm1559, %v1637, 0.0
        %1675 = vadd.xlane.f32.xlu0 %v1674
        %v1676 = vpop.xlane.xlu0 %1675
        %v1677 = vsel %vm1559, %v1639, 0.0
        %1678 = vadd.xlane.f32.xlu0 %v1677
        %v1679 = vpop.xlane.xlu0 %1678
        %v1680 = vsel %vm1559, %v1641, 0.0
        %1681 = vadd.xlane.f32.xlu0 %v1680
        %v1682 = vpop.xlane.xlu0 %1681
        %v1683 = vsel %vm1559, %v1643, 0.0
        %1684 = vadd.xlane.f32.xlu0 %v1683
        %v1685 = vpop.xlane.xlu0 %1684
        %v1686 = vsel %vm1559, %v1645, 0.0
        %1687 = vadd.xlane.f32.xlu0 %v1686
        %v1688 = vpop.xlane.xlu0 %1687
        %v1689 = vsel %vm1559, %v1647, 0.0
        %1690 = vadd.xlane.f32.xlu0 %v1689
        %v1691 = vpop.xlane.xlu0 %1690
        %v1692 = vsel %vm1559, %v1649, 0.0
        %1693 = vadd.xlane.f32.xlu0 %v1692
        %v1694 = vpop.xlane.xlu0 %1693
        %v1695 = vsel %vm1559, %v1651, 0.0
        %1696 = vadd.xlane.f32.xlu0 %v1695
        %v1697 = vpop.xlane.xlu0 %1696
        %v1698 = vsel %vm1559, %v1653, 0.0
        %1699 = vadd.xlane.f32.xlu0 %v1698
        %v1700 = vpop.xlane.xlu0 %1699
        %v1701 = vsel %vm1559, %v1655, 0.0
        %1702 = vadd.xlane.f32.xlu0 %v1701
        %v1703 = vpop.xlane.xlu0 %1702
        %v1704 = vrcp.pop %v1658
        %v1705 = vrcp.pop %v1661
        %v1706 = vrcp.pop %v1664
        %v1707 = vrcp.pop %v1667
        %v1708 = vrcp.pop %v1670
        %v1709 = vrcp.pop %v1673
        %v1710 = vrcp.pop %v1676
        %v1711 = vrcp.pop %v1679
        %v1712 = vrcp.pop %v1682
        %v1713 = vrcp.pop %v1685
        %v1714 = vrcp.pop %v1688
        %v1715 = vrcp.pop %v1691
        %v1716 = vrcp.pop %v1694
        %v1717 = vrcp.pop %v1697
        %v1718 = vrcp.pop %v1700
        %v1719 = vrcp.pop %v1703
        %v1720 = vmul.f32 %v1625, %v1704
        %v1721 = vmul.f32 %v1627, %v1705
        %v1722 = vmul.f32 %v1629, %v1706
        %v1723 = vmul.f32 %v1631, %v1707
        %v1724 = vmul.f32 %v1633, %v1708
        %v1725 = vmul.f32 %v1635, %v1709
        %v1726 = vmul.f32 %v1637, %v1710
        %v1727 = vmul.f32 %v1639, %v1711
        %v1728 = vmul.f32 %v1641, %v1712
        %v1729 = vmul.f32 %v1643, %v1713
        %v1730 = vmul.f32 %v1645, %v1714
        %v1731 = vmul.f32 %v1647, %v1715
        %v1732 = vmul.f32 %v1649, %v1716
        %v1733 = vmul.f32 %v1651, %v1717
        %v1734 = vmul.f32 %v1653, %v1718
        %v1735 = vmul.f32 %v1655, %v1719
        %v1736 = vpack.c.bf16 %v1721, %v1720
        %v1737 = vpack.c.bf16 %v1723, %v1722
        %v1738 = vpack.c.bf16 %v1725, %v1724
        %v1739 = vpack.c.bf16 %v1727, %v1726
        %v1740 = vpack.c.bf16 %v1729, %v1728
        %v1741 = vpack.c.bf16 %v1731, %v1730
        %v1742 = vpack.c.bf16 %v1733, %v1732
        %v1743 = vpack.c.bf16 %v1735, %v1734
        %v1745 = vsel %vm1559, %v1736, 0
        %1747 = vmatprep.subr.bf16.mxu0 0
        %1748 = vmatpush1.bf16.msra.mxu0 %v1174
        %1749 = vmatprep.subr.bf16.mxu0 0
        %1750 = vmatpush1.bf16.msra.mxu0 0
        %1751 = vmatprep.subr.bf16.mxu0 0
        %1752 = vmatpush1.bf16.msra.mxu0 0
        %1753 = vmatprep.subr.bf16.mxu0 0
        %1754 = vmatpush1.bf16.msra.mxu0 0
        %1755 = vmatprep.subr.bf16.mxu0 0
        %1756 = vmatpush1.bf16.msra.mxu0 0
        %1757 = vmatprep.subr.bf16.mxu0 0
        %1758 = vmatpush1.bf16.msra.mxu0 0
        %1759 = vmatprep.subr.bf16.mxu0 0
        %1760 = vmatpush1.bf16.msra.mxu0 0
        %1761 = vmatprep.subr.bf16.mxu0 0
        %1762 = vmatpush1.bf16.msra.mxu0 0
        %1763 = vmatprep.subr.bf16.mxu0 0
        %1764 = vmatpush1.bf16.msra.mxu0 0
        %1765 = vmatprep.subr.bf16.mxu0 0
        %1766 = vmatpush1.bf16.msra.mxu0 0
        %1767 = vmatprep.subr.bf16.mxu0 0
        %1768 = vmatpush1.bf16.msra.mxu0 0
        %1769 = vmatprep.subr.bf16.mxu0 0
        %1770 = vmatpush1.bf16.msra.mxu0 0
        %1771 = vmatprep.subr.bf16.mxu0 0
        %1772 = vmatpush1.bf16.msra.mxu0 0
        %1773 = vmatprep.subr.bf16.mxu0 0
        %1774 = vmatpush1.bf16.msra.mxu0 0
        %1775 = vmatprep.subr.bf16.mxu0 0
        %1776 = vmatpush1.bf16.msra.mxu0 0
        %1777 = vmatprep.subr.bf16.mxu0 0
        %1778 = vmatpush1.bf16.msra.mxu0 0
        %1779 = vmatprep.mubr.bf16.mxu0 0
        %1780 = vmatmul.mubr.bf16.gmra.mrb[0].mxu0 %v1745
        %v1781 = vpop.f32.mrb[0].mxu0
        %v1782 = vadd.f32 0.0, %v1781
        %v1783 = vpop.f32.mrb[0].mxu0
        %v1784 = vpop.f32.mrb[0].mxu0
        %v1785 = vadd.f32 0.0, %v1784
        %v1786 = vpop.f32.mrb[0].mxu0
        %1787 = vdwg.mxu0
        %v1789 = vsel %vm1559, %v1737, 0
        %1791 = vmatprep.subr.bf16.mxu0 0
        %1792 = vmatpush1.bf16.msra.mxu0 %v1175
        %1793 = vmatprep.subr.bf16.mxu0 0
        %1794 = vmatpush1.bf16.msra.mxu0 0
        %1795 = vmatprep.subr.bf16.mxu0 0
        %1796 = vmatpush1.bf16.msra.mxu0 0
        %1797 = vmatprep.subr.bf16.mxu0 0
        %1798 = vmatpush1.bf16.msra.mxu0 0
        %1799 = vmatprep.subr.bf16.mxu0 0
        %1800 = vmatpush1.bf16.msra.mxu0 0
        %1801 = vmatprep.subr.bf16.mxu0 0
        %1802 = vmatpush1.bf16.msra.mxu0 0
        %1803 = vmatprep.subr.bf16.mxu0 0
        %1804 = vmatpush1.bf16.msra.mxu0 0
        %1805 = vmatprep.subr.bf16.mxu0 0
        %1806 = vmatpush1.bf16.msra.mxu0 0
        %1807 = vmatprep.subr.bf16.mxu0 0
        %1808 = vmatpush1.bf16.msra.mxu0 0
        %1809 = vmatprep.subr.bf16.mxu0 0
        %1810 = vmatpush1.bf16.msra.mxu0 0
        %1811 = vmatprep.subr.bf16.mxu0 0
        %1812 = vmatpush1.bf16.msra.mxu0 0
        %1813 = vmatprep.subr.bf16.mxu0 0
        %1814 = vmatpush1.bf16.msra.mxu0 0
        %1815 = vmatprep.subr.bf16.mxu0 0
        %1816 = vmatpush1.bf16.msra.mxu0 0
        %1817 = vmatprep.subr.bf16.mxu0 0
        %1818 = vmatpush1.bf16.msra.mxu0 0
        %1819 = vmatprep.subr.bf16.mxu0 0
        %1820 = vmatpush1.bf16.msra.mxu0 0
        %1821 = vmatprep.subr.bf16.mxu0 0
        %1822 = vmatpush1.bf16.msra.mxu0 0
        %1823 = vmatprep.mubr.bf16.mxu0 0
        %1824 = vmatmul.mubr.bf16.gmra.mrb[0].mxu0 %v1789
        %v1825 = vpop.f32.mrb[0].mxu0
        %v1826 = vadd.f32 0.0, %v1825
        %v1827 = vpop.f32.mrb[0].mxu0
        %v1828 = vpop.f32.mrb[0].mxu0
        %v1829 = vadd.f32 0.0, %v1828
        %v1830 = vpop.f32.mrb[0].mxu0
        %1831 = vdwg.mxu0
        %v1833 = vsel %vm1559, %v1738, 0
        %1835 = vmatprep.subr.bf16.mxu0 0
        %1836 = vmatpush1.bf16.msra.mxu0 %v1176
        %1837 = vmatprep.subr.bf16.mxu0 0
        %1838 = vmatpush1.bf16.msra.mxu0 0
        %1839 = vmatprep.subr.bf16.mxu0 0
        %1840 = vmatpush1.bf16.msra.mxu0 0
        %1841 = vmatprep.subr.bf16.mxu0 0
        %1842 = vmatpush1.bf16.msra.mxu0 0
        %1843 = vmatprep.subr.bf16.mxu0 0
        %1844 = vmatpush1.bf16.msra.mxu0 0
        %1845 = vmatprep.subr.bf16.mxu0 0
        %1846 = vmatpush1.bf16.msra.mxu0 0
        %1847 = vmatprep.subr.bf16.mxu0 0
        %1848 = vmatpush1.bf16.msra.mxu0 0
        %1849 = vmatprep.subr.bf16.mxu0 0
        %1850 = vmatpush1.bf16.msra.mxu0 0
        %1851 = vmatprep.subr.bf16.mxu0 0
        %1852 = vmatpush1.bf16.msra.mxu0 0
        %1853 = vmatprep.subr.bf16.mxu0 0
        %1854 = vmatpush1.bf16.msra.mxu0 0
        %1855 = vmatprep.subr.bf16.mxu0 0
        %1856 = vmatpush1.bf16.msra.mxu0 0
        %1857 = vmatprep.subr.bf16.mxu0 0
        %1858 = vmatpush1.bf16.msra.mxu0 0
        %1859 = vmatprep.subr.bf16.mxu0 0
        %1860 = vmatpush1.bf16.msra.mxu0 0
        %1861 = vmatprep.subr.bf16.mxu0 0
        %1862 = vmatpush1.bf16.msra.mxu0 0
        %1863 = vmatprep.subr.bf16.mxu0 0
        %1864 = vmatpush1.bf16.msra.mxu0 0
        %1865 = vmatprep.subr.bf16.mxu0 0
        %1866 = vmatpush1.bf16.msra.mxu0 0
        %1867 = vmatprep.mubr.bf16.mxu0 0
        %1868 = vmatmul.mubr.bf16.gmra.mrb[0].mxu0 %v1833
        %v1869 = vpop.f32.mrb[0].mxu0
        %v1870 = vadd.f32 0.0, %v1869
        %v1871 = vpop.f32.mrb[0].mxu0
        %v1872 = vpop.f32.mrb[0].mxu0
        %v1873 = vadd.f32 0.0, %v1872
        %v1874 = vpop.f32.mrb[0].mxu0
        %1875 = vdwg.mxu0
        %v1877 = vsel %vm1559, %v1739, 0
        %1879 = vmatprep.subr.bf16.mxu0 0
        %1880 = vmatpush1.bf16.msra.mxu0 %v1177
        %1881 = vmatprep.subr.bf16.mxu0 0
        %1882 = vmatpush1.bf16.msra.mxu0 0
        %1883 = vmatprep.subr.bf16.mxu0 0
        %1884 = vmatpush1.bf16.msra.mxu0 0
        %1885 = vmatprep.subr.bf16.mxu0 0
        %1886 = vmatpush1.bf16.msra.mxu0 0
        %1887 = vmatprep.subr.bf16.mxu0 0
        %1888 = vmatpush1.bf16.msra.mxu0 0
        %1889 = vmatprep.subr.bf16.mxu0 0
        %1890 = vmatpush1.bf16.msra.mxu0 0
        %1891 = vmatprep.subr.bf16.mxu0 0
        %1892 = vmatpush1.bf16.msra.mxu0 0
        %1893 = vmatprep.subr.bf16.mxu0 0
        %1894 = vmatpush1.bf16.msra.mxu0 0
        %1895 = vmatprep.subr.bf16.mxu0 0
        %1896 = vmatpush1.bf16.msra.mxu0 0
        %1897 = vmatprep.subr.bf16.mxu0 0
        %1898 = vmatpush1.bf16.msra.mxu0 0
        %1899 = vmatprep.subr.bf16.mxu0 0
        %1900 = vmatpush1.bf16.msra.mxu0 0
        %1901 = vmatprep.subr.bf16.mxu0 0
        %1902 = vmatpush1.bf16.msra.mxu0 0
        %1903 = vmatprep.subr.bf16.mxu0 0
        %1904 = vmatpush1.bf16.msra.mxu0 0
        %1905 = vmatprep.subr.bf16.mxu0 0
        %1906 = vmatpush1.bf16.msra.mxu0 0
        %1907 = vmatprep.subr.bf16.mxu0 0
        %1908 = vmatpush1.bf16.msra.mxu0 0
        %1909 = vmatprep.subr.bf16.mxu0 0
        %1910 = vmatpush1.bf16.msra.mxu0 0
        %1911 = vmatprep.mubr.bf16.mxu0 0
        %1912 = vmatmul.mubr.bf16.gmra.mrb[0].mxu0 %v1877
        %v1913 = vpop.f32.mrb[0].mxu0
        %v1914 = vadd.f32 0.0, %v1913
        %v1915 = vpop.f32.mrb[0].mxu0
        %v1916 = vpop.f32.mrb[0].mxu0
        %v1917 = vadd.f32 0.0, %v1916
        %v1918 = vpop.f32.mrb[0].mxu0
        %1919 = vdwg.mxu0
        %v1921 = vsel %vm1559, %v1740, 0
        %1923 = vmatprep.subr.bf16.mxu0 0
        %1924 = vmatpush1.bf16.msra.mxu0 %v1178
        %1925 = vmatprep.subr.bf16.mxu0 0
        %1926 = vmatpush1.bf16.msra.mxu0 0
        %1927 = vmatprep.subr.bf16.mxu0 0
        %1928 = vmatpush1.bf16.msra.mxu0 0
        %1929 = vmatprep.subr.bf16.mxu0 0
        %1930 = vmatpush1.bf16.msra.mxu0 0
        %1931 = vmatprep.subr.bf16.mxu0 0
        %1932 = vmatpush1.bf16.msra.mxu0 0
        %1933 = vmatprep.subr.bf16.mxu0 0
        %1934 = vmatpush1.bf16.msra.mxu0 0
        %1935 = vmatprep.subr.bf16.mxu0 0
        %1936 = vmatpush1.bf16.msra.mxu0 0
        %1937 = vmatprep.subr.bf16.mxu0 0
        %1938 = vmatpush1.bf16.msra.mxu0 0
        %1939 = vmatprep.subr.bf16.mxu0 0
        %1940 = vmatpush1.bf16.msra.mxu0 0
        %1941 = vmatprep.subr.bf16.mxu0 0
        %1942 = vmatpush1.bf16.msra.mxu0 0
        %1943 = vmatprep.subr.bf16.mxu0 0
        %1944 = vmatpush1.bf16.msra.mxu0 0
        %1945 = vmatprep.subr.bf16.mxu0 0
        %1946 = vmatpush1.bf16.msra.mxu0 0
        %1947 = vmatprep.subr.bf16.mxu0 0
        %1948 = vmatpush1.bf16.msra.mxu0 0
        %1949 = vmatprep.subr.bf16.mxu0 0
        %1950 = vmatpush1.bf16.msra.mxu0 0
        %1951 = vmatprep.subr.bf16.mxu0 0
        %1952 = vmatpush1.bf16.msra.mxu0 0
        %1953 = vmatprep.subr.bf16.mxu0 0
        %1954 = vmatpush1.bf16.msra.mxu0 0
        %1955 = vmatprep.mubr.bf16.mxu0 0
        %1956 = vmatmul.mubr.bf16.gmra.mrb[0].mxu0 %v1921
        %v1957 = vpop.f32.mrb[0].mxu0
        %v1958 = vadd.f32 0.0, %v1957
        %v1959 = vpop.f32.mrb[0].mxu0
        %v1960 = vpop.f32.mrb[0].mxu0
        %v1961 = vadd.f32 0.0, %v1960
        %v1962 = vpop.f32.mrb[0].mxu0
        %1963 = vdwg.mxu0
        %v1965 = vsel %vm1559, %v1741, 0
        %1967 = vmatprep.subr.bf16.mxu0 0
        %1968 = vmatpush1.bf16.msra.mxu0 %v1179
        %1969 = vmatprep.subr.bf16.mxu0 0
        %1970 = vmatpush1.bf16.msra.mxu0 0
        %1971 = vmatprep.subr.bf16.mxu0 0
        %1972 = vmatpush1.bf16.msra.mxu0 0
        %1973 = vmatprep.subr.bf16.mxu0 0
        %1974 = vmatpush1.bf16.msra.mxu0 0
        %1975 = vmatprep.subr.bf16.mxu0 0
        %1976 = vmatpush1.bf16.msra.mxu0 0
        %1977 = vmatprep.subr.bf16.mxu0 0
        %1978 = vmatpush1.bf16.msra.mxu0 0
        %1979 = vmatprep.subr.bf16.mxu0 0
        %1980 = vmatpush1.bf16.msra.mxu0 0
        %1981 = vmatprep.subr.bf16.mxu0 0
        %1982 = vmatpush1.bf16.msra.mxu0 0
        %1983 = vmatprep.subr.bf16.mxu0 0
        %1984 = vmatpush1.bf16.msra.mxu0 0
        %1985 = vmatprep.subr.bf16.mxu0 0
        %1986 = vmatpush1.bf16.msra.mxu0 0
        %1987 = vmatprep.subr.bf16.mxu0 0
        %1988 = vmatpush1.bf16.msra.mxu0 0
        %1989 = vmatprep.subr.bf16.mxu0 0
        %1990 = vmatpush1.bf16.msra.mxu0 0
        %1991 = vmatprep.subr.bf16.mxu0 0
        %1992 = vmatpush1.bf16.msra.mxu0 0
        %1993 = vmatprep.subr.bf16.mxu0 0
        %1994 = vmatpush1.bf16.msra.mxu0 0
        %1995 = vmatprep.subr.bf16.mxu0 0
        %1996 = vmatpush1.bf16.msra.mxu0 0
        %1997 = vmatprep.subr.bf16.mxu0 0
        %1998 = vmatpush1.bf16.msra.mxu0 0
        %1999 = vmatprep.mubr.bf16.mxu0 0
        %2000 = vmatmul.mubr.bf16.gmra.mrb[0].mxu0 %v1965
        %v2001 = vpop.f32.mrb[0].mxu0
        %v2002 = vadd.f32 0.0, %v2001
        %v2003 = vpop.f32.mrb[0].mxu0
        %v2004 = vpop.f32.mrb[0].mxu0
        %v2005 = vadd.f32 0.0, %v2004
        %v2006 = vpop.f32.mrb[0].mxu0
        %2007 = vdwg.mxu0
        %v2009 = vsel %vm1559, %v1742, 0
        %2011 = vmatprep.subr.bf16.mxu0 0
        %2012 = vmatpush1.bf16.msra.mxu0 %v1180
        %2013 = vmatprep.subr.bf16.mxu0 0
        %2014 = vmatpush1.bf16.msra.mxu0 0
        %2015 = vmatprep.subr.bf16.mxu0 0
        %2016 = vmatpush1.bf16.msra.mxu0 0
        %2017 = vmatprep.subr.bf16.mxu0 0
        %2018 = vmatpush1.bf16.msra.mxu0 0
        %2019 = vmatprep.subr.bf16.mxu0 0
        %2020 = vmatpush1.bf16.msra.mxu0 0
        %2021 = vmatprep.subr.bf16.mxu0 0
        %2022 = vmatpush1.bf16.msra.mxu0 0
        %2023 = vmatprep.subr.bf16.mxu0 0
        %2024 = vmatpush1.bf16.msra.mxu0 0
        %2025 = vmatprep.subr.bf16.mxu0 0
        %2026 = vmatpush1.bf16.msra.mxu0 0
        %2027 = vmatprep.subr.bf16.mxu0 0
        %2028 = vmatpush1.bf16.msra.mxu0 0
        %2029 = vmatprep.subr.bf16.mxu0 0
        %2030 = vmatpush1.bf16.msra.mxu0 0
        %2031 = vmatprep.subr.bf16.mxu0 0
        %2032 = vmatpush1.bf16.msra.mxu0 0
        %2033 = vmatprep.subr.bf16.mxu0 0
        %2034 = vmatpush1.bf16.msra.mxu0 0
        %2035 = vmatprep.subr.bf16.mxu0 0
        %2036 = vmatpush1.bf16.msra.mxu0 0
        %2037 = vmatprep.subr.bf16.mxu0 0
        %2038 = vmatpush1.bf16.msra.mxu0 0
        %2039 = vmatprep.subr.bf16.mxu0 0
        %2040 = vmatpush1.bf16.msra.mxu0 0
        %2041 = vmatprep.subr.bf16.mxu0 0
        %2042 = vmatpush1.bf16.msra.mxu0 0
        %2043 = vmatprep.mubr.bf16.mxu0 0
        %2044 = vmatmul.mubr.bf16.gmra.mrb[0].mxu0 %v2009
        %v2045 = vpop.f32.mrb[0].mxu0
        %v2046 = vadd.f32 0.0, %v2045
        %v2047 = vpop.f32.mrb[0].mxu0
        %v2048 = vpop.f32.mrb[0].mxu0
        %v2049 = vadd.f32 0.0, %v2048
        %v2050 = vpop.f32.mrb[0].mxu0
        %2051 = vdwg.mxu0
        %v2053 = vsel %vm1559, %v1743, 0
        %2055 = vmatprep.subr.bf16.mxu0 0
        %2056 = vmatpush1.bf16.msra.mxu0 %v1181
        %2057 = vmatprep.subr.bf16.mxu0 0
        %2058 = vmatpush1.bf16.msra.mxu0 0
        %2059 = vmatprep.subr.bf16.mxu0 0
        %2060 = vmatpush1.bf16.msra.mxu0 0
        %2061 = vmatprep.subr.bf16.mxu0 0
        %2062 = vmatpush1.bf16.msra.mxu0 0
        %2063 = vmatprep.subr.bf16.mxu0 0
        %2064 = vmatpush1.bf16.msra.mxu0 0
        %2065 = vmatprep.subr.bf16.mxu0 0
        %2066 = vmatpush1.bf16.msra.mxu0 0
        %2067 = vmatprep.subr.bf16.mxu0 0
        %2068 = vmatpush1.bf16.msra.mxu0 0
        %2069 = vmatprep.subr.bf16.mxu0 0
        %2070 = vmatpush1.bf16.msra.mxu0 0
        %2071 = vmatprep.subr.bf16.mxu0 0
        %2072 = vmatpush1.bf16.msra.mxu0 0
        %2073 = vmatprep.subr.bf16.mxu0 0
        %2074 = vmatpush1.bf16.msra.mxu0 0
        %2075 = vmatprep.subr.bf16.mxu0 0
        %2076 = vmatpush1.bf16.msra.mxu0 0
        %2077 = vmatprep.subr.bf16.mxu0 0
        %2078 = vmatpush1.bf16.msra.mxu0 0
        %2079 = vmatprep.subr.bf16.mxu0 0
        %2080 = vmatpush1.bf16.msra.mxu0 0
        %2081 = vmatprep.subr.bf16.mxu0 0
        %2082 = vmatpush1.bf16.msra.mxu0 0
        %2083 = vmatprep.subr.bf16.mxu0 0
        %2084 = vmatpush1.bf16.msra.mxu0 0
        %2085 = vmatprep.subr.bf16.mxu0 0
        %2086 = vmatpush1.bf16.msra.mxu0 0
        %2087 = vmatprep.mubr.bf16.mxu0 0
        %2088 = vmatmul.mubr.bf16.gmra.mrb[0].mxu0 %v2053
        %v2089 = vpop.f32.mrb[0].mxu0
        %v2090 = vadd.f32 0.0, %v2089
        %v2091 = vpop.f32.mrb[0].mxu0
        %v2092 = vpop.f32.mrb[0].mxu0
        %v2093 = vadd.f32 0.0, %v2092
        %v2094 = vpop.f32.mrb[0].mxu0
        %2095 = vdwg.mxu0
        %v2096 = vpack.c.bf16 %v1785, %v1782
        %v2097 = vpack.c.bf16 %v1829, %v1826
        %v2098 = vpack.c.bf16 %v1873, %v1870
        %v2099 = vpack.c.bf16 %v1917, %v1914
        %v2100 = vpack.c.bf16 %v1961, %v1958
        %v2101 = vpack.c.bf16 %v2005, %v2002
        %v2102 = vpack.c.bf16 %v2049, %v2046
        %v2103 = vpack.c.bf16 %v2093, %v2090
        %v2104 = vld [vmem:[%s8] sm:$0xf]
        %v2105 = vld [vmem:[%s8 + $0x4] sm:$0xf]
        %v2106 = vld [vmem:[%s8 + $0x8] sm:$0xf]
        %v2107 = vld [vmem:[%s8 + $0xc] sm:$0xf]
        %s2108 = scalar_lea.vmem %s2, 64
        %v2109 = vld [vmem:[%s2108] sm:$0xf]
        %v2110 = vld [vmem:[%s2108 + $0x4] sm:$0xf]
        %v2111 = vld [vmem:[%s2108 + $0x8] sm:$0xf]
        %v2112 = vld [vmem:[%s2108 + $0xc] sm:$0xf]
        %v2113 = vld [vmem:[%s2108 + $0x10] sm:$0xf]
        %v2114 = vld [vmem:[%s2108 + $0x14] sm:$0xf]
        %v2115 = vld [vmem:[%s2108 + $0x18] sm:$0xf]
        %v2116 = vld [vmem:[%s2108 + $0x1c] sm:$0xf]
        %v2117 = vld [vmem:[%s2108 + $0x20] sm:$0xf]
        %v2118 = vld [vmem:[%s2108 + $0x24] sm:$0xf]
        %v2119 = vld [vmem:[%s2108 + $0x28] sm:$0xf]
        %v2120 = vld [vmem:[%s2108 + $0x2c] sm:$0xf]
        %v2121 = vld [vmem:[%s2108 + $0x30] sm:$0xf]
        %v2122 = vld [vmem:[%s2108 + $0x34] sm:$0xf]
        %v2123 = vld [vmem:[%s2108 + $0x38] sm:$0xf]
        %v2124 = vld [vmem:[%s2108 + $0x3c] sm:$0xf]
        %s2125 = scalar_lea.vmem %s5, 1
        %v2126 = vld [vmem:[%s2125] sm:$0x1]
        %v2128 = vlaneseq
        %v2129 = vshrl.u32 %v2128, 7
        %v2130 = vsub.s32 0, %v2129
        %v2131 = vrot.slane %v2126, %v2130
        %v2149 = vunpack.c.l.b16 %v2109
        %v2150 = vunpack.c.l.b16 %v2110
        %v2151 = vunpack.c.l.b16 %v2111
        %v2152 = vunpack.c.l.b16 %v2112
        %v2153 = vunpack.c.l.b16 %v2113
        %v2154 = vunpack.c.l.b16 %v2114
        %v2155 = vunpack.c.l.b16 %v2115
        %v2156 = vunpack.c.l.b16 %v2116
        %v2157 = vunpack.c.l.b16 %v2117
        %v2158 = vunpack.c.l.b16 %v2118
        %v2159 = vunpack.c.l.b16 %v2119
        %v2160 = vunpack.c.l.b16 %v2120
        %v2161 = vunpack.c.l.b16 %v2121
        %v2162 = vunpack.c.l.b16 %v2122
        %v2163 = vunpack.c.l.b16 %v2123
        %v2164 = vunpack.c.l.b16 %v2124
        %v2165 = vpack.c.b16 %v2150, %v2149
        %v2166 = vpack.c.b16 %v2152, %v2151
        %v2167 = vpack.c.b16 %v2154, %v2153
        %v2168 = vpack.c.b16 %v2156, %v2155
        %v2169 = vpack.c.b16 %v2158, %v2157
        %v2170 = vpack.c.b16 %v2160, %v2159
        %v2171 = vpack.c.b16 %v2162, %v2161
        %v2172 = vpack.c.b16 %v2164, %v2163
        %2181 = vmatprep.subr.bf16.mxu0 0
        %2182 = vmatpush1.bf16.msra.mxu0 %v2165
        %2183 = vmatprep.subr.bf16.mxu0 0
        %2184 = vmatpush1.bf16.msra.mxu0 %v2166
        %2185 = vmatprep.subr.bf16.mxu0 0
        %2186 = vmatpush1.bf16.msra.mxu0 %v2167
        %2187 = vmatprep.subr.bf16.mxu0 0
        %2188 = vmatpush1.bf16.msra.mxu0 %v2168
        %2189 = vmatprep.subr.bf16.mxu0 0
        %2190 = vmatpush1.bf16.msra.mxu0 %v2169
        %2191 = vmatprep.subr.bf16.mxu0 0
        %2192 = vmatpush1.bf16.msra.mxu0 %v2170
        %2193 = vmatprep.subr.bf16.mxu0 0
        %2194 = vmatpush1.bf16.msra.mxu0 %v2171
        %2195 = vmatprep.subr.bf16.mxu0 0
        %2196 = vmatpush1.bf16.msra.mxu0 %v2172
        %2197 = vmatprep.subr.bf16.mxu0 0
        %2198 = vmatpush1.bf16.msra.mxu0 0
        %2199 = vmatprep.subr.bf16.mxu0 0
        %2200 = vmatpush1.bf16.msra.mxu0 0
        %2201 = vmatprep.subr.bf16.mxu0 0
        %2202 = vmatpush1.bf16.msra.mxu0 0
        %2203 = vmatprep.subr.bf16.mxu0 0
        %2204 = vmatpush1.bf16.msra.mxu0 0
        %2205 = vmatprep.subr.bf16.mxu0 0
        %2206 = vmatpush1.bf16.msra.mxu0 0
        %2207 = vmatprep.subr.bf16.mxu0 0
        %2208 = vmatpush1.bf16.msra.mxu0 0
        %2209 = vmatprep.subr.bf16.mxu0 0
        %2210 = vmatpush1.bf16.msra.mxu0 0
        %2211 = vmatprep.subr.bf16.mxu0 0
        %2212 = vmatpush1.bf16.msra.mxu0 0
        %2213 = vmatprep.mubr.bf16.mxu0 0
        %2214 = vmatmul.mubr.bf16.gmra.mrb[0].mxu0 %v638
        %v2215 = vpop.f32.mrb[0].mxu0
        %v2216 = vadd.f32 %v2131, %v2215
        %v2217 = vpop.f32.mrb[0].mxu0
        %v2218 = vpop.f32.mrb[0].mxu0
        %v2219 = vadd.f32 %v2131, %v2218
        %v2220 = vpop.f32.mrb[0].mxu0
        %2221 = vmatprep.mubr.bf16.mxu0 0
        %2222 = vmatmul.mubr.bf16.gmra.mrb[0].mxu0 %v639
        %v2223 = vpop.f32.mrb[0].mxu0
        %v2224 = vadd.f32 %v2131, %v2223
        %v2225 = vpop.f32.mrb[0].mxu0
        %v2226 = vpop.f32.mrb[0].mxu0
        %v2227 = vadd.f32 %v2131, %v2226
        %v2228 = vpop.f32.mrb[0].mxu0
        %2229 = vmatprep.mubr.bf16.mxu0 0
        %2230 = vmatmul.mubr.bf16.gmra.mrb[0].mxu0 %v640
        %v2231 = vpop.f32.mrb[0].mxu0
        %v2232 = vadd.f32 %v2131, %v2231
        %v2233 = vpop.f32.mrb[0].mxu0
        %v2234 = vpop.f32.mrb[0].mxu0
        %v2235 = vadd.f32 %v2131, %v2234
        %v2236 = vpop.f32.mrb[0].mxu0
        %2237 = vmatprep.mubr.bf16.mxu0 0
        %2238 = vmatmul.mubr.bf16.gmra.mrb[0].mxu0 %v641
        %v2239 = vpop.f32.mrb[0].mxu0
        %v2240 = vadd.f32 %v2131, %v2239
        %v2241 = vpop.f32.mrb[0].mxu0
        %v2242 = vpop.f32.mrb[0].mxu0
        %v2243 = vadd.f32 %v2131, %v2242
        %v2244 = vpop.f32.mrb[0].mxu0
        %2245 = vmatprep.mubr.bf16.mxu0 0
        %2246 = vmatmul.mubr.bf16.gmra.mrb[0].mxu0 %v642
        %v2247 = vpop.f32.mrb[0].mxu0
        %v2248 = vadd.f32 %v2131, %v2247
        %v2249 = vpop.f32.mrb[0].mxu0
        %v2250 = vpop.f32.mrb[0].mxu0
        %v2251 = vadd.f32 %v2131, %v2250
        %v2252 = vpop.f32.mrb[0].mxu0
        %2253 = vmatprep.mubr.bf16.mxu0 0
        %2254 = vmatmul.mubr.bf16.gmra.mrb[0].mxu0 %v643
        %v2255 = vpop.f32.mrb[0].mxu0
        %v2256 = vadd.f32 %v2131, %v2255
        %v2257 = vpop.f32.mrb[0].mxu0
        %v2258 = vpop.f32.mrb[0].mxu0
        %v2259 = vadd.f32 %v2131, %v2258
        %v2260 = vpop.f32.mrb[0].mxu0
        %2261 = vmatprep.mubr.bf16.mxu0 0
        %2262 = vmatmul.mubr.bf16.gmra.mrb[0].mxu0 %v644
        %v2263 = vpop.f32.mrb[0].mxu0
        %v2264 = vadd.f32 %v2131, %v2263
        %v2265 = vpop.f32.mrb[0].mxu0
        %v2266 = vpop.f32.mrb[0].mxu0
        %v2267 = vadd.f32 %v2131, %v2266
        %v2268 = vpop.f32.mrb[0].mxu0
        %2269 = vmatprep.mubr.bf16.mxu0 0
        %2270 = vmatmul.mubr.bf16.gmra.mrb[0].mxu0 %v645
        %v2271 = vpop.f32.mrb[0].mxu0
        %v2272 = vadd.f32 %v2131, %v2271
        %v2273 = vpop.f32.mrb[0].mxu0
        %v2274 = vpop.f32.mrb[0].mxu0
        %v2275 = vadd.f32 %v2131, %v2274
        %v2276 = vpop.f32.mrb[0].mxu0
        %2277 = vdwg.mxu0
        %s2278 = scalar_lea.vmem %s3, 64
        %v2279 = vld [vmem:[%s2278] sm:$0xf]
        %v2280 = vld [vmem:[%s2278 + $0x4] sm:$0xf]
        %v2281 = vld [vmem:[%s2278 + $0x8] sm:$0xf]
        %v2282 = vld [vmem:[%s2278 + $0xc] sm:$0xf]
        %v2283 = vld [vmem:[%s2278 + $0x10] sm:$0xf]
        %v2284 = vld [vmem:[%s2278 + $0x14] sm:$0xf]
        %v2285 = vld [vmem:[%s2278 + $0x18] sm:$0xf]
        %v2286 = vld [vmem:[%s2278 + $0x1c] sm:$0xf]
        %v2287 = vld [vmem:[%s2278 + $0x20] sm:$0xf]
        %v2288 = vld [vmem:[%s2278 + $0x24] sm:$0xf]
        %v2289 = vld [vmem:[%s2278 + $0x28] sm:$0xf]
        %v2290 = vld [vmem:[%s2278 + $0x2c] sm:$0xf]
        %v2291 = vld [vmem:[%s2278 + $0x30] sm:$0xf]
        %v2292 = vld [vmem:[%s2278 + $0x34] sm:$0xf]
        %v2293 = vld [vmem:[%s2278 + $0x38] sm:$0xf]
        %v2294 = vld [vmem:[%s2278 + $0x3c] sm:$0xf]
        %s2295 = scalar_lea.vmem %s6, 1
        %v2296 = vld [vmem:[%s2295] sm:$0x1]
        %v2298 = vlaneseq
        %v2299 = vshrl.u32 %v2298, 7
        %v2300 = vsub.s32 0, %v2299
        %v2301 = vrot.slane %v2296, %v2300
        %v2319 = vunpack.c.l.b16 %v2279
        %v2320 = vunpack.c.l.b16 %v2280
        %v2321 = vunpack.c.l.b16 %v2281
        %v2322 = vunpack.c.l.b16 %v2282
        %v2323 = vunpack.c.l.b16 %v2283
        %v2324 = vunpack.c.l.b16 %v2284
        %v2325 = vunpack.c.l.b16 %v2285
        %v2326 = vunpack.c.l.b16 %v2286
        %v2327 = vunpack.c.l.b16 %v2287
        %v2328 = vunpack.c.l.b16 %v2288
        %v2329 = vunpack.c.l.b16 %v2289
        %v2330 = vunpack.c.l.b16 %v2290
        %v2331 = vunpack.c.l.b16 %v2291
        %v2332 = vunpack.c.l.b16 %v2292
        %v2333 = vunpack.c.l.b16 %v2293
        %v2334 = vunpack.c.l.b16 %v2294
        %v2335 = vpack.c.b16 %v2320, %v2319
        %v2336 = vpack.c.b16 %v2322, %v2321
        %v2337 = vpack.c.b16 %v2324, %v2323
        %v2338 = vpack.c.b16 %v2326, %v2325
        %v2339 = vpack.c.b16 %v2328, %v2327
        %v2340 = vpack.c.b16 %v2330, %v2329
        %v2341 = vpack.c.b16 %v2332, %v2331
        %v2342 = vpack.c.b16 %v2334, %v2333
        %2351 = vmatprep.subr.bf16.mxu0 0
        %2352 = vmatpush1.bf16.msra.mxu0 %v2335
        %2353 = vmatprep.subr.bf16.mxu0 0
        %2354 = vmatpush1.bf16.msra.mxu0 %v2336
        %2355 = vmatprep.subr.bf16.mxu0 0
        %2356 = vmatpush1.bf16.msra.mxu0 %v2337
        %2357 = vmatprep.subr.bf16.mxu0 0
        %2358 = vmatpush1.bf16.msra.mxu0 %v2338
        %2359 = vmatprep.subr.bf16.mxu0 0
        %2360 = vmatpush1.bf16.msra.mxu0 %v2339
        %2361 = vmatprep.subr.bf16.mxu0 0
        %2362 = vmatpush1.bf16.msra.mxu0 %v2340
        %2363 = vmatprep.subr.bf16.mxu0 0
        %2364 = vmatpush1.bf16.msra.mxu0 %v2341
        %2365 = vmatprep.subr.bf16.mxu0 0
        %2366 = vmatpush1.bf16.msra.mxu0 %v2342
        %2367 = vmatprep.subr.bf16.mxu0 0
        %2368 = vmatpush1.bf16.msra.mxu0 0
        %2369 = vmatprep.subr.bf16.mxu0 0
        %2370 = vmatpush1.bf16.msra.mxu0 0
        %2371 = vmatprep.subr.bf16.mxu0 0
        %2372 = vmatpush1.bf16.msra.mxu0 0
        %2373 = vmatprep.subr.bf16.mxu0 0
        %2374 = vmatpush1.bf16.msra.mxu0 0
        %2375 = vmatprep.subr.bf16.mxu0 0
        %2376 = vmatpush1.bf16.msra.mxu0 0
        %2377 = vmatprep.subr.bf16.mxu0 0
        %2378 = vmatpush1.bf16.msra.mxu0 0
        %2379 = vmatprep.subr.bf16.mxu0 0
        %2380 = vmatpush1.bf16.msra.mxu0 0
        %2381 = vmatprep.subr.bf16.mxu0 0
        %2382 = vmatpush1.bf16.msra.mxu0 0
        %2383 = vmatprep.mubr.bf16.mxu0 0
        %2384 = vmatmul.mubr.bf16.gmra.mrb[0].mxu0 %v646
        %v2385 = vpop.f32.mrb[0].mxu0
        %v2386 = vadd.f32 %v2301, %v2385
        %v2387 = vpop.f32.mrb[0].mxu0
        %v2388 = vpop.f32.mrb[0].mxu0
        %v2389 = vadd.f32 %v2301, %v2388
        %v2390 = vpop.f32.mrb[0].mxu0
        %2391 = vmatprep.mubr.bf16.mxu0 0
        %2392 = vmatmul.mubr.bf16.gmra.mrb[0].mxu0 %v647
        %v2393 = vpop.f32.mrb[0].mxu0
        %v2394 = vadd.f32 %v2301, %v2393
        %v2395 = vpop.f32.mrb[0].mxu0
        %v2396 = vpop.f32.mrb[0].mxu0
        %v2397 = vadd.f32 %v2301, %v2396
        %v2398 = vpop.f32.mrb[0].mxu0
        %2399 = vmatprep.mubr.bf16.mxu0 0
        %2400 = vmatmul.mubr.bf16.gmra.mrb[0].mxu0 %v648
        %v2401 = vpop.f32.mrb[0].mxu0
        %v2402 = vadd.f32 %v2301, %v2401
        %v2403 = vpop.f32.mrb[0].mxu0
        %v2404 = vpop.f32.mrb[0].mxu0
        %v2405 = vadd.f32 %v2301, %v2404
        %v2406 = vpop.f32.mrb[0].mxu0
        %2407 = vmatprep.mubr.bf16.mxu0 0
        %2408 = vmatmul.mubr.bf16.gmra.mrb[0].mxu0 %v649
        %v2409 = vpop.f32.mrb[0].mxu0
        %v2410 = vadd.f32 %v2301, %v2409
        %v2411 = vpop.f32.mrb[0].mxu0
        %v2412 = vpop.f32.mrb[0].mxu0
        %v2413 = vadd.f32 %v2301, %v2412
        %v2414 = vpop.f32.mrb[0].mxu0
        %2415 = vmatprep.mubr.bf16.mxu0 0
        %2416 = vmatmul.mubr.bf16.gmra.mrb[0].mxu0 %v650
        %v2417 = vpop.f32.mrb[0].mxu0
        %v2418 = vadd.f32 %v2301, %v2417
        %v2419 = vpop.f32.mrb[0].mxu0
        %v2420 = vpop.f32.mrb[0].mxu0
        %v2421 = vadd.f32 %v2301, %v2420
        %v2422 = vpop.f32.mrb[0].mxu0
        %2423 = vmatprep.mubr.bf16.mxu0 0
        %2424 = vmatmul.mubr.bf16.gmra.mrb[0].mxu0 %v651
        %v2425 = vpop.f32.mrb[0].mxu0
        %v2426 = vadd.f32 %v2301, %v2425
        %v2427 = vpop.f32.mrb[0].mxu0
        %v2428 = vpop.f32.mrb[0].mxu0
        %v2429 = vadd.f32 %v2301, %v2428
        %v2430 = vpop.f32.mrb[0].mxu0
        %2431 = vmatprep.mubr.bf16.mxu0 0
        %2432 = vmatmul.mubr.bf16.gmra.mrb[0].mxu0 %v652
        %v2433 = vpop.f32.mrb[0].mxu0
        %v2434 = vadd.f32 %v2301, %v2433
        %v2435 = vpop.f32.mrb[0].mxu0
        %v2436 = vpop.f32.mrb[0].mxu0
        %v2437 = vadd.f32 %v2301, %v2436
        %v2438 = vpop.f32.mrb[0].mxu0
        %2439 = vmatprep.mubr.bf16.mxu0 0
        %2440 = vmatmul.mubr.bf16.gmra.mrb[0].mxu0 %v653
        %v2441 = vpop.f32.mrb[0].mxu0
        %v2442 = vadd.f32 %v2301, %v2441
        %v2443 = vpop.f32.mrb[0].mxu0
        %v2444 = vpop.f32.mrb[0].mxu0
        %v2445 = vadd.f32 %v2301, %v2444
        %v2446 = vpop.f32.mrb[0].mxu0
        %2447 = vdwg.mxu0
        %s2448 = scalar_lea.vmem %s4, 64
        %v2449 = vld [vmem:[%s2448] sm:$0xf]
        %v2450 = vld [vmem:[%s2448 + $0x4] sm:$0xf]
        %v2451 = vld [vmem:[%s2448 + $0x8] sm:$0xf]
        %v2452 = vld [vmem:[%s2448 + $0xc] sm:$0xf]
        %v2453 = vld [vmem:[%s2448 + $0x10] sm:$0xf]
        %v2454 = vld [vmem:[%s2448 + $0x14] sm:$0xf]
        %v2455 = vld [vmem:[%s2448 + $0x18] sm:$0xf]
        %v2456 = vld [vmem:[%s2448 + $0x1c] sm:$0xf]
        %v2457 = vld [vmem:[%s2448 + $0x20] sm:$0xf]
        %v2458 = vld [vmem:[%s2448 + $0x24] sm:$0xf]
        %v2459 = vld [vmem:[%s2448 + $0x28] sm:$0xf]
        %v2460 = vld [vmem:[%s2448 + $0x2c] sm:$0xf]
        %v2461 = vld [vmem:[%s2448 + $0x30] sm:$0xf]
        %v2462 = vld [vmem:[%s2448 + $0x34] sm:$0xf]
        %v2463 = vld [vmem:[%s2448 + $0x38] sm:$0xf]
        %v2464 = vld [vmem:[%s2448 + $0x3c] sm:$0xf]
        %s2465 = scalar_lea.vmem %s7, 1
        %v2466 = vld [vmem:[%s2465] sm:$0x1]
        %v2468 = vlaneseq
        %v2469 = vshrl.u32 %v2468, 7
        %v2470 = vsub.s32 0, %v2469
        %v2471 = vrot.slane %v2466, %v2470
        %v2489 = vunpack.c.l.b16 %v2449
        %v2490 = vunpack.c.l.b16 %v2450
        %v2491 = vunpack.c.l.b16 %v2451
        %v2492 = vunpack.c.l.b16 %v2452
        %v2493 = vunpack.c.l.b16 %v2453
        %v2494 = vunpack.c.l.b16 %v2454
        %v2495 = vunpack.c.l.b16 %v2455
        %v2496 = vunpack.c.l.b16 %v2456
        %v2497 = vunpack.c.l.b16 %v2457
        %v2498 = vunpack.c.l.b16 %v2458
        %v2499 = vunpack.c.l.b16 %v2459
        %v2500 = vunpack.c.l.b16 %v2460
        %v2501 = vunpack.c.l.b16 %v2461
        %v2502 = vunpack.c.l.b16 %v2462
        %v2503 = vunpack.c.l.b16 %v2463
        %v2504 = vunpack.c.l.b16 %v2464
        %v2505 = vpack.c.b16 %v2490, %v2489
        %v2506 = vpack.c.b16 %v2492, %v2491
        %v2507 = vpack.c.b16 %v2494, %v2493
        %v2508 = vpack.c.b16 %v2496, %v2495
        %v2509 = vpack.c.b16 %v2498, %v2497
        %v2510 = vpack.c.b16 %v2500, %v2499
        %v2511 = vpack.c.b16 %v2502, %v2501
        %v2512 = vpack.c.b16 %v2504, %v2503
        %2521 = vmatprep.subr.bf16.mxu0 0
        %2522 = vmatpush1.bf16.msra.mxu0 %v2505
        %2523 = vmatprep.subr.bf16.mxu0 0
        %2524 = vmatpush1.bf16.msra.mxu0 %v2506
        %2525 = vmatprep.subr.bf16.mxu0 0
        %2526 = vmatpush1.bf16.msra.mxu0 %v2507
        %2527 = vmatprep.subr.bf16.mxu0 0
        %2528 = vmatpush1.bf16.msra.mxu0 %v2508
        %2529 = vmatprep.subr.bf16.mxu0 0
        %2530 = vmatpush1.bf16.msra.mxu0 %v2509
        %2531 = vmatprep.subr.bf16.mxu0 0
        %2532 = vmatpush1.bf16.msra.mxu0 %v2510
        %2533 = vmatprep.subr.bf16.mxu0 0
        %2534 = vmatpush1.bf16.msra.mxu0 %v2511
        %2535 = vmatprep.subr.bf16.mxu0 0
        %2536 = vmatpush1.bf16.msra.mxu0 %v2512
        %2537 = vmatprep.subr.bf16.mxu0 0
        %2538 = vmatpush1.bf16.msra.mxu0 0
        %2539 = vmatprep.subr.bf16.mxu0 0
        %2540 = vmatpush1.bf16.msra.mxu0 0
        %2541 = vmatprep.subr.bf16.mxu0 0
        %2542 = vmatpush1.bf16.msra.mxu0 0
        %2543 = vmatprep.subr.bf16.mxu0 0
        %2544 = vmatpush1.bf16.msra.mxu0 0
        %2545 = vmatprep.subr.bf16.mxu0 0
        %2546 = vmatpush1.bf16.msra.mxu0 0
        %2547 = vmatprep.subr.bf16.mxu0 0
        %2548 = vmatpush1.bf16.msra.mxu0 0
        %2549 = vmatprep.subr.bf16.mxu0 0
        %2550 = vmatpush1.bf16.msra.mxu0 0
        %2551 = vmatprep.subr.bf16.mxu0 0
        %2552 = vmatpush1.bf16.msra.mxu0 0
        %2553 = vmatprep.mubr.bf16.mxu0 0
        %2554 = vmatmul.mubr.bf16.gmra.mrb[0].mxu0 %v646
        %v2555 = vpop.f32.mrb[0].mxu0
        %v2556 = vadd.f32 %v2471, %v2555
        %v2557 = vpop.f32.mrb[0].mxu0
        %v2558 = vpop.f32.mrb[0].mxu0
        %v2559 = vadd.f32 %v2471, %v2558
        %v2560 = vpop.f32.mrb[0].mxu0
        %2561 = vmatprep.mubr.bf16.mxu0 0
        %2562 = vmatmul.mubr.bf16.gmra.mrb[0].mxu0 %v647
        %v2563 = vpop.f32.mrb[0].mxu0
        %v2564 = vadd.f32 %v2471, %v2563
        %v2565 = vpop.f32.mrb[0].mxu0
        %v2566 = vpop.f32.mrb[0].mxu0
        %v2567 = vadd.f32 %v2471, %v2566
        %v2568 = vpop.f32.mrb[0].mxu0
        %2569 = vmatprep.mubr.bf16.mxu0 0
        %2570 = vmatmul.mubr.bf16.gmra.mrb[0].mxu0 %v648
        %v2571 = vpop.f32.mrb[0].mxu0
        %v2572 = vadd.f32 %v2471, %v2571
        %v2573 = vpop.f32.mrb[0].mxu0
        %v2574 = vpop.f32.mrb[0].mxu0
        %v2575 = vadd.f32 %v2471, %v2574
        %v2576 = vpop.f32.mrb[0].mxu0
        %2577 = vmatprep.mubr.bf16.mxu0 0
        %2578 = vmatmul.mubr.bf16.gmra.mrb[0].mxu0 %v649
        %v2579 = vpop.f32.mrb[0].mxu0
        %v2580 = vadd.f32 %v2471, %v2579
        %v2581 = vpop.f32.mrb[0].mxu0
        %v2582 = vpop.f32.mrb[0].mxu0
        %v2583 = vadd.f32 %v2471, %v2582
        %v2584 = vpop.f32.mrb[0].mxu0
        %2585 = vmatprep.mubr.bf16.mxu0 0
        %2586 = vmatmul.mubr.bf16.gmra.mrb[0].mxu0 %v650
        %v2587 = vpop.f32.mrb[0].mxu0
        %v2588 = vadd.f32 %v2471, %v2587
        %v2589 = vpop.f32.mrb[0].mxu0
        %v2590 = vpop.f32.mrb[0].mxu0
        %v2591 = vadd.f32 %v2471, %v2590
        %v2592 = vpop.f32.mrb[0].mxu0
        %2593 = vmatprep.mubr.bf16.mxu0 0
        %2594 = vmatmul.mubr.bf16.gmra.mrb[0].mxu0 %v651
        %v2595 = vpop.f32.mrb[0].mxu0
        %v2596 = vadd.f32 %v2471, %v2595
        %v2597 = vpop.f32.mrb[0].mxu0
        %v2598 = vpop.f32.mrb[0].mxu0
        %v2599 = vadd.f32 %v2471, %v2598
        %v2600 = vpop.f32.mrb[0].mxu0
        %2601 = vmatprep.mubr.bf16.mxu0 0
        %2602 = vmatmul.mubr.bf16.gmra.mrb[0].mxu0 %v652
        %v2603 = vpop.f32.mrb[0].mxu0
        %v2604 = vadd.f32 %v2471, %v2603
        %v2605 = vpop.f32.mrb[0].mxu0
        %v2606 = vpop.f32.mrb[0].mxu0
        %v2607 = vadd.f32 %v2471, %v2606
        %v2608 = vpop.f32.mrb[0].mxu0
        %2609 = vmatprep.mubr.bf16.mxu0 0
        %2610 = vmatmul.mubr.bf16.gmra.mrb[0].mxu0 %v653
        %v2611 = vpop.f32.mrb[0].mxu0
        %v2612 = vadd.f32 %v2471, %v2611
        %v2613 = vpop.f32.mrb[0].mxu0
        %v2614 = vpop.f32.mrb[0].mxu0
        %v2615 = vadd.f32 %v2471, %v2614
        %v2616 = vpop.f32.mrb[0].mxu0
        %2617 = vdwg.mxu0
        %v2618 = vpack.c.bf16 %v2219, %v2216
        %v2619 = vpack.c.bf16 %v2227, %v2224
        %v2620 = vpack.c.bf16 %v2235, %v2232
        %v2621 = vpack.c.bf16 %v2243, %v2240
        %v2622 = vpack.c.bf16 %v2251, %v2248
        %v2623 = vpack.c.bf16 %v2259, %v2256
        %v2624 = vpack.c.bf16 %v2267, %v2264
        %v2625 = vpack.c.bf16 %v2275, %v2272
        %v2626 = vpack.c.bf16 %v2389, %v2386
        %v2627 = vpack.c.bf16 %v2397, %v2394
        %v2628 = vpack.c.bf16 %v2405, %v2402
        %v2629 = vpack.c.bf16 %v2413, %v2410
        %v2630 = vpack.c.bf16 %v2421, %v2418
        %v2631 = vpack.c.bf16 %v2429, %v2426
        %v2632 = vpack.c.bf16 %v2437, %v2434
        %v2633 = vpack.c.bf16 %v2445, %v2442
        %v2634 = vpack.c.bf16 %v2559, %v2556
        %v2635 = vpack.c.bf16 %v2567, %v2564
        %v2636 = vpack.c.bf16 %v2575, %v2572
        %v2637 = vpack.c.bf16 %v2583, %v2580
        %v2638 = vpack.c.bf16 %v2591, %v2588
        %v2639 = vpack.c.bf16 %v2599, %v2596
        %v2640 = vpack.c.bf16 %v2607, %v2604
        %v2641 = vpack.c.bf16 %v2615, %v2612
        %v2643 = vsel %vm1182, %v2618, 0
        %v2646 = vsel %vm1182, %v2626, 0
        %2648 = vmatprep.subr.bf16.mxu0 0
        %2649 = vmatpush1.bf16.xpose.msra.mxu0 %v2646
        %2650 = vmatprep.subr.bf16.mxu0 0
        %2651 = vmatpush1.bf16.xpose.msra.mxu0 0
        %2652 = vmatprep.subr.bf16.mxu0 0
        %2653 = vmatpush1.bf16.xpose.msra.mxu0 0
        %2654 = vmatprep.subr.bf16.mxu0 0
        %2655 = vmatpush1.bf16.xpose.msra.mxu0 0
        %2656 = vmatprep.subr.bf16.mxu0 0
        %2657 = vmatpush1.bf16.xpose.msra.mxu0 0
        %2658 = vmatprep.subr.bf16.mxu0 0
        %2659 = vmatpush1.bf16.xpose.msra.mxu0 0
        %2660 = vmatprep.subr.bf16.mxu0 0
        %2661 = vmatpush1.bf16.xpose.msra.mxu0 0
        %2662 = vmatprep.subr.bf16.mxu0 0
        %2663 = vmatpush1.bf16.xpose.msra.mxu0 0
        %2664 = vmatprep.subr.bf16.mxu0 0
        %2665 = vmatpush1.bf16.xpose.msra.mxu0 0
        %2666 = vmatprep.subr.bf16.mxu0 0
        %2667 = vmatpush1.bf16.xpose.msra.mxu0 0
        %2668 = vmatprep.subr.bf16.mxu0 0
        %2669 = vmatpush1.bf16.xpose.msra.mxu0 0
        %2670 = vmatprep.subr.bf16.mxu0 0
        %2671 = vmatpush1.bf16.xpose.msra.mxu0 0
        %2672 = vmatprep.subr.bf16.mxu0 0
        %2673 = vmatpush1.bf16.xpose.msra.mxu0 0
        %2674 = vmatprep.subr.bf16.mxu0 0
        %2675 = vmatpush1.bf16.xpose.msra.mxu0 0
        %2676 = vmatprep.subr.bf16.mxu0 0
        %2677 = vmatpush1.bf16.xpose.msra.mxu0 0
        %2678 = vmatprep.subr.bf16.mxu0 0
        %2679 = vmatpush1.bf16.xpose.msra.mxu0 0
        %2680 = vmatprep.mubr.bf16.mxu0 0
        %2681 = vmatmul.mubr.bf16.gmra.mrb[0].mxu0 %v2643
        %v2682 = vpop.f32.mrb[0].mxu0
        %v2683 = vadd.f32 0.0, %v2682
        %v2684 = vpop.f32.mrb[0].mxu0
        %v2685 = vpop.f32.mrb[0].mxu0
        %v2686 = vadd.f32 0.0, %v2685
        %v2687 = vpop.f32.mrb[0].mxu0
        %2688 = vdwg.mxu0
        %v2690 = vsel %vm1182, %v2619, 0
        %v2693 = vsel %vm1182, %v2627, 0
        %2695 = vmatprep.subr.bf16.mxu0 0
        %2696 = vmatpush1.bf16.xpose.msra.mxu0 %v2693
        %2697 = vmatprep.subr.bf16.mxu0 0
        %2698 = vmatpush1.bf16.xpose.msra.mxu0 0
        %2699 = vmatprep.subr.bf16.mxu0 0
        %2700 = vmatpush1.bf16.xpose.msra.mxu0 0
        %2701 = vmatprep.subr.bf16.mxu0 0
        %2702 = vmatpush1.bf16.xpose.msra.mxu0 0
        %2703 = vmatprep.subr.bf16.mxu0 0
        %2704 = vmatpush1.bf16.xpose.msra.mxu0 0
        %2705 = vmatprep.subr.bf16.mxu0 0
        %2706 = vmatpush1.bf16.xpose.msra.mxu0 0
        %2707 = vmatprep.subr.bf16.mxu0 0
        %2708 = vmatpush1.bf16.xpose.msra.mxu0 0
        %2709 = vmatprep.subr.bf16.mxu0 0
        %2710 = vmatpush1.bf16.xpose.msra.mxu0 0
        %2711 = vmatprep.subr.bf16.mxu0 0
        %2712 = vmatpush1.bf16.xpose.msra.mxu0 0
        %2713 = vmatprep.subr.bf16.mxu0 0
        %2714 = vmatpush1.bf16.xpose.msra.mxu0 0
        %2715 = vmatprep.subr.bf16.mxu0 0
        %2716 = vmatpush1.bf16.xpose.msra.mxu0 0
        %2717 = vmatprep.subr.bf16.mxu0 0
        %2718 = vmatpush1.bf16.xpose.msra.mxu0 0
        %2719 = vmatprep.subr.bf16.mxu0 0
        %2720 = vmatpush1.bf16.xpose.msra.mxu0 0
        %2721 = vmatprep.subr.bf16.mxu0 0
        %2722 = vmatpush1.bf16.xpose.msra.mxu0 0
        %2723 = vmatprep.subr.bf16.mxu0 0
        %2724 = vmatpush1.bf16.xpose.msra.mxu0 0
        %2725 = vmatprep.subr.bf16.mxu0 0
        %2726 = vmatpush1.bf16.xpose.msra.mxu0 0
        %2727 = vmatprep.mubr.bf16.mxu0 0
        %2728 = vmatmul.mubr.bf16.gmra.mrb[0].mxu0 %v2690
        %v2729 = vpop.f32.mrb[0].mxu0
        %v2730 = vadd.f32 0.0, %v2729
        %v2731 = vpop.f32.mrb[0].mxu0
        %v2732 = vpop.f32.mrb[0].mxu0
        %v2733 = vadd.f32 0.0, %v2732
        %v2734 = vpop.f32.mrb[0].mxu0
        %2735 = vdwg.mxu0
        %v2737 = vsel %vm1182, %v2620, 0
        %v2740 = vsel %vm1182, %v2628, 0
        %2742 = vmatprep.subr.bf16.mxu0 0
        %2743 = vmatpush1.bf16.xpose.msra.mxu0 %v2740
        %2744 = vmatprep.subr.bf16.mxu0 0
        %2745 = vmatpush1.bf16.xpose.msra.mxu0 0
        %2746 = vmatprep.subr.bf16.mxu0 0
        %2747 = vmatpush1.bf16.xpose.msra.mxu0 0
        %2748 = vmatprep.subr.bf16.mxu0 0
        %2749 = vmatpush1.bf16.xpose.msra.mxu0 0
        %2750 = vmatprep.subr.bf16.mxu0 0
        %2751 = vmatpush1.bf16.xpose.msra.mxu0 0
        %2752 = vmatprep.subr.bf16.mxu0 0
        %2753 = vmatpush1.bf16.xpose.msra.mxu0 0
        %2754 = vmatprep.subr.bf16.mxu0 0
        %2755 = vmatpush1.bf16.xpose.msra.mxu0 0
        %2756 = vmatprep.subr.bf16.mxu0 0
        %2757 = vmatpush1.bf16.xpose.msra.mxu0 0
        %2758 = vmatprep.subr.bf16.mxu0 0
        %2759 = vmatpush1.bf16.xpose.msra.mxu0 0
        %2760 = vmatprep.subr.bf16.mxu0 0
        %2761 = vmatpush1.bf16.xpose.msra.mxu0 0
        %2762 = vmatprep.subr.bf16.mxu0 0
        %2763 = vmatpush1.bf16.xpose.msra.mxu0 0
        %2764 = vmatprep.subr.bf16.mxu0 0
        %2765 = vmatpush1.bf16.xpose.msra.mxu0 0
        %2766 = vmatprep.subr.bf16.mxu0 0
        %2767 = vmatpush1.bf16.xpose.msra.mxu0 0
        %2768 = vmatprep.subr.bf16.mxu0 0
        %2769 = vmatpush1.bf16.xpose.msra.mxu0 0
        %2770 = vmatprep.subr.bf16.mxu0 0
        %2771 = vmatpush1.bf16.xpose.msra.mxu0 0
        %2772 = vmatprep.subr.bf16.mxu0 0
        %2773 = vmatpush1.bf16.xpose.msra.mxu0 0
        %2774 = vmatprep.mubr.bf16.mxu0 0
        %2775 = vmatmul.mubr.bf16.gmra.mrb[0].mxu0 %v2737
        %v2776 = vpop.f32.mrb[0].mxu0
        %v2777 = vadd.f32 0.0, %v2776
        %v2778 = vpop.f32.mrb[0].mxu0
        %v2779 = vpop.f32.mrb[0].mxu0
        %v2780 = vadd.f32 0.0, %v2779
        %v2781 = vpop.f32.mrb[0].mxu0
        %2782 = vdwg.mxu0
        %v2784 = vsel %vm1182, %v2621, 0
        %v2787 = vsel %vm1182, %v2629, 0
        %2789 = vmatprep.subr.bf16.mxu0 0
        %2790 = vmatpush1.bf16.xpose.msra.mxu0 %v2787
        %2791 = vmatprep.subr.bf16.mxu0 0
        %2792 = vmatpush1.bf16.xpose.msra.mxu0 0
        %2793 = vmatprep.subr.bf16.mxu0 0
        %2794 = vmatpush1.bf16.xpose.msra.mxu0 0
        %2795 = vmatprep.subr.bf16.mxu0 0
        %2796 = vmatpush1.bf16.xpose.msra.mxu0 0
        %2797 = vmatprep.subr.bf16.mxu0 0
        %2798 = vmatpush1.bf16.xpose.msra.mxu0 0
        %2799 = vmatprep.subr.bf16.mxu0 0
        %2800 = vmatpush1.bf16.xpose.msra.mxu0 0
        %2801 = vmatprep.subr.bf16.mxu0 0
        %2802 = vmatpush1.bf16.xpose.msra.mxu0 0
        %2803 = vmatprep.subr.bf16.mxu0 0
        %2804 = vmatpush1.bf16.xpose.msra.mxu0 0
        %2805 = vmatprep.subr.bf16.mxu0 0
        %2806 = vmatpush1.bf16.xpose.msra.mxu0 0
        %2807 = vmatprep.subr.bf16.mxu0 0
        %2808 = vmatpush1.bf16.xpose.msra.mxu0 0
        %2809 = vmatprep.subr.bf16.mxu0 0
        %2810 = vmatpush1.bf16.xpose.msra.mxu0 0
        %2811 = vmatprep.subr.bf16.mxu0 0
        %2812 = vmatpush1.bf16.xpose.msra.mxu0 0
        %2813 = vmatprep.subr.bf16.mxu0 0
        %2814 = vmatpush1.bf16.xpose.msra.mxu0 0
        %2815 = vmatprep.subr.bf16.mxu0 0
        %2816 = vmatpush1.bf16.xpose.msra.mxu0 0
        %2817 = vmatprep.subr.bf16.mxu0 0
        %2818 = vmatpush1.bf16.xpose.msra.mxu0 0
        %2819 = vmatprep.subr.bf16.mxu0 0
        %2820 = vmatpush1.bf16.xpose.msra.mxu0 0
        %2821 = vmatprep.mubr.bf16.mxu0 0
        %2822 = vmatmul.mubr.bf16.gmra.mrb[0].mxu0 %v2784
        %v2823 = vpop.f32.mrb[0].mxu0
        %v2824 = vadd.f32 0.0, %v2823
        %v2825 = vpop.f32.mrb[0].mxu0
        %v2826 = vpop.f32.mrb[0].mxu0
        %v2827 = vadd.f32 0.0, %v2826
        %v2828 = vpop.f32.mrb[0].mxu0
        %2829 = vdwg.mxu0
        %v2831 = vsel %vm1182, %v2622, 0
        %v2834 = vsel %vm1182, %v2630, 0
        %2836 = vmatprep.subr.bf16.mxu0 0
        %2837 = vmatpush1.bf16.xpose.msra.mxu0 %v2834
        %2838 = vmatprep.subr.bf16.mxu0 0
        %2839 = vmatpush1.bf16.xpose.msra.mxu0 0
        %2840 = vmatprep.subr.bf16.mxu0 0
        %2841 = vmatpush1.bf16.xpose.msra.mxu0 0
        %2842 = vmatprep.subr.bf16.mxu0 0
        %2843 = vmatpush1.bf16.xpose.msra.mxu0 0
        %2844 = vmatprep.subr.bf16.mxu0 0
        %2845 = vmatpush1.bf16.xpose.msra.mxu0 0
        %2846 = vmatprep.subr.bf16.mxu0 0
        %2847 = vmatpush1.bf16.xpose.msra.mxu0 0
        %2848 = vmatprep.subr.bf16.mxu0 0
        %2849 = vmatpush1.bf16.xpose.msra.mxu0 0
        %2850 = vmatprep.subr.bf16.mxu0 0
        %2851 = vmatpush1.bf16.xpose.msra.mxu0 0
        %2852 = vmatprep.subr.bf16.mxu0 0
        %2853 = vmatpush1.bf16.xpose.msra.mxu0 0
        %2854 = vmatprep.subr.bf16.mxu0 0
        %2855 = vmatpush1.bf16.xpose.msra.mxu0 0
        %2856 = vmatprep.subr.bf16.mxu0 0
        %2857 = vmatpush1.bf16.xpose.msra.mxu0 0
        %2858 = vmatprep.subr.bf16.mxu0 0
        %2859 = vmatpush1.bf16.xpose.msra.mxu0 0
        %2860 = vmatprep.subr.bf16.mxu0 0
        %2861 = vmatpush1.bf16.xpose.msra.mxu0 0
        %2862 = vmatprep.subr.bf16.mxu0 0
        %2863 = vmatpush1.bf16.xpose.msra.mxu0 0
        %2864 = vmatprep.subr.bf16.mxu0 0
        %2865 = vmatpush1.bf16.xpose.msra.mxu0 0
        %2866 = vmatprep.subr.bf16.mxu0 0
        %2867 = vmatpush1.bf16.xpose.msra.mxu0 0
        %2868 = vmatprep.mubr.bf16.mxu0 0
        %2869 = vmatmul.mubr.bf16.gmra.mrb[0].mxu0 %v2831
        %v2870 = vpop.f32.mrb[0].mxu0
        %v2871 = vadd.f32 0.0, %v2870
        %v2872 = vpop.f32.mrb[0].mxu0
        %v2873 = vpop.f32.mrb[0].mxu0
        %v2874 = vadd.f32 0.0, %v2873
        %v2875 = vpop.f32.mrb[0].mxu0
        %2876 = vdwg.mxu0
        %v2878 = vsel %vm1182, %v2623, 0
        %v2881 = vsel %vm1182, %v2631, 0
        %2883 = vmatprep.subr.bf16.mxu0 0
        %2884 = vmatpush1.bf16.xpose.msra.mxu0 %v2881
        %2885 = vmatprep.subr.bf16.mxu0 0
        %2886 = vmatpush1.bf16.xpose.msra.mxu0 0
        %2887 = vmatprep.subr.bf16.mxu0 0
        %2888 = vmatpush1.bf16.xpose.msra.mxu0 0
        %2889 = vmatprep.subr.bf16.mxu0 0
        %2890 = vmatpush1.bf16.xpose.msra.mxu0 0
        %2891 = vmatprep.subr.bf16.mxu0 0
        %2892 = vmatpush1.bf16.xpose.msra.mxu0 0
        %2893 = vmatprep.subr.bf16.mxu0 0
        %2894 = vmatpush1.bf16.xpose.msra.mxu0 0
        %2895 = vmatprep.subr.bf16.mxu0 0
        %2896 = vmatpush1.bf16.xpose.msra.mxu0 0
        %2897 = vmatprep.subr.bf16.mxu0 0
        %2898 = vmatpush1.bf16.xpose.msra.mxu0 0
        %2899 = vmatprep.subr.bf16.mxu0 0
        %2900 = vmatpush1.bf16.xpose.msra.mxu0 0
        %2901 = vmatprep.subr.bf16.mxu0 0
        %2902 = vmatpush1.bf16.xpose.msra.mxu0 0
        %2903 = vmatprep.subr.bf16.mxu0 0
        %2904 = vmatpush1.bf16.xpose.msra.mxu0 0
        %2905 = vmatprep.subr.bf16.mxu0 0
        %2906 = vmatpush1.bf16.xpose.msra.mxu0 0
        %2907 = vmatprep.subr.bf16.mxu0 0
        %2908 = vmatpush1.bf16.xpose.msra.mxu0 0
        %2909 = vmatprep.subr.bf16.mxu0 0
        %2910 = vmatpush1.bf16.xpose.msra.mxu0 0
        %2911 = vmatprep.subr.bf16.mxu0 0
        %2912 = vmatpush1.bf16.xpose.msra.mxu0 0
        %2913 = vmatprep.subr.bf16.mxu0 0
        %2914 = vmatpush1.bf16.xpose.msra.mxu0 0
        %2915 = vmatprep.mubr.bf16.mxu0 0
        %2916 = vmatmul.mubr.bf16.gmra.mrb[0].mxu0 %v2878
        %v2917 = vpop.f32.mrb[0].mxu0
        %v2918 = vadd.f32 0.0, %v2917
        %v2919 = vpop.f32.mrb[0].mxu0
        %v2920 = vpop.f32.mrb[0].mxu0
        %v2921 = vadd.f32 0.0, %v2920
        %v2922 = vpop.f32.mrb[0].mxu0
        %2923 = vdwg.mxu0
        %v2925 = vsel %vm1182, %v2624, 0
        %v2928 = vsel %vm1182, %v2632, 0
        %2930 = vmatprep.subr.bf16.mxu0 0
        %2931 = vmatpush1.bf16.xpose.msra.mxu0 %v2928
        %2932 = vmatprep.subr.bf16.mxu0 0
        %2933 = vmatpush1.bf16.xpose.msra.mxu0 0
        %2934 = vmatprep.subr.bf16.mxu0 0
        %2935 = vmatpush1.bf16.xpose.msra.mxu0 0
        %2936 = vmatprep.subr.bf16.mxu0 0
        %2937 = vmatpush1.bf16.xpose.msra.mxu0 0
        %2938 = vmatprep.subr.bf16.mxu0 0
        %2939 = vmatpush1.bf16.xpose.msra.mxu0 0
        %2940 = vmatprep.subr.bf16.mxu0 0
        %2941 = vmatpush1.bf16.xpose.msra.mxu0 0
        %2942 = vmatprep.subr.bf16.mxu0 0
        %2943 = vmatpush1.bf16.xpose.msra.mxu0 0
        %2944 = vmatprep.subr.bf16.mxu0 0
        %2945 = vmatpush1.bf16.xpose.msra.mxu0 0
        %2946 = vmatprep.subr.bf16.mxu0 0
        %2947 = vmatpush1.bf16.xpose.msra.mxu0 0
        %2948 = vmatprep.subr.bf16.mxu0 0
        %2949 = vmatpush1.bf16.xpose.msra.mxu0 0
        %2950 = vmatprep.subr.bf16.mxu0 0
        %2951 = vmatpush1.bf16.xpose.msra.mxu0 0
        %2952 = vmatprep.subr.bf16.mxu0 0
        %2953 = vmatpush1.bf16.xpose.msra.mxu0 0
        %2954 = vmatprep.subr.bf16.mxu0 0
        %2955 = vmatpush1.bf16.xpose.msra.mxu0 0
        %2956 = vmatprep.subr.bf16.mxu0 0
        %2957 = vmatpush1.bf16.xpose.msra.mxu0 0
        %2958 = vmatprep.subr.bf16.mxu0 0
        %2959 = vmatpush1.bf16.xpose.msra.mxu0 0
        %2960 = vmatprep.subr.bf16.mxu0 0
        %2961 = vmatpush1.bf16.xpose.msra.mxu0 0
        %2962 = vmatprep.mubr.bf16.mxu0 0
        %2963 = vmatmul.mubr.bf16.gmra.mrb[0].mxu0 %v2925
        %v2964 = vpop.f32.mrb[0].mxu0
        %v2965 = vadd.f32 0.0, %v2964
        %v2966 = vpop.f32.mrb[0].mxu0
        %v2967 = vpop.f32.mrb[0].mxu0
        %v2968 = vadd.f32 0.0, %v2967
        %v2969 = vpop.f32.mrb[0].mxu0
        %2970 = vdwg.mxu0
        %v2972 = vsel %vm1182, %v2625, 0
        %v2975 = vsel %vm1182, %v2633, 0
        %2977 = vmatprep.subr.bf16.mxu0 0
        %2978 = vmatpush1.bf16.xpose.msra.mxu0 %v2975
        %2979 = vmatprep.subr.bf16.mxu0 0
        %2980 = vmatpush1.bf16.xpose.msra.mxu0 0
        %2981 = vmatprep.subr.bf16.mxu0 0
        %2982 = vmatpush1.bf16.xpose.msra.mxu0 0
        %2983 = vmatprep.subr.bf16.mxu0 0
        %2984 = vmatpush1.bf16.xpose.msra.mxu0 0
        %2985 = vmatprep.subr.bf16.mxu0 0
        %2986 = vmatpush1.bf16.xpose.msra.mxu0 0
        %2987 = vmatprep.subr.bf16.mxu0 0
        %2988 = vmatpush1.bf16.xpose.msra.mxu0 0
        %2989 = vmatprep.subr.bf16.mxu0 0
        %2990 = vmatpush1.bf16.xpose.msra.mxu0 0
        %2991 = vmatprep.subr.bf16.mxu0 0
        %2992 = vmatpush1.bf16.xpose.msra.mxu0 0
        %2993 = vmatprep.subr.bf16.mxu0 0
        %2994 = vmatpush1.bf16.xpose.msra.mxu0 0
        %2995 = vmatprep.subr.bf16.mxu0 0
        %2996 = vmatpush1.bf16.xpose.msra.mxu0 0
        %2997 = vmatprep.subr.bf16.mxu0 0
        %2998 = vmatpush1.bf16.xpose.msra.mxu0 0
        %2999 = vmatprep.subr.bf16.mxu0 0
        %3000 = vmatpush1.bf16.xpose.msra.mxu0 0
        %3001 = vmatprep.subr.bf16.mxu0 0
        %3002 = vmatpush1.bf16.xpose.msra.mxu0 0
        %3003 = vmatprep.subr.bf16.mxu0 0
        %3004 = vmatpush1.bf16.xpose.msra.mxu0 0
        %3005 = vmatprep.subr.bf16.mxu0 0
        %3006 = vmatpush1.bf16.xpose.msra.mxu0 0
        %3007 = vmatprep.subr.bf16.mxu0 0
        %3008 = vmatpush1.bf16.xpose.msra.mxu0 0
        %3009 = vmatprep.mubr.bf16.mxu0 0
        %3010 = vmatmul.mubr.bf16.gmra.mrb[0].mxu0 %v2972
        %v3011 = vpop.f32.mrb[0].mxu0
        %v3012 = vadd.f32 0.0, %v3011
        %v3013 = vpop.f32.mrb[0].mxu0
        %v3014 = vpop.f32.mrb[0].mxu0
        %v3015 = vadd.f32 0.0, %v3014
        %v3016 = vpop.f32.mrb[0].mxu0
        %3017 = vdwg.mxu0
        %v3018 = vsel %vm1559, %v2683, -inf
        %3019 = vmax.xlane.f32.xlu0 %v3018
        %v3020 = vpop.xlane.xlu0 %3019
        %v3021 = vsel %vm1559, %v2686, -inf
        %3022 = vmax.xlane.f32.xlu0 %v3021
        %v3023 = vpop.xlane.xlu0 %3022
        %v3024 = vsel %vm1559, %v2730, -inf
        %3025 = vmax.xlane.f32.xlu0 %v3024
        %v3026 = vpop.xlane.xlu0 %3025
        %v3027 = vsel %vm1559, %v2733, -inf
        %3028 = vmax.xlane.f32.xlu0 %v3027
        %v3029 = vpop.xlane.xlu0 %3028
        %v3030 = vsel %vm1559, %v2777, -inf
        %3031 = vmax.xlane.f32.xlu0 %v3030
        %v3032 = vpop.xlane.xlu0 %3031
        %v3033 = vsel %vm1559, %v2780, -inf
        %3034 = vmax.xlane.f32.xlu0 %v3033
        %v3035 = vpop.xlane.xlu0 %3034
        %v3036 = vsel %vm1559, %v2824, -inf
        %3037 = vmax.xlane.f32.xlu0 %v3036
        %v3038 = vpop.xlane.xlu0 %3037
        %v3039 = vsel %vm1559, %v2827, -inf
        %3040 = vmax.xlane.f32.xlu0 %v3039
        %v3041 = vpop.xlane.xlu0 %3040
        %v3042 = vsel %vm1559, %v2871, -inf
        %3043 = vmax.xlane.f32.xlu0 %v3042
        %v3044 = vpop.xlane.xlu0 %3043
        %v3045 = vsel %vm1559, %v2874, -inf
        %3046 = vmax.xlane.f32.xlu0 %v3045
        %v3047 = vpop.xlane.xlu0 %3046
        %v3048 = vsel %vm1559, %v2918, -inf
        %3049 = vmax.xlane.f32.xlu0 %v3048
        %v3050 = vpop.xlane.xlu0 %3049
        %v3051 = vsel %vm1559, %v2921, -inf
        %3052 = vmax.xlane.f32.xlu0 %v3051
        %v3053 = vpop.xlane.xlu0 %3052
        %v3054 = vsel %vm1559, %v2965, -inf
        %3055 = vmax.xlane.f32.xlu0 %v3054
        %v3056 = vpop.xlane.xlu0 %3055
        %v3057 = vsel %vm1559, %v2968, -inf
        %3058 = vmax.xlane.f32.xlu0 %v3057
        %v3059 = vpop.xlane.xlu0 %3058
        %v3060 = vsel %vm1559, %v3012, -inf
        %3061 = vmax.xlane.f32.xlu0 %v3060
        %v3062 = vpop.xlane.xlu0 %3061
        %v3063 = vsel %vm1559, %v3015, -inf
        %3064 = vmax.xlane.f32.xlu0 %v3063
        %v3065 = vpop.xlane.xlu0 %3064
        %v3066 = vsub.f32 %v2683, %v3020
        %v3067 = vsub.f32 %v2686, %v3023
        %v3068 = vsub.f32 %v2730, %v3026
        %v3069 = vsub.f32 %v2733, %v3029
        %v3070 = vsub.f32 %v2777, %v3032
        %v3071 = vsub.f32 %v2780, %v3035
        %v3072 = vsub.f32 %v2824, %v3038
        %v3073 = vsub.f32 %v2827, %v3041
        %v3074 = vsub.f32 %v2871, %v3044
        %v3075 = vsub.f32 %v2874, %v3047
        %v3076 = vsub.f32 %v2918, %v3050
        %v3077 = vsub.f32 %v2921, %v3053
        %v3078 = vsub.f32 %v2965, %v3056
        %v3079 = vsub.f32 %v2968, %v3059
        %v3080 = vsub.f32 %v3012, %v3062
        %v3081 = vsub.f32 %v3015, %v3065
        %v3082 = vmul.f32 %v3066, 1.442695
        %v3083 = vpow.pop %v3082
        %v3084 = vmul.f32 %v3067, 1.442695
        %v3085 = vpow.pop %v3084
        %v3086 = vmul.f32 %v3068, 1.442695
        %v3087 = vpow.pop %v3086
        %v3088 = vmul.f32 %v3069, 1.442695
        %v3089 = vpow.pop %v3088
        %v3090 = vmul.f32 %v3070, 1.442695
        %v3091 = vpow.pop %v3090
        %v3092 = vmul.f32 %v3071, 1.442695
        %v3093 = vpow.pop %v3092
        %v3094 = vmul.f32 %v3072, 1.442695
        %v3095 = vpow.pop %v3094
        %v3096 = vmul.f32 %v3073, 1.442695
        %v3097 = vpow.pop %v3096
        %v3098 = vmul.f32 %v3074, 1.442695
        %v3099 = vpow.pop %v3098
        %v3100 = vmul.f32 %v3075, 1.442695
        %v3101 = vpow.pop %v3100
        %v3102 = vmul.f32 %v3076, 1.442695
        %v3103 = vpow.pop %v3102
        %v3104 = vmul.f32 %v3077, 1.442695
        %v3105 = vpow.pop %v3104
        %v3106 = vmul.f32 %v3078, 1.442695
        %v3107 = vpow.pop %v3106
        %v3108 = vmul.f32 %v3079, 1.442695
        %v3109 = vpow.pop %v3108
        %v3110 = vmul.f32 %v3080, 1.442695
        %v3111 = vpow.pop %v3110
        %v3112 = vmul.f32 %v3081, 1.442695
        %v3113 = vpow.pop %v3112
        %v3114 = vsel %vm1559, %v3083, 0.0
        %3115 = vadd.xlane.f32.xlu0 %v3114
        %v3116 = vpop.xlane.xlu0 %3115
        %v3117 = vsel %vm1559, %v3085, 0.0
        %3118 = vadd.xlane.f32.xlu0 %v3117
        %v3119 = vpop.xlane.xlu0 %3118
        %v3120 = vsel %vm1559, %v3087, 0.0
        %3121 = vadd.xlane.f32.xlu0 %v3120
        %v3122 = vpop.xlane.xlu0 %3121
        %v3123 = vsel %vm1559, %v3089, 0.0
        %3124 = vadd.xlane.f32.xlu0 %v3123
        %v3125 = vpop.xlane.xlu0 %3124
        %v3126 = vsel %vm1559, %v3091, 0.0
        %3127 = vadd.xlane.f32.xlu0 %v3126
        %v3128 = vpop.xlane.xlu0 %3127
        %v3129 = vsel %vm1559, %v3093, 0.0
        %3130 = vadd.xlane.f32.xlu0 %v3129
        %v3131 = vpop.xlane.xlu0 %3130
        %v3132 = vsel %vm1559, %v3095, 0.0
        %3133 = vadd.xlane.f32.xlu0 %v3132
        %v3134 = vpop.xlane.xlu0 %3133
        %v3135 = vsel %vm1559, %v3097, 0.0
        %3136 = vadd.xlane.f32.xlu0 %v3135
        %v3137 = vpop.xlane.xlu0 %3136
        %v3138 = vsel %vm1559, %v3099, 0.0
        %3139 = vadd.xlane.f32.xlu0 %v3138
        %v3140 = vpop.xlane.xlu0 %3139
        %v3141 = vsel %vm1559, %v3101, 0.0
        %3142 = vadd.xlane.f32.xlu0 %v3141
        %v3143 = vpop.xlane.xlu0 %3142
        %v3144 = vsel %vm1559, %v3103, 0.0
        %3145 = vadd.xlane.f32.xlu0 %v3144
        %v3146 = vpop.xlane.xlu0 %3145
        %v3147 = vsel %vm1559, %v3105, 0.0
        %3148 = vadd.xlane.f32.xlu0 %v3147
        %v3149 = vpop.xlane.xlu0 %3148
        %v3150 = vsel %vm1559, %v3107, 0.0
        %3151 = vadd.xlane.f32.xlu0 %v3150
        %v3152 = vpop.xlane.xlu0 %3151
        %v3153 = vsel %vm1559, %v3109, 0.0
        %3154 = vadd.xlane.f32.xlu0 %v3153
        %v3155 = vpop.xlane.xlu0 %3154
        %v3156 = vsel %vm1559, %v3111, 0.0
        %3157 = vadd.xlane.f32.xlu0 %v3156
        %v3158 = vpop.xlane.xlu0 %3157
        %v3159 = vsel %vm1559, %v3113, 0.0
        %3160 = vadd.xlane.f32.xlu0 %v3159
        %v3161 = vpop.xlane.xlu0 %3160
        %v3162 = vrcp.pop %v3116
        %v3163 = vrcp.pop %v3119
        %v3164 = vrcp.pop %v3122
        %v3165 = vrcp.pop %v3125
        %v3166 = vrcp.pop %v3128
        %v3167 = vrcp.pop %v3131
        %v3168 = vrcp.pop %v3134
        %v3169 = vrcp.pop %v3137
        %v3170 = vrcp.pop %v3140
        %v3171 = vrcp.pop %v3143
        %v3172 = vrcp.pop %v3146
        %v3173 = vrcp.pop %v3149
        %v3174 = vrcp.pop %v3152
        %v3175 = vrcp.pop %v3155
        %v3176 = vrcp.pop %v3158
        %v3177 = vrcp.pop %v3161
        %v3178 = vmul.f32 %v3083, %v3162
        %v3179 = vmul.f32 %v3085, %v3163
        %v3180 = vmul.f32 %v3087, %v3164
        %v3181 = vmul.f32 %v3089, %v3165
        %v3182 = vmul.f32 %v3091, %v3166
        %v3183 = vmul.f32 %v3093, %v3167
        %v3184 = vmul.f32 %v3095, %v3168
        %v3185 = vmul.f32 %v3097, %v3169
        %v3186 = vmul.f32 %v3099, %v3170
        %v3187 = vmul.f32 %v3101, %v3171
        %v3188 = vmul.f32 %v3103, %v3172
        %v3189 = vmul.f32 %v3105, %v3173
        %v3190 = vmul.f32 %v3107, %v3174
        %v3191 = vmul.f32 %v3109, %v3175
        %v3192 = vmul.f32 %v3111, %v3176
        %v3193 = vmul.f32 %v3113, %v3177
        %v3194 = vpack.c.bf16 %v3179, %v3178
        %v3195 = vpack.c.bf16 %v3181, %v3180
        %v3196 = vpack.c.bf16 %v3183, %v3182
        %v3197 = vpack.c.bf16 %v3185, %v3184
        %v3198 = vpack.c.bf16 %v3187, %v3186
        %v3199 = vpack.c.bf16 %v3189, %v3188
        %v3200 = vpack.c.bf16 %v3191, %v3190
        %v3201 = vpack.c.bf16 %v3193, %v3192
        %v3203 = vsel %vm1559, %v3194, 0
        %3205 = vmatprep.subr.bf16.mxu0 0
        %3206 = vmatpush1.bf16.msra.mxu0 %v2634
        %3207 = vmatprep.subr.bf16.mxu0 0
        %3208 = vmatpush1.bf16.msra.mxu0 0
        %3209 = vmatprep.subr.bf16.mxu0 0
        %3210 = vmatpush1.bf16.msra.mxu0 0
        %3211 = vmatprep.subr.bf16.mxu0 0
        %3212 = vmatpush1.bf16.msra.mxu0 0
        %3213 = vmatprep.subr.bf16.mxu0 0
        %3214 = vmatpush1.bf16.msra.mxu0 0
        %3215 = vmatprep.subr.bf16.mxu0 0
        %3216 = vmatpush1.bf16.msra.mxu0 0
        %3217 = vmatprep.subr.bf16.mxu0 0
        %3218 = vmatpush1.bf16.msra.mxu0 0
        %3219 = vmatprep.subr.bf16.mxu0 0
        %3220 = vmatpush1.bf16.msra.mxu0 0
        %3221 = vmatprep.subr.bf16.mxu0 0
        %3222 = vmatpush1.bf16.msra.mxu0 0
        %3223 = vmatprep.subr.bf16.mxu0 0
        %3224 = vmatpush1.bf16.msra.mxu0 0
        %3225 = vmatprep.subr.bf16.mxu0 0
        %3226 = vmatpush1.bf16.msra.mxu0 0
        %3227 = vmatprep.subr.bf16.mxu0 0
        %3228 = vmatpush1.bf16.msra.mxu0 0
        %3229 = vmatprep.subr.bf16.mxu0 0
        %3230 = vmatpush1.bf16.msra.mxu0 0
        %3231 = vmatprep.subr.bf16.mxu0 0
        %3232 = vmatpush1.bf16.msra.mxu0 0
        %3233 = vmatprep.subr.bf16.mxu0 0
        %3234 = vmatpush1.bf16.msra.mxu0 0
        %3235 = vmatprep.subr.bf16.mxu0 0
        %3236 = vmatpush1.bf16.msra.mxu0 0
        %3237 = vmatprep.mubr.bf16.mxu0 0
        %3238 = vmatmul.mubr.bf16.gmra.mrb[0].mxu0 %v3203
        %v3239 = vpop.f32.mrb[0].mxu0
        %v3240 = vadd.f32 0.0, %v3239
        %v3241 = vpop.f32.mrb[0].mxu0
        %v3242 = vpop.f32.mrb[0].mxu0
        %v3243 = vadd.f32 0.0, %v3242
        %v3244 = vpop.f32.mrb[0].mxu0
        %3245 = vdwg.mxu0
        %v3247 = vsel %vm1559, %v3195, 0
        %3249 = vmatprep.subr.bf16.mxu0 0
        %3250 = vmatpush1.bf16.msra.mxu0 %v2635
        %3251 = vmatprep.subr.bf16.mxu0 0
        %3252 = vmatpush1.bf16.msra.mxu0 0
        %3253 = vmatprep.subr.bf16.mxu0 0
        %3254 = vmatpush1.bf16.msra.mxu0 0
        %3255 = vmatprep.subr.bf16.mxu0 0
        %3256 = vmatpush1.bf16.msra.mxu0 0
        %3257 = vmatprep.subr.bf16.mxu0 0
        %3258 = vmatpush1.bf16.msra.mxu0 0
        %3259 = vmatprep.subr.bf16.mxu0 0
        %3260 = vmatpush1.bf16.msra.mxu0 0
        %3261 = vmatprep.subr.bf16.mxu0 0
        %3262 = vmatpush1.bf16.msra.mxu0 0
        %3263 = vmatprep.subr.bf16.mxu0 0
        %3264 = vmatpush1.bf16.msra.mxu0 0
        %3265 = vmatprep.subr.bf16.mxu0 0
        %3266 = vmatpush1.bf16.msra.mxu0 0
        %3267 = vmatprep.subr.bf16.mxu0 0
        %3268 = vmatpush1.bf16.msra.mxu0 0
        %3269 = vmatprep.subr.bf16.mxu0 0
        %3270 = vmatpush1.bf16.msra.mxu0 0
        %3271 = vmatprep.subr.bf16.mxu0 0
        %3272 = vmatpush1.bf16.msra.mxu0 0
        %3273 = vmatprep.subr.bf16.mxu0 0
        %3274 = vmatpush1.bf16.msra.mxu0 0
        %3275 = vmatprep.subr.bf16.mxu0 0
        %3276 = vmatpush1.bf16.msra.mxu0 0
        %3277 = vmatprep.subr.bf16.mxu0 0
        %3278 = vmatpush1.bf16.msra.mxu0 0
        %3279 = vmatprep.subr.bf16.mxu0 0
        %3280 = vmatpush1.bf16.msra.mxu0 0
        %3281 = vmatprep.mubr.bf16.mxu0 0
        %3282 = vmatmul.mubr.bf16.gmra.mrb[0].mxu0 %v3247
        %v3283 = vpop.f32.mrb[0].mxu0
        %v3284 = vadd.f32 0.0, %v3283
        %v3285 = vpop.f32.mrb[0].mxu0
        %v3286 = vpop.f32.mrb[0].mxu0
        %v3287 = vadd.f32 0.0, %v3286
        %v3288 = vpop.f32.mrb[0].mxu0
        %3289 = vdwg.mxu0
        %v3291 = vsel %vm1559, %v3196, 0
        %3293 = vmatprep.subr.bf16.mxu0 0
        %3294 = vmatpush1.bf16.msra.mxu0 %v2636
        %3295 = vmatprep.subr.bf16.mxu0 0
        %3296 = vmatpush1.bf16.msra.mxu0 0
        %3297 = vmatprep.subr.bf16.mxu0 0
        %3298 = vmatpush1.bf16.msra.mxu0 0
        %3299 = vmatprep.subr.bf16.mxu0 0
        %3300 = vmatpush1.bf16.msra.mxu0 0
        %3301 = vmatprep.subr.bf16.mxu0 0
        %3302 = vmatpush1.bf16.msra.mxu0 0
        %3303 = vmatprep.subr.bf16.mxu0 0
        %3304 = vmatpush1.bf16.msra.mxu0 0
        %3305 = vmatprep.subr.bf16.mxu0 0
        %3306 = vmatpush1.bf16.msra.mxu0 0
        %3307 = vmatprep.subr.bf16.mxu0 0
        %3308 = vmatpush1.bf16.msra.mxu0 0
        %3309 = vmatprep.subr.bf16.mxu0 0
        %3310 = vmatpush1.bf16.msra.mxu0 0
        %3311 = vmatprep.subr.bf16.mxu0 0
        %3312 = vmatpush1.bf16.msra.mxu0 0
        %3313 = vmatprep.subr.bf16.mxu0 0
        %3314 = vmatpush1.bf16.msra.mxu0 0
        %3315 = vmatprep.subr.bf16.mxu0 0
        %3316 = vmatpush1.bf16.msra.mxu0 0
        %3317 = vmatprep.subr.bf16.mxu0 0
        %3318 = vmatpush1.bf16.msra.mxu0 0
        %3319 = vmatprep.subr.bf16.mxu0 0
        %3320 = vmatpush1.bf16.msra.mxu0 0
        %3321 = vmatprep.subr.bf16.mxu0 0
        %3322 = vmatpush1.bf16.msra.mxu0 0
        %3323 = vmatprep.subr.bf16.mxu0 0
        %3324 = vmatpush1.bf16.msra.mxu0 0
        %3325 = vmatprep.mubr.bf16.mxu0 0
        %3326 = vmatmul.mubr.bf16.gmra.mrb[0].mxu0 %v3291
        %v3327 = vpop.f32.mrb[0].mxu0
        %v3328 = vadd.f32 0.0, %v3327
        %v3329 = vpop.f32.mrb[0].mxu0
        %v3330 = vpop.f32.mrb[0].mxu0
        %v3331 = vadd.f32 0.0, %v3330
        %v3332 = vpop.f32.mrb[0].mxu0
        %3333 = vdwg.mxu0
        %v3335 = vsel %vm1559, %v3197, 0
        %3337 = vmatprep.subr.bf16.mxu0 0
        %3338 = vmatpush1.bf16.msra.mxu0 %v2637
        %3339 = vmatprep.subr.bf16.mxu0 0
        %3340 = vmatpush1.bf16.msra.mxu0 0
        %3341 = vmatprep.subr.bf16.mxu0 0
        %3342 = vmatpush1.bf16.msra.mxu0 0
        %3343 = vmatprep.subr.bf16.mxu0 0
        %3344 = vmatpush1.bf16.msra.mxu0 0
        %3345 = vmatprep.subr.bf16.mxu0 0
        %3346 = vmatpush1.bf16.msra.mxu0 0
        %3347 = vmatprep.subr.bf16.mxu0 0
        %3348 = vmatpush1.bf16.msra.mxu0 0
        %3349 = vmatprep.subr.bf16.mxu0 0
        %3350 = vmatpush1.bf16.msra.mxu0 0
        %3351 = vmatprep.subr.bf16.mxu0 0
        %3352 = vmatpush1.bf16.msra.mxu0 0
        %3353 = vmatprep.subr.bf16.mxu0 0
        %3354 = vmatpush1.bf16.msra.mxu0 0
        %3355 = vmatprep.subr.bf16.mxu0 0
        %3356 = vmatpush1.bf16.msra.mxu0 0
        %3357 = vmatprep.subr.bf16.mxu0 0
        %3358 = vmatpush1.bf16.msra.mxu0 0
        %3359 = vmatprep.subr.bf16.mxu0 0
        %3360 = vmatpush1.bf16.msra.mxu0 0
        %3361 = vmatprep.subr.bf16.mxu0 0
        %3362 = vmatpush1.bf16.msra.mxu0 0
        %3363 = vmatprep.subr.bf16.mxu0 0
        %3364 = vmatpush1.bf16.msra.mxu0 0
        %3365 = vmatprep.subr.bf16.mxu0 0
        %3366 = vmatpush1.bf16.msra.mxu0 0
        %3367 = vmatprep.subr.bf16.mxu0 0
        %3368 = vmatpush1.bf16.msra.mxu0 0
        %3369 = vmatprep.mubr.bf16.mxu0 0
        %3370 = vmatmul.mubr.bf16.gmra.mrb[0].mxu0 %v3335
        %v3371 = vpop.f32.mrb[0].mxu0
        %v3372 = vadd.f32 0.0, %v3371
        %v3373 = vpop.f32.mrb[0].mxu0
        %v3374 = vpop.f32.mrb[0].mxu0
        %v3375 = vadd.f32 0.0, %v3374
        %v3376 = vpop.f32.mrb[0].mxu0
        %3377 = vdwg.mxu0
        %v3379 = vsel %vm1559, %v3198, 0
        %3381 = vmatprep.subr.bf16.mxu0 0
        %3382 = vmatpush1.bf16.msra.mxu0 %v2638
        %3383 = vmatprep.subr.bf16.mxu0 0
        %3384 = vmatpush1.bf16.msra.mxu0 0
        %3385 = vmatprep.subr.bf16.mxu0 0
        %3386 = vmatpush1.bf16.msra.mxu0 0
        %3387 = vmatprep.subr.bf16.mxu0 0
        %3388 = vmatpush1.bf16.msra.mxu0 0
        %3389 = vmatprep.subr.bf16.mxu0 0
        %3390 = vmatpush1.bf16.msra.mxu0 0
        %3391 = vmatprep.subr.bf16.mxu0 0
        %3392 = vmatpush1.bf16.msra.mxu0 0
        %3393 = vmatprep.subr.bf16.mxu0 0
        %3394 = vmatpush1.bf16.msra.mxu0 0
        %3395 = vmatprep.subr.bf16.mxu0 0
        %3396 = vmatpush1.bf16.msra.mxu0 0
        %3397 = vmatprep.subr.bf16.mxu0 0
        %3398 = vmatpush1.bf16.msra.mxu0 0
        %3399 = vmatprep.subr.bf16.mxu0 0
        %3400 = vmatpush1.bf16.msra.mxu0 0
        %3401 = vmatprep.subr.bf16.mxu0 0
        %3402 = vmatpush1.bf16.msra.mxu0 0
        %3403 = vmatprep.subr.bf16.mxu0 0
        %3404 = vmatpush1.bf16.msra.mxu0 0
        %3405 = vmatprep.subr.bf16.mxu0 0
        %3406 = vmatpush1.bf16.msra.mxu0 0
        %3407 = vmatprep.subr.bf16.mxu0 0
        %3408 = vmatpush1.bf16.msra.mxu0 0
        %3409 = vmatprep.subr.bf16.mxu0 0
        %3410 = vmatpush1.bf16.msra.mxu0 0
        %3411 = vmatprep.subr.bf16.mxu0 0
        %3412 = vmatpush1.bf16.msra.mxu0 0
        %3413 = vmatprep.mubr.bf16.mxu0 0
        %3414 = vmatmul.mubr.bf16.gmra.mrb[0].mxu0 %v3379
        %v3415 = vpop.f32.mrb[0].mxu0
        %v3416 = vadd.f32 0.0, %v3415
        %v3417 = vpop.f32.mrb[0].mxu0
        %v3418 = vpop.f32.mrb[0].mxu0
        %v3419 = vadd.f32 0.0, %v3418
        %v3420 = vpop.f32.mrb[0].mxu0
        %3421 = vdwg.mxu0
        %v3423 = vsel %vm1559, %v3199, 0
        %3425 = vmatprep.subr.bf16.mxu0 0
        %3426 = vmatpush1.bf16.msra.mxu0 %v2639
        %3427 = vmatprep.subr.bf16.mxu0 0
        %3428 = vmatpush1.bf16.msra.mxu0 0
        %3429 = vmatprep.subr.bf16.mxu0 0
        %3430 = vmatpush1.bf16.msra.mxu0 0
        %3431 = vmatprep.subr.bf16.mxu0 0
        %3432 = vmatpush1.bf16.msra.mxu0 0
        %3433 = vmatprep.subr.bf16.mxu0 0
        %3434 = vmatpush1.bf16.msra.mxu0 0
        %3435 = vmatprep.subr.bf16.mxu0 0
        %3436 = vmatpush1.bf16.msra.mxu0 0
        %3437 = vmatprep.subr.bf16.mxu0 0
        %3438 = vmatpush1.bf16.msra.mxu0 0
        %3439 = vmatprep.subr.bf16.mxu0 0
        %3440 = vmatpush1.bf16.msra.mxu0 0
        %3441 = vmatprep.subr.bf16.mxu0 0
        %3442 = vmatpush1.bf16.msra.mxu0 0
        %3443 = vmatprep.subr.bf16.mxu0 0
        %3444 = vmatpush1.bf16.msra.mxu0 0
        %3445 = vmatprep.subr.bf16.mxu0 0
        %3446 = vmatpush1.bf16.msra.mxu0 0
        %3447 = vmatprep.subr.bf16.mxu0 0
        %3448 = vmatpush1.bf16.msra.mxu0 0
        %3449 = vmatprep.subr.bf16.mxu0 0
        %3450 = vmatpush1.bf16.msra.mxu0 0
        %3451 = vmatprep.subr.bf16.mxu0 0
        %3452 = vmatpush1.bf16.msra.mxu0 0
        %3453 = vmatprep.subr.bf16.mxu0 0
        %3454 = vmatpush1.bf16.msra.mxu0 0
        %3455 = vmatprep.subr.bf16.mxu0 0
        %3456 = vmatpush1.bf16.msra.mxu0 0
        %3457 = vmatprep.mubr.bf16.mxu0 0
        %3458 = vmatmul.mubr.bf16.gmra.mrb[0].mxu0 %v3423
        %v3459 = vpop.f32.mrb[0].mxu0
        %v3460 = vadd.f32 0.0, %v3459
        %v3461 = vpop.f32.mrb[0].mxu0
        %v3462 = vpop.f32.mrb[0].mxu0
        %v3463 = vadd.f32 0.0, %v3462
        %v3464 = vpop.f32.mrb[0].mxu0
        %3465 = vdwg.mxu0
        %v3467 = vsel %vm1559, %v3200, 0
        %3469 = vmatprep.subr.bf16.mxu0 0
        %3470 = vmatpush1.bf16.msra.mxu0 %v2640
        %3471 = vmatprep.subr.bf16.mxu0 0
        %3472 = vmatpush1.bf16.msra.mxu0 0
        %3473 = vmatprep.subr.bf16.mxu0 0
        %3474 = vmatpush1.bf16.msra.mxu0 0
        %3475 = vmatprep.subr.bf16.mxu0 0
        %3476 = vmatpush1.bf16.msra.mxu0 0
        %3477 = vmatprep.subr.bf16.mxu0 0
        %3478 = vmatpush1.bf16.msra.mxu0 0
        %3479 = vmatprep.subr.bf16.mxu0 0
        %3480 = vmatpush1.bf16.msra.mxu0 0
        %3481 = vmatprep.subr.bf16.mxu0 0
        %3482 = vmatpush1.bf16.msra.mxu0 0
        %3483 = vmatprep.subr.bf16.mxu0 0
        %3484 = vmatpush1.bf16.msra.mxu0 0
        %3485 = vmatprep.subr.bf16.mxu0 0
        %3486 = vmatpush1.bf16.msra.mxu0 0
        %3487 = vmatprep.subr.bf16.mxu0 0
        %3488 = vmatpush1.bf16.msra.mxu0 0
        %3489 = vmatprep.subr.bf16.mxu0 0
        %3490 = vmatpush1.bf16.msra.mxu0 0
        %3491 = vmatprep.subr.bf16.mxu0 0
        %3492 = vmatpush1.bf16.msra.mxu0 0
        %3493 = vmatprep.subr.bf16.mxu0 0
        %3494 = vmatpush1.bf16.msra.mxu0 0
        %3495 = vmatprep.subr.bf16.mxu0 0
        %3496 = vmatpush1.bf16.msra.mxu0 0
        %3497 = vmatprep.subr.bf16.mxu0 0
        %3498 = vmatpush1.bf16.msra.mxu0 0
        %3499 = vmatprep.subr.bf16.mxu0 0
        %3500 = vmatpush1.bf16.msra.mxu0 0
        %3501 = vmatprep.mubr.bf16.mxu0 0
        %3502 = vmatmul.mubr.bf16.gmra.mrb[0].mxu0 %v3467
        %v3503 = vpop.f32.mrb[0].mxu0
        %v3504 = vadd.f32 0.0, %v3503
        %v3505 = vpop.f32.mrb[0].mxu0
        %v3506 = vpop.f32.mrb[0].mxu0
        %v3507 = vadd.f32 0.0, %v3506
        %v3508 = vpop.f32.mrb[0].mxu0
        %3509 = vdwg.mxu0
        %v3511 = vsel %vm1559, %v3201, 0
        %3513 = vmatprep.subr.bf16.mxu0 0
        %3514 = vmatpush1.bf16.msra.mxu0 %v2641
        %3515 = vmatprep.subr.bf16.mxu0 0
        %3516 = vmatpush1.bf16.msra.mxu0 0
        %3517 = vmatprep.subr.bf16.mxu0 0
        %3518 = vmatpush1.bf16.msra.mxu0 0
        %3519 = vmatprep.subr.bf16.mxu0 0
        %3520 = vmatpush1.bf16.msra.mxu0 0
        %3521 = vmatprep.subr.bf16.mxu0 0
        %3522 = vmatpush1.bf16.msra.mxu0 0
        %3523 = vmatprep.subr.bf16.mxu0 0
        %3524 = vmatpush1.bf16.msra.mxu0 0
        %3525 = vmatprep.subr.bf16.mxu0 0
        %3526 = vmatpush1.bf16.msra.mxu0 0
        %3527 = vmatprep.subr.bf16.mxu0 0
        %3528 = vmatpush1.bf16.msra.mxu0 0
        %3529 = vmatprep.subr.bf16.mxu0 0
        %3530 = vmatpush1.bf16.msra.mxu0 0
        %3531 = vmatprep.subr.bf16.mxu0 0
        %3532 = vmatpush1.bf16.msra.mxu0 0
        %3533 = vmatprep.subr.bf16.mxu0 0
        %3534 = vmatpush1.bf16.msra.mxu0 0
        %3535 = vmatprep.subr.bf16.mxu0 0
        %3536 = vmatpush1.bf16.msra.mxu0 0
        %3537 = vmatprep.subr.bf16.mxu0 0
        %3538 = vmatpush1.bf16.msra.mxu0 0
        %3539 = vmatprep.subr.bf16.mxu0 0
        %3540 = vmatpush1.bf16.msra.mxu0 0
        %3541 = vmatprep.subr.bf16.mxu0 0
        %3542 = vmatpush1.bf16.msra.mxu0 0
        %3543 = vmatprep.subr.bf16.mxu0 0
        %3544 = vmatpush1.bf16.msra.mxu0 0
        %3545 = vmatprep.mubr.bf16.mxu0 0
        %3546 = vmatmul.mubr.bf16.gmra.mrb[0].mxu0 %v3511
        %v3547 = vpop.f32.mrb[0].mxu0
        %v3548 = vadd.f32 0.0, %v3547
        %v3549 = vpop.f32.mrb[0].mxu0
        %v3550 = vpop.f32.mrb[0].mxu0
        %v3551 = vadd.f32 0.0, %v3550
        %v3552 = vpop.f32.mrb[0].mxu0
        %3553 = vdwg.mxu0
        %v3554 = vpack.c.bf16 %v3243, %v3240
        %v3555 = vpack.c.bf16 %v3287, %v3284
        %v3556 = vpack.c.bf16 %v3331, %v3328
        %v3557 = vpack.c.bf16 %v3375, %v3372
        %v3558 = vpack.c.bf16 %v3419, %v3416
        %v3559 = vpack.c.bf16 %v3463, %v3460
        %v3560 = vpack.c.bf16 %v3507, %v3504
        %v3561 = vpack.c.bf16 %v3551, %v3548
        %s3562 = scalar_lea.vmem %s8, 16
        %v3563 = vld [vmem:[%s3562] sm:$0xf]
        %v3564 = vld [vmem:[%s3562 + $0x4] sm:$0xf]
        %v3565 = vld [vmem:[%s3562 + $0x8] sm:$0xf]
        %v3566 = vld [vmem:[%s3562 + $0xc] sm:$0xf]
        %v3571 = vunpack.c.l.b16 %v3563
        %v3572 = vunpack.c.l.b16 %v3564
        %v3573 = vunpack.c.l.b16 %v3565
        %v3574 = vunpack.c.l.b16 %v3566
        %v3575 = vpack.c.b16 %v3572, %v3571
        %v3576 = vpack.c.b16 %v3574, %v3573
        %v3580 = vsel %vm1182, %v3554, 0
        %v3583 = vsel %vm1182, %v3555, 0
        %v3586 = vsel %vm1182, %v3556, 0
        %v3589 = vsel %vm1182, %v3557, 0
        %v3592 = vsel %vm1182, %v3558, 0
        %v3595 = vsel %vm1182, %v3559, 0
        %v3598 = vsel %vm1182, %v3560, 0
        %v3601 = vsel %vm1182, %v3561, 0
        %3603 = vmatprep.subr.bf16.mxu0 0
        %3604 = vmatpush1.bf16.msra.mxu0 %v3575
        %3605 = vmatprep.subr.bf16.mxu0 0
        %3606 = vmatpush1.bf16.msra.mxu0 %v3576
        %3607 = vmatprep.subr.bf16.mxu0 0
        %3608 = vmatpush1.bf16.msra.mxu0 0
        %3609 = vmatprep.subr.bf16.mxu0 0
        %3610 = vmatpush1.bf16.msra.mxu0 0
        %3611 = vmatprep.subr.bf16.mxu0 0
        %3612 = vmatpush1.bf16.msra.mxu0 0
        %3613 = vmatprep.subr.bf16.mxu0 0
        %3614 = vmatpush1.bf16.msra.mxu0 0
        %3615 = vmatprep.subr.bf16.mxu0 0
        %3616 = vmatpush1.bf16.msra.mxu0 0
        %3617 = vmatprep.subr.bf16.mxu0 0
        %3618 = vmatpush1.bf16.msra.mxu0 0
        %3619 = vmatprep.subr.bf16.mxu0 0
        %3620 = vmatpush1.bf16.msra.mxu0 0
        %3621 = vmatprep.subr.bf16.mxu0 0
        %3622 = vmatpush1.bf16.msra.mxu0 0
        %3623 = vmatprep.subr.bf16.mxu0 0
        %3624 = vmatpush1.bf16.msra.mxu0 0
        %3625 = vmatprep.subr.bf16.mxu0 0
        %3626 = vmatpush1.bf16.msra.mxu0 0
        %3627 = vmatprep.subr.bf16.mxu0 0
        %3628 = vmatpush1.bf16.msra.mxu0 0
        %3629 = vmatprep.subr.bf16.mxu0 0
        %3630 = vmatpush1.bf16.msra.mxu0 0
        %3631 = vmatprep.subr.bf16.mxu0 0
        %3632 = vmatpush1.bf16.msra.mxu0 0
        %3633 = vmatprep.subr.bf16.mxu0 0
        %3634 = vmatpush1.bf16.msra.mxu0 0
        %3635 = vmatprep.mubr.bf16.mxu0 0
        %3636 = vmatmul.mubr.bf16.gmra.mrb[0].mxu0 %v3580
        %v3637 = vpop.f32.mrb[0].mxu0
        %v3638 = vadd.f32 0.0, %v3637
        %v3639 = vpop.f32.mrb[0].mxu0
        %v3640 = vpop.f32.mrb[0].mxu0
        %v3641 = vadd.f32 0.0, %v3640
        %v3642 = vpop.f32.mrb[0].mxu0
        %3643 = vmatprep.mubr.bf16.mxu0 0
        %3644 = vmatmul.mubr.bf16.gmra.mrb[0].mxu0 %v3583
        %v3645 = vpop.f32.mrb[0].mxu0
        %v3646 = vadd.f32 0.0, %v3645
        %v3647 = vpop.f32.mrb[0].mxu0
        %v3648 = vpop.f32.mrb[0].mxu0
        %v3649 = vadd.f32 0.0, %v3648
        %v3650 = vpop.f32.mrb[0].mxu0
        %3651 = vmatprep.mubr.bf16.mxu0 0
        %3652 = vmatmul.mubr.bf16.gmra.mrb[0].mxu0 %v3586
        %v3653 = vpop.f32.mrb[0].mxu0
        %v3654 = vadd.f32 0.0, %v3653
        %v3655 = vpop.f32.mrb[0].mxu0
        %v3656 = vpop.f32.mrb[0].mxu0
        %v3657 = vadd.f32 0.0, %v3656
        %v3658 = vpop.f32.mrb[0].mxu0
        %3659 = vmatprep.mubr.bf16.mxu0 0
        %3660 = vmatmul.mubr.bf16.gmra.mrb[0].mxu0 %v3589
        %v3661 = vpop.f32.mrb[0].mxu0
        %v3662 = vadd.f32 0.0, %v3661
        %v3663 = vpop.f32.mrb[0].mxu0
        %v3664 = vpop.f32.mrb[0].mxu0
        %v3665 = vadd.f32 0.0, %v3664
        %v3666 = vpop.f32.mrb[0].mxu0
        %3667 = vmatprep.mubr.bf16.mxu0 0
        %3668 = vmatmul.mubr.bf16.gmra.mrb[0].mxu0 %v3592
        %v3669 = vpop.f32.mrb[0].mxu0
        %v3670 = vadd.f32 0.0, %v3669
        %v3671 = vpop.f32.mrb[0].mxu0
        %v3672 = vpop.f32.mrb[0].mxu0
        %v3673 = vadd.f32 0.0, %v3672
        %v3674 = vpop.f32.mrb[0].mxu0
        %3675 = vmatprep.mubr.bf16.mxu0 0
        %3676 = vmatmul.mubr.bf16.gmra.mrb[0].mxu0 %v3595
        %v3677 = vpop.f32.mrb[0].mxu0
        %v3678 = vadd.f32 0.0, %v3677
        %v3679 = vpop.f32.mrb[0].mxu0
        %v3680 = vpop.f32.mrb[0].mxu0
        %v3681 = vadd.f32 0.0, %v3680
        %v3682 = vpop.f32.mrb[0].mxu0
        %3683 = vmatprep.mubr.bf16.mxu0 0
        %3684 = vmatmul.mubr.bf16.gmra.mrb[0].mxu0 %v3598
        %v3685 = vpop.f32.mrb[0].mxu0
        %v3686 = vadd.f32 0.0, %v3685
        %v3687 = vpop.f32.mrb[0].mxu0
        %v3688 = vpop.f32.mrb[0].mxu0
        %v3689 = vadd.f32 0.0, %v3688
        %v3690 = vpop.f32.mrb[0].mxu0
        %3691 = vmatprep.mubr.bf16.mxu0 0
        %3692 = vmatmul.mubr.bf16.gmra.mrb[0].mxu0 %v3601
        %v3693 = vpop.f32.mrb[0].mxu0
        %v3694 = vadd.f32 0.0, %v3693
        %v3695 = vpop.f32.mrb[0].mxu0
        %v3696 = vpop.f32.mrb[0].mxu0
        %v3697 = vadd.f32 0.0, %v3696
        %v3698 = vpop.f32.mrb[0].mxu0
        %3699 = vdwg.mxu0
        %v3704 = vunpack.c.l.b16 %v2104
        %v3705 = vunpack.c.l.b16 %v2105
        %v3706 = vunpack.c.l.b16 %v2106
        %v3707 = vunpack.c.l.b16 %v2107
        %v3708 = vpack.c.b16 %v3705, %v3704
        %v3709 = vpack.c.b16 %v3707, %v3706
        %v3713 = vsel %vm1182, %v2096, 0
        %v3716 = vsel %vm1182, %v2097, 0
        %v3719 = vsel %vm1182, %v2098, 0
        %v3722 = vsel %vm1182, %v2099, 0
        %v3725 = vsel %vm1182, %v2100, 0
        %v3728 = vsel %vm1182, %v2101, 0
        %v3731 = vsel %vm1182, %v2102, 0
        %v3734 = vsel %vm1182, %v2103, 0
        %3736 = vmatprep.subr.bf16.mxu0 0
        %3737 = vmatpush1.bf16.msra.mxu0 %v3708
        %3738 = vmatprep.subr.bf16.mxu0 0
        %3739 = vmatpush1.bf16.msra.mxu0 %v3709
        %3740 = vmatprep.subr.bf16.mxu0 0
        %3741 = vmatpush1.bf16.msra.mxu0 0
        %3742 = vmatprep.subr.bf16.mxu0 0
        %3743 = vmatpush1.bf16.msra.mxu0 0
        %3744 = vmatprep.subr.bf16.mxu0 0
        %3745 = vmatpush1.bf16.msra.mxu0 0
        %3746 = vmatprep.subr.bf16.mxu0 0
        %3747 = vmatpush1.bf16.msra.mxu0 0
        %3748 = vmatprep.subr.bf16.mxu0 0
        %3749 = vmatpush1.bf16.msra.mxu0 0
        %3750 = vmatprep.subr.bf16.mxu0 0
        %3751 = vmatpush1.bf16.msra.mxu0 0
        %3752 = vmatprep.subr.bf16.mxu0 0
        %3753 = vmatpush1.bf16.msra.mxu0 0
        %3754 = vmatprep.subr.bf16.mxu0 0
        %3755 = vmatpush1.bf16.msra.mxu0 0
        %3756 = vmatprep.subr.bf16.mxu0 0
        %3757 = vmatpush1.bf16.msra.mxu0 0
        %3758 = vmatprep.subr.bf16.mxu0 0
        %3759 = vmatpush1.bf16.msra.mxu0 0
        %3760 = vmatprep.subr.bf16.mxu0 0
        %3761 = vmatpush1.bf16.msra.mxu0 0
        %3762 = vmatprep.subr.bf16.mxu0 0
        %3763 = vmatpush1.bf16.msra.mxu0 0
        %3764 = vmatprep.subr.bf16.mxu0 0
        %3765 = vmatpush1.bf16.msra.mxu0 0
        %3766 = vmatprep.subr.bf16.mxu0 0
        %3767 = vmatpush1.bf16.msra.mxu0 0
        %3768 = vmatprep.mubr.bf16.mxu0 0
        %3769 = vmatmul.mubr.bf16.gmra.mrb[0].mxu0 %v3713
        %v3770 = vpop.f32.mrb[0].mxu0
        %v3771 = vadd.f32 %v3638, %v3770
        %v3772 = vpop.f32.mrb[0].mxu0
        %v3773 = vpop.f32.mrb[0].mxu0
        %v3774 = vadd.f32 %v3641, %v3773
        %v3775 = vpop.f32.mrb[0].mxu0
        %3776 = vmatprep.mubr.bf16.mxu0 0
        %3777 = vmatmul.mubr.bf16.gmra.mrb[0].mxu0 %v3716
        %v3778 = vpop.f32.mrb[0].mxu0
        %v3779 = vadd.f32 %v3646, %v3778
        %v3780 = vpop.f32.mrb[0].mxu0
        %v3781 = vpop.f32.mrb[0].mxu0
        %v3782 = vadd.f32 %v3649, %v3781
        %v3783 = vpop.f32.mrb[0].mxu0
        %3784 = vmatprep.mubr.bf16.mxu0 0
        %3785 = vmatmul.mubr.bf16.gmra.mrb[0].mxu0 %v3719
        %v3786 = vpop.f32.mrb[0].mxu0
        %v3787 = vadd.f32 %v3654, %v3786
        %v3788 = vpop.f32.mrb[0].mxu0
        %v3789 = vpop.f32.mrb[0].mxu0
        %v3790 = vadd.f32 %v3657, %v3789
        %v3791 = vpop.f32.mrb[0].mxu0
        %3792 = vmatprep.mubr.bf16.mxu0 0
        %3793 = vmatmul.mubr.bf16.gmra.mrb[0].mxu0 %v3722
        %v3794 = vpop.f32.mrb[0].mxu0
        %v3795 = vadd.f32 %v3662, %v3794
        %v3796 = vpop.f32.mrb[0].mxu0
        %v3797 = vpop.f32.mrb[0].mxu0
        %v3798 = vadd.f32 %v3665, %v3797
        %v3799 = vpop.f32.mrb[0].mxu0
        %3800 = vmatprep.mubr.bf16.mxu0 0
        %3801 = vmatmul.mubr.bf16.gmra.mrb[0].mxu0 %v3725
        %v3802 = vpop.f32.mrb[0].mxu0
        %v3803 = vadd.f32 %v3670, %v3802
        %v3804 = vpop.f32.mrb[0].mxu0
        %v3805 = vpop.f32.mrb[0].mxu0
        %v3806 = vadd.f32 %v3673, %v3805
        %v3807 = vpop.f32.mrb[0].mxu0
        %3808 = vmatprep.mubr.bf16.mxu0 0
        %3809 = vmatmul.mubr.bf16.gmra.mrb[0].mxu0 %v3728
        %v3810 = vpop.f32.mrb[0].mxu0
        %v3811 = vadd.f32 %v3678, %v3810
        %v3812 = vpop.f32.mrb[0].mxu0
        %v3813 = vpop.f32.mrb[0].mxu0
        %v3814 = vadd.f32 %v3681, %v3813
        %v3815 = vpop.f32.mrb[0].mxu0
        %3816 = vmatprep.mubr.bf16.mxu0 0
        %3817 = vmatmul.mubr.bf16.gmra.mrb[0].mxu0 %v3731
        %v3818 = vpop.f32.mrb[0].mxu0
        %v3819 = vadd.f32 %v3686, %v3818
        %v3820 = vpop.f32.mrb[0].mxu0
        %v3821 = vpop.f32.mrb[0].mxu0
        %v3822 = vadd.f32 %v3689, %v3821
        %v3823 = vpop.f32.mrb[0].mxu0
        %3824 = vmatprep.mubr.bf16.mxu0 0
        %3825 = vmatmul.mubr.bf16.gmra.mrb[0].mxu0 %v3734
        %v3826 = vpop.f32.mrb[0].mxu0
        %v3827 = vadd.f32 %v3694, %v3826
        %v3828 = vpop.f32.mrb[0].mxu0
        %v3829 = vpop.f32.mrb[0].mxu0
        %v3830 = vadd.f32 %v3697, %v3829
        %v3831 = vpop.f32.mrb[0].mxu0
        %3832 = vdwg.mxu0
        %s3833 = scalar_lea.vmem %s2, 128
        %v3834 = vld [vmem:[%s3833] sm:$0xf]
        %v3835 = vld [vmem:[%s3833 + $0x4] sm:$0xf]
        %v3836 = vld [vmem:[%s3833 + $0x8] sm:$0xf]
        %v3837 = vld [vmem:[%s3833 + $0xc] sm:$0xf]
        %v3838 = vld [vmem:[%s3833 + $0x10] sm:$0xf]
        %v3839 = vld [vmem:[%s3833 + $0x14] sm:$0xf]
        %v3840 = vld [vmem:[%s3833 + $0x18] sm:$0xf]
        %v3841 = vld [vmem:[%s3833 + $0x1c] sm:$0xf]
        %v3842 = vld [vmem:[%s3833 + $0x20] sm:$0xf]
        %v3843 = vld [vmem:[%s3833 + $0x24] sm:$0xf]
        %v3844 = vld [vmem:[%s3833 + $0x28] sm:$0xf]
        %v3845 = vld [vmem:[%s3833 + $0x2c] sm:$0xf]
        %v3846 = vld [vmem:[%s3833 + $0x30] sm:$0xf]
        %v3847 = vld [vmem:[%s3833 + $0x34] sm:$0xf]
        %v3848 = vld [vmem:[%s3833 + $0x38] sm:$0xf]
        %v3849 = vld [vmem:[%s3833 + $0x3c] sm:$0xf]
        %s3850 = scalar_lea.vmem %s5, 2
        %v3851 = vld [vmem:[%s3850] sm:$0x1]
        %v3853 = vlaneseq
        %v3854 = vshrl.u32 %v3853, 7
        %v3855 = vsub.s32 0, %v3854
        %v3856 = vrot.slane %v3851, %v3855
        %v3874 = vunpack.c.l.b16 %v3834
        %v3875 = vunpack.c.l.b16 %v3835
        %v3876 = vunpack.c.l.b16 %v3836
        %v3877 = vunpack.c.l.b16 %v3837
        %v3878 = vunpack.c.l.b16 %v3838
        %v3879 = vunpack.c.l.b16 %v3839
        %v3880 = vunpack.c.l.b16 %v3840
        %v3881 = vunpack.c.l.b16 %v3841
        %v3882 = vunpack.c.l.b16 %v3842
        %v3883 = vunpack.c.l.b16 %v3843
        %v3884 = vunpack.c.l.b16 %v3844
        %v3885 = vunpack.c.l.b16 %v3845
        %v3886 = vunpack.c.l.b16 %v3846
        %v3887 = vunpack.c.l.b16 %v3847
        %v3888 = vunpack.c.l.b16 %v3848
        %v3889 = vunpack.c.l.b16 %v3849
        %v3890 = vpack.c.b16 %v3875, %v3874
        %v3891 = vpack.c.b16 %v3877, %v3876
        %v3892 = vpack.c.b16 %v3879, %v3878
        %v3893 = vpack.c.b16 %v3881, %v3880
        %v3894 = vpack.c.b16 %v3883, %v3882
        %v3895 = vpack.c.b16 %v3885, %v3884
        %v3896 = vpack.c.b16 %v3887, %v3886
        %v3897 = vpack.c.b16 %v3889, %v3888
        %3906 = vmatprep.subr.bf16.mxu0 0
        %3907 = vmatpush1.bf16.msra.mxu0 %v3890
        %3908 = vmatprep.subr.bf16.mxu0 0
        %3909 = vmatpush1.bf16.msra.mxu0 %v3891
        %3910 = vmatprep.subr.bf16.mxu0 0
        %3911 = vmatpush1.bf16.msra.mxu0 %v3892
        %3912 = vmatprep.subr.bf16.mxu0 0
        %3913 = vmatpush1.bf16.msra.mxu0 %v3893
        %3914 = vmatprep.subr.bf16.mxu0 0
        %3915 = vmatpush1.bf16.msra.mxu0 %v3894
        %3916 = vmatprep.subr.bf16.mxu0 0
        %3917 = vmatpush1.bf16.msra.mxu0 %v3895
        %3918 = vmatprep.subr.bf16.mxu0 0
        %3919 = vmatpush1.bf16.msra.mxu0 %v3896
        %3920 = vmatprep.subr.bf16.mxu0 0
        %3921 = vmatpush1.bf16.msra.mxu0 %v3897
        %3922 = vmatprep.subr.bf16.mxu0 0
        %3923 = vmatpush1.bf16.msra.mxu0 0
        %3924 = vmatprep.subr.bf16.mxu0 0
        %3925 = vmatpush1.bf16.msra.mxu0 0
        %3926 = vmatprep.subr.bf16.mxu0 0
        %3927 = vmatpush1.bf16.msra.mxu0 0
        %3928 = vmatprep.subr.bf16.mxu0 0
        %3929 = vmatpush1.bf16.msra.mxu0 0
        %3930 = vmatprep.subr.bf16.mxu0 0
        %3931 = vmatpush1.bf16.msra.mxu0 0
        %3932 = vmatprep.subr.bf16.mxu0 0
        %3933 = vmatpush1.bf16.msra.mxu0 0
        %3934 = vmatprep.subr.bf16.mxu0 0
        %3935 = vmatpush1.bf16.msra.mxu0 0
        %3936 = vmatprep.subr.bf16.mxu0 0
        %3937 = vmatpush1.bf16.msra.mxu0 0
        %3938 = vmatprep.mubr.bf16.mxu0 0
        %3939 = vmatmul.mubr.bf16.gmra.mrb[0].mxu0 %v638
        %v3940 = vpop.f32.mrb[0].mxu0
        %v3941 = vadd.f32 %v3856, %v3940
        %v3942 = vpop.f32.mrb[0].mxu0
        %v3943 = vpop.f32.mrb[0].mxu0
        %v3944 = vadd.f32 %v3856, %v3943
        %v3945 = vpop.f32.mrb[0].mxu0
        %3946 = vmatprep.mubr.bf16.mxu0 0
        %3947 = vmatmul.mubr.bf16.gmra.mrb[0].mxu0 %v639
        %v3948 = vpop.f32.mrb[0].mxu0
        %v3949 = vadd.f32 %v3856, %v3948
        %v3950 = vpop.f32.mrb[0].mxu0
        %v3951 = vpop.f32.mrb[0].mxu0
        %v3952 = vadd.f32 %v3856, %v3951
        %v3953 = vpop.f32.mrb[0].mxu0
        %3954 = vmatprep.mubr.bf16.mxu0 0
        %3955 = vmatmul.mubr.bf16.gmra.mrb[0].mxu0 %v640
        %v3956 = vpop.f32.mrb[0].mxu0
        %v3957 = vadd.f32 %v3856, %v3956
        %v3958 = vpop.f32.mrb[0].mxu0
        %v3959 = vpop.f32.mrb[0].mxu0
        %v3960 = vadd.f32 %v3856, %v3959
        %v3961 = vpop.f32.mrb[0].mxu0
        %3962 = vmatprep.mubr.bf16.mxu0 0
        %3963 = vmatmul.mubr.bf16.gmra.mrb[0].mxu0 %v641
        %v3964 = vpop.f32.mrb[0].mxu0
        %v3965 = vadd.f32 %v3856, %v3964
        %v3966 = vpop.f32.mrb[0].mxu0
        %v3967 = vpop.f32.mrb[0].mxu0
        %v3968 = vadd.f32 %v3856, %v3967
        %v3969 = vpop.f32.mrb[0].mxu0
        %3970 = vmatprep.mubr.bf16.mxu0 0
        %3971 = vmatmul.mubr.bf16.gmra.mrb[0].mxu0 %v642
        %v3972 = vpop.f32.mrb[0].mxu0
        %v3973 = vadd.f32 %v3856, %v3972
        %v3974 = vpop.f32.mrb[0].mxu0
        %v3975 = vpop.f32.mrb[0].mxu0
        %v3976 = vadd.f32 %v3856, %v3975
        %v3977 = vpop.f32.mrb[0].mxu0
        %3978 = vmatprep.mubr.bf16.mxu0 0
        %3979 = vmatmul.mubr.bf16.gmra.mrb[0].mxu0 %v643
        %v3980 = vpop.f32.mrb[0].mxu0
        %v3981 = vadd.f32 %v3856, %v3980
        %v3982 = vpop.f32.mrb[0].mxu0
        %v3983 = vpop.f32.mrb[0].mxu0
        %v3984 = vadd.f32 %v3856, %v3983
        %v3985 = vpop.f32.mrb[0].mxu0
        %3986 = vmatprep.mubr.bf16.mxu0 0
        %3987 = vmatmul.mubr.bf16.gmra.mrb[0].mxu0 %v644
        %v3988 = vpop.f32.mrb[0].mxu0
        %v3989 = vadd.f32 %v3856, %v3988
        %v3990 = vpop.f32.mrb[0].mxu0
        %v3991 = vpop.f32.mrb[0].mxu0
        %v3992 = vadd.f32 %v3856, %v3991
        %v3993 = vpop.f32.mrb[0].mxu0
        %3994 = vmatprep.mubr.bf16.mxu0 0
        %3995 = vmatmul.mubr.bf16.gmra.mrb[0].mxu0 %v645
        %v3996 = vpop.f32.mrb[0].mxu0
        %v3997 = vadd.f32 %v3856, %v3996
        %v3998 = vpop.f32.mrb[0].mxu0
        %v3999 = vpop.f32.mrb[0].mxu0
        %v4000 = vadd.f32 %v3856, %v3999
        %v4001 = vpop.f32.mrb[0].mxu0
        %4002 = vdwg.mxu0
        %s4003 = scalar_lea.vmem %s3, 128
        %v4004 = vld [vmem:[%s4003] sm:$0xf]
        %v4005 = vld [vmem:[%s4003 + $0x4] sm:$0xf]
        %v4006 = vld [vmem:[%s4003 + $0x8] sm:$0xf]
        %v4007 = vld [vmem:[%s4003 + $0xc] sm:$0xf]
        %v4008 = vld [vmem:[%s4003 + $0x10] sm:$0xf]
        %v4009 = vld [vmem:[%s4003 + $0x14] sm:$0xf]
        %v4010 = vld [vmem:[%s4003 + $0x18] sm:$0xf]
        %v4011 = vld [vmem:[%s4003 + $0x1c] sm:$0xf]
        %v4012 = vld [vmem:[%s4003 + $0x20] sm:$0xf]
        %v4013 = vld [vmem:[%s4003 + $0x24] sm:$0xf]
        %v4014 = vld [vmem:[%s4003 + $0x28] sm:$0xf]
        %v4015 = vld [vmem:[%s4003 + $0x2c] sm:$0xf]
        %v4016 = vld [vmem:[%s4003 + $0x30] sm:$0xf]
        %v4017 = vld [vmem:[%s4003 + $0x34] sm:$0xf]
        %v4018 = vld [vmem:[%s4003 + $0x38] sm:$0xf]
        %v4019 = vld [vmem:[%s4003 + $0x3c] sm:$0xf]
        %s4020 = scalar_lea.vmem %s6, 2
        %v4021 = vld [vmem:[%s4020] sm:$0x1]
        %v4023 = vlaneseq
        %v4024 = vshrl.u32 %v4023, 7
        %v4025 = vsub.s32 0, %v4024
        %v4026 = vrot.slane %v4021, %v4025
        %v4044 = vunpack.c.l.b16 %v4004
        %v4045 = vunpack.c.l.b16 %v4005
        %v4046 = vunpack.c.l.b16 %v4006
        %v4047 = vunpack.c.l.b16 %v4007
        %v4048 = vunpack.c.l.b16 %v4008
        %v4049 = vunpack.c.l.b16 %v4009
        %v4050 = vunpack.c.l.b16 %v4010
        %v4051 = vunpack.c.l.b16 %v4011
        %v4052 = vunpack.c.l.b16 %v4012
        %v4053 = vunpack.c.l.b16 %v4013
        %v4054 = vunpack.c.l.b16 %v4014
        %v4055 = vunpack.c.l.b16 %v4015
        %v4056 = vunpack.c.l.b16 %v4016
        %v4057 = vunpack.c.l.b16 %v4017
        %v4058 = vunpack.c.l.b16 %v4018
        %v4059 = vunpack.c.l.b16 %v4019
        %v4060 = vpack.c.b16 %v4045, %v4044
        %v4061 = vpack.c.b16 %v4047, %v4046
        %v4062 = vpack.c.b16 %v4049, %v4048
        %v4063 = vpack.c.b16 %v4051, %v4050
        %v4064 = vpack.c.b16 %v4053, %v4052
        %v4065 = vpack.c.b16 %v4055, %v4054
        %v4066 = vpack.c.b16 %v4057, %v4056
        %v4067 = vpack.c.b16 %v4059, %v4058
        %4076 = vmatprep.subr.bf16.mxu0 0
        %4077 = vmatpush1.bf16.msra.mxu0 %v4060
        %4078 = vmatprep.subr.bf16.mxu0 0
        %4079 = vmatpush1.bf16.msra.mxu0 %v4061
        %4080 = vmatprep.subr.bf16.mxu0 0
        %4081 = vmatpush1.bf16.msra.mxu0 %v4062
        %4082 = vmatprep.subr.bf16.mxu0 0
        %4083 = vmatpush1.bf16.msra.mxu0 %v4063
        %4084 = vmatprep.subr.bf16.mxu0 0
        %4085 = vmatpush1.bf16.msra.mxu0 %v4064
        %4086 = vmatprep.subr.bf16.mxu0 0
        %4087 = vmatpush1.bf16.msra.mxu0 %v4065
        %4088 = vmatprep.subr.bf16.mxu0 0
        %4089 = vmatpush1.bf16.msra.mxu0 %v4066
        %4090 = vmatprep.subr.bf16.mxu0 0
        %4091 = vmatpush1.bf16.msra.mxu0 %v4067
        %4092 = vmatprep.subr.bf16.mxu0 0
        %4093 = vmatpush1.bf16.msra.mxu0 0
        %4094 = vmatprep.subr.bf16.mxu0 0
        %4095 = vmatpush1.bf16.msra.mxu0 0
        %4096 = vmatprep.subr.bf16.mxu0 0
        %4097 = vmatpush1.bf16.msra.mxu0 0
        %4098 = vmatprep.subr.bf16.mxu0 0
        %4099 = vmatpush1.bf16.msra.mxu0 0
        %4100 = vmatprep.subr.bf16.mxu0 0
        %4101 = vmatpush1.bf16.msra.mxu0 0
        %4102 = vmatprep.subr.bf16.mxu0 0
        %4103 = vmatpush1.bf16.msra.mxu0 0
        %4104 = vmatprep.subr.bf16.mxu0 0
        %4105 = vmatpush1.bf16.msra.mxu0 0
        %4106 = vmatprep.subr.bf16.mxu0 0
        %4107 = vmatpush1.bf16.msra.mxu0 0
        %4108 = vmatprep.mubr.bf16.mxu0 0
        %4109 = vmatmul.mubr.bf16.gmra.mrb[0].mxu0 %v646
        %v4110 = vpop.f32.mrb[0].mxu0
        %v4111 = vadd.f32 %v4026, %v4110
        %v4112 = vpop.f32.mrb[0].mxu0
        %v4113 = vpop.f32.mrb[0].mxu0
        %v4114 = vadd.f32 %v4026, %v4113
        %v4115 = vpop.f32.mrb[0].mxu0
        %4116 = vmatprep.mubr.bf16.mxu0 0
        %4117 = vmatmul.mubr.bf16.gmra.mrb[0].mxu0 %v647
        %v4118 = vpop.f32.mrb[0].mxu0
        %v4119 = vadd.f32 %v4026, %v4118
        %v4120 = vpop.f32.mrb[0].mxu0
        %v4121 = vpop.f32.mrb[0].mxu0
        %v4122 = vadd.f32 %v4026, %v4121
        %v4123 = vpop.f32.mrb[0].mxu0
        %4124 = vmatprep.mubr.bf16.mxu0 0
        %4125 = vmatmul.mubr.bf16.gmra.mrb[0].mxu0 %v648
        %v4126 = vpop.f32.mrb[0].mxu0
        %v4127 = vadd.f32 %v4026, %v4126
        %v4128 = vpop.f32.mrb[0].mxu0
        %v4129 = vpop.f32.mrb[0].mxu0
        %v4130 = vadd.f32 %v4026, %v4129
        %v4131 = vpop.f32.mrb[0].mxu0
        %4132 = vmatprep.mubr.bf16.mxu0 0
        %4133 = vmatmul.mubr.bf16.gmra.mrb[0].mxu0 %v649
        %v4134 = vpop.f32.mrb[0].mxu0
        %v4135 = vadd.f32 %v4026, %v4134
        %v4136 = vpop.f32.mrb[0].mxu0
        %v4137 = vpop.f32.mrb[0].mxu0
        %v4138 = vadd.f32 %v4026, %v4137
        %v4139 = vpop.f32.mrb[0].mxu0
        %4140 = vmatprep.mubr.bf16.mxu0 0
        %4141 = vmatmul.mubr.bf16.gmra.mrb[0].mxu0 %v650
        %v4142 = vpop.f32.mrb[0].mxu0
        %v4143 = vadd.f32 %v4026, %v4142
        %v4144 = vpop.f32.mrb[0].mxu0
        %v4145 = vpop.f32.mrb[0].mxu0
        %v4146 = vadd.f32 %v4026, %v4145
        %v4147 = vpop.f32.mrb[0].mxu0
        %4148 = vmatprep.mubr.bf16.mxu0 0
        %4149 = vmatmul.mubr.bf16.gmra.mrb[0].mxu0 %v651
        %v4150 = vpop.f32.mrb[0].mxu0
        %v4151 = vadd.f32 %v4026, %v4150
        %v4152 = vpop.f32.mrb[0].mxu0
        %v4153 = vpop.f32.mrb[0].mxu0
        %v4154 = vadd.f32 %v4026, %v4153
        %v4155 = vpop.f32.mrb[0].mxu0
        %4156 = vmatprep.mubr.bf16.mxu0 0
        %4157 = vmatmul.mubr.bf16.gmra.mrb[0].mxu0 %v652
        %v4158 = vpop.f32.mrb[0].mxu0
        %v4159 = vadd.f32 %v4026, %v4158
        %v4160 = vpop.f32.mrb[0].mxu0
        %v4161 = vpop.f32.mrb[0].mxu0
        %v4162 = vadd.f32 %v4026, %v4161
        %v4163 = vpop.f32.mrb[0].mxu0
        %4164 = vmatprep.mubr.bf16.mxu0 0
        %4165 = vmatmul.mubr.bf16.gmra.mrb[0].mxu0 %v653
        %v4166 = vpop.f32.mrb[0].mxu0
        %v4167 = vadd.f32 %v4026, %v4166
        %v4168 = vpop.f32.mrb[0].mxu0
        %v4169 = vpop.f32.mrb[0].mxu0
        %v4170 = vadd.f32 %v4026, %v4169
        %v4171 = vpop.f32.mrb[0].mxu0
        %4172 = vdwg.mxu0
        %s4173 = scalar_lea.vmem %s4, 128
        %v4174 = vld [vmem:[%s4173] sm:$0xf]
        %v4175 = vld [vmem:[%s4173 + $0x4] sm:$0xf]
        %v4176 = vld [vmem:[%s4173 + $0x8] sm:$0xf]
        %v4177 = vld [vmem:[%s4173 + $0xc] sm:$0xf]
        %v4178 = vld [vmem:[%s4173 + $0x10] sm:$0xf]
        %v4179 = vld [vmem:[%s4173 + $0x14] sm:$0xf]
        %v4180 = vld [vmem:[%s4173 + $0x18] sm:$0xf]
        %v4181 = vld [vmem:[%s4173 + $0x1c] sm:$0xf]
        %v4182 = vld [vmem:[%s4173 + $0x20] sm:$0xf]
        %v4183 = vld [vmem:[%s4173 + $0x24] sm:$0xf]
        %v4184 = vld [vmem:[%s4173 + $0x28] sm:$0xf]
        %v4185 = vld [vmem:[%s4173 + $0x2c] sm:$0xf]
        %v4186 = vld [vmem:[%s4173 + $0x30] sm:$0xf]
        %v4187 = vld [vmem:[%s4173 + $0x34] sm:$0xf]
        %v4188 = vld [vmem:[%s4173 + $0x38] sm:$0xf]
        %v4189 = vld [vmem:[%s4173 + $0x3c] sm:$0xf]
        %s4190 = scalar_lea.vmem %s7, 2
        %v4191 = vld [vmem:[%s4190] sm:$0x1]
        %v4193 = vlaneseq
        %v4194 = vshrl.u32 %v4193, 7
        %v4195 = vsub.s32 0, %v4194
        %v4196 = vrot.slane %v4191, %v4195
        %v4214 = vunpack.c.l.b16 %v4174
        %v4215 = vunpack.c.l.b16 %v4175
        %v4216 = vunpack.c.l.b16 %v4176
        %v4217 = vunpack.c.l.b16 %v4177
        %v4218 = vunpack.c.l.b16 %v4178
        %v4219 = vunpack.c.l.b16 %v4179
        %v4220 = vunpack.c.l.b16 %v4180
        %v4221 = vunpack.c.l.b16 %v4181
        %v4222 = vunpack.c.l.b16 %v4182
        %v4223 = vunpack.c.l.b16 %v4183
        %v4224 = vunpack.c.l.b16 %v4184
        %v4225 = vunpack.c.l.b16 %v4185
        %v4226 = vunpack.c.l.b16 %v4186
        %v4227 = vunpack.c.l.b16 %v4187
        %v4228 = vunpack.c.l.b16 %v4188
        %v4229 = vunpack.c.l.b16 %v4189
        %v4230 = vpack.c.b16 %v4215, %v4214
        %v4231 = vpack.c.b16 %v4217, %v4216
        %v4232 = vpack.c.b16 %v4219, %v4218
        %v4233 = vpack.c.b16 %v4221, %v4220
        %v4234 = vpack.c.b16 %v4223, %v4222
        %v4235 = vpack.c.b16 %v4225, %v4224
        %v4236 = vpack.c.b16 %v4227, %v4226
        %v4237 = vpack.c.b16 %v4229, %v4228
        %4246 = vmatprep.subr.bf16.mxu0 0
        %4247 = vmatpush1.bf16.msra.mxu0 %v4230
        %4248 = vmatprep.subr.bf16.mxu0 0
        %4249 = vmatpush1.bf16.msra.mxu0 %v4231
        %4250 = vmatprep.subr.bf16.mxu0 0
        %4251 = vmatpush1.bf16.msra.mxu0 %v4232
        %4252 = vmatprep.subr.bf16.mxu0 0
        %4253 = vmatpush1.bf16.msra.mxu0 %v4233
        %4254 = vmatprep.subr.bf16.mxu0 0
        %4255 = vmatpush1.bf16.msra.mxu0 %v4234
        %4256 = vmatprep.subr.bf16.mxu0 0
        %4257 = vmatpush1.bf16.msra.mxu0 %v4235
        %4258 = vmatprep.subr.bf16.mxu0 0
        %4259 = vmatpush1.bf16.msra.mxu0 %v4236
        %4260 = vmatprep.subr.bf16.mxu0 0
        %4261 = vmatpush1.bf16.msra.mxu0 %v4237
        %4262 = vmatprep.subr.bf16.mxu0 0
        %4263 = vmatpush1.bf16.msra.mxu0 0
        %4264 = vmatprep.subr.bf16.mxu0 0
        %4265 = vmatpush1.bf16.msra.mxu0 0
        %4266 = vmatprep.subr.bf16.mxu0 0
        %4267 = vmatpush1.bf16.msra.mxu0 0
        %4268 = vmatprep.subr.bf16.mxu0 0
        %4269 = vmatpush1.bf16.msra.mxu0 0
        %4270 = vmatprep.subr.bf16.mxu0 0
        %4271 = vmatpush1.bf16.msra.mxu0 0
        %4272 = vmatprep.subr.bf16.mxu0 0
        %4273 = vmatpush1.bf16.msra.mxu0 0
        %4274 = vmatprep.subr.bf16.mxu0 0
        %4275 = vmatpush1.bf16.msra.mxu0 0
        %4276 = vmatprep.subr.bf16.mxu0 0
        %4277 = vmatpush1.bf16.msra.mxu0 0
        %4278 = vmatprep.mubr.bf16.mxu0 0
        %4279 = vmatmul.mubr.bf16.gmra.mrb[0].mxu0 %v646
        %v4280 = vpop.f32.mrb[0].mxu0
        %v4281 = vadd.f32 %v4196, %v4280
        %v4282 = vpop.f32.mrb[0].mxu0
        %v4283 = vpop.f32.mrb[0].mxu0
        %v4284 = vadd.f32 %v4196, %v4283
        %v4285 = vpop.f32.mrb[0].mxu0
        %4286 = vmatprep.mubr.bf16.mxu0 0
        %4287 = vmatmul.mubr.bf16.gmra.mrb[0].mxu0 %v647
        %v4288 = vpop.f32.mrb[0].mxu0
        %v4289 = vadd.f32 %v4196, %v4288
        %v4290 = vpop.f32.mrb[0].mxu0
        %v4291 = vpop.f32.mrb[0].mxu0
        %v4292 = vadd.f32 %v4196, %v4291
        %v4293 = vpop.f32.mrb[0].mxu0
        %4294 = vmatprep.mubr.bf16.mxu0 0
        %4295 = vmatmul.mubr.bf16.gmra.mrb[0].mxu0 %v648
        %v4296 = vpop.f32.mrb[0].mxu0
        %v4297 = vadd.f32 %v4196, %v4296
        %v4298 = vpop.f32.mrb[0].mxu0
        %v4299 = vpop.f32.mrb[0].mxu0
        %v4300 = vadd.f32 %v4196, %v4299
        %v4301 = vpop.f32.mrb[0].mxu0
        %4302 = vmatprep.mubr.bf16.mxu0 0
        %4303 = vmatmul.mubr.bf16.gmra.mrb[0].mxu0 %v649
        %v4304 = vpop.f32.mrb[0].mxu0
        %v4305 = vadd.f32 %v4196, %v4304
        %v4306 = vpop.f32.mrb[0].mxu0
        %v4307 = vpop.f32.mrb[0].mxu0
        %v4308 = vadd.f32 %v4196, %v4307
        %v4309 = vpop.f32.mrb[0].mxu0
        %4310 = vmatprep.mubr.bf16.mxu0 0
        %4311 = vmatmul.mubr.bf16.gmra.mrb[0].mxu0 %v650
        %v4312 = vpop.f32.mrb[0].mxu0
        %v4313 = vadd.f32 %v4196, %v4312
        %v4314 = vpop.f32.mrb[0].mxu0
        %v4315 = vpop.f32.mrb[0].mxu0
        %v4316 = vadd.f32 %v4196, %v4315
        %v4317 = vpop.f32.mrb[0].mxu0
        %4318 = vmatprep.mubr.bf16.mxu0 0
        %4319 = vmatmul.mubr.bf16.gmra.mrb[0].mxu0 %v651
        %v4320 = vpop.f32.mrb[0].mxu0
        %v4321 = vadd.f32 %v4196, %v4320
        %v4322 = vpop.f32.mrb[0].mxu0
        %v4323 = vpop.f32.mrb[0].mxu0
        %v4324 = vadd.f32 %v4196, %v4323
        %v4325 = vpop.f32.mrb[0].mxu0
        %4326 = vmatprep.mubr.bf16.mxu0 0
        %4327 = vmatmul.mubr.bf16.gmra.mrb[0].mxu0 %v652
        %v4328 = vpop.f32.mrb[0].mxu0
        %v4329 = vadd.f32 %v4196, %v4328
        %v4330 = vpop.f32.mrb[0].mxu0
        %v4331 = vpop.f32.mrb[0].mxu0
        %v4332 = vadd.f32 %v4196, %v4331
        %v4333 = vpop.f32.mrb[0].mxu0
        %4334 = vmatprep.mubr.bf16.mxu0 0
        %4335 = vmatmul.mubr.bf16.gmra.mrb[0].mxu0 %v653
        %v4336 = vpop.f32.mrb[0].mxu0
        %v4337 = vadd.f32 %v4196, %v4336
        %v4338 = vpop.f32.mrb[0].mxu0
        %v4339 = vpop.f32.mrb[0].mxu0
        %v4340 = vadd.f32 %v4196, %v4339
        %v4341 = vpop.f32.mrb[0].mxu0
        %4342 = vdwg.mxu0
        %v4343 = vpack.c.bf16 %v3944, %v3941
        %v4344 = vpack.c.bf16 %v3952, %v3949
        %v4345 = vpack.c.bf16 %v3960, %v3957
        %v4346 = vpack.c.bf16 %v3968, %v3965
        %v4347 = vpack.c.bf16 %v3976, %v3973
        %v4348 = vpack.c.bf16 %v3984, %v3981
        %v4349 = vpack.c.bf16 %v3992, %v3989
        %v4350 = vpack.c.bf16 %v4000, %v3997
        %v4351 = vpack.c.bf16 %v4114, %v4111
        %v4352 = vpack.c.bf16 %v4122, %v4119
        %v4353 = vpack.c.bf16 %v4130, %v4127
        %v4354 = vpack.c.bf16 %v4138, %v4135
        %v4355 = vpack.c.bf16 %v4146, %v4143
        %v4356 = vpack.c.bf16 %v4154, %v4151
        %v4357 = vpack.c.bf16 %v4162, %v4159
        %v4358 = vpack.c.bf16 %v4170, %v4167
        %v4359 = vpack.c.bf16 %v4284, %v4281
        %v4360 = vpack.c.bf16 %v4292, %v4289
        %v4361 = vpack.c.bf16 %v4300, %v4297
        %v4362 = vpack.c.bf16 %v4308, %v4305
        %v4363 = vpack.c.bf16 %v4316, %v4313
        %v4364 = vpack.c.bf16 %v4324, %v4321
        %v4365 = vpack.c.bf16 %v4332, %v4329
        %v4366 = vpack.c.bf16 %v4340, %v4337
        %v4368 = vsel %vm1182, %v4343, 0
        %v4371 = vsel %vm1182, %v4351, 0
        %4373 = vmatprep.subr.bf16.mxu0 0
        %4374 = vmatpush1.bf16.xpose.msra.mxu0 %v4371
        %4375 = vmatprep.subr.bf16.mxu0 0
        %4376 = vmatpush1.bf16.xpose.msra.mxu0 0
        %4377 = vmatprep.subr.bf16.mxu0 0
        %4378 = vmatpush1.bf16.xpose.msra.mxu0 0
        %4379 = vmatprep.subr.bf16.mxu0 0
        %4380 = vmatpush1.bf16.xpose.msra.mxu0 0
        %4381 = vmatprep.subr.bf16.mxu0 0
        %4382 = vmatpush1.bf16.xpose.msra.mxu0 0
        %4383 = vmatprep.subr.bf16.mxu0 0
        %4384 = vmatpush1.bf16.xpose.msra.mxu0 0
        %4385 = vmatprep.subr.bf16.mxu0 0
        %4386 = vmatpush1.bf16.xpose.msra.mxu0 0
        %4387 = vmatprep.subr.bf16.mxu0 0
        %4388 = vmatpush1.bf16.xpose.msra.mxu0 0
        %4389 = vmatprep.subr.bf16.mxu0 0
        %4390 = vmatpush1.bf16.xpose.msra.mxu0 0
        %4391 = vmatprep.subr.bf16.mxu0 0
        %4392 = vmatpush1.bf16.xpose.msra.mxu0 0
        %4393 = vmatprep.subr.bf16.mxu0 0
        %4394 = vmatpush1.bf16.xpose.msra.mxu0 0
        %4395 = vmatprep.subr.bf16.mxu0 0
        %4396 = vmatpush1.bf16.xpose.msra.mxu0 0
        %4397 = vmatprep.subr.bf16.mxu0 0
        %4398 = vmatpush1.bf16.xpose.msra.mxu0 0
        %4399 = vmatprep.subr.bf16.mxu0 0
        %4400 = vmatpush1.bf16.xpose.msra.mxu0 0
        %4401 = vmatprep.subr.bf16.mxu0 0
        %4402 = vmatpush1.bf16.xpose.msra.mxu0 0
        %4403 = vmatprep.subr.bf16.mxu0 0
        %4404 = vmatpush1.bf16.xpose.msra.mxu0 0
        %4405 = vmatprep.mubr.bf16.mxu0 0
        %4406 = vmatmul.mubr.bf16.gmra.mrb[0].mxu0 %v4368
        %v4407 = vpop.f32.mrb[0].mxu0
        %v4408 = vadd.f32 0.0, %v4407
        %v4409 = vpop.f32.mrb[0].mxu0
        %v4410 = vpop.f32.mrb[0].mxu0
        %v4411 = vadd.f32 0.0, %v4410
        %v4412 = vpop.f32.mrb[0].mxu0
        %4413 = vdwg.mxu0
        %v4415 = vsel %vm1182, %v4344, 0
        %v4418 = vsel %vm1182, %v4352, 0
        %4420 = vmatprep.subr.bf16.mxu0 0
        %4421 = vmatpush1.bf16.xpose.msra.mxu0 %v4418
        %4422 = vmatprep.subr.bf16.mxu0 0
        %4423 = vmatpush1.bf16.xpose.msra.mxu0 0
        %4424 = vmatprep.subr.bf16.mxu0 0
        %4425 = vmatpush1.bf16.xpose.msra.mxu0 0
        %4426 = vmatprep.subr.bf16.mxu0 0
        %4427 = vmatpush1.bf16.xpose.msra.mxu0 0
        %4428 = vmatprep.subr.bf16.mxu0 0
        %4429 = vmatpush1.bf16.xpose.msra.mxu0 0
        %4430 = vmatprep.subr.bf16.mxu0 0
        %4431 = vmatpush1.bf16.xpose.msra.mxu0 0
        %4432 = vmatprep.subr.bf16.mxu0 0
        %4433 = vmatpush1.bf16.xpose.msra.mxu0 0
        %4434 = vmatprep.subr.bf16.mxu0 0
        %4435 = vmatpush1.bf16.xpose.msra.mxu0 0
        %4436 = vmatprep.subr.bf16.mxu0 0
        %4437 = vmatpush1.bf16.xpose.msra.mxu0 0
        %4438 = vmatprep.subr.bf16.mxu0 0
        %4439 = vmatpush1.bf16.xpose.msra.mxu0 0
        %4440 = vmatprep.subr.bf16.mxu0 0
        %4441 = vmatpush1.bf16.xpose.msra.mxu0 0
        %4442 = vmatprep.subr.bf16.mxu0 0
        %4443 = vmatpush1.bf16.xpose.msra.mxu0 0
        %4444 = vmatprep.subr.bf16.mxu0 0
        %4445 = vmatpush1.bf16.xpose.msra.mxu0 0
        %4446 = vmatprep.subr.bf16.mxu0 0
        %4447 = vmatpush1.bf16.xpose.msra.mxu0 0
        %4448 = vmatprep.subr.bf16.mxu0 0
        %4449 = vmatpush1.bf16.xpose.msra.mxu0 0
        %4450 = vmatprep.subr.bf16.mxu0 0
        %4451 = vmatpush1.bf16.xpose.msra.mxu0 0
        %4452 = vmatprep.mubr.bf16.mxu0 0
        %4453 = vmatmul.mubr.bf16.gmra.mrb[0].mxu0 %v4415
        %v4454 = vpop.f32.mrb[0].mxu0
        %v4455 = vadd.f32 0.0, %v4454
        %v4456 = vpop.f32.mrb[0].mxu0
        %v4457 = vpop.f32.mrb[0].mxu0
        %v4458 = vadd.f32 0.0, %v4457
        %v4459 = vpop.f32.mrb[0].mxu0
        %4460 = vdwg.mxu0
        %v4462 = vsel %vm1182, %v4345, 0
        %v4465 = vsel %vm1182, %v4353, 0
        %4467 = vmatprep.subr.bf16.mxu0 0
        %4468 = vmatpush1.bf16.xpose.msra.mxu0 %v4465
        %4469 = vmatprep.subr.bf16.mxu0 0
        %4470 = vmatpush1.bf16.xpose.msra.mxu0 0
        %4471 = vmatprep.subr.bf16.mxu0 0
        %4472 = vmatpush1.bf16.xpose.msra.mxu0 0
        %4473 = vmatprep.subr.bf16.mxu0 0
        %4474 = vmatpush1.bf16.xpose.msra.mxu0 0
        %4475 = vmatprep.subr.bf16.mxu0 0
        %4476 = vmatpush1.bf16.xpose.msra.mxu0 0
        %4477 = vmatprep.subr.bf16.mxu0 0
        %4478 = vmatpush1.bf16.xpose.msra.mxu0 0
        %4479 = vmatprep.subr.bf16.mxu0 0
        %4480 = vmatpush1.bf16.xpose.msra.mxu0 0
        %4481 = vmatprep.subr.bf16.mxu0 0
        %4482 = vmatpush1.bf16.xpose.msra.mxu0 0
        %4483 = vmatprep.subr.bf16.mxu0 0
        %4484 = vmatpush1.bf16.xpose.msra.mxu0 0
        %4485 = vmatprep.subr.bf16.mxu0 0
        %4486 = vmatpush1.bf16.xpose.msra.mxu0 0
        %4487 = vmatprep.subr.bf16.mxu0 0
        %4488 = vmatpush1.bf16.xpose.msra.mxu0 0
        %4489 = vmatprep.subr.bf16.mxu0 0
        %4490 = vmatpush1.bf16.xpose.msra.mxu0 0
        %4491 = vmatprep.subr.bf16.mxu0 0
        %4492 = vmatpush1.bf16.xpose.msra.mxu0 0
        %4493 = vmatprep.subr.bf16.mxu0 0
        %4494 = vmatpush1.bf16.xpose.msra.mxu0 0
        %4495 = vmatprep.subr.bf16.mxu0 0
        %4496 = vmatpush1.bf16.xpose.msra.mxu0 0
        %4497 = vmatprep.subr.bf16.mxu0 0
        %4498 = vmatpush1.bf16.xpose.msra.mxu0 0
        %4499 = vmatprep.mubr.bf16.mxu0 0
        %4500 = vmatmul.mubr.bf16.gmra.mrb[0].mxu0 %v4462
        %v4501 = vpop.f32.mrb[0].mxu0
        %v4502 = vadd.f32 0.0, %v4501
        %v4503 = vpop.f32.mrb[0].mxu0
        %v4504 = vpop.f32.mrb[0].mxu0
        %v4505 = vadd.f32 0.0, %v4504
        %v4506 = vpop.f32.mrb[0].mxu0
        %4507 = vdwg.mxu0
        %v4509 = vsel %vm1182, %v4346, 0
        %v4512 = vsel %vm1182, %v4354, 0
        %4514 = vmatprep.subr.bf16.mxu0 0
        %4515 = vmatpush1.bf16.xpose.msra.mxu0 %v4512
        %4516 = vmatprep.subr.bf16.mxu0 0
        %4517 = vmatpush1.bf16.xpose.msra.mxu0 0
        %4518 = vmatprep.subr.bf16.mxu0 0
        %4519 = vmatpush1.bf16.xpose.msra.mxu0 0
        %4520 = vmatprep.subr.bf16.mxu0 0
        %4521 = vmatpush1.bf16.xpose.msra.mxu0 0
        %4522 = vmatprep.subr.bf16.mxu0 0
        %4523 = vmatpush1.bf16.xpose.msra.mxu0 0
        %4524 = vmatprep.subr.bf16.mxu0 0
        %4525 = vmatpush1.bf16.xpose.msra.mxu0 0
        %4526 = vmatprep.subr.bf16.mxu0 0
        %4527 = vmatpush1.bf16.xpose.msra.mxu0 0
        %4528 = vmatprep.subr.bf16.mxu0 0
        %4529 = vmatpush1.bf16.xpose.msra.mxu0 0
        %4530 = vmatprep.subr.bf16.mxu0 0
        %4531 = vmatpush1.bf16.xpose.msra.mxu0 0
        %4532 = vmatprep.subr.bf16.mxu0 0
        %4533 = vmatpush1.bf16.xpose.msra.mxu0 0
        %4534 = vmatprep.subr.bf16.mxu0 0
        %4535 = vmatpush1.bf16.xpose.msra.mxu0 0
        %4536 = vmatprep.subr.bf16.mxu0 0
        %4537 = vmatpush1.bf16.xpose.msra.mxu0 0
        %4538 = vmatprep.subr.bf16.mxu0 0
        %4539 = vmatpush1.bf16.xpose.msra.mxu0 0
        %4540 = vmatprep.subr.bf16.mxu0 0
        %4541 = vmatpush1.bf16.xpose.msra.mxu0 0
        %4542 = vmatprep.subr.bf16.mxu0 0
        %4543 = vmatpush1.bf16.xpose.msra.mxu0 0
        %4544 = vmatprep.subr.bf16.mxu0 0
        %4545 = vmatpush1.bf16.xpose.msra.mxu0 0
        %4546 = vmatprep.mubr.bf16.mxu0 0
        %4547 = vmatmul.mubr.bf16.gmra.mrb[0].mxu0 %v4509
        %v4548 = vpop.f32.mrb[0].mxu0
        %v4549 = vadd.f32 0.0, %v4548
        %v4550 = vpop.f32.mrb[0].mxu0
        %v4551 = vpop.f32.mrb[0].mxu0
        %v4552 = vadd.f32 0.0, %v4551
        %v4553 = vpop.f32.mrb[0].mxu0
        %4554 = vdwg.mxu0
        %v4556 = vsel %vm1182, %v4347, 0
        %v4559 = vsel %vm1182, %v4355, 0
        %4561 = vmatprep.subr.bf16.mxu0 0
        %4562 = vmatpush1.bf16.xpose.msra.mxu0 %v4559
        %4563 = vmatprep.subr.bf16.mxu0 0
        %4564 = vmatpush1.bf16.xpose.msra.mxu0 0
        %4565 = vmatprep.subr.bf16.mxu0 0
        %4566 = vmatpush1.bf16.xpose.msra.mxu0 0
        %4567 = vmatprep.subr.bf16.mxu0 0
        %4568 = vmatpush1.bf16.xpose.msra.mxu0 0
        %4569 = vmatprep.subr.bf16.mxu0 0
        %4570 = vmatpush1.bf16.xpose.msra.mxu0 0
        %4571 = vmatprep.subr.bf16.mxu0 0
        %4572 = vmatpush1.bf16.xpose.msra.mxu0 0
        %4573 = vmatprep.subr.bf16.mxu0 0
        %4574 = vmatpush1.bf16.xpose.msra.mxu0 0
        %4575 = vmatprep.subr.bf16.mxu0 0
        %4576 = vmatpush1.bf16.xpose.msra.mxu0 0
        %4577 = vmatprep.subr.bf16.mxu0 0
        %4578 = vmatpush1.bf16.xpose.msra.mxu0 0
        %4579 = vmatprep.subr.bf16.mxu0 0
        %4580 = vmatpush1.bf16.xpose.msra.mxu0 0
        %4581 = vmatprep.subr.bf16.mxu0 0
        %4582 = vmatpush1.bf16.xpose.msra.mxu0 0
        %4583 = vmatprep.subr.bf16.mxu0 0
        %4584 = vmatpush1.bf16.xpose.msra.mxu0 0
        %4585 = vmatprep.subr.bf16.mxu0 0
        %4586 = vmatpush1.bf16.xpose.msra.mxu0 0
        %4587 = vmatprep.subr.bf16.mxu0 0
        %4588 = vmatpush1.bf16.xpose.msra.mxu0 0
        %4589 = vmatprep.subr.bf16.mxu0 0
        %4590 = vmatpush1.bf16.xpose.msra.mxu0 0
        %4591 = vmatprep.subr.bf16.mxu0 0
        %4592 = vmatpush1.bf16.xpose.msra.mxu0 0
        %4593 = vmatprep.mubr.bf16.mxu0 0
        %4594 = vmatmul.mubr.bf16.gmra.mrb[0].mxu0 %v4556
        %v4595 = vpop.f32.mrb[0].mxu0
        %v4596 = vadd.f32 0.0, %v4595
        %v4597 = vpop.f32.mrb[0].mxu0
        %v4598 = vpop.f32.mrb[0].mxu0
        %v4599 = vadd.f32 0.0, %v4598
        %v4600 = vpop.f32.mrb[0].mxu0
        %4601 = vdwg.mxu0
        %v4603 = vsel %vm1182, %v4348, 0
        %v4606 = vsel %vm1182, %v4356, 0
        %4608 = vmatprep.subr.bf16.mxu0 0
        %4609 = vmatpush1.bf16.xpose.msra.mxu0 %v4606
        %4610 = vmatprep.subr.bf16.mxu0 0
        %4611 = vmatpush1.bf16.xpose.msra.mxu0 0
        %4612 = vmatprep.subr.bf16.mxu0 0
        %4613 = vmatpush1.bf16.xpose.msra.mxu0 0
        %4614 = vmatprep.subr.bf16.mxu0 0
        %4615 = vmatpush1.bf16.xpose.msra.mxu0 0
        %4616 = vmatprep.subr.bf16.mxu0 0
        %4617 = vmatpush1.bf16.xpose.msra.mxu0 0
        %4618 = vmatprep.subr.bf16.mxu0 0
        %4619 = vmatpush1.bf16.xpose.msra.mxu0 0
        %4620 = vmatprep.subr.bf16.mxu0 0
        %4621 = vmatpush1.bf16.xpose.msra.mxu0 0
        %4622 = vmatprep.subr.bf16.mxu0 0
        %4623 = vmatpush1.bf16.xpose.msra.mxu0 0
        %4624 = vmatprep.subr.bf16.mxu0 0
        %4625 = vmatpush1.bf16.xpose.msra.mxu0 0
        %4626 = vmatprep.subr.bf16.mxu0 0
        %4627 = vmatpush1.bf16.xpose.msra.mxu0 0
        %4628 = vmatprep.subr.bf16.mxu0 0
        %4629 = vmatpush1.bf16.xpose.msra.mxu0 0
        %4630 = vmatprep.subr.bf16.mxu0 0
        %4631 = vmatpush1.bf16.xpose.msra.mxu0 0
        %4632 = vmatprep.subr.bf16.mxu0 0
        %4633 = vmatpush1.bf16.xpose.msra.mxu0 0
        %4634 = vmatprep.subr.bf16.mxu0 0
        %4635 = vmatpush1.bf16.xpose.msra.mxu0 0
        %4636 = vmatprep.subr.bf16.mxu0 0
        %4637 = vmatpush1.bf16.xpose.msra.mxu0 0
        %4638 = vmatprep.subr.bf16.mxu0 0
        %4639 = vmatpush1.bf16.xpose.msra.mxu0 0
        %4640 = vmatprep.mubr.bf16.mxu0 0
        %4641 = vmatmul.mubr.bf16.gmra.mrb[0].mxu0 %v4603
        %v4642 = vpop.f32.mrb[0].mxu0
        %v4643 = vadd.f32 0.0, %v4642
        %v4644 = vpop.f32.mrb[0].mxu0
        %v4645 = vpop.f32.mrb[0].mxu0
        %v4646 = vadd.f32 0.0, %v4645
        %v4647 = vpop.f32.mrb[0].mxu0
        %4648 = vdwg.mxu0
        %v4650 = vsel %vm1182, %v4349, 0
        %v4653 = vsel %vm1182, %v4357, 0
        %4655 = vmatprep.subr.bf16.mxu0 0
        %4656 = vmatpush1.bf16.xpose.msra.mxu0 %v4653
        %4657 = vmatprep.subr.bf16.mxu0 0
        %4658 = vmatpush1.bf16.xpose.msra.mxu0 0
        %4659 = vmatprep.subr.bf16.mxu0 0
        %4660 = vmatpush1.bf16.xpose.msra.mxu0 0
        %4661 = vmatprep.subr.bf16.mxu0 0
        %4662 = vmatpush1.bf16.xpose.msra.mxu0 0
        %4663 = vmatprep.subr.bf16.mxu0 0
        %4664 = vmatpush1.bf16.xpose.msra.mxu0 0
        %4665 = vmatprep.subr.bf16.mxu0 0
        %4666 = vmatpush1.bf16.xpose.msra.mxu0 0
        %4667 = vmatprep.subr.bf16.mxu0 0
        %4668 = vmatpush1.bf16.xpose.msra.mxu0 0
        %4669 = vmatprep.subr.bf16.mxu0 0
        %4670 = vmatpush1.bf16.xpose.msra.mxu0 0
        %4671 = vmatprep.subr.bf16.mxu0 0
        %4672 = vmatpush1.bf16.xpose.msra.mxu0 0
        %4673 = vmatprep.subr.bf16.mxu0 0
        %4674 = vmatpush1.bf16.xpose.msra.mxu0 0
        %4675 = vmatprep.subr.bf16.mxu0 0
        %4676 = vmatpush1.bf16.xpose.msra.mxu0 0
        %4677 = vmatprep.subr.bf16.mxu0 0
        %4678 = vmatpush1.bf16.xpose.msra.mxu0 0
        %4679 = vmatprep.subr.bf16.mxu0 0
        %4680 = vmatpush1.bf16.xpose.msra.mxu0 0
        %4681 = vmatprep.subr.bf16.mxu0 0
        %4682 = vmatpush1.bf16.xpose.msra.mxu0 0
        %4683 = vmatprep.subr.bf16.mxu0 0
        %4684 = vmatpush1.bf16.xpose.msra.mxu0 0
        %4685 = vmatprep.subr.bf16.mxu0 0
        %4686 = vmatpush1.bf16.xpose.msra.mxu0 0
        %4687 = vmatprep.mubr.bf16.mxu0 0
        %4688 = vmatmul.mubr.bf16.gmra.mrb[0].mxu0 %v4650
        %v4689 = vpop.f32.mrb[0].mxu0
        %v4690 = vadd.f32 0.0, %v4689
        %v4691 = vpop.f32.mrb[0].mxu0
        %v4692 = vpop.f32.mrb[0].mxu0
        %v4693 = vadd.f32 0.0, %v4692
        %v4694 = vpop.f32.mrb[0].mxu0
        %4695 = vdwg.mxu0
        %v4697 = vsel %vm1182, %v4350, 0
        %v4700 = vsel %vm1182, %v4358, 0
        %4702 = vmatprep.subr.bf16.mxu0 0
        %4703 = vmatpush1.bf16.xpose.msra.mxu0 %v4700
        %4704 = vmatprep.subr.bf16.mxu0 0
        %4705 = vmatpush1.bf16.xpose.msra.mxu0 0
        %4706 = vmatprep.subr.bf16.mxu0 0
        %4707 = vmatpush1.bf16.xpose.msra.mxu0 0
        %4708 = vmatprep.subr.bf16.mxu0 0
        %4709 = vmatpush1.bf16.xpose.msra.mxu0 0
        %4710 = vmatprep.subr.bf16.mxu0 0
        %4711 = vmatpush1.bf16.xpose.msra.mxu0 0
        %4712 = vmatprep.subr.bf16.mxu0 0
        %4713 = vmatpush1.bf16.xpose.msra.mxu0 0
        %4714 = vmatprep.subr.bf16.mxu0 0
        %4715 = vmatpush1.bf16.xpose.msra.mxu0 0
        %4716 = vmatprep.subr.bf16.mxu0 0
        %4717 = vmatpush1.bf16.xpose.msra.mxu0 0
        %4718 = vmatprep.subr.bf16.mxu0 0
        %4719 = vmatpush1.bf16.xpose.msra.mxu0 0
        %4720 = vmatprep.subr.bf16.mxu0 0
        %4721 = vmatpush1.bf16.xpose.msra.mxu0 0
        %4722 = vmatprep.subr.bf16.mxu0 0
        %4723 = vmatpush1.bf16.xpose.msra.mxu0 0
        %4724 = vmatprep.subr.bf16.mxu0 0
        %4725 = vmatpush1.bf16.xpose.msra.mxu0 0
        %4726 = vmatprep.subr.bf16.mxu0 0
        %4727 = vmatpush1.bf16.xpose.msra.mxu0 0
        %4728 = vmatprep.subr.bf16.mxu0 0
        %4729 = vmatpush1.bf16.xpose.msra.mxu0 0
        %4730 = vmatprep.subr.bf16.mxu0 0
        %4731 = vmatpush1.bf16.xpose.msra.mxu0 0
        %4732 = vmatprep.subr.bf16.mxu0 0
        %4733 = vmatpush1.bf16.xpose.msra.mxu0 0
        %4734 = vmatprep.mubr.bf16.mxu0 0
        %4735 = vmatmul.mubr.bf16.gmra.mrb[0].mxu0 %v4697
        %v4736 = vpop.f32.mrb[0].mxu0
        %v4737 = vadd.f32 0.0, %v4736
        %v4738 = vpop.f32.mrb[0].mxu0
        %v4739 = vpop.f32.mrb[0].mxu0
        %v4740 = vadd.f32 0.0, %v4739
        %v4741 = vpop.f32.mrb[0].mxu0
        %4742 = vdwg.mxu0
        %v4743 = vsel %vm1559, %v4408, -inf
        %4744 = vmax.xlane.f32.xlu0 %v4743
        %v4745 = vpop.xlane.xlu0 %4744
        %v4746 = vsel %vm1559, %v4411, -inf
        %4747 = vmax.xlane.f32.xlu0 %v4746
        %v4748 = vpop.xlane.xlu0 %4747
        %v4749 = vsel %vm1559, %v4455, -inf
        %4750 = vmax.xlane.f32.xlu0 %v4749
        %v4751 = vpop.xlane.xlu0 %4750
        %v4752 = vsel %vm1559, %v4458, -inf
        %4753 = vmax.xlane.f32.xlu0 %v4752
        %v4754 = vpop.xlane.xlu0 %4753
        %v4755 = vsel %vm1559, %v4502, -inf
        %4756 = vmax.xlane.f32.xlu0 %v4755
        %v4757 = vpop.xlane.xlu0 %4756
        %v4758 = vsel %vm1559, %v4505, -inf
        %4759 = vmax.xlane.f32.xlu0 %v4758
        %v4760 = vpop.xlane.xlu0 %4759
        %v4761 = vsel %vm1559, %v4549, -inf
        %4762 = vmax.xlane.f32.xlu0 %v4761
        %v4763 = vpop.xlane.xlu0 %4762
        %v4764 = vsel %vm1559, %v4552, -inf
        %4765 = vmax.xlane.f32.xlu0 %v4764
        %v4766 = vpop.xlane.xlu0 %4765
        %v4767 = vsel %vm1559, %v4596, -inf
        %4768 = vmax.xlane.f32.xlu0 %v4767
        %v4769 = vpop.xlane.xlu0 %4768
        %v4770 = vsel %vm1559, %v4599, -inf
        %4771 = vmax.xlane.f32.xlu0 %v4770
        %v4772 = vpop.xlane.xlu0 %4771
        %v4773 = vsel %vm1559, %v4643, -inf
        %4774 = vmax.xlane.f32.xlu0 %v4773
        %v4775 = vpop.xlane.xlu0 %4774
        %v4776 = vsel %vm1559, %v4646, -inf
        %4777 = vmax.xlane.f32.xlu0 %v4776
        %v4778 = vpop.xlane.xlu0 %4777
        %v4779 = vsel %vm1559, %v4690, -inf
        %4780 = vmax.xlane.f32.xlu0 %v4779
        %v4781 = vpop.xlane.xlu0 %4780
        %v4782 = vsel %vm1559, %v4693, -inf
        %4783 = vmax.xlane.f32.xlu0 %v4782
        %v4784 = vpop.xlane.xlu0 %4783
        %v4785 = vsel %vm1559, %v4737, -inf
        %4786 = vmax.xlane.f32.xlu0 %v4785
        %v4787 = vpop.xlane.xlu0 %4786
        %v4788 = vsel %vm1559, %v4740, -inf
        %4789 = vmax.xlane.f32.xlu0 %v4788
        %v4790 = vpop.xlane.xlu0 %4789
        %v4791 = vsub.f32 %v4408, %v4745
        %v4792 = vsub.f32 %v4411, %v4748
        %v4793 = vsub.f32 %v4455, %v4751
        %v4794 = vsub.f32 %v4458, %v4754
        %v4795 = vsub.f32 %v4502, %v4757
        %v4796 = vsub.f32 %v4505, %v4760
        %v4797 = vsub.f32 %v4549, %v4763
        %v4798 = vsub.f32 %v4552, %v4766
        %v4799 = vsub.f32 %v4596, %v4769
        %v4800 = vsub.f32 %v4599, %v4772
        %v4801 = vsub.f32 %v4643, %v4775
        %v4802 = vsub.f32 %v4646, %v4778
        %v4803 = vsub.f32 %v4690, %v4781
        %v4804 = vsub.f32 %v4693, %v4784
        %v4805 = vsub.f32 %v4737, %v4787
        %v4806 = vsub.f32 %v4740, %v4790
        %v4807 = vmul.f32 %v4791, 1.442695
        %v4808 = vpow.pop %v4807
        %v4809 = vmul.f32 %v4792, 1.442695
        %v4810 = vpow.pop %v4809
        %v4811 = vmul.f32 %v4793, 1.442695
        %v4812 = vpow.pop %v4811
        %v4813 = vmul.f32 %v4794, 1.442695
        %v4814 = vpow.pop %v4813
        %v4815 = vmul.f32 %v4795, 1.442695
        %v4816 = vpow.pop %v4815
        %v4817 = vmul.f32 %v4796, 1.442695
        %v4818 = vpow.pop %v4817
        %v4819 = vmul.f32 %v4797, 1.442695
        %v4820 = vpow.pop %v4819
        %v4821 = vmul.f32 %v4798, 1.442695
        %v4822 = vpow.pop %v4821
        %v4823 = vmul.f32 %v4799, 1.442695
        %v4824 = vpow.pop %v4823
        %v4825 = vmul.f32 %v4800, 1.442695
        %v4826 = vpow.pop %v4825
        %v4827 = vmul.f32 %v4801, 1.442695
        %v4828 = vpow.pop %v4827
        %v4829 = vmul.f32 %v4802, 1.442695
        %v4830 = vpow.pop %v4829
        %v4831 = vmul.f32 %v4803, 1.442695
        %v4832 = vpow.pop %v4831
        %v4833 = vmul.f32 %v4804, 1.442695
        %v4834 = vpow.pop %v4833
        %v4835 = vmul.f32 %v4805, 1.442695
        %v4836 = vpow.pop %v4835
        %v4837 = vmul.f32 %v4806, 1.442695
        %v4838 = vpow.pop %v4837
        %v4839 = vsel %vm1559, %v4808, 0.0
        %4840 = vadd.xlane.f32.xlu0 %v4839
        %v4841 = vpop.xlane.xlu0 %4840
        %v4842 = vsel %vm1559, %v4810, 0.0
        %4843 = vadd.xlane.f32.xlu0 %v4842
        %v4844 = vpop.xlane.xlu0 %4843
        %v4845 = vsel %vm1559, %v4812, 0.0
        %4846 = vadd.xlane.f32.xlu0 %v4845
        %v4847 = vpop.xlane.xlu0 %4846
        %v4848 = vsel %vm1559, %v4814, 0.0
        %4849 = vadd.xlane.f32.xlu0 %v4848
        %v4850 = vpop.xlane.xlu0 %4849
        %v4851 = vsel %vm1559, %v4816, 0.0
        %4852 = vadd.xlane.f32.xlu0 %v4851
        %v4853 = vpop.xlane.xlu0 %4852
        %v4854 = vsel %vm1559, %v4818, 0.0
        %4855 = vadd.xlane.f32.xlu0 %v4854
        %v4856 = vpop.xlane.xlu0 %4855
        %v4857 = vsel %vm1559, %v4820, 0.0
        %4858 = vadd.xlane.f32.xlu0 %v4857
        %v4859 = vpop.xlane.xlu0 %4858
        %v4860 = vsel %vm1559, %v4822, 0.0
        %4861 = vadd.xlane.f32.xlu0 %v4860
        %v4862 = vpop.xlane.xlu0 %4861
        %v4863 = vsel %vm1559, %v4824, 0.0
        %4864 = vadd.xlane.f32.xlu0 %v4863
        %v4865 = vpop.xlane.xlu0 %4864
        %v4866 = vsel %vm1559, %v4826, 0.0
        %4867 = vadd.xlane.f32.xlu0 %v4866
        %v4868 = vpop.xlane.xlu0 %4867
        %v4869 = vsel %vm1559, %v4828, 0.0
        %4870 = vadd.xlane.f32.xlu0 %v4869
        %v4871 = vpop.xlane.xlu0 %4870
        %v4872 = vsel %vm1559, %v4830, 0.0
        %4873 = vadd.xlane.f32.xlu0 %v4872
        %v4874 = vpop.xlane.xlu0 %4873
        %v4875 = vsel %vm1559, %v4832, 0.0
        %4876 = vadd.xlane.f32.xlu0 %v4875
        %v4877 = vpop.xlane.xlu0 %4876
        %v4878 = vsel %vm1559, %v4834, 0.0
        %4879 = vadd.xlane.f32.xlu0 %v4878
        %v4880 = vpop.xlane.xlu0 %4879
        %v4881 = vsel %vm1559, %v4836, 0.0
        %4882 = vadd.xlane.f32.xlu0 %v4881
        %v4883 = vpop.xlane.xlu0 %4882
        %v4884 = vsel %vm1559, %v4838, 0.0
        %4885 = vadd.xlane.f32.xlu0 %v4884
        %v4886 = vpop.xlane.xlu0 %4885
        %v4887 = vrcp.pop %v4841
        %v4888 = vrcp.pop %v4844
        %v4889 = vrcp.pop %v4847
        %v4890 = vrcp.pop %v4850
        %v4891 = vrcp.pop %v4853
        %v4892 = vrcp.pop %v4856
        %v4893 = vrcp.pop %v4859
        %v4894 = vrcp.pop %v4862
        %v4895 = vrcp.pop %v4865
        %v4896 = vrcp.pop %v4868
        %v4897 = vrcp.pop %v4871
        %v4898 = vrcp.pop %v4874
        %v4899 = vrcp.pop %v4877
        %v4900 = vrcp.pop %v4880
        %v4901 = vrcp.pop %v4883
        %v4902 = vrcp.pop %v4886
        %v4903 = vmul.f32 %v4808, %v4887
        %v4904 = vmul.f32 %v4810, %v4888
        %v4905 = vmul.f32 %v4812, %v4889
        %v4906 = vmul.f32 %v4814, %v4890
        %v4907 = vmul.f32 %v4816, %v4891
        %v4908 = vmul.f32 %v4818, %v4892
        %v4909 = vmul.f32 %v4820, %v4893
        %v4910 = vmul.f32 %v4822, %v4894
        %v4911 = vmul.f32 %v4824, %v4895
        %v4912 = vmul.f32 %v4826, %v4896
        %v4913 = vmul.f32 %v4828, %v4897
        %v4914 = vmul.f32 %v4830, %v4898
        %v4915 = vmul.f32 %v4832, %v4899
        %v4916 = vmul.f32 %v4834, %v4900
        %v4917 = vmul.f32 %v4836, %v4901
        %v4918 = vmul.f32 %v4838, %v4902
        %v4919 = vpack.c.bf16 %v4904, %v4903
        %v4920 = vpack.c.bf16 %v4906, %v4905
        %v4921 = vpack.c.bf16 %v4908, %v4907
        %v4922 = vpack.c.bf16 %v4910, %v4909
        %v4923 = vpack.c.bf16 %v4912, %v4911
        %v4924 = vpack.c.bf16 %v4914, %v4913
        %v4925 = vpack.c.bf16 %v4916, %v4915
        %v4926 = vpack.c.bf16 %v4918, %v4917
        %v4928 = vsel %vm1559, %v4919, 0
        %4930 = vmatprep.subr.bf16.mxu0 0
        %4931 = vmatpush1.bf16.msra.mxu0 %v4359
        %4932 = vmatprep.subr.bf16.mxu0 0
        %4933 = vmatpush1.bf16.msra.mxu0 0
        %4934 = vmatprep.subr.bf16.mxu0 0
        %4935 = vmatpush1.bf16.msra.mxu0 0
        %4936 = vmatprep.subr.bf16.mxu0 0
        %4937 = vmatpush1.bf16.msra.mxu0 0
        %4938 = vmatprep.subr.bf16.mxu0 0
        %4939 = vmatpush1.bf16.msra.mxu0 0
        %4940 = vmatprep.subr.bf16.mxu0 0
        %4941 = vmatpush1.bf16.msra.mxu0 0
        %4942 = vmatprep.subr.bf16.mxu0 0
        %4943 = vmatpush1.bf16.msra.mxu0 0
        %4944 = vmatprep.subr.bf16.mxu0 0
        %4945 = vmatpush1.bf16.msra.mxu0 0
        %4946 = vmatprep.subr.bf16.mxu0 0
        %4947 = vmatpush1.bf16.msra.mxu0 0
        %4948 = vmatprep.subr.bf16.mxu0 0
        %4949 = vmatpush1.bf16.msra.mxu0 0
        %4950 = vmatprep.subr.bf16.mxu0 0
        %4951 = vmatpush1.bf16.msra.mxu0 0
        %4952 = vmatprep.subr.bf16.mxu0 0
        %4953 = vmatpush1.bf16.msra.mxu0 0
        %4954 = vmatprep.subr.bf16.mxu0 0
        %4955 = vmatpush1.bf16.msra.mxu0 0
        %4956 = vmatprep.subr.bf16.mxu0 0
        %4957 = vmatpush1.bf16.msra.mxu0 0
        %4958 = vmatprep.subr.bf16.mxu0 0
        %4959 = vmatpush1.bf16.msra.mxu0 0
        %4960 = vmatprep.subr.bf16.mxu0 0
        %4961 = vmatpush1.bf16.msra.mxu0 0
        %4962 = vmatprep.mubr.bf16.mxu0 0
        %4963 = vmatmul.mubr.bf16.gmra.mrb[0].mxu0 %v4928
        %v4964 = vpop.f32.mrb[0].mxu0
        %v4965 = vadd.f32 0.0, %v4964
        %v4966 = vpop.f32.mrb[0].mxu0
        %v4967 = vpop.f32.mrb[0].mxu0
        %v4968 = vadd.f32 0.0, %v4967
        %v4969 = vpop.f32.mrb[0].mxu0
        %4970 = vdwg.mxu0
        %v4972 = vsel %vm1559, %v4920, 0
        %4974 = vmatprep.subr.bf16.mxu0 0
        %4975 = vmatpush1.bf16.msra.mxu0 %v4360
        %4976 = vmatprep.subr.bf16.mxu0 0
        %4977 = vmatpush1.bf16.msra.mxu0 0
        %4978 = vmatprep.subr.bf16.mxu0 0
        %4979 = vmatpush1.bf16.msra.mxu0 0
        %4980 = vmatprep.subr.bf16.mxu0 0
        %4981 = vmatpush1.bf16.msra.mxu0 0
        %4982 = vmatprep.subr.bf16.mxu0 0
        %4983 = vmatpush1.bf16.msra.mxu0 0
        %4984 = vmatprep.subr.bf16.mxu0 0
        %4985 = vmatpush1.bf16.msra.mxu0 0
        %4986 = vmatprep.subr.bf16.mxu0 0
        %4987 = vmatpush1.bf16.msra.mxu0 0
        %4988 = vmatprep.subr.bf16.mxu0 0
        %4989 = vmatpush1.bf16.msra.mxu0 0
        %4990 = vmatprep.subr.bf16.mxu0 0
        %4991 = vmatpush1.bf16.msra.mxu0 0
        %4992 = vmatprep.subr.bf16.mxu0 0
        %4993 = vmatpush1.bf16.msra.mxu0 0
        %4994 = vmatprep.subr.bf16.mxu0 0
        %4995 = vmatpush1.bf16.msra.mxu0 0
        %4996 = vmatprep.subr.bf16.mxu0 0
        %4997 = vmatpush1.bf16.msra.mxu0 0
        %4998 = vmatprep.subr.bf16.mxu0 0
        %4999 = vmatpush1.bf16.msra.mxu0 0
        %5000 = vmatprep.subr.bf16.mxu0 0
        %5001 = vmatpush1.bf16.msra.mxu0 0
        %5002 = vmatprep.subr.bf16.mxu0 0
        %5003 = vmatpush1.bf16.msra.mxu0 0
        %5004 = vmatprep.subr.bf16.mxu0 0
        %5005 = vmatpush1.bf16.msra.mxu0 0
        %5006 = vmatprep.mubr.bf16.mxu0 0
        %5007 = vmatmul.mubr.bf16.gmra.mrb[0].mxu0 %v4972
        %v5008 = vpop.f32.mrb[0].mxu0
        %v5009 = vadd.f32 0.0, %v5008
        %v5010 = vpop.f32.mrb[0].mxu0
        %v5011 = vpop.f32.mrb[0].mxu0
        %v5012 = vadd.f32 0.0, %v5011
        %v5013 = vpop.f32.mrb[0].mxu0
        %5014 = vdwg.mxu0
        %v5016 = vsel %vm1559, %v4921, 0
        %5018 = vmatprep.subr.bf16.mxu0 0
        %5019 = vmatpush1.bf16.msra.mxu0 %v4361
        %5020 = vmatprep.subr.bf16.mxu0 0
        %5021 = vmatpush1.bf16.msra.mxu0 0
        %5022 = vmatprep.subr.bf16.mxu0 0
        %5023 = vmatpush1.bf16.msra.mxu0 0
        %5024 = vmatprep.subr.bf16.mxu0 0
        %5025 = vmatpush1.bf16.msra.mxu0 0
        %5026 = vmatprep.subr.bf16.mxu0 0
        %5027 = vmatpush1.bf16.msra.mxu0 0
        %5028 = vmatprep.subr.bf16.mxu0 0
        %5029 = vmatpush1.bf16.msra.mxu0 0
        %5030 = vmatprep.subr.bf16.mxu0 0
        %5031 = vmatpush1.bf16.msra.mxu0 0
        %5032 = vmatprep.subr.bf16.mxu0 0
        %5033 = vmatpush1.bf16.msra.mxu0 0
        %5034 = vmatprep.subr.bf16.mxu0 0
        %5035 = vmatpush1.bf16.msra.mxu0 0
        %5036 = vmatprep.subr.bf16.mxu0 0
        %5037 = vmatpush1.bf16.msra.mxu0 0
        %5038 = vmatprep.subr.bf16.mxu0 0
        %5039 = vmatpush1.bf16.msra.mxu0 0
        %5040 = vmatprep.subr.bf16.mxu0 0
        %5041 = vmatpush1.bf16.msra.mxu0 0
        %5042 = vmatprep.subr.bf16.mxu0 0
        %5043 = vmatpush1.bf16.msra.mxu0 0
        %5044 = vmatprep.subr.bf16.mxu0 0
        %5045 = vmatpush1.bf16.msra.mxu0 0
        %5046 = vmatprep.subr.bf16.mxu0 0
        %5047 = vmatpush1.bf16.msra.mxu0 0
        %5048 = vmatprep.subr.bf16.mxu0 0
        %5049 = vmatpush1.bf16.msra.mxu0 0
        %5050 = vmatprep.mubr.bf16.mxu0 0
        %5051 = vmatmul.mubr.bf16.gmra.mrb[0].mxu0 %v5016
        %v5052 = vpop.f32.mrb[0].mxu0
        %v5053 = vadd.f32 0.0, %v5052
        %v5054 = vpop.f32.mrb[0].mxu0
        %v5055 = vpop.f32.mrb[0].mxu0
        %v5056 = vadd.f32 0.0, %v5055
        %v5057 = vpop.f32.mrb[0].mxu0
        %5058 = vdwg.mxu0
        %v5060 = vsel %vm1559, %v4922, 0
        %5062 = vmatprep.subr.bf16.mxu0 0
        %5063 = vmatpush1.bf16.msra.mxu0 %v4362
        %5064 = vmatprep.subr.bf16.mxu0 0
        %5065 = vmatpush1.bf16.msra.mxu0 0
        %5066 = vmatprep.subr.bf16.mxu0 0
        %5067 = vmatpush1.bf16.msra.mxu0 0
        %5068 = vmatprep.subr.bf16.mxu0 0
        %5069 = vmatpush1.bf16.msra.mxu0 0
        %5070 = vmatprep.subr.bf16.mxu0 0
        %5071 = vmatpush1.bf16.msra.mxu0 0
        %5072 = vmatprep.subr.bf16.mxu0 0
        %5073 = vmatpush1.bf16.msra.mxu0 0
        %5074 = vmatprep.subr.bf16.mxu0 0
        %5075 = vmatpush1.bf16.msra.mxu0 0
        %5076 = vmatprep.subr.bf16.mxu0 0
        %5077 = vmatpush1.bf16.msra.mxu0 0
        %5078 = vmatprep.subr.bf16.mxu0 0
        %5079 = vmatpush1.bf16.msra.mxu0 0
        %5080 = vmatprep.subr.bf16.mxu0 0
        %5081 = vmatpush1.bf16.msra.mxu0 0
        %5082 = vmatprep.subr.bf16.mxu0 0
        %5083 = vmatpush1.bf16.msra.mxu0 0
        %5084 = vmatprep.subr.bf16.mxu0 0
        %5085 = vmatpush1.bf16.msra.mxu0 0
        %5086 = vmatprep.subr.bf16.mxu0 0
        %5087 = vmatpush1.bf16.msra.mxu0 0
        %5088 = vmatprep.subr.bf16.mxu0 0
        %5089 = vmatpush1.bf16.msra.mxu0 0
        %5090 = vmatprep.subr.bf16.mxu0 0
        %5091 = vmatpush1.bf16.msra.mxu0 0
        %5092 = vmatprep.subr.bf16.mxu0 0
        %5093 = vmatpush1.bf16.msra.mxu0 0
        %5094 = vmatprep.mubr.bf16.mxu0 0
        %5095 = vmatmul.mubr.bf16.gmra.mrb[0].mxu0 %v5060
        %v5096 = vpop.f32.mrb[0].mxu0
        %v5097 = vadd.f32 0.0, %v5096
        %v5098 = vpop.f32.mrb[0].mxu0
        %v5099 = vpop.f32.mrb[0].mxu0
        %v5100 = vadd.f32 0.0, %v5099
        %v5101 = vpop.f32.mrb[0].mxu0
        %5102 = vdwg.mxu0
        %v5104 = vsel %vm1559, %v4923, 0
        %5106 = vmatprep.subr.bf16.mxu0 0
        %5107 = vmatpush1.bf16.msra.mxu0 %v4363
        %5108 = vmatprep.subr.bf16.mxu0 0
        %5109 = vmatpush1.bf16.msra.mxu0 0
        %5110 = vmatprep.subr.bf16.mxu0 0
        %5111 = vmatpush1.bf16.msra.mxu0 0
        %5112 = vmatprep.subr.bf16.mxu0 0
        %5113 = vmatpush1.bf16.msra.mxu0 0
        %5114 = vmatprep.subr.bf16.mxu0 0
        %5115 = vmatpush1.bf16.msra.mxu0 0
        %5116 = vmatprep.subr.bf16.mxu0 0
        %5117 = vmatpush1.bf16.msra.mxu0 0
        %5118 = vmatprep.subr.bf16.mxu0 0
        %5119 = vmatpush1.bf16.msra.mxu0 0
        %5120 = vmatprep.subr.bf16.mxu0 0
        %5121 = vmatpush1.bf16.msra.mxu0 0
        %5122 = vmatprep.subr.bf16.mxu0 0
        %5123 = vmatpush1.bf16.msra.mxu0 0
        %5124 = vmatprep.subr.bf16.mxu0 0
        %5125 = vmatpush1.bf16.msra.mxu0 0
        %5126 = vmatprep.subr.bf16.mxu0 0
        %5127 = vmatpush1.bf16.msra.mxu0 0
        %5128 = vmatprep.subr.bf16.mxu0 0
        %5129 = vmatpush1.bf16.msra.mxu0 0
        %5130 = vmatprep.subr.bf16.mxu0 0
        %5131 = vmatpush1.bf16.msra.mxu0 0
        %5132 = vmatprep.subr.bf16.mxu0 0
        %5133 = vmatpush1.bf16.msra.mxu0 0
        %5134 = vmatprep.subr.bf16.mxu0 0
        %5135 = vmatpush1.bf16.msra.mxu0 0
        %5136 = vmatprep.subr.bf16.mxu0 0
        %5137 = vmatpush1.bf16.msra.mxu0 0
        %5138 = vmatprep.mubr.bf16.mxu0 0
        %5139 = vmatmul.mubr.bf16.gmra.mrb[0].mxu0 %v5104
        %v5140 = vpop.f32.mrb[0].mxu0
        %v5141 = vadd.f32 0.0, %v5140
        %v5142 = vpop.f32.mrb[0].mxu0
        %v5143 = vpop.f32.mrb[0].mxu0
        %v5144 = vadd.f32 0.0, %v5143
        %v5145 = vpop.f32.mrb[0].mxu0
        %5146 = vdwg.mxu0
        %v5148 = vsel %vm1559, %v4924, 0
        %5150 = vmatprep.subr.bf16.mxu0 0
        %5151 = vmatpush1.bf16.msra.mxu0 %v4364
        %5152 = vmatprep.subr.bf16.mxu0 0
        %5153 = vmatpush1.bf16.msra.mxu0 0
        %5154 = vmatprep.subr.bf16.mxu0 0
        %5155 = vmatpush1.bf16.msra.mxu0 0
        %5156 = vmatprep.subr.bf16.mxu0 0
        %5157 = vmatpush1.bf16.msra.mxu0 0
        %5158 = vmatprep.subr.bf16.mxu0 0
        %5159 = vmatpush1.bf16.msra.mxu0 0
        %5160 = vmatprep.subr.bf16.mxu0 0
        %5161 = vmatpush1.bf16.msra.mxu0 0
        %5162 = vmatprep.subr.bf16.mxu0 0
        %5163 = vmatpush1.bf16.msra.mxu0 0
        %5164 = vmatprep.subr.bf16.mxu0 0
        %5165 = vmatpush1.bf16.msra.mxu0 0
        %5166 = vmatprep.subr.bf16.mxu0 0
        %5167 = vmatpush1.bf16.msra.mxu0 0
        %5168 = vmatprep.subr.bf16.mxu0 0
        %5169 = vmatpush1.bf16.msra.mxu0 0
        %5170 = vmatprep.subr.bf16.mxu0 0
        %5171 = vmatpush1.bf16.msra.mxu0 0
        %5172 = vmatprep.subr.bf16.mxu0 0
        %5173 = vmatpush1.bf16.msra.mxu0 0
        %5174 = vmatprep.subr.bf16.mxu0 0
        %5175 = vmatpush1.bf16.msra.mxu0 0
        %5176 = vmatprep.subr.bf16.mxu0 0
        %5177 = vmatpush1.bf16.msra.mxu0 0
        %5178 = vmatprep.subr.bf16.mxu0 0
        %5179 = vmatpush1.bf16.msra.mxu0 0
        %5180 = vmatprep.subr.bf16.mxu0 0
        %5181 = vmatpush1.bf16.msra.mxu0 0
        %5182 = vmatprep.mubr.bf16.mxu0 0
        %5183 = vmatmul.mubr.bf16.gmra.mrb[0].mxu0 %v5148
        %v5184 = vpop.f32.mrb[0].mxu0
        %v5185 = vadd.f32 0.0, %v5184
        %v5186 = vpop.f32.mrb[0].mxu0
        %v5187 = vpop.f32.mrb[0].mxu0
        %v5188 = vadd.f32 0.0, %v5187
        %v5189 = vpop.f32.mrb[0].mxu0
        %5190 = vdwg.mxu0
        %v5192 = vsel %vm1559, %v4925, 0
        %5194 = vmatprep.subr.bf16.mxu0 0
        %5195 = vmatpush1.bf16.msra.mxu0 %v4365
        %5196 = vmatprep.subr.bf16.mxu0 0
        %5197 = vmatpush1.bf16.msra.mxu0 0
        %5198 = vmatprep.subr.bf16.mxu0 0
        %5199 = vmatpush1.bf16.msra.mxu0 0
        %5200 = vmatprep.subr.bf16.mxu0 0
        %5201 = vmatpush1.bf16.msra.mxu0 0
        %5202 = vmatprep.subr.bf16.mxu0 0
        %5203 = vmatpush1.bf16.msra.mxu0 0
        %5204 = vmatprep.subr.bf16.mxu0 0
        %5205 = vmatpush1.bf16.msra.mxu0 0
        %5206 = vmatprep.subr.bf16.mxu0 0
        %5207 = vmatpush1.bf16.msra.mxu0 0
        %5208 = vmatprep.subr.bf16.mxu0 0
        %5209 = vmatpush1.bf16.msra.mxu0 0
        %5210 = vmatprep.subr.bf16.mxu0 0
        %5211 = vmatpush1.bf16.msra.mxu0 0
        %5212 = vmatprep.subr.bf16.mxu0 0
        %5213 = vmatpush1.bf16.msra.mxu0 0
        %5214 = vmatprep.subr.bf16.mxu0 0
        %5215 = vmatpush1.bf16.msra.mxu0 0
        %5216 = vmatprep.subr.bf16.mxu0 0
        %5217 = vmatpush1.bf16.msra.mxu0 0
        %5218 = vmatprep.subr.bf16.mxu0 0
        %5219 = vmatpush1.bf16.msra.mxu0 0
        %5220 = vmatprep.subr.bf16.mxu0 0
        %5221 = vmatpush1.bf16.msra.mxu0 0
        %5222 = vmatprep.subr.bf16.mxu0 0
        %5223 = vmatpush1.bf16.msra.mxu0 0
        %5224 = vmatprep.subr.bf16.mxu0 0
        %5225 = vmatpush1.bf16.msra.mxu0 0
        %5226 = vmatprep.mubr.bf16.mxu0 0
        %5227 = vmatmul.mubr.bf16.gmra.mrb[0].mxu0 %v5192
        %v5228 = vpop.f32.mrb[0].mxu0
        %v5229 = vadd.f32 0.0, %v5228
        %v5230 = vpop.f32.mrb[0].mxu0
        %v5231 = vpop.f32.mrb[0].mxu0
        %v5232 = vadd.f32 0.0, %v5231
        %v5233 = vpop.f32.mrb[0].mxu0
        %5234 = vdwg.mxu0
        %v5236 = vsel %vm1559, %v4926, 0
        %5238 = vmatprep.subr.bf16.mxu0 0
        %5239 = vmatpush1.bf16.msra.mxu0 %v4366
        %5240 = vmatprep.subr.bf16.mxu0 0
        %5241 = vmatpush1.bf16.msra.mxu0 0
        %5242 = vmatprep.subr.bf16.mxu0 0
        %5243 = vmatpush1.bf16.msra.mxu0 0
        %5244 = vmatprep.subr.bf16.mxu0 0
        %5245 = vmatpush1.bf16.msra.mxu0 0
        %5246 = vmatprep.subr.bf16.mxu0 0
        %5247 = vmatpush1.bf16.msra.mxu0 0
        %5248 = vmatprep.subr.bf16.mxu0 0
        %5249 = vmatpush1.bf16.msra.mxu0 0
        %5250 = vmatprep.subr.bf16.mxu0 0
        %5251 = vmatpush1.bf16.msra.mxu0 0
        %5252 = vmatprep.subr.bf16.mxu0 0
        %5253 = vmatpush1.bf16.msra.mxu0 0
        %5254 = vmatprep.subr.bf16.mxu0 0
        %5255 = vmatpush1.bf16.msra.mxu0 0
        %5256 = vmatprep.subr.bf16.mxu0 0
        %5257 = vmatpush1.bf16.msra.mxu0 0
        %5258 = vmatprep.subr.bf16.mxu0 0
        %5259 = vmatpush1.bf16.msra.mxu0 0
        %5260 = vmatprep.subr.bf16.mxu0 0
        %5261 = vmatpush1.bf16.msra.mxu0 0
        %5262 = vmatprep.subr.bf16.mxu0 0
        %5263 = vmatpush1.bf16.msra.mxu0 0
        %5264 = vmatprep.subr.bf16.mxu0 0
        %5265 = vmatpush1.bf16.msra.mxu0 0
        %5266 = vmatprep.subr.bf16.mxu0 0
        %5267 = vmatpush1.bf16.msra.mxu0 0
        %5268 = vmatprep.subr.bf16.mxu0 0
        %5269 = vmatpush1.bf16.msra.mxu0 0
        %5270 = vmatprep.mubr.bf16.mxu0 0
        %5271 = vmatmul.mubr.bf16.gmra.mrb[0].mxu0 %v5236
        %v5272 = vpop.f32.mrb[0].mxu0
        %v5273 = vadd.f32 0.0, %v5272
        %v5274 = vpop.f32.mrb[0].mxu0
        %v5275 = vpop.f32.mrb[0].mxu0
        %v5276 = vadd.f32 0.0, %v5275
        %v5277 = vpop.f32.mrb[0].mxu0
        %5278 = vdwg.mxu0
        %v5279 = vpack.c.bf16 %v4968, %v4965
        %v5280 = vpack.c.bf16 %v5012, %v5009
        %v5281 = vpack.c.bf16 %v5056, %v5053
        %v5282 = vpack.c.bf16 %v5100, %v5097
        %v5283 = vpack.c.bf16 %v5144, %v5141
        %v5284 = vpack.c.bf16 %v5188, %v5185
        %v5285 = vpack.c.bf16 %v5232, %v5229
        %v5286 = vpack.c.bf16 %v5276, %v5273
        %s5287 = scalar_lea.vmem %s8, 32
        %v5288 = vld [vmem:[%s5287] sm:$0xf]
        %v5289 = vld [vmem:[%s5287 + $0x4] sm:$0xf]
        %v5290 = vld [vmem:[%s5287 + $0x8] sm:$0xf]
        %v5291 = vld [vmem:[%s5287 + $0xc] sm:$0xf]
        %v5296 = vunpack.c.l.b16 %v5288
        %v5297 = vunpack.c.l.b16 %v5289
        %v5298 = vunpack.c.l.b16 %v5290
        %v5299 = vunpack.c.l.b16 %v5291
        %v5300 = vpack.c.b16 %v5297, %v5296
        %v5301 = vpack.c.b16 %v5299, %v5298
        %v5305 = vsel %vm1182, %v5279, 0
        %v5308 = vsel %vm1182, %v5280, 0
        %v5311 = vsel %vm1182, %v5281, 0
        %v5314 = vsel %vm1182, %v5282, 0
        %v5317 = vsel %vm1182, %v5283, 0
        %v5320 = vsel %vm1182, %v5284, 0
        %v5323 = vsel %vm1182, %v5285, 0
        %v5326 = vsel %vm1182, %v5286, 0
        %5328 = vmatprep.subr.bf16.mxu0 0
        %5329 = vmatpush1.bf16.msra.mxu0 %v5300
        %5330 = vmatprep.subr.bf16.mxu0 0
        %5331 = vmatpush1.bf16.msra.mxu0 %v5301
        %5332 = vmatprep.subr.bf16.mxu0 0
        %5333 = vmatpush1.bf16.msra.mxu0 0
        %5334 = vmatprep.subr.bf16.mxu0 0
        %5335 = vmatpush1.bf16.msra.mxu0 0
        %5336 = vmatprep.subr.bf16.mxu0 0
        %5337 = vmatpush1.bf16.msra.mxu0 0
        %5338 = vmatprep.subr.bf16.mxu0 0
        %5339 = vmatpush1.bf16.msra.mxu0 0
        %5340 = vmatprep.subr.bf16.mxu0 0
        %5341 = vmatpush1.bf16.msra.mxu0 0
        %5342 = vmatprep.subr.bf16.mxu0 0
        %5343 = vmatpush1.bf16.msra.mxu0 0
        %5344 = vmatprep.subr.bf16.mxu0 0
        %5345 = vmatpush1.bf16.msra.mxu0 0
        %5346 = vmatprep.subr.bf16.mxu0 0
        %5347 = vmatpush1.bf16.msra.mxu0 0
        %5348 = vmatprep.subr.bf16.mxu0 0
        %5349 = vmatpush1.bf16.msra.mxu0 0
        %5350 = vmatprep.subr.bf16.mxu0 0
        %5351 = vmatpush1.bf16.msra.mxu0 0
        %5352 = vmatprep.subr.bf16.mxu0 0
        %5353 = vmatpush1.bf16.msra.mxu0 0
        %5354 = vmatprep.subr.bf16.mxu0 0
        %5355 = vmatpush1.bf16.msra.mxu0 0
        %5356 = vmatprep.subr.bf16.mxu0 0
        %5357 = vmatpush1.bf16.msra.mxu0 0
        %5358 = vmatprep.subr.bf16.mxu0 0
        %5359 = vmatpush1.bf16.msra.mxu0 0
        %5360 = vmatprep.mubr.bf16.mxu0 0
        %5361 = vmatmul.mubr.bf16.gmra.mrb[0].mxu0 %v5305
        %v5362 = vpop.f32.mrb[0].mxu0
        %v5363 = vadd.f32 0.0, %v5362
        %v5364 = vpop.f32.mrb[0].mxu0
        %v5365 = vpop.f32.mrb[0].mxu0
        %v5366 = vadd.f32 0.0, %v5365
        %v5367 = vpop.f32.mrb[0].mxu0
        %5368 = vmatprep.mubr.bf16.mxu0 0
        %5369 = vmatmul.mubr.bf16.gmra.mrb[0].mxu0 %v5308
        %v5370 = vpop.f32.mrb[0].mxu0
        %v5371 = vadd.f32 0.0, %v5370
        %v5372 = vpop.f32.mrb[0].mxu0
        %v5373 = vpop.f32.mrb[0].mxu0
        %v5374 = vadd.f32 0.0, %v5373
        %v5375 = vpop.f32.mrb[0].mxu0
        %5376 = vmatprep.mubr.bf16.mxu0 0
        %5377 = vmatmul.mubr.bf16.gmra.mrb[0].mxu0 %v5311
        %v5378 = vpop.f32.mrb[0].mxu0
        %v5379 = vadd.f32 0.0, %v5378
        %v5380 = vpop.f32.mrb[0].mxu0
        %v5381 = vpop.f32.mrb[0].mxu0
        %v5382 = vadd.f32 0.0, %v5381
        %v5383 = vpop.f32.mrb[0].mxu0
        %5384 = vmatprep.mubr.bf16.mxu0 0
        %5385 = vmatmul.mubr.bf16.gmra.mrb[0].mxu0 %v5314
        %v5386 = vpop.f32.mrb[0].mxu0
        %v5387 = vadd.f32 0.0, %v5386
        %v5388 = vpop.f32.mrb[0].mxu0
        %v5389 = vpop.f32.mrb[0].mxu0
        %v5390 = vadd.f32 0.0, %v5389
        %v5391 = vpop.f32.mrb[0].mxu0
        %5392 = vmatprep.mubr.bf16.mxu0 0
        %5393 = vmatmul.mubr.bf16.gmra.mrb[0].mxu0 %v5317
        %v5394 = vpop.f32.mrb[0].mxu0
        %v5395 = vadd.f32 0.0, %v5394
        %v5396 = vpop.f32.mrb[0].mxu0
        %v5397 = vpop.f32.mrb[0].mxu0
        %v5398 = vadd.f32 0.0, %v5397
        %v5399 = vpop.f32.mrb[0].mxu0
        %5400 = vmatprep.mubr.bf16.mxu0 0
        %5401 = vmatmul.mubr.bf16.gmra.mrb[0].mxu0 %v5320
        %v5402 = vpop.f32.mrb[0].mxu0
        %v5403 = vadd.f32 0.0, %v5402
        %v5404 = vpop.f32.mrb[0].mxu0
        %v5405 = vpop.f32.mrb[0].mxu0
        %v5406 = vadd.f32 0.0, %v5405
        %v5407 = vpop.f32.mrb[0].mxu0
        %5408 = vmatprep.mubr.bf16.mxu0 0
        %5409 = vmatmul.mubr.bf16.gmra.mrb[0].mxu0 %v5323
        %v5410 = vpop.f32.mrb[0].mxu0
        %v5411 = vadd.f32 0.0, %v5410
        %v5412 = vpop.f32.mrb[0].mxu0
        %v5413 = vpop.f32.mrb[0].mxu0
        %v5414 = vadd.f32 0.0, %v5413
        %v5415 = vpop.f32.mrb[0].mxu0
        %5416 = vmatprep.mubr.bf16.mxu0 0
        %5417 = vmatmul.mubr.bf16.gmra.mrb[0].mxu0 %v5326
        %v5418 = vpop.f32.mrb[0].mxu0
        %v5419 = vadd.f32 0.0, %v5418
        %v5420 = vpop.f32.mrb[0].mxu0
        %v5421 = vpop.f32.mrb[0].mxu0
        %v5422 = vadd.f32 0.0, %v5421
        %v5423 = vpop.f32.mrb[0].mxu0
        %5424 = vdwg.mxu0
        %v5425 = vadd.f32 %v3771, %v5363
        %v5426 = vadd.f32 %v3774, %v5366
        %v5427 = vadd.f32 %v3779, %v5371
        %v5428 = vadd.f32 %v3782, %v5374
        %v5429 = vadd.f32 %v3787, %v5379
        %v5430 = vadd.f32 %v3790, %v5382
        %v5431 = vadd.f32 %v3795, %v5387
        %v5432 = vadd.f32 %v3798, %v5390
        %v5433 = vadd.f32 %v3803, %v5395
        %v5434 = vadd.f32 %v3806, %v5398
        %v5435 = vadd.f32 %v3811, %v5403
        %v5436 = vadd.f32 %v3814, %v5406
        %v5437 = vadd.f32 %v3819, %v5411
        %v5438 = vadd.f32 %v3822, %v5414
        %v5439 = vadd.f32 %v3827, %v5419
        %v5440 = vadd.f32 %v3830, %v5422
        %s5441 = scalar_lea.vmem %s2, 192
        %v5442 = vld [vmem:[%s5441] sm:$0xf]
        %v5443 = vld [vmem:[%s5441 + $0x4] sm:$0xf]
        %v5444 = vld [vmem:[%s5441 + $0x8] sm:$0xf]
        %v5445 = vld [vmem:[%s5441 + $0xc] sm:$0xf]
        %v5446 = vld [vmem:[%s5441 + $0x10] sm:$0xf]
        %v5447 = vld [vmem:[%s5441 + $0x14] sm:$0xf]
        %v5448 = vld [vmem:[%s5441 + $0x18] sm:$0xf]
        %v5449 = vld [vmem:[%s5441 + $0x1c] sm:$0xf]
        %v5450 = vld [vmem:[%s5441 + $0x20] sm:$0xf]
        %v5451 = vld [vmem:[%s5441 + $0x24] sm:$0xf]
        %v5452 = vld [vmem:[%s5441 + $0x28] sm:$0xf]
        %v5453 = vld [vmem:[%s5441 + $0x2c] sm:$0xf]
        %v5454 = vld [vmem:[%s5441 + $0x30] sm:$0xf]
        %v5455 = vld [vmem:[%s5441 + $0x34] sm:$0xf]
        %v5456 = vld [vmem:[%s5441 + $0x38] sm:$0xf]
        %v5457 = vld [vmem:[%s5441 + $0x3c] sm:$0xf]
        %s5458 = scalar_lea.vmem %s5, 3
        %v5459 = vld [vmem:[%s5458] sm:$0x1]
        %v5461 = vlaneseq
        %v5462 = vshrl.u32 %v5461, 7
        %v5463 = vsub.s32 0, %v5462
        %v5464 = vrot.slane %v5459, %v5463
        %v5482 = vunpack.c.l.b16 %v5442
        %v5483 = vunpack.c.l.b16 %v5443
        %v5484 = vunpack.c.l.b16 %v5444
        %v5485 = vunpack.c.l.b16 %v5445
        %v5486 = vunpack.c.l.b16 %v5446
        %v5487 = vunpack.c.l.b16 %v5447
        %v5488 = vunpack.c.l.b16 %v5448
        %v5489 = vunpack.c.l.b16 %v5449
        %v5490 = vunpack.c.l.b16 %v5450
        %v5491 = vunpack.c.l.b16 %v5451
        %v5492 = vunpack.c.l.b16 %v5452
        %v5493 = vunpack.c.l.b16 %v5453
        %v5494 = vunpack.c.l.b16 %v5454
        %v5495 = vunpack.c.l.b16 %v5455
        %v5496 = vunpack.c.l.b16 %v5456
        %v5497 = vunpack.c.l.b16 %v5457
        %v5498 = vpack.c.b16 %v5483, %v5482
        %v5499 = vpack.c.b16 %v5485, %v5484
        %v5500 = vpack.c.b16 %v5487, %v5486
        %v5501 = vpack.c.b16 %v5489, %v5488
        %v5502 = vpack.c.b16 %v5491, %v5490
        %v5503 = vpack.c.b16 %v5493, %v5492
        %v5504 = vpack.c.b16 %v5495, %v5494
        %v5505 = vpack.c.b16 %v5497, %v5496
        %5514 = vmatprep.subr.bf16.mxu0 0
        %5515 = vmatpush1.bf16.msra.mxu0 %v5498
        %5516 = vmatprep.subr.bf16.mxu0 0
        %5517 = vmatpush1.bf16.msra.mxu0 %v5499
        %5518 = vmatprep.subr.bf16.mxu0 0
        %5519 = vmatpush1.bf16.msra.mxu0 %v5500
        %5520 = vmatprep.subr.bf16.mxu0 0
        %5521 = vmatpush1.bf16.msra.mxu0 %v5501
        %5522 = vmatprep.subr.bf16.mxu0 0
        %5523 = vmatpush1.bf16.msra.mxu0 %v5502
        %5524 = vmatprep.subr.bf16.mxu0 0
        %5525 = vmatpush1.bf16.msra.mxu0 %v5503
        %5526 = vmatprep.subr.bf16.mxu0 0
        %5527 = vmatpush1.bf16.msra.mxu0 %v5504
        %5528 = vmatprep.subr.bf16.mxu0 0
        %5529 = vmatpush1.bf16.msra.mxu0 %v5505
        %5530 = vmatprep.subr.bf16.mxu0 0
        %5531 = vmatpush1.bf16.msra.mxu0 0
        %5532 = vmatprep.subr.bf16.mxu0 0
        %5533 = vmatpush1.bf16.msra.mxu0 0
        %5534 = vmatprep.subr.bf16.mxu0 0
        %5535 = vmatpush1.bf16.msra.mxu0 0
        %5536 = vmatprep.subr.bf16.mxu0 0
        %5537 = vmatpush1.bf16.msra.mxu0 0
        %5538 = vmatprep.subr.bf16.mxu0 0
        %5539 = vmatpush1.bf16.msra.mxu0 0
        %5540 = vmatprep.subr.bf16.mxu0 0
        %5541 = vmatpush1.bf16.msra.mxu0 0
        %5542 = vmatprep.subr.bf16.mxu0 0
        %5543 = vmatpush1.bf16.msra.mxu0 0
        %5544 = vmatprep.subr.bf16.mxu0 0
        %5545 = vmatpush1.bf16.msra.mxu0 0
        %5546 = vmatprep.mubr.bf16.mxu0 0
        %5547 = vmatmul.mubr.bf16.gmra.mrb[0].mxu0 %v638
        %v5548 = vpop.f32.mrb[0].mxu0
        %v5549 = vadd.f32 %v5464, %v5548
        %v5550 = vpop.f32.mrb[0].mxu0
        %v5551 = vpop.f32.mrb[0].mxu0
        %v5552 = vadd.f32 %v5464, %v5551
        %v5553 = vpop.f32.mrb[0].mxu0
        %5554 = vmatprep.mubr.bf16.mxu0 0
        %5555 = vmatmul.mubr.bf16.gmra.mrb[0].mxu0 %v639
        %v5556 = vpop.f32.mrb[0].mxu0
        %v5557 = vadd.f32 %v5464, %v5556
        %v5558 = vpop.f32.mrb[0].mxu0
        %v5559 = vpop.f32.mrb[0].mxu0
        %v5560 = vadd.f32 %v5464, %v5559
        %v5561 = vpop.f32.mrb[0].mxu0
        %5562 = vmatprep.mubr.bf16.mxu0 0
        %5563 = vmatmul.mubr.bf16.gmra.mrb[0].mxu0 %v640
        %v5564 = vpop.f32.mrb[0].mxu0
        %v5565 = vadd.f32 %v5464, %v5564
        %v5566 = vpop.f32.mrb[0].mxu0
        %v5567 = vpop.f32.mrb[0].mxu0
        %v5568 = vadd.f32 %v5464, %v5567
        %v5569 = vpop.f32.mrb[0].mxu0
        %5570 = vmatprep.mubr.bf16.mxu0 0
        %5571 = vmatmul.mubr.bf16.gmra.mrb[0].mxu0 %v641
        %v5572 = vpop.f32.mrb[0].mxu0
        %v5573 = vadd.f32 %v5464, %v5572
        %v5574 = vpop.f32.mrb[0].mxu0
        %v5575 = vpop.f32.mrb[0].mxu0
        %v5576 = vadd.f32 %v5464, %v5575
        %v5577 = vpop.f32.mrb[0].mxu0
        %5578 = vmatprep.mubr.bf16.mxu0 0
        %5579 = vmatmul.mubr.bf16.gmra.mrb[0].mxu0 %v642
        %v5580 = vpop.f32.mrb[0].mxu0
        %v5581 = vadd.f32 %v5464, %v5580
        %v5582 = vpop.f32.mrb[0].mxu0
        %v5583 = vpop.f32.mrb[0].mxu0
        %v5584 = vadd.f32 %v5464, %v5583
        %v5585 = vpop.f32.mrb[0].mxu0
        %5586 = vmatprep.mubr.bf16.mxu0 0
        %5587 = vmatmul.mubr.bf16.gmra.mrb[0].mxu0 %v643
        %v5588 = vpop.f32.mrb[0].mxu0
        %v5589 = vadd.f32 %v5464, %v5588
        %v5590 = vpop.f32.mrb[0].mxu0
        %v5591 = vpop.f32.mrb[0].mxu0
        %v5592 = vadd.f32 %v5464, %v5591
        %v5593 = vpop.f32.mrb[0].mxu0
        %5594 = vmatprep.mubr.bf16.mxu0 0
        %5595 = vmatmul.mubr.bf16.gmra.mrb[0].mxu0 %v644
        %v5596 = vpop.f32.mrb[0].mxu0
        %v5597 = vadd.f32 %v5464, %v5596
        %v5598 = vpop.f32.mrb[0].mxu0
        %v5599 = vpop.f32.mrb[0].mxu0
        %v5600 = vadd.f32 %v5464, %v5599
        %v5601 = vpop.f32.mrb[0].mxu0
        %5602 = vmatprep.mubr.bf16.mxu0 0
        %5603 = vmatmul.mubr.bf16.gmra.mrb[0].mxu0 %v645
        %v5604 = vpop.f32.mrb[0].mxu0
        %v5605 = vadd.f32 %v5464, %v5604
        %v5606 = vpop.f32.mrb[0].mxu0
        %v5607 = vpop.f32.mrb[0].mxu0
        %v5608 = vadd.f32 %v5464, %v5607
        %v5609 = vpop.f32.mrb[0].mxu0
        %5610 = vdwg.mxu0
        %s5611 = scalar_lea.vmem %s3, 192
        %v5612 = vld [vmem:[%s5611] sm:$0xf]
        %v5613 = vld [vmem:[%s5611 + $0x4] sm:$0xf]
        %v5614 = vld [vmem:[%s5611 + $0x8] sm:$0xf]
        %v5615 = vld [vmem:[%s5611 + $0xc] sm:$0xf]
        %v5616 = vld [vmem:[%s5611 + $0x10] sm:$0xf]
        %v5617 = vld [vmem:[%s5611 + $0x14] sm:$0xf]
        %v5618 = vld [vmem:[%s5611 + $0x18] sm:$0xf]
        %v5619 = vld [vmem:[%s5611 + $0x1c] sm:$0xf]
        %v5620 = vld [vmem:[%s5611 + $0x20] sm:$0xf]
        %v5621 = vld [vmem:[%s5611 + $0x24] sm:$0xf]
        %v5622 = vld [vmem:[%s5611 + $0x28] sm:$0xf]
        %v5623 = vld [vmem:[%s5611 + $0x2c] sm:$0xf]
        %v5624 = vld [vmem:[%s5611 + $0x30] sm:$0xf]
        %v5625 = vld [vmem:[%s5611 + $0x34] sm:$0xf]
        %v5626 = vld [vmem:[%s5611 + $0x38] sm:$0xf]
        %v5627 = vld [vmem:[%s5611 + $0x3c] sm:$0xf]
        %s5628 = scalar_lea.vmem %s6, 3
        %v5629 = vld [vmem:[%s5628] sm:$0x1]
        %v5631 = vlaneseq
        %v5632 = vshrl.u32 %v5631, 7
        %v5633 = vsub.s32 0, %v5632
        %v5634 = vrot.slane %v5629, %v5633
        %v5652 = vunpack.c.l.b16 %v5612
        %v5653 = vunpack.c.l.b16 %v5613
        %v5654 = vunpack.c.l.b16 %v5614
        %v5655 = vunpack.c.l.b16 %v5615
        %v5656 = vunpack.c.l.b16 %v5616
        %v5657 = vunpack.c.l.b16 %v5617
        %v5658 = vunpack.c.l.b16 %v5618
        %v5659 = vunpack.c.l.b16 %v5619
        %v5660 = vunpack.c.l.b16 %v5620
        %v5661 = vunpack.c.l.b16 %v5621
        %v5662 = vunpack.c.l.b16 %v5622
        %v5663 = vunpack.c.l.b16 %v5623
        %v5664 = vunpack.c.l.b16 %v5624
        %v5665 = vunpack.c.l.b16 %v5625
        %v5666 = vunpack.c.l.b16 %v5626
        %v5667 = vunpack.c.l.b16 %v5627
        %v5668 = vpack.c.b16 %v5653, %v5652
        %v5669 = vpack.c.b16 %v5655, %v5654
        %v5670 = vpack.c.b16 %v5657, %v5656
        %v5671 = vpack.c.b16 %v5659, %v5658
        %v5672 = vpack.c.b16 %v5661, %v5660
        %v5673 = vpack.c.b16 %v5663, %v5662
        %v5674 = vpack.c.b16 %v5665, %v5664
        %v5675 = vpack.c.b16 %v5667, %v5666
        %5684 = vmatprep.subr.bf16.mxu0 0
        %5685 = vmatpush1.bf16.msra.mxu0 %v5668
        %5686 = vmatprep.subr.bf16.mxu0 0
        %5687 = vmatpush1.bf16.msra.mxu0 %v5669
        %5688 = vmatprep.subr.bf16.mxu0 0
        %5689 = vmatpush1.bf16.msra.mxu0 %v5670
        %5690 = vmatprep.subr.bf16.mxu0 0
        %5691 = vmatpush1.bf16.msra.mxu0 %v5671
        %5692 = vmatprep.subr.bf16.mxu0 0
        %5693 = vmatpush1.bf16.msra.mxu0 %v5672
        %5694 = vmatprep.subr.bf16.mxu0 0
        %5695 = vmatpush1.bf16.msra.mxu0 %v5673
        %5696 = vmatprep.subr.bf16.mxu0 0
        %5697 = vmatpush1.bf16.msra.mxu0 %v5674
        %5698 = vmatprep.subr.bf16.mxu0 0
        %5699 = vmatpush1.bf16.msra.mxu0 %v5675
        %5700 = vmatprep.subr.bf16.mxu0 0
        %5701 = vmatpush1.bf16.msra.mxu0 0
        %5702 = vmatprep.subr.bf16.mxu0 0
        %5703 = vmatpush1.bf16.msra.mxu0 0
        %5704 = vmatprep.subr.bf16.mxu0 0
        %5705 = vmatpush1.bf16.msra.mxu0 0
        %5706 = vmatprep.subr.bf16.mxu0 0
        %5707 = vmatpush1.bf16.msra.mxu0 0
        %5708 = vmatprep.subr.bf16.mxu0 0
        %5709 = vmatpush1.bf16.msra.mxu0 0
        %5710 = vmatprep.subr.bf16.mxu0 0
        %5711 = vmatpush1.bf16.msra.mxu0 0
        %5712 = vmatprep.subr.bf16.mxu0 0
        %5713 = vmatpush1.bf16.msra.mxu0 0
        %5714 = vmatprep.subr.bf16.mxu0 0
        %5715 = vmatpush1.bf16.msra.mxu0 0
        %5716 = vmatprep.mubr.bf16.mxu0 0
        %5717 = vmatmul.mubr.bf16.gmra.mrb[0].mxu0 %v646
        %v5718 = vpop.f32.mrb[0].mxu0
        %v5719 = vadd.f32 %v5634, %v5718
        %v5720 = vpop.f32.mrb[0].mxu0
        %v5721 = vpop.f32.mrb[0].mxu0
        %v5722 = vadd.f32 %v5634, %v5721
        %v5723 = vpop.f32.mrb[0].mxu0
        %5724 = vmatprep.mubr.bf16.mxu0 0
        %5725 = vmatmul.mubr.bf16.gmra.mrb[0].mxu0 %v647
        %v5726 = vpop.f32.mrb[0].mxu0
        %v5727 = vadd.f32 %v5634, %v5726
        %v5728 = vpop.f32.mrb[0].mxu0
        %v5729 = vpop.f32.mrb[0].mxu0
        %v5730 = vadd.f32 %v5634, %v5729
        %v5731 = vpop.f32.mrb[0].mxu0
        %5732 = vmatprep.mubr.bf16.mxu0 0
        %5733 = vmatmul.mubr.bf16.gmra.mrb[0].mxu0 %v648
        %v5734 = vpop.f32.mrb[0].mxu0
        %v5735 = vadd.f32 %v5634, %v5734
        %v5736 = vpop.f32.mrb[0].mxu0
        %v5737 = vpop.f32.mrb[0].mxu0
        %v5738 = vadd.f32 %v5634, %v5737
        %v5739 = vpop.f32.mrb[0].mxu0
        %5740 = vmatprep.mubr.bf16.mxu0 0
        %5741 = vmatmul.mubr.bf16.gmra.mrb[0].mxu0 %v649
        %v5742 = vpop.f32.mrb[0].mxu0
        %v5743 = vadd.f32 %v5634, %v5742
        %v5744 = vpop.f32.mrb[0].mxu0
        %v5745 = vpop.f32.mrb[0].mxu0
        %v5746 = vadd.f32 %v5634, %v5745
        %v5747 = vpop.f32.mrb[0].mxu0
        %5748 = vmatprep.mubr.bf16.mxu0 0
        %5749 = vmatmul.mubr.bf16.gmra.mrb[0].mxu0 %v650
        %v5750 = vpop.f32.mrb[0].mxu0
        %v5751 = vadd.f32 %v5634, %v5750
        %v5752 = vpop.f32.mrb[0].mxu0
        %v5753 = vpop.f32.mrb[0].mxu0
        %v5754 = vadd.f32 %v5634, %v5753
        %v5755 = vpop.f32.mrb[0].mxu0
        %5756 = vmatprep.mubr.bf16.mxu0 0
        %5757 = vmatmul.mubr.bf16.gmra.mrb[0].mxu0 %v651
        %v5758 = vpop.f32.mrb[0].mxu0
        %v5759 = vadd.f32 %v5634, %v5758
        %v5760 = vpop.f32.mrb[0].mxu0
        %v5761 = vpop.f32.mrb[0].mxu0
        %v5762 = vadd.f32 %v5634, %v5761
        %v5763 = vpop.f32.mrb[0].mxu0
        %5764 = vmatprep.mubr.bf16.mxu0 0
        %5765 = vmatmul.mubr.bf16.gmra.mrb[0].mxu0 %v652
        %v5766 = vpop.f32.mrb[0].mxu0
        %v5767 = vadd.f32 %v5634, %v5766
        %v5768 = vpop.f32.mrb[0].mxu0
        %v5769 = vpop.f32.mrb[0].mxu0
        %v5770 = vadd.f32 %v5634, %v5769
        %v5771 = vpop.f32.mrb[0].mxu0
        %5772 = vmatprep.mubr.bf16.mxu0 0
        %5773 = vmatmul.mubr.bf16.gmra.mrb[0].mxu0 %v653
        %v5774 = vpop.f32.mrb[0].mxu0
        %v5775 = vadd.f32 %v5634, %v5774
        %v5776 = vpop.f32.mrb[0].mxu0
        %v5777 = vpop.f32.mrb[0].mxu0
        %v5778 = vadd.f32 %v5634, %v5777
        %v5779 = vpop.f32.mrb[0].mxu0
        %5780 = vdwg.mxu0
        %s5781 = scalar_lea.vmem %s4, 192
        %v5782 = vld [vmem:[%s5781] sm:$0xf]
        %v5783 = vld [vmem:[%s5781 + $0x4] sm:$0xf]
        %v5784 = vld [vmem:[%s5781 + $0x8] sm:$0xf]
        %v5785 = vld [vmem:[%s5781 + $0xc] sm:$0xf]
        %v5786 = vld [vmem:[%s5781 + $0x10] sm:$0xf]
        %v5787 = vld [vmem:[%s5781 + $0x14] sm:$0xf]
        %v5788 = vld [vmem:[%s5781 + $0x18] sm:$0xf]
        %v5789 = vld [vmem:[%s5781 + $0x1c] sm:$0xf]
        %v5790 = vld [vmem:[%s5781 + $0x20] sm:$0xf]
        %v5791 = vld [vmem:[%s5781 + $0x24] sm:$0xf]
        %v5792 = vld [vmem:[%s5781 + $0x28] sm:$0xf]
        %v5793 = vld [vmem:[%s5781 + $0x2c] sm:$0xf]
        %v5794 = vld [vmem:[%s5781 + $0x30] sm:$0xf]
        %v5795 = vld [vmem:[%s5781 + $0x34] sm:$0xf]
        %v5796 = vld [vmem:[%s5781 + $0x38] sm:$0xf]
        %v5797 = vld [vmem:[%s5781 + $0x3c] sm:$0xf]
        %s5798 = scalar_lea.vmem %s7, 3
        %v5799 = vld [vmem:[%s5798] sm:$0x1]
        %v5801 = vlaneseq
        %v5802 = vshrl.u32 %v5801, 7
        %v5803 = vsub.s32 0, %v5802
        %v5804 = vrot.slane %v5799, %v5803
        %v5822 = vunpack.c.l.b16 %v5782
        %v5823 = vunpack.c.l.b16 %v5783
        %v5824 = vunpack.c.l.b16 %v5784
        %v5825 = vunpack.c.l.b16 %v5785
        %v5826 = vunpack.c.l.b16 %v5786
        %v5827 = vunpack.c.l.b16 %v5787
        %v5828 = vunpack.c.l.b16 %v5788
        %v5829 = vunpack.c.l.b16 %v5789
        %v5830 = vunpack.c.l.b16 %v5790
        %v5831 = vunpack.c.l.b16 %v5791
        %v5832 = vunpack.c.l.b16 %v5792
        %v5833 = vunpack.c.l.b16 %v5793
        %v5834 = vunpack.c.l.b16 %v5794
        %v5835 = vunpack.c.l.b16 %v5795
        %v5836 = vunpack.c.l.b16 %v5796
        %v5837 = vunpack.c.l.b16 %v5797
        %v5838 = vpack.c.b16 %v5823, %v5822
        %v5839 = vpack.c.b16 %v5825, %v5824
        %v5840 = vpack.c.b16 %v5827, %v5826
        %v5841 = vpack.c.b16 %v5829, %v5828
        %v5842 = vpack.c.b16 %v5831, %v5830
        %v5843 = vpack.c.b16 %v5833, %v5832
        %v5844 = vpack.c.b16 %v5835, %v5834
        %v5845 = vpack.c.b16 %v5837, %v5836
        %5854 = vmatprep.subr.bf16.mxu0 0
        %5855 = vmatpush1.bf16.msra.mxu0 %v5838
        %5856 = vmatprep.subr.bf16.mxu0 0
        %5857 = vmatpush1.bf16.msra.mxu0 %v5839
        %5858 = vmatprep.subr.bf16.mxu0 0
        %5859 = vmatpush1.bf16.msra.mxu0 %v5840
        %5860 = vmatprep.subr.bf16.mxu0 0
        %5861 = vmatpush1.bf16.msra.mxu0 %v5841
        %5862 = vmatprep.subr.bf16.mxu0 0
        %5863 = vmatpush1.bf16.msra.mxu0 %v5842
        %5864 = vmatprep.subr.bf16.mxu0 0
        %5865 = vmatpush1.bf16.msra.mxu0 %v5843
        %5866 = vmatprep.subr.bf16.mxu0 0
        %5867 = vmatpush1.bf16.msra.mxu0 %v5844
        %5868 = vmatprep.subr.bf16.mxu0 0
        %5869 = vmatpush1.bf16.msra.mxu0 %v5845
        %5870 = vmatprep.subr.bf16.mxu0 0
        %5871 = vmatpush1.bf16.msra.mxu0 0
        %5872 = vmatprep.subr.bf16.mxu0 0
        %5873 = vmatpush1.bf16.msra.mxu0 0
        %5874 = vmatprep.subr.bf16.mxu0 0
        %5875 = vmatpush1.bf16.msra.mxu0 0
        %5876 = vmatprep.subr.bf16.mxu0 0
        %5877 = vmatpush1.bf16.msra.mxu0 0
        %5878 = vmatprep.subr.bf16.mxu0 0
        %5879 = vmatpush1.bf16.msra.mxu0 0
        %5880 = vmatprep.subr.bf16.mxu0 0
        %5881 = vmatpush1.bf16.msra.mxu0 0
        %5882 = vmatprep.subr.bf16.mxu0 0
        %5883 = vmatpush1.bf16.msra.mxu0 0
        %5884 = vmatprep.subr.bf16.mxu0 0
        %5885 = vmatpush1.bf16.msra.mxu0 0
        %5886 = vmatprep.mubr.bf16.mxu0 0
        %5887 = vmatmul.mubr.bf16.gmra.mrb[0].mxu0 %v646
        %v5888 = vpop.f32.mrb[0].mxu0
        %v5889 = vadd.f32 %v5804, %v5888
        %v5890 = vpop.f32.mrb[0].mxu0
        %v5891 = vpop.f32.mrb[0].mxu0
        %v5892 = vadd.f32 %v5804, %v5891
        %v5893 = vpop.f32.mrb[0].mxu0
        %5894 = vmatprep.mubr.bf16.mxu0 0
        %5895 = vmatmul.mubr.bf16.gmra.mrb[0].mxu0 %v647
        %v5896 = vpop.f32.mrb[0].mxu0
        %v5897 = vadd.f32 %v5804, %v5896
        %v5898 = vpop.f32.mrb[0].mxu0
        %v5899 = vpop.f32.mrb[0].mxu0
        %v5900 = vadd.f32 %v5804, %v5899
        %v5901 = vpop.f32.mrb[0].mxu0
        %5902 = vmatprep.mubr.bf16.mxu0 0
        %5903 = vmatmul.mubr.bf16.gmra.mrb[0].mxu0 %v648
        %v5904 = vpop.f32.mrb[0].mxu0
        %v5905 = vadd.f32 %v5804, %v5904
        %v5906 = vpop.f32.mrb[0].mxu0
        %v5907 = vpop.f32.mrb[0].mxu0
        %v5908 = vadd.f32 %v5804, %v5907
        %v5909 = vpop.f32.mrb[0].mxu0
        %5910 = vmatprep.mubr.bf16.mxu0 0
        %5911 = vmatmul.mubr.bf16.gmra.mrb[0].mxu0 %v649
        %v5912 = vpop.f32.mrb[0].mxu0
        %v5913 = vadd.f32 %v5804, %v5912
        %v5914 = vpop.f32.mrb[0].mxu0
        %v5915 = vpop.f32.mrb[0].mxu0
        %v5916 = vadd.f32 %v5804, %v5915
        %v5917 = vpop.f32.mrb[0].mxu0
        %5918 = vmatprep.mubr.bf16.mxu0 0
        %5919 = vmatmul.mubr.bf16.gmra.mrb[0].mxu0 %v650
        %v5920 = vpop.f32.mrb[0].mxu0
        %v5921 = vadd.f32 %v5804, %v5920
        %v5922 = vpop.f32.mrb[0].mxu0
        %v5923 = vpop.f32.mrb[0].mxu0
        %v5924 = vadd.f32 %v5804, %v5923
        %v5925 = vpop.f32.mrb[0].mxu0
        %5926 = vmatprep.mubr.bf16.mxu0 0
        %5927 = vmatmul.mubr.bf16.gmra.mrb[0].mxu0 %v651
        %v5928 = vpop.f32.mrb[0].mxu0
        %v5929 = vadd.f32 %v5804, %v5928
        %v5930 = vpop.f32.mrb[0].mxu0
        %v5931 = vpop.f32.mrb[0].mxu0
        %v5932 = vadd.f32 %v5804, %v5931
        %v5933 = vpop.f32.mrb[0].mxu0
        %5934 = vmatprep.mubr.bf16.mxu0 0
        %5935 = vmatmul.mubr.bf16.gmra.mrb[0].mxu0 %v652
        %v5936 = vpop.f32.mrb[0].mxu0
        %v5937 = vadd.f32 %v5804, %v5936
        %v5938 = vpop.f32.mrb[0].mxu0
        %v5939 = vpop.f32.mrb[0].mxu0
        %v5940 = vadd.f32 %v5804, %v5939
        %v5941 = vpop.f32.mrb[0].mxu0
        %5942 = vmatprep.mubr.bf16.mxu0 0
        %5943 = vmatmul.mubr.bf16.gmra.mrb[0].mxu0 %v653
        %v5944 = vpop.f32.mrb[0].mxu0
        %v5945 = vadd.f32 %v5804, %v5944
        %v5946 = vpop.f32.mrb[0].mxu0
        %v5947 = vpop.f32.mrb[0].mxu0
        %v5948 = vadd.f32 %v5804, %v5947
        %v5949 = vpop.f32.mrb[0].mxu0
        %5950 = vdwg.mxu0
        %v5951 = vpack.c.bf16 %v5552, %v5549
        %v5952 = vpack.c.bf16 %v5560, %v5557
        %v5953 = vpack.c.bf16 %v5568, %v5565
        %v5954 = vpack.c.bf16 %v5576, %v5573
        %v5955 = vpack.c.bf16 %v5584, %v5581
        %v5956 = vpack.c.bf16 %v5592, %v5589
        %v5957 = vpack.c.bf16 %v5600, %v5597
        %v5958 = vpack.c.bf16 %v5608, %v5605
        %v5959 = vpack.c.bf16 %v5722, %v5719
        %v5960 = vpack.c.bf16 %v5730, %v5727
        %v5961 = vpack.c.bf16 %v5738, %v5735
        %v5962 = vpack.c.bf16 %v5746, %v5743
        %v5963 = vpack.c.bf16 %v5754, %v5751
        %v5964 = vpack.c.bf16 %v5762, %v5759
        %v5965 = vpack.c.bf16 %v5770, %v5767
        %v5966 = vpack.c.bf16 %v5778, %v5775
        %v5967 = vpack.c.bf16 %v5892, %v5889
        %v5968 = vpack.c.bf16 %v5900, %v5897
        %v5969 = vpack.c.bf16 %v5908, %v5905
        %v5970 = vpack.c.bf16 %v5916, %v5913
        %v5971 = vpack.c.bf16 %v5924, %v5921
        %v5972 = vpack.c.bf16 %v5932, %v5929
        %v5973 = vpack.c.bf16 %v5940, %v5937
        %v5974 = vpack.c.bf16 %v5948, %v5945
        %v5976 = vsel %vm1182, %v5951, 0
        %v5979 = vsel %vm1182, %v5959, 0
        %5981 = vmatprep.subr.bf16.mxu0 0
        %5982 = vmatpush1.bf16.xpose.msra.mxu0 %v5979
        %5983 = vmatprep.subr.bf16.mxu0 0
        %5984 = vmatpush1.bf16.xpose.msra.mxu0 0
        %5985 = vmatprep.subr.bf16.mxu0 0
        %5986 = vmatpush1.bf16.xpose.msra.mxu0 0
        %5987 = vmatprep.subr.bf16.mxu0 0
        %5988 = vmatpush1.bf16.xpose.msra.mxu0 0
        %5989 = vmatprep.subr.bf16.mxu0 0
        %5990 = vmatpush1.bf16.xpose.msra.mxu0 0
        %5991 = vmatprep.subr.bf16.mxu0 0
        %5992 = vmatpush1.bf16.xpose.msra.mxu0 0
        %5993 = vmatprep.subr.bf16.mxu0 0
        %5994 = vmatpush1.bf16.xpose.msra.mxu0 0
        %5995 = vmatprep.subr.bf16.mxu0 0
        %5996 = vmatpush1.bf16.xpose.msra.mxu0 0
        %5997 = vmatprep.subr.bf16.mxu0 0
        %5998 = vmatpush1.bf16.xpose.msra.mxu0 0
        %5999 = vmatprep.subr.bf16.mxu0 0
        %6000 = vmatpush1.bf16.xpose.msra.mxu0 0
        %6001 = vmatprep.subr.bf16.mxu0 0
        %6002 = vmatpush1.bf16.xpose.msra.mxu0 0
        %6003 = vmatprep.subr.bf16.mxu0 0
        %6004 = vmatpush1.bf16.xpose.msra.mxu0 0
        %6005 = vmatprep.subr.bf16.mxu0 0
        %6006 = vmatpush1.bf16.xpose.msra.mxu0 0
        %6007 = vmatprep.subr.bf16.mxu0 0
        %6008 = vmatpush1.bf16.xpose.msra.mxu0 0
        %6009 = vmatprep.subr.bf16.mxu0 0
        %6010 = vmatpush1.bf16.xpose.msra.mxu0 0
        %6011 = vmatprep.subr.bf16.mxu0 0
        %6012 = vmatpush1.bf16.xpose.msra.mxu0 0
        %6013 = vmatprep.mubr.bf16.mxu0 0
        %6014 = vmatmul.mubr.bf16.gmra.mrb[0].mxu0 %v5976
        %v6015 = vpop.f32.mrb[0].mxu0
        %v6016 = vadd.f32 0.0, %v6015
        %v6017 = vpop.f32.mrb[0].mxu0
        %v6018 = vpop.f32.mrb[0].mxu0
        %v6019 = vadd.f32 0.0, %v6018
        %v6020 = vpop.f32.mrb[0].mxu0
        %6021 = vdwg.mxu0
        %v6023 = vsel %vm1182, %v5952, 0
        %v6026 = vsel %vm1182, %v5960, 0
        %6028 = vmatprep.subr.bf16.mxu0 0
        %6029 = vmatpush1.bf16.xpose.msra.mxu0 %v6026
        %6030 = vmatprep.subr.bf16.mxu0 0
        %6031 = vmatpush1.bf16.xpose.msra.mxu0 0
        %6032 = vmatprep.subr.bf16.mxu0 0
        %6033 = vmatpush1.bf16.xpose.msra.mxu0 0
        %6034 = vmatprep.subr.bf16.mxu0 0
        %6035 = vmatpush1.bf16.xpose.msra.mxu0 0
        %6036 = vmatprep.subr.bf16.mxu0 0
        %6037 = vmatpush1.bf16.xpose.msra.mxu0 0
        %6038 = vmatprep.subr.bf16.mxu0 0
        %6039 = vmatpush1.bf16.xpose.msra.mxu0 0
        %6040 = vmatprep.subr.bf16.mxu0 0
        %6041 = vmatpush1.bf16.xpose.msra.mxu0 0
        %6042 = vmatprep.subr.bf16.mxu0 0
        %6043 = vmatpush1.bf16.xpose.msra.mxu0 0
        %6044 = vmatprep.subr.bf16.mxu0 0
        %6045 = vmatpush1.bf16.xpose.msra.mxu0 0
        %6046 = vmatprep.subr.bf16.mxu0 0
        %6047 = vmatpush1.bf16.xpose.msra.mxu0 0
        %6048 = vmatprep.subr.bf16.mxu0 0
        %6049 = vmatpush1.bf16.xpose.msra.mxu0 0
        %6050 = vmatprep.subr.bf16.mxu0 0
        %6051 = vmatpush1.bf16.xpose.msra.mxu0 0
        %6052 = vmatprep.subr.bf16.mxu0 0
        %6053 = vmatpush1.bf16.xpose.msra.mxu0 0
        %6054 = vmatprep.subr.bf16.mxu0 0
        %6055 = vmatpush1.bf16.xpose.msra.mxu0 0
        %6056 = vmatprep.subr.bf16.mxu0 0
        %6057 = vmatpush1.bf16.xpose.msra.mxu0 0
        %6058 = vmatprep.subr.bf16.mxu0 0
        %6059 = vmatpush1.bf16.xpose.msra.mxu0 0
        %6060 = vmatprep.mubr.bf16.mxu0 0
        %6061 = vmatmul.mubr.bf16.gmra.mrb[0].mxu0 %v6023
        %v6062 = vpop.f32.mrb[0].mxu0
        %v6063 = vadd.f32 0.0, %v6062
        %v6064 = vpop.f32.mrb[0].mxu0
        %v6065 = vpop.f32.mrb[0].mxu0
        %v6066 = vadd.f32 0.0, %v6065
        %v6067 = vpop.f32.mrb[0].mxu0
        %6068 = vdwg.mxu0
        %v6070 = vsel %vm1182, %v5953, 0
        %v6073 = vsel %vm1182, %v5961, 0
        %6075 = vmatprep.subr.bf16.mxu0 0
        %6076 = vmatpush1.bf16.xpose.msra.mxu0 %v6073
        %6077 = vmatprep.subr.bf16.mxu0 0
        %6078 = vmatpush1.bf16.xpose.msra.mxu0 0
        %6079 = vmatprep.subr.bf16.mxu0 0
        %6080 = vmatpush1.bf16.xpose.msra.mxu0 0
        %6081 = vmatprep.subr.bf16.mxu0 0
        %6082 = vmatpush1.bf16.xpose.msra.mxu0 0
        %6083 = vmatprep.subr.bf16.mxu0 0
        %6084 = vmatpush1.bf16.xpose.msra.mxu0 0
        %6085 = vmatprep.subr.bf16.mxu0 0
        %6086 = vmatpush1.bf16.xpose.msra.mxu0 0
        %6087 = vmatprep.subr.bf16.mxu0 0
        %6088 = vmatpush1.bf16.xpose.msra.mxu0 0
        %6089 = vmatprep.subr.bf16.mxu0 0
        %6090 = vmatpush1.bf16.xpose.msra.mxu0 0
        %6091 = vmatprep.subr.bf16.mxu0 0
        %6092 = vmatpush1.bf16.xpose.msra.mxu0 0
        %6093 = vmatprep.subr.bf16.mxu0 0
        %6094 = vmatpush1.bf16.xpose.msra.mxu0 0
        %6095 = vmatprep.subr.bf16.mxu0 0
        %6096 = vmatpush1.bf16.xpose.msra.mxu0 0
        %6097 = vmatprep.subr.bf16.mxu0 0
        %6098 = vmatpush1.bf16.xpose.msra.mxu0 0
        %6099 = vmatprep.subr.bf16.mxu0 0
        %6100 = vmatpush1.bf16.xpose.msra.mxu0 0
        %6101 = vmatprep.subr.bf16.mxu0 0
        %6102 = vmatpush1.bf16.xpose.msra.mxu0 0
        %6103 = vmatprep.subr.bf16.mxu0 0
        %6104 = vmatpush1.bf16.xpose.msra.mxu0 0
        %6105 = vmatprep.subr.bf16.mxu0 0
        %6106 = vmatpush1.bf16.xpose.msra.mxu0 0
        %6107 = vmatprep.mubr.bf16.mxu0 0
        %6108 = vmatmul.mubr.bf16.gmra.mrb[0].mxu0 %v6070
        %v6109 = vpop.f32.mrb[0].mxu0
        %v6110 = vadd.f32 0.0, %v6109
        %v6111 = vpop.f32.mrb[0].mxu0
        %v6112 = vpop.f32.mrb[0].mxu0
        %v6113 = vadd.f32 0.0, %v6112
        %v6114 = vpop.f32.mrb[0].mxu0
        %6115 = vdwg.mxu0
        %v6117 = vsel %vm1182, %v5954, 0
        %v6120 = vsel %vm1182, %v5962, 0
        %6122 = vmatprep.subr.bf16.mxu0 0
        %6123 = vmatpush1.bf16.xpose.msra.mxu0 %v6120
        %6124 = vmatprep.subr.bf16.mxu0 0
        %6125 = vmatpush1.bf16.xpose.msra.mxu0 0
        %6126 = vmatprep.subr.bf16.mxu0 0
        %6127 = vmatpush1.bf16.xpose.msra.mxu0 0
        %6128 = vmatprep.subr.bf16.mxu0 0
        %6129 = vmatpush1.bf16.xpose.msra.mxu0 0
        %6130 = vmatprep.subr.bf16.mxu0 0
        %6131 = vmatpush1.bf16.xpose.msra.mxu0 0
        %6132 = vmatprep.subr.bf16.mxu0 0
        %6133 = vmatpush1.bf16.xpose.msra.mxu0 0
        %6134 = vmatprep.subr.bf16.mxu0 0
        %6135 = vmatpush1.bf16.xpose.msra.mxu0 0
        %6136 = vmatprep.subr.bf16.mxu0 0
        %6137 = vmatpush1.bf16.xpose.msra.mxu0 0
        %6138 = vmatprep.subr.bf16.mxu0 0
        %6139 = vmatpush1.bf16.xpose.msra.mxu0 0
        %6140 = vmatprep.subr.bf16.mxu0 0
        %6141 = vmatpush1.bf16.xpose.msra.mxu0 0
        %6142 = vmatprep.subr.bf16.mxu0 0
        %6143 = vmatpush1.bf16.xpose.msra.mxu0 0
        %6144 = vmatprep.subr.bf16.mxu0 0
        %6145 = vmatpush1.bf16.xpose.msra.mxu0 0
        %6146 = vmatprep.subr.bf16.mxu0 0
        %6147 = vmatpush1.bf16.xpose.msra.mxu0 0
        %6148 = vmatprep.subr.bf16.mxu0 0
        %6149 = vmatpush1.bf16.xpose.msra.mxu0 0
        %6150 = vmatprep.subr.bf16.mxu0 0
        %6151 = vmatpush1.bf16.xpose.msra.mxu0 0
        %6152 = vmatprep.subr.bf16.mxu0 0
        %6153 = vmatpush1.bf16.xpose.msra.mxu0 0
        %6154 = vmatprep.mubr.bf16.mxu0 0
        %6155 = vmatmul.mubr.bf16.gmra.mrb[0].mxu0 %v6117
        %v6156 = vpop.f32.mrb[0].mxu0
        %v6157 = vadd.f32 0.0, %v6156
        %v6158 = vpop.f32.mrb[0].mxu0
        %v6159 = vpop.f32.mrb[0].mxu0
        %v6160 = vadd.f32 0.0, %v6159
        %v6161 = vpop.f32.mrb[0].mxu0
        %6162 = vdwg.mxu0
        %v6164 = vsel %vm1182, %v5955, 0
        %v6167 = vsel %vm1182, %v5963, 0
        %6169 = vmatprep.subr.bf16.mxu0 0
        %6170 = vmatpush1.bf16.xpose.msra.mxu0 %v6167
        %6171 = vmatprep.subr.bf16.mxu0 0
        %6172 = vmatpush1.bf16.xpose.msra.mxu0 0
        %6173 = vmatprep.subr.bf16.mxu0 0
        %6174 = vmatpush1.bf16.xpose.msra.mxu0 0
        %6175 = vmatprep.subr.bf16.mxu0 0
        %6176 = vmatpush1.bf16.xpose.msra.mxu0 0
        %6177 = vmatprep.subr.bf16.mxu0 0
        %6178 = vmatpush1.bf16.xpose.msra.mxu0 0
        %6179 = vmatprep.subr.bf16.mxu0 0
        %6180 = vmatpush1.bf16.xpose.msra.mxu0 0
        %6181 = vmatprep.subr.bf16.mxu0 0
        %6182 = vmatpush1.bf16.xpose.msra.mxu0 0
        %6183 = vmatprep.subr.bf16.mxu0 0
        %6184 = vmatpush1.bf16.xpose.msra.mxu0 0
        %6185 = vmatprep.subr.bf16.mxu0 0
        %6186 = vmatpush1.bf16.xpose.msra.mxu0 0
        %6187 = vmatprep.subr.bf16.mxu0 0
        %6188 = vmatpush1.bf16.xpose.msra.mxu0 0
        %6189 = vmatprep.subr.bf16.mxu0 0
        %6190 = vmatpush1.bf16.xpose.msra.mxu0 0
        %6191 = vmatprep.subr.bf16.mxu0 0
        %6192 = vmatpush1.bf16.xpose.msra.mxu0 0
        %6193 = vmatprep.subr.bf16.mxu0 0
        %6194 = vmatpush1.bf16.xpose.msra.mxu0 0
        %6195 = vmatprep.subr.bf16.mxu0 0
        %6196 = vmatpush1.bf16.xpose.msra.mxu0 0
        %6197 = vmatprep.subr.bf16.mxu0 0
        %6198 = vmatpush1.bf16.xpose.msra.mxu0 0
        %6199 = vmatprep.subr.bf16.mxu0 0
        %6200 = vmatpush1.bf16.xpose.msra.mxu0 0
        %6201 = vmatprep.mubr.bf16.mxu0 0
        %6202 = vmatmul.mubr.bf16.gmra.mrb[0].mxu0 %v6164
        %v6203 = vpop.f32.mrb[0].mxu0
        %v6204 = vadd.f32 0.0, %v6203
        %v6205 = vpop.f32.mrb[0].mxu0
        %v6206 = vpop.f32.mrb[0].mxu0
        %v6207 = vadd.f32 0.0, %v6206
        %v6208 = vpop.f32.mrb[0].mxu0
        %6209 = vdwg.mxu0
        %v6211 = vsel %vm1182, %v5956, 0
        %v6214 = vsel %vm1182, %v5964, 0
        %6216 = vmatprep.subr.bf16.mxu0 0
        %6217 = vmatpush1.bf16.xpose.msra.mxu0 %v6214
        %6218 = vmatprep.subr.bf16.mxu0 0
        %6219 = vmatpush1.bf16.xpose.msra.mxu0 0
        %6220 = vmatprep.subr.bf16.mxu0 0
        %6221 = vmatpush1.bf16.xpose.msra.mxu0 0
        %6222 = vmatprep.subr.bf16.mxu0 0
        %6223 = vmatpush1.bf16.xpose.msra.mxu0 0
        %6224 = vmatprep.subr.bf16.mxu0 0
        %6225 = vmatpush1.bf16.xpose.msra.mxu0 0
        %6226 = vmatprep.subr.bf16.mxu0 0
        %6227 = vmatpush1.bf16.xpose.msra.mxu0 0
        %6228 = vmatprep.subr.bf16.mxu0 0
        %6229 = vmatpush1.bf16.xpose.msra.mxu0 0
        %6230 = vmatprep.subr.bf16.mxu0 0
        %6231 = vmatpush1.bf16.xpose.msra.mxu0 0
        %6232 = vmatprep.subr.bf16.mxu0 0
        %6233 = vmatpush1.bf16.xpose.msra.mxu0 0
        %6234 = vmatprep.subr.bf16.mxu0 0
        %6235 = vmatpush1.bf16.xpose.msra.mxu0 0
        %6236 = vmatprep.subr.bf16.mxu0 0
        %6237 = vmatpush1.bf16.xpose.msra.mxu0 0
        %6238 = vmatprep.subr.bf16.mxu0 0
        %6239 = vmatpush1.bf16.xpose.msra.mxu0 0
        %6240 = vmatprep.subr.bf16.mxu0 0
        %6241 = vmatpush1.bf16.xpose.msra.mxu0 0
        %6242 = vmatprep.subr.bf16.mxu0 0
        %6243 = vmatpush1.bf16.xpose.msra.mxu0 0
        %6244 = vmatprep.subr.bf16.mxu0 0
        %6245 = vmatpush1.bf16.xpose.msra.mxu0 0
        %6246 = vmatprep.subr.bf16.mxu0 0
        %6247 = vmatpush1.bf16.xpose.msra.mxu0 0
        %6248 = vmatprep.mubr.bf16.mxu0 0
        %6249 = vmatmul.mubr.bf16.gmra.mrb[0].mxu0 %v6211
        %v6250 = vpop.f32.mrb[0].mxu0
        %v6251 = vadd.f32 0.0, %v6250
        %v6252 = vpop.f32.mrb[0].mxu0
        %v6253 = vpop.f32.mrb[0].mxu0
        %v6254 = vadd.f32 0.0, %v6253
        %v6255 = vpop.f32.mrb[0].mxu0
        %6256 = vdwg.mxu0
        %v6258 = vsel %vm1182, %v5957, 0
        %v6261 = vsel %vm1182, %v5965, 0
        %6263 = vmatprep.subr.bf16.mxu0 0
        %6264 = vmatpush1.bf16.xpose.msra.mxu0 %v6261
        %6265 = vmatprep.subr.bf16.mxu0 0
        %6266 = vmatpush1.bf16.xpose.msra.mxu0 0
        %6267 = vmatprep.subr.bf16.mxu0 0
        %6268 = vmatpush1.bf16.xpose.msra.mxu0 0
        %6269 = vmatprep.subr.bf16.mxu0 0
        %6270 = vmatpush1.bf16.xpose.msra.mxu0 0
        %6271 = vmatprep.subr.bf16.mxu0 0
        %6272 = vmatpush1.bf16.xpose.msra.mxu0 0
        %6273 = vmatprep.subr.bf16.mxu0 0
        %6274 = vmatpush1.bf16.xpose.msra.mxu0 0
        %6275 = vmatprep.subr.bf16.mxu0 0
        %6276 = vmatpush1.bf16.xpose.msra.mxu0 0
        %6277 = vmatprep.subr.bf16.mxu0 0
        %6278 = vmatpush1.bf16.xpose.msra.mxu0 0
        %6279 = vmatprep.subr.bf16.mxu0 0
        %6280 = vmatpush1.bf16.xpose.msra.mxu0 0
        %6281 = vmatprep.subr.bf16.mxu0 0
        %6282 = vmatpush1.bf16.xpose.msra.mxu0 0
        %6283 = vmatprep.subr.bf16.mxu0 0
        %6284 = vmatpush1.bf16.xpose.msra.mxu0 0
        %6285 = vmatprep.subr.bf16.mxu0 0
        %6286 = vmatpush1.bf16.xpose.msra.mxu0 0
        %6287 = vmatprep.subr.bf16.mxu0 0
        %6288 = vmatpush1.bf16.xpose.msra.mxu0 0
        %6289 = vmatprep.subr.bf16.mxu0 0
        %6290 = vmatpush1.bf16.xpose.msra.mxu0 0
        %6291 = vmatprep.subr.bf16.mxu0 0
        %6292 = vmatpush1.bf16.xpose.msra.mxu0 0
        %6293 = vmatprep.subr.bf16.mxu0 0
        %6294 = vmatpush1.bf16.xpose.msra.mxu0 0
        %6295 = vmatprep.mubr.bf16.mxu0 0
        %6296 = vmatmul.mubr.bf16.gmra.mrb[0].mxu0 %v6258
        %v6297 = vpop.f32.mrb[0].mxu0
        %v6298 = vadd.f32 0.0, %v6297
        %v6299 = vpop.f32.mrb[0].mxu0
        %v6300 = vpop.f32.mrb[0].mxu0
        %v6301 = vadd.f32 0.0, %v6300
        %v6302 = vpop.f32.mrb[0].mxu0
        %6303 = vdwg.mxu0
        %v6305 = vsel %vm1182, %v5958, 0
        %v6308 = vsel %vm1182, %v5966, 0
        %6310 = vmatprep.subr.bf16.mxu0 0
        %6311 = vmatpush1.bf16.xpose.msra.mxu0 %v6308
        %6312 = vmatprep.subr.bf16.mxu0 0
        %6313 = vmatpush1.bf16.xpose.msra.mxu0 0
        %6314 = vmatprep.subr.bf16.mxu0 0
        %6315 = vmatpush1.bf16.xpose.msra.mxu0 0
        %6316 = vmatprep.subr.bf16.mxu0 0
        %6317 = vmatpush1.bf16.xpose.msra.mxu0 0
        %6318 = vmatprep.subr.bf16.mxu0 0
        %6319 = vmatpush1.bf16.xpose.msra.mxu0 0
        %6320 = vmatprep.subr.bf16.mxu0 0
        %6321 = vmatpush1.bf16.xpose.msra.mxu0 0
        %6322 = vmatprep.subr.bf16.mxu0 0
        %6323 = vmatpush1.bf16.xpose.msra.mxu0 0
        %6324 = vmatprep.subr.bf16.mxu0 0
        %6325 = vmatpush1.bf16.xpose.msra.mxu0 0
        %6326 = vmatprep.subr.bf16.mxu0 0
        %6327 = vmatpush1.bf16.xpose.msra.mxu0 0
        %6328 = vmatprep.subr.bf16.mxu0 0
        %6329 = vmatpush1.bf16.xpose.msra.mxu0 0
        %6330 = vmatprep.subr.bf16.mxu0 0
        %6331 = vmatpush1.bf16.xpose.msra.mxu0 0
        %6332 = vmatprep.subr.bf16.mxu0 0
        %6333 = vmatpush1.bf16.xpose.msra.mxu0 0
        %6334 = vmatprep.subr.bf16.mxu0 0
        %6335 = vmatpush1.bf16.xpose.msra.mxu0 0
        %6336 = vmatprep.subr.bf16.mxu0 0
        %6337 = vmatpush1.bf16.xpose.msra.mxu0 0
        %6338 = vmatprep.subr.bf16.mxu0 0
        %6339 = vmatpush1.bf16.xpose.msra.mxu0 0
        %6340 = vmatprep.subr.bf16.mxu0 0
        %6341 = vmatpush1.bf16.xpose.msra.mxu0 0
        %6342 = vmatprep.mubr.bf16.mxu0 0
        %6343 = vmatmul.mubr.bf16.gmra.mrb[0].mxu0 %v6305
        %v6344 = vpop.f32.mrb[0].mxu0
        %v6345 = vadd.f32 0.0, %v6344
        %v6346 = vpop.f32.mrb[0].mxu0
        %v6347 = vpop.f32.mrb[0].mxu0
        %v6348 = vadd.f32 0.0, %v6347
        %v6349 = vpop.f32.mrb[0].mxu0
        %6350 = vdwg.mxu0
        %v6351 = vsel %vm1559, %v6016, -inf
        %6352 = vmax.xlane.f32.xlu0 %v6351
        %v6353 = vpop.xlane.xlu0 %6352
        %v6354 = vsel %vm1559, %v6019, -inf
        %6355 = vmax.xlane.f32.xlu0 %v6354
        %v6356 = vpop.xlane.xlu0 %6355
        %v6357 = vsel %vm1559, %v6063, -inf
        %6358 = vmax.xlane.f32.xlu0 %v6357
        %v6359 = vpop.xlane.xlu0 %6358
        %v6360 = vsel %vm1559, %v6066, -inf
        %6361 = vmax.xlane.f32.xlu0 %v6360
        %v6362 = vpop.xlane.xlu0 %6361
        %v6363 = vsel %vm1559, %v6110, -inf
        %6364 = vmax.xlane.f32.xlu0 %v6363
        %v6365 = vpop.xlane.xlu0 %6364
        %v6366 = vsel %vm1559, %v6113, -inf
        %6367 = vmax.xlane.f32.xlu0 %v6366
        %v6368 = vpop.xlane.xlu0 %6367
        %v6369 = vsel %vm1559, %v6157, -inf
        %6370 = vmax.xlane.f32.xlu0 %v6369
        %v6371 = vpop.xlane.xlu0 %6370
        %v6372 = vsel %vm1559, %v6160, -inf
        %6373 = vmax.xlane.f32.xlu0 %v6372
        %v6374 = vpop.xlane.xlu0 %6373
        %v6375 = vsel %vm1559, %v6204, -inf
        %6376 = vmax.xlane.f32.xlu0 %v6375
        %v6377 = vpop.xlane.xlu0 %6376
        %v6378 = vsel %vm1559, %v6207, -inf
        %6379 = vmax.xlane.f32.xlu0 %v6378
        %v6380 = vpop.xlane.xlu0 %6379
        %v6381 = vsel %vm1559, %v6251, -inf
        %6382 = vmax.xlane.f32.xlu0 %v6381
        %v6383 = vpop.xlane.xlu0 %6382
        %v6384 = vsel %vm1559, %v6254, -inf
        %6385 = vmax.xlane.f32.xlu0 %v6384
        %v6386 = vpop.xlane.xlu0 %6385
        %v6387 = vsel %vm1559, %v6298, -inf
        %6388 = vmax.xlane.f32.xlu0 %v6387
        %v6389 = vpop.xlane.xlu0 %6388
        %v6390 = vsel %vm1559, %v6301, -inf
        %6391 = vmax.xlane.f32.xlu0 %v6390
        %v6392 = vpop.xlane.xlu0 %6391
        %v6393 = vsel %vm1559, %v6345, -inf
        %6394 = vmax.xlane.f32.xlu0 %v6393
        %v6395 = vpop.xlane.xlu0 %6394
        %v6396 = vsel %vm1559, %v6348, -inf
        %6397 = vmax.xlane.f32.xlu0 %v6396
        %v6398 = vpop.xlane.xlu0 %6397
        %v6399 = vsub.f32 %v6016, %v6353
        %v6400 = vsub.f32 %v6019, %v6356
        %v6401 = vsub.f32 %v6063, %v6359
        %v6402 = vsub.f32 %v6066, %v6362
        %v6403 = vsub.f32 %v6110, %v6365
        %v6404 = vsub.f32 %v6113, %v6368
        %v6405 = vsub.f32 %v6157, %v6371
        %v6406 = vsub.f32 %v6160, %v6374
        %v6407 = vsub.f32 %v6204, %v6377
        %v6408 = vsub.f32 %v6207, %v6380
        %v6409 = vsub.f32 %v6251, %v6383
        %v6410 = vsub.f32 %v6254, %v6386
        %v6411 = vsub.f32 %v6298, %v6389
        %v6412 = vsub.f32 %v6301, %v6392
        %v6413 = vsub.f32 %v6345, %v6395
        %v6414 = vsub.f32 %v6348, %v6398
        %v6415 = vmul.f32 %v6399, 1.442695
        %v6416 = vpow.pop %v6415
        %v6417 = vmul.f32 %v6400, 1.442695
        %v6418 = vpow.pop %v6417
        %v6419 = vmul.f32 %v6401, 1.442695
        %v6420 = vpow.pop %v6419
        %v6421 = vmul.f32 %v6402, 1.442695
        %v6422 = vpow.pop %v6421
        %v6423 = vmul.f32 %v6403, 1.442695
        %v6424 = vpow.pop %v6423
        %v6425 = vmul.f32 %v6404, 1.442695
        %v6426 = vpow.pop %v6425
        %v6427 = vmul.f32 %v6405, 1.442695
        %v6428 = vpow.pop %v6427
        %v6429 = vmul.f32 %v6406, 1.442695
        %v6430 = vpow.pop %v6429
        %v6431 = vmul.f32 %v6407, 1.442695
        %v6432 = vpow.pop %v6431
        %v6433 = vmul.f32 %v6408, 1.442695
        %v6434 = vpow.pop %v6433
        %v6435 = vmul.f32 %v6409, 1.442695
        %v6436 = vpow.pop %v6435
        %v6437 = vmul.f32 %v6410, 1.442695
        %v6438 = vpow.pop %v6437
        %v6439 = vmul.f32 %v6411, 1.442695
        %v6440 = vpow.pop %v6439
        %v6441 = vmul.f32 %v6412, 1.442695
        %v6442 = vpow.pop %v6441
        %v6443 = vmul.f32 %v6413, 1.442695
        %v6444 = vpow.pop %v6443
        %v6445 = vmul.f32 %v6414, 1.442695
        %v6446 = vpow.pop %v6445
        %v6447 = vsel %vm1559, %v6416, 0.0
        %6448 = vadd.xlane.f32.xlu0 %v6447
        %v6449 = vpop.xlane.xlu0 %6448
        %v6450 = vsel %vm1559, %v6418, 0.0
        %6451 = vadd.xlane.f32.xlu0 %v6450
        %v6452 = vpop.xlane.xlu0 %6451
        %v6453 = vsel %vm1559, %v6420, 0.0
        %6454 = vadd.xlane.f32.xlu0 %v6453
        %v6455 = vpop.xlane.xlu0 %6454
        %v6456 = vsel %vm1559, %v6422, 0.0
        %6457 = vadd.xlane.f32.xlu0 %v6456
        %v6458 = vpop.xlane.xlu0 %6457
        %v6459 = vsel %vm1559, %v6424, 0.0
        %6460 = vadd.xlane.f32.xlu0 %v6459
        %v6461 = vpop.xlane.xlu0 %6460
        %v6462 = vsel %vm1559, %v6426, 0.0
        %6463 = vadd.xlane.f32.xlu0 %v6462
        %v6464 = vpop.xlane.xlu0 %6463
        %v6465 = vsel %vm1559, %v6428, 0.0
        %6466 = vadd.xlane.f32.xlu0 %v6465
        %v6467 = vpop.xlane.xlu0 %6466
        %v6468 = vsel %vm1559, %v6430, 0.0
        %6469 = vadd.xlane.f32.xlu0 %v6468
        %v6470 = vpop.xlane.xlu0 %6469
        %v6471 = vsel %vm1559, %v6432, 0.0
        %6472 = vadd.xlane.f32.xlu0 %v6471
        %v6473 = vpop.xlane.xlu0 %6472
        %v6474 = vsel %vm1559, %v6434, 0.0
        %6475 = vadd.xlane.f32.xlu0 %v6474
        %v6476 = vpop.xlane.xlu0 %6475
        %v6477 = vsel %vm1559, %v6436, 0.0
        %6478 = vadd.xlane.f32.xlu0 %v6477
        %v6479 = vpop.xlane.xlu0 %6478
        %v6480 = vsel %vm1559, %v6438, 0.0
        %6481 = vadd.xlane.f32.xlu0 %v6480
        %v6482 = vpop.xlane.xlu0 %6481
        %v6483 = vsel %vm1559, %v6440, 0.0
        %6484 = vadd.xlane.f32.xlu0 %v6483
        %v6485 = vpop.xlane.xlu0 %6484
        %v6486 = vsel %vm1559, %v6442, 0.0
        %6487 = vadd.xlane.f32.xlu0 %v6486
        %v6488 = vpop.xlane.xlu0 %6487
        %v6489 = vsel %vm1559, %v6444, 0.0
        %6490 = vadd.xlane.f32.xlu0 %v6489
        %v6491 = vpop.xlane.xlu0 %6490
        %v6492 = vsel %vm1559, %v6446, 0.0
        %6493 = vadd.xlane.f32.xlu0 %v6492
        %v6494 = vpop.xlane.xlu0 %6493
        %v6495 = vrcp.pop %v6449
        %v6496 = vrcp.pop %v6452
        %v6497 = vrcp.pop %v6455
        %v6498 = vrcp.pop %v6458
        %v6499 = vrcp.pop %v6461
        %v6500 = vrcp.pop %v6464
        %v6501 = vrcp.pop %v6467
        %v6502 = vrcp.pop %v6470
        %v6503 = vrcp.pop %v6473
        %v6504 = vrcp.pop %v6476
        %v6505 = vrcp.pop %v6479
        %v6506 = vrcp.pop %v6482
        %v6507 = vrcp.pop %v6485
        %v6508 = vrcp.pop %v6488
        %v6509 = vrcp.pop %v6491
        %v6510 = vrcp.pop %v6494
        %v6511 = vmul.f32 %v6416, %v6495
        %v6512 = vmul.f32 %v6418, %v6496
        %v6513 = vmul.f32 %v6420, %v6497
        %v6514 = vmul.f32 %v6422, %v6498
        %v6515 = vmul.f32 %v6424, %v6499
        %v6516 = vmul.f32 %v6426, %v6500
        %v6517 = vmul.f32 %v6428, %v6501
        %v6518 = vmul.f32 %v6430, %v6502
        %v6519 = vmul.f32 %v6432, %v6503
        %v6520 = vmul.f32 %v6434, %v6504
        %v6521 = vmul.f32 %v6436, %v6505
        %v6522 = vmul.f32 %v6438, %v6506
        %v6523 = vmul.f32 %v6440, %v6507
        %v6524 = vmul.f32 %v6442, %v6508
        %v6525 = vmul.f32 %v6444, %v6509
        %v6526 = vmul.f32 %v6446, %v6510
        %v6527 = vpack.c.bf16 %v6512, %v6511
        %v6528 = vpack.c.bf16 %v6514, %v6513
        %v6529 = vpack.c.bf16 %v6516, %v6515
        %v6530 = vpack.c.bf16 %v6518, %v6517
        %v6531 = vpack.c.bf16 %v6520, %v6519
        %v6532 = vpack.c.bf16 %v6522, %v6521
        %v6533 = vpack.c.bf16 %v6524, %v6523
        %v6534 = vpack.c.bf16 %v6526, %v6525
        %v6536 = vsel %vm1559, %v6527, 0
        %6538 = vmatprep.subr.bf16.mxu0 0
        %6539 = vmatpush1.bf16.msra.mxu0 %v5967
        %6540 = vmatprep.subr.bf16.mxu0 0
        %6541 = vmatpush1.bf16.msra.mxu0 0
        %6542 = vmatprep.subr.bf16.mxu0 0
        %6543 = vmatpush1.bf16.msra.mxu0 0
        %6544 = vmatprep.subr.bf16.mxu0 0
        %6545 = vmatpush1.bf16.msra.mxu0 0
        %6546 = vmatprep.subr.bf16.mxu0 0
        %6547 = vmatpush1.bf16.msra.mxu0 0
        %6548 = vmatprep.subr.bf16.mxu0 0
        %6549 = vmatpush1.bf16.msra.mxu0 0
        %6550 = vmatprep.subr.bf16.mxu0 0
        %6551 = vmatpush1.bf16.msra.mxu0 0
        %6552 = vmatprep.subr.bf16.mxu0 0
        %6553 = vmatpush1.bf16.msra.mxu0 0
        %6554 = vmatprep.subr.bf16.mxu0 0
        %6555 = vmatpush1.bf16.msra.mxu0 0
        %6556 = vmatprep.subr.bf16.mxu0 0
        %6557 = vmatpush1.bf16.msra.mxu0 0
        %6558 = vmatprep.subr.bf16.mxu0 0
        %6559 = vmatpush1.bf16.msra.mxu0 0
        %6560 = vmatprep.subr.bf16.mxu0 0
        %6561 = vmatpush1.bf16.msra.mxu0 0
        %6562 = vmatprep.subr.bf16.mxu0 0
        %6563 = vmatpush1.bf16.msra.mxu0 0
        %6564 = vmatprep.subr.bf16.mxu0 0
        %6565 = vmatpush1.bf16.msra.mxu0 0
        %6566 = vmatprep.subr.bf16.mxu0 0
        %6567 = vmatpush1.bf16.msra.mxu0 0
        %6568 = vmatprep.subr.bf16.mxu0 0
        %6569 = vmatpush1.bf16.msra.mxu0 0
        %6570 = vmatprep.mubr.bf16.mxu0 0
        %6571 = vmatmul.mubr.bf16.gmra.mrb[0].mxu0 %v6536
        %v6572 = vpop.f32.mrb[0].mxu0
        %v6573 = vadd.f32 0.0, %v6572
        %v6574 = vpop.f32.mrb[0].mxu0
        %v6575 = vpop.f32.mrb[0].mxu0
        %v6576 = vadd.f32 0.0, %v6575
        %v6577 = vpop.f32.mrb[0].mxu0
        %6578 = vdwg.mxu0
        %v6580 = vsel %vm1559, %v6528, 0
        %6582 = vmatprep.subr.bf16.mxu0 0
        %6583 = vmatpush1.bf16.msra.mxu0 %v5968
        %6584 = vmatprep.subr.bf16.mxu0 0
        %6585 = vmatpush1.bf16.msra.mxu0 0
        %6586 = vmatprep.subr.bf16.mxu0 0
        %6587 = vmatpush1.bf16.msra.mxu0 0
        %6588 = vmatprep.subr.bf16.mxu0 0
        %6589 = vmatpush1.bf16.msra.mxu0 0
        %6590 = vmatprep.subr.bf16.mxu0 0
        %6591 = vmatpush1.bf16.msra.mxu0 0
        %6592 = vmatprep.subr.bf16.mxu0 0
        %6593 = vmatpush1.bf16.msra.mxu0 0
        %6594 = vmatprep.subr.bf16.mxu0 0
        %6595 = vmatpush1.bf16.msra.mxu0 0
        %6596 = vmatprep.subr.bf16.mxu0 0
        %6597 = vmatpush1.bf16.msra.mxu0 0
        %6598 = vmatprep.subr.bf16.mxu0 0
        %6599 = vmatpush1.bf16.msra.mxu0 0
        %6600 = vmatprep.subr.bf16.mxu0 0
        %6601 = vmatpush1.bf16.msra.mxu0 0
        %6602 = vmatprep.subr.bf16.mxu0 0
        %6603 = vmatpush1.bf16.msra.mxu0 0
        %6604 = vmatprep.subr.bf16.mxu0 0
        %6605 = vmatpush1.bf16.msra.mxu0 0
        %6606 = vmatprep.subr.bf16.mxu0 0
        %6607 = vmatpush1.bf16.msra.mxu0 0
        %6608 = vmatprep.subr.bf16.mxu0 0
        %6609 = vmatpush1.bf16.msra.mxu0 0
        %6610 = vmatprep.subr.bf16.mxu0 0
        %6611 = vmatpush1.bf16.msra.mxu0 0
        %6612 = vmatprep.subr.bf16.mxu0 0
        %6613 = vmatpush1.bf16.msra.mxu0 0
        %6614 = vmatprep.mubr.bf16.mxu0 0
        %6615 = vmatmul.mubr.bf16.gmra.mrb[0].mxu0 %v6580
        %v6616 = vpop.f32.mrb[0].mxu0
        %v6617 = vadd.f32 0.0, %v6616
        %v6618 = vpop.f32.mrb[0].mxu0
        %v6619 = vpop.f32.mrb[0].mxu0
        %v6620 = vadd.f32 0.0, %v6619
        %v6621 = vpop.f32.mrb[0].mxu0
        %6622 = vdwg.mxu0
        %v6624 = vsel %vm1559, %v6529, 0
        %6626 = vmatprep.subr.bf16.mxu0 0
        %6627 = vmatpush1.bf16.msra.mxu0 %v5969
        %6628 = vmatprep.subr.bf16.mxu0 0
        %6629 = vmatpush1.bf16.msra.mxu0 0
        %6630 = vmatprep.subr.bf16.mxu0 0
        %6631 = vmatpush1.bf16.msra.mxu0 0
        %6632 = vmatprep.subr.bf16.mxu0 0
        %6633 = vmatpush1.bf16.msra.mxu0 0
        %6634 = vmatprep.subr.bf16.mxu0 0
        %6635 = vmatpush1.bf16.msra.mxu0 0
        %6636 = vmatprep.subr.bf16.mxu0 0
        %6637 = vmatpush1.bf16.msra.mxu0 0
        %6638 = vmatprep.subr.bf16.mxu0 0
        %6639 = vmatpush1.bf16.msra.mxu0 0
        %6640 = vmatprep.subr.bf16.mxu0 0
        %6641 = vmatpush1.bf16.msra.mxu0 0
        %6642 = vmatprep.subr.bf16.mxu0 0
        %6643 = vmatpush1.bf16.msra.mxu0 0
        %6644 = vmatprep.subr.bf16.mxu0 0
        %6645 = vmatpush1.bf16.msra.mxu0 0
        %6646 = vmatprep.subr.bf16.mxu0 0
        %6647 = vmatpush1.bf16.msra.mxu0 0
        %6648 = vmatprep.subr.bf16.mxu0 0
        %6649 = vmatpush1.bf16.msra.mxu0 0
        %6650 = vmatprep.subr.bf16.mxu0 0
        %6651 = vmatpush1.bf16.msra.mxu0 0
        %6652 = vmatprep.subr.bf16.mxu0 0
        %6653 = vmatpush1.bf16.msra.mxu0 0
        %6654 = vmatprep.subr.bf16.mxu0 0
        %6655 = vmatpush1.bf16.msra.mxu0 0
        %6656 = vmatprep.subr.bf16.mxu0 0
        %6657 = vmatpush1.bf16.msra.mxu0 0
        %6658 = vmatprep.mubr.bf16.mxu0 0
        %6659 = vmatmul.mubr.bf16.gmra.mrb[0].mxu0 %v6624
        %v6660 = vpop.f32.mrb[0].mxu0
        %v6661 = vadd.f32 0.0, %v6660
        %v6662 = vpop.f32.mrb[0].mxu0
        %v6663 = vpop.f32.mrb[0].mxu0
        %v6664 = vadd.f32 0.0, %v6663
        %v6665 = vpop.f32.mrb[0].mxu0
        %6666 = vdwg.mxu0
        %v6668 = vsel %vm1559, %v6530, 0
        %6670 = vmatprep.subr.bf16.mxu0 0
        %6671 = vmatpush1.bf16.msra.mxu0 %v5970
        %6672 = vmatprep.subr.bf16.mxu0 0
        %6673 = vmatpush1.bf16.msra.mxu0 0
        %6674 = vmatprep.subr.bf16.mxu0 0
        %6675 = vmatpush1.bf16.msra.mxu0 0
        %6676 = vmatprep.subr.bf16.mxu0 0
        %6677 = vmatpush1.bf16.msra.mxu0 0
        %6678 = vmatprep.subr.bf16.mxu0 0
        %6679 = vmatpush1.bf16.msra.mxu0 0
        %6680 = vmatprep.subr.bf16.mxu0 0
        %6681 = vmatpush1.bf16.msra.mxu0 0
        %6682 = vmatprep.subr.bf16.mxu0 0
        %6683 = vmatpush1.bf16.msra.mxu0 0
        %6684 = vmatprep.subr.bf16.mxu0 0
        %6685 = vmatpush1.bf16.msra.mxu0 0
        %6686 = vmatprep.subr.bf16.mxu0 0
        %6687 = vmatpush1.bf16.msra.mxu0 0
        %6688 = vmatprep.subr.bf16.mxu0 0
        %6689 = vmatpush1.bf16.msra.mxu0 0
        %6690 = vmatprep.subr.bf16.mxu0 0
        %6691 = vmatpush1.bf16.msra.mxu0 0
        %6692 = vmatprep.subr.bf16.mxu0 0
        %6693 = vmatpush1.bf16.msra.mxu0 0
        %6694 = vmatprep.subr.bf16.mxu0 0
        %6695 = vmatpush1.bf16.msra.mxu0 0
        %6696 = vmatprep.subr.bf16.mxu0 0
        %6697 = vmatpush1.bf16.msra.mxu0 0
        %6698 = vmatprep.subr.bf16.mxu0 0
        %6699 = vmatpush1.bf16.msra.mxu0 0
        %6700 = vmatprep.subr.bf16.mxu0 0
        %6701 = vmatpush1.bf16.msra.mxu0 0
        %6702 = vmatprep.mubr.bf16.mxu0 0
        %6703 = vmatmul.mubr.bf16.gmra.mrb[0].mxu0 %v6668
        %v6704 = vpop.f32.mrb[0].mxu0
        %v6705 = vadd.f32 0.0, %v6704
        %v6706 = vpop.f32.mrb[0].mxu0
        %v6707 = vpop.f32.mrb[0].mxu0
        %v6708 = vadd.f32 0.0, %v6707
        %v6709 = vpop.f32.mrb[0].mxu0
        %6710 = vdwg.mxu0
        %v6712 = vsel %vm1559, %v6531, 0
        %6714 = vmatprep.subr.bf16.mxu0 0
        %6715 = vmatpush1.bf16.msra.mxu0 %v5971
        %6716 = vmatprep.subr.bf16.mxu0 0
        %6717 = vmatpush1.bf16.msra.mxu0 0
        %6718 = vmatprep.subr.bf16.mxu0 0
        %6719 = vmatpush1.bf16.msra.mxu0 0
        %6720 = vmatprep.subr.bf16.mxu0 0
        %6721 = vmatpush1.bf16.msra.mxu0 0
        %6722 = vmatprep.subr.bf16.mxu0 0
        %6723 = vmatpush1.bf16.msra.mxu0 0
        %6724 = vmatprep.subr.bf16.mxu0 0
        %6725 = vmatpush1.bf16.msra.mxu0 0
        %6726 = vmatprep.subr.bf16.mxu0 0
        %6727 = vmatpush1.bf16.msra.mxu0 0
        %6728 = vmatprep.subr.bf16.mxu0 0
        %6729 = vmatpush1.bf16.msra.mxu0 0
        %6730 = vmatprep.subr.bf16.mxu0 0
        %6731 = vmatpush1.bf16.msra.mxu0 0
        %6732 = vmatprep.subr.bf16.mxu0 0
        %6733 = vmatpush1.bf16.msra.mxu0 0
        %6734 = vmatprep.subr.bf16.mxu0 0
        %6735 = vmatpush1.bf16.msra.mxu0 0
        %6736 = vmatprep.subr.bf16.mxu0 0
        %6737 = vmatpush1.bf16.msra.mxu0 0
        %6738 = vmatprep.subr.bf16.mxu0 0
        %6739 = vmatpush1.bf16.msra.mxu0 0
        %6740 = vmatprep.subr.bf16.mxu0 0
        %6741 = vmatpush1.bf16.msra.mxu0 0
        %6742 = vmatprep.subr.bf16.mxu0 0
        %6743 = vmatpush1.bf16.msra.mxu0 0
        %6744 = vmatprep.subr.bf16.mxu0 0
        %6745 = vmatpush1.bf16.msra.mxu0 0
        %6746 = vmatprep.mubr.bf16.mxu0 0
        %6747 = vmatmul.mubr.bf16.gmra.mrb[0].mxu0 %v6712
        %v6748 = vpop.f32.mrb[0].mxu0
        %v6749 = vadd.f32 0.0, %v6748
        %v6750 = vpop.f32.mrb[0].mxu0
        %v6751 = vpop.f32.mrb[0].mxu0
        %v6752 = vadd.f32 0.0, %v6751
        %v6753 = vpop.f32.mrb[0].mxu0
        %6754 = vdwg.mxu0
        %v6756 = vsel %vm1559, %v6532, 0
        %6758 = vmatprep.subr.bf16.mxu0 0
        %6759 = vmatpush1.bf16.msra.mxu0 %v5972
        %6760 = vmatprep.subr.bf16.mxu0 0
        %6761 = vmatpush1.bf16.msra.mxu0 0
        %6762 = vmatprep.subr.bf16.mxu0 0
        %6763 = vmatpush1.bf16.msra.mxu0 0
        %6764 = vmatprep.subr.bf16.mxu0 0
        %6765 = vmatpush1.bf16.msra.mxu0 0
        %6766 = vmatprep.subr.bf16.mxu0 0
        %6767 = vmatpush1.bf16.msra.mxu0 0
        %6768 = vmatprep.subr.bf16.mxu0 0
        %6769 = vmatpush1.bf16.msra.mxu0 0
        %6770 = vmatprep.subr.bf16.mxu0 0
        %6771 = vmatpush1.bf16.msra.mxu0 0
        %6772 = vmatprep.subr.bf16.mxu0 0
        %6773 = vmatpush1.bf16.msra.mxu0 0
        %6774 = vmatprep.subr.bf16.mxu0 0
        %6775 = vmatpush1.bf16.msra.mxu0 0
        %6776 = vmatprep.subr.bf16.mxu0 0
        %6777 = vmatpush1.bf16.msra.mxu0 0
        %6778 = vmatprep.subr.bf16.mxu0 0
        %6779 = vmatpush1.bf16.msra.mxu0 0
        %6780 = vmatprep.subr.bf16.mxu0 0
        %6781 = vmatpush1.bf16.msra.mxu0 0
        %6782 = vmatprep.subr.bf16.mxu0 0
        %6783 = vmatpush1.bf16.msra.mxu0 0
        %6784 = vmatprep.subr.bf16.mxu0 0
        %6785 = vmatpush1.bf16.msra.mxu0 0
        %6786 = vmatprep.subr.bf16.mxu0 0
        %6787 = vmatpush1.bf16.msra.mxu0 0
        %6788 = vmatprep.subr.bf16.mxu0 0
        %6789 = vmatpush1.bf16.msra.mxu0 0
        %6790 = vmatprep.mubr.bf16.mxu0 0
        %6791 = vmatmul.mubr.bf16.gmra.mrb[0].mxu0 %v6756
        %v6792 = vpop.f32.mrb[0].mxu0
        %v6793 = vadd.f32 0.0, %v6792
        %v6794 = vpop.f32.mrb[0].mxu0
        %v6795 = vpop.f32.mrb[0].mxu0
        %v6796 = vadd.f32 0.0, %v6795
        %v6797 = vpop.f32.mrb[0].mxu0
        %6798 = vdwg.mxu0
        %v6800 = vsel %vm1559, %v6533, 0
        %6802 = vmatprep.subr.bf16.mxu0 0
        %6803 = vmatpush1.bf16.msra.mxu0 %v5973
        %6804 = vmatprep.subr.bf16.mxu0 0
        %6805 = vmatpush1.bf16.msra.mxu0 0
        %6806 = vmatprep.subr.bf16.mxu0 0
        %6807 = vmatpush1.bf16.msra.mxu0 0
        %6808 = vmatprep.subr.bf16.mxu0 0
        %6809 = vmatpush1.bf16.msra.mxu0 0
        %6810 = vmatprep.subr.bf16.mxu0 0
        %6811 = vmatpush1.bf16.msra.mxu0 0
        %6812 = vmatprep.subr.bf16.mxu0 0
        %6813 = vmatpush1.bf16.msra.mxu0 0
        %6814 = vmatprep.subr.bf16.mxu0 0
        %6815 = vmatpush1.bf16.msra.mxu0 0
        %6816 = vmatprep.subr.bf16.mxu0 0
        %6817 = vmatpush1.bf16.msra.mxu0 0
        %6818 = vmatprep.subr.bf16.mxu0 0
        %6819 = vmatpush1.bf16.msra.mxu0 0
        %6820 = vmatprep.subr.bf16.mxu0 0
        %6821 = vmatpush1.bf16.msra.mxu0 0
        %6822 = vmatprep.subr.bf16.mxu0 0
        %6823 = vmatpush1.bf16.msra.mxu0 0
        %6824 = vmatprep.subr.bf16.mxu0 0
        %6825 = vmatpush1.bf16.msra.mxu0 0
        %6826 = vmatprep.subr.bf16.mxu0 0
        %6827 = vmatpush1.bf16.msra.mxu0 0
        %6828 = vmatprep.subr.bf16.mxu0 0
        %6829 = vmatpush1.bf16.msra.mxu0 0
        %6830 = vmatprep.subr.bf16.mxu0 0
        %6831 = vmatpush1.bf16.msra.mxu0 0
        %6832 = vmatprep.subr.bf16.mxu0 0
        %6833 = vmatpush1.bf16.msra.mxu0 0
        %6834 = vmatprep.mubr.bf16.mxu0 0
        %6835 = vmatmul.mubr.bf16.gmra.mrb[0].mxu0 %v6800
        %v6836 = vpop.f32.mrb[0].mxu0
        %v6837 = vadd.f32 0.0, %v6836
        %v6838 = vpop.f32.mrb[0].mxu0
        %v6839 = vpop.f32.mrb[0].mxu0
        %v6840 = vadd.f32 0.0, %v6839
        %v6841 = vpop.f32.mrb[0].mxu0
        %6842 = vdwg.mxu0
        %v6844 = vsel %vm1559, %v6534, 0
        %6846 = vmatprep.subr.bf16.mxu0 0
        %6847 = vmatpush1.bf16.msra.mxu0 %v5974
        %6848 = vmatprep.subr.bf16.mxu0 0
        %6849 = vmatpush1.bf16.msra.mxu0 0
        %6850 = vmatprep.subr.bf16.mxu0 0
        %6851 = vmatpush1.bf16.msra.mxu0 0
        %6852 = vmatprep.subr.bf16.mxu0 0
        %6853 = vmatpush1.bf16.msra.mxu0 0
        %6854 = vmatprep.subr.bf16.mxu0 0
        %6855 = vmatpush1.bf16.msra.mxu0 0
        %6856 = vmatprep.subr.bf16.mxu0 0
        %6857 = vmatpush1.bf16.msra.mxu0 0
        %6858 = vmatprep.subr.bf16.mxu0 0
        %6859 = vmatpush1.bf16.msra.mxu0 0
        %6860 = vmatprep.subr.bf16.mxu0 0
        %6861 = vmatpush1.bf16.msra.mxu0 0
        %6862 = vmatprep.subr.bf16.mxu0 0
        %6863 = vmatpush1.bf16.msra.mxu0 0
        %6864 = vmatprep.subr.bf16.mxu0 0
        %6865 = vmatpush1.bf16.msra.mxu0 0
        %6866 = vmatprep.subr.bf16.mxu0 0
        %6867 = vmatpush1.bf16.msra.mxu0 0
        %6868 = vmatprep.subr.bf16.mxu0 0
        %6869 = vmatpush1.bf16.msra.mxu0 0
        %6870 = vmatprep.subr.bf16.mxu0 0
        %6871 = vmatpush1.bf16.msra.mxu0 0
        %6872 = vmatprep.subr.bf16.mxu0 0
        %6873 = vmatpush1.bf16.msra.mxu0 0
        %6874 = vmatprep.subr.bf16.mxu0 0
        %6875 = vmatpush1.bf16.msra.mxu0 0
        %6876 = vmatprep.subr.bf16.mxu0 0
        %6877 = vmatpush1.bf16.msra.mxu0 0
        %6878 = vmatprep.mubr.bf16.mxu0 0
        %6879 = vmatmul.mubr.bf16.gmra.mrb[0].mxu0 %v6844
        %v6880 = vpop.f32.mrb[0].mxu0
        %v6881 = vadd.f32 0.0, %v6880
        %v6882 = vpop.f32.mrb[0].mxu0
        %v6883 = vpop.f32.mrb[0].mxu0
        %v6884 = vadd.f32 0.0, %v6883
        %v6885 = vpop.f32.mrb[0].mxu0
        %6886 = vdwg.mxu0
        %v6887 = vpack.c.bf16 %v6576, %v6573
        %v6888 = vpack.c.bf16 %v6620, %v6617
        %v6889 = vpack.c.bf16 %v6664, %v6661
        %v6890 = vpack.c.bf16 %v6708, %v6705
        %v6891 = vpack.c.bf16 %v6752, %v6749
        %v6892 = vpack.c.bf16 %v6796, %v6793
        %v6893 = vpack.c.bf16 %v6840, %v6837
        %v6894 = vpack.c.bf16 %v6884, %v6881
        %s6895 = scalar_lea.vmem %s8, 48
        %v6896 = vld [vmem:[%s6895] sm:$0xf]
        %v6897 = vld [vmem:[%s6895 + $0x4] sm:$0xf]
        %v6898 = vld [vmem:[%s6895 + $0x8] sm:$0xf]
        %v6899 = vld [vmem:[%s6895 + $0xc] sm:$0xf]
        %v6904 = vunpack.c.l.b16 %v6896
        %v6905 = vunpack.c.l.b16 %v6897
        %v6906 = vunpack.c.l.b16 %v6898
        %v6907 = vunpack.c.l.b16 %v6899
        %v6908 = vpack.c.b16 %v6905, %v6904
        %v6909 = vpack.c.b16 %v6907, %v6906
        %v6913 = vsel %vm1182, %v6887, 0
        %v6916 = vsel %vm1182, %v6888, 0
        %v6919 = vsel %vm1182, %v6889, 0
        %v6922 = vsel %vm1182, %v6890, 0
        %v6925 = vsel %vm1182, %v6891, 0
        %v6928 = vsel %vm1182, %v6892, 0
        %v6931 = vsel %vm1182, %v6893, 0
        %v6934 = vsel %vm1182, %v6894, 0
        %6936 = vmatprep.subr.bf16.mxu0 0
        %6937 = vmatpush1.bf16.msra.mxu0 %v6908
        %6938 = vmatprep.subr.bf16.mxu0 0
        %6939 = vmatpush1.bf16.msra.mxu0 %v6909
        %6940 = vmatprep.subr.bf16.mxu0 0
        %6941 = vmatpush1.bf16.msra.mxu0 0
        %6942 = vmatprep.subr.bf16.mxu0 0
        %6943 = vmatpush1.bf16.msra.mxu0 0
        %6944 = vmatprep.subr.bf16.mxu0 0
        %6945 = vmatpush1.bf16.msra.mxu0 0
        %6946 = vmatprep.subr.bf16.mxu0 0
        %6947 = vmatpush1.bf16.msra.mxu0 0
        %6948 = vmatprep.subr.bf16.mxu0 0
        %6949 = vmatpush1.bf16.msra.mxu0 0
        %6950 = vmatprep.subr.bf16.mxu0 0
        %6951 = vmatpush1.bf16.msra.mxu0 0
        %6952 = vmatprep.subr.bf16.mxu0 0
        %6953 = vmatpush1.bf16.msra.mxu0 0
        %6954 = vmatprep.subr.bf16.mxu0 0
        %6955 = vmatpush1.bf16.msra.mxu0 0
        %6956 = vmatprep.subr.bf16.mxu0 0
        %6957 = vmatpush1.bf16.msra.mxu0 0
        %6958 = vmatprep.subr.bf16.mxu0 0
        %6959 = vmatpush1.bf16.msra.mxu0 0
        %6960 = vmatprep.subr.bf16.mxu0 0
        %6961 = vmatpush1.bf16.msra.mxu0 0
        %6962 = vmatprep.subr.bf16.mxu0 0
        %6963 = vmatpush1.bf16.msra.mxu0 0
        %6964 = vmatprep.subr.bf16.mxu0 0
        %6965 = vmatpush1.bf16.msra.mxu0 0
        %6966 = vmatprep.subr.bf16.mxu0 0
        %6967 = vmatpush1.bf16.msra.mxu0 0
        %6968 = vmatprep.mubr.bf16.mxu0 0
        %6969 = vmatmul.mubr.bf16.gmra.mrb[0].mxu0 %v6913
        %v6970 = vpop.f32.mrb[0].mxu0
        %v6971 = vadd.f32 0.0, %v6970
        %v6972 = vpop.f32.mrb[0].mxu0
        %v6973 = vpop.f32.mrb[0].mxu0
        %v6974 = vadd.f32 0.0, %v6973
        %v6975 = vpop.f32.mrb[0].mxu0
        %6976 = vmatprep.mubr.bf16.mxu0 0
        %6977 = vmatmul.mubr.bf16.gmra.mrb[0].mxu0 %v6916
        %v6978 = vpop.f32.mrb[0].mxu0
        %v6979 = vadd.f32 0.0, %v6978
        %v6980 = vpop.f32.mrb[0].mxu0
        %v6981 = vpop.f32.mrb[0].mxu0
        %v6982 = vadd.f32 0.0, %v6981
        %v6983 = vpop.f32.mrb[0].mxu0
        %6984 = vmatprep.mubr.bf16.mxu0 0
        %6985 = vmatmul.mubr.bf16.gmra.mrb[0].mxu0 %v6919
        %v6986 = vpop.f32.mrb[0].mxu0
        %v6987 = vadd.f32 0.0, %v6986
        %v6988 = vpop.f32.mrb[0].mxu0
        %v6989 = vpop.f32.mrb[0].mxu0
        %v6990 = vadd.f32 0.0, %v6989
        %v6991 = vpop.f32.mrb[0].mxu0
        %6992 = vmatprep.mubr.bf16.mxu0 0
        %6993 = vmatmul.mubr.bf16.gmra.mrb[0].mxu0 %v6922
        %v6994 = vpop.f32.mrb[0].mxu0
        %v6995 = vadd.f32 0.0, %v6994
        %v6996 = vpop.f32.mrb[0].mxu0
        %v6997 = vpop.f32.mrb[0].mxu0
        %v6998 = vadd.f32 0.0, %v6997
        %v6999 = vpop.f32.mrb[0].mxu0
        %7000 = vmatprep.mubr.bf16.mxu0 0
        %7001 = vmatmul.mubr.bf16.gmra.mrb[0].mxu0 %v6925
        %v7002 = vpop.f32.mrb[0].mxu0
        %v7003 = vadd.f32 0.0, %v7002
        %v7004 = vpop.f32.mrb[0].mxu0
        %v7005 = vpop.f32.mrb[0].mxu0
        %v7006 = vadd.f32 0.0, %v7005
        %v7007 = vpop.f32.mrb[0].mxu0
        %7008 = vmatprep.mubr.bf16.mxu0 0
        %7009 = vmatmul.mubr.bf16.gmra.mrb[0].mxu0 %v6928
        %v7010 = vpop.f32.mrb[0].mxu0
        %v7011 = vadd.f32 0.0, %v7010
        %v7012 = vpop.f32.mrb[0].mxu0
        %v7013 = vpop.f32.mrb[0].mxu0
        %v7014 = vadd.f32 0.0, %v7013
        %v7015 = vpop.f32.mrb[0].mxu0
        %7016 = vmatprep.mubr.bf16.mxu0 0
        %7017 = vmatmul.mubr.bf16.gmra.mrb[0].mxu0 %v6931
        %v7018 = vpop.f32.mrb[0].mxu0
        %v7019 = vadd.f32 0.0, %v7018
        %v7020 = vpop.f32.mrb[0].mxu0
        %v7021 = vpop.f32.mrb[0].mxu0
        %v7022 = vadd.f32 0.0, %v7021
        %v7023 = vpop.f32.mrb[0].mxu0
        %7024 = vmatprep.mubr.bf16.mxu0 0
        %7025 = vmatmul.mubr.bf16.gmra.mrb[0].mxu0 %v6934
        %v7026 = vpop.f32.mrb[0].mxu0
        %v7027 = vadd.f32 0.0, %v7026
        %v7028 = vpop.f32.mrb[0].mxu0
        %v7029 = vpop.f32.mrb[0].mxu0
        %v7030 = vadd.f32 0.0, %v7029
        %v7031 = vpop.f32.mrb[0].mxu0
        %7032 = vdwg.mxu0
        %v7033 = vadd.f32 %v5425, %v6971
        %v7034 = vadd.f32 %v5426, %v6974
        %v7035 = vadd.f32 %v5427, %v6979
        %v7036 = vadd.f32 %v5428, %v6982
        %v7037 = vadd.f32 %v5429, %v6987
        %v7038 = vadd.f32 %v5430, %v6990
        %v7039 = vadd.f32 %v5431, %v6995
        %v7040 = vadd.f32 %v5432, %v6998
        %v7041 = vadd.f32 %v5433, %v7003
        %v7042 = vadd.f32 %v5434, %v7006
        %v7043 = vadd.f32 %v5435, %v7011
        %v7044 = vadd.f32 %v5436, %v7014
        %v7045 = vadd.f32 %v5437, %v7019
        %v7046 = vadd.f32 %v5438, %v7022
        %v7047 = vadd.f32 %v5439, %v7027
        %v7048 = vadd.f32 %v5440, %v7030
        %v7049 = vld [vmem:[%s9] sm:$0x1]
        %v7051 = vlaneseq
        %v7052 = vshrl.u32 %v7051, 7
        %v7053 = vsub.s32 0, %v7052
        %v7054 = vrot.slane %v7049, %v7053
        %v7056 = vadd.f32 %v7033, %v7054
        %v7057 = vadd.f32 %v7034, %v7054
        %v7058 = vadd.f32 %v7035, %v7054
        %v7059 = vadd.f32 %v7036, %v7054
        %v7060 = vadd.f32 %v7037, %v7054
        %v7061 = vadd.f32 %v7038, %v7054
        %v7062 = vadd.f32 %v7039, %v7054
        %v7063 = vadd.f32 %v7040, %v7054
        %v7064 = vadd.f32 %v7041, %v7054
        %v7065 = vadd.f32 %v7042, %v7054
        %v7066 = vadd.f32 %v7043, %v7054
        %v7067 = vadd.f32 %v7044, %v7054
        %v7068 = vadd.f32 %v7045, %v7054
        %v7069 = vadd.f32 %v7046, %v7054
        %v7070 = vadd.f32 %v7047, %v7054
        %v7071 = vadd.f32 %v7048, %v7054
        %v7072 = vadd.f32 %v606, %v7056
        %v7073 = vadd.f32 %v607, %v7057
        %v7074 = vadd.f32 %v608, %v7058
        %v7075 = vadd.f32 %v609, %v7059
        %v7076 = vadd.f32 %v610, %v7060
        %v7077 = vadd.f32 %v611, %v7061
        %v7078 = vadd.f32 %v612, %v7062
        %v7079 = vadd.f32 %v613, %v7063
        %v7080 = vadd.f32 %v614, %v7064
        %v7081 = vadd.f32 %v615, %v7065
        %v7082 = vadd.f32 %v616, %v7066
        %v7083 = vadd.f32 %v617, %v7067
        %v7084 = vadd.f32 %v618, %v7068
        %v7085 = vadd.f32 %v619, %v7069
        %v7086 = vadd.f32 %v620, %v7070
        %v7087 = vadd.f32 %v621, %v7071
        %7088 = vadd.xlane.f32.xlu0 %v7072
        %v7089 = vpop.xlane.xlu0 %7088
        %7090 = vadd.xlane.f32.xlu0 %v7073
        %v7091 = vpop.xlane.xlu0 %7090
        %7092 = vadd.xlane.f32.xlu0 %v7074
        %v7093 = vpop.xlane.xlu0 %7092
        %7094 = vadd.xlane.f32.xlu0 %v7075
        %v7095 = vpop.xlane.xlu0 %7094
        %7096 = vadd.xlane.f32.xlu0 %v7076
        %v7097 = vpop.xlane.xlu0 %7096
        %7098 = vadd.xlane.f32.xlu0 %v7077
        %v7099 = vpop.xlane.xlu0 %7098
        %7100 = vadd.xlane.f32.xlu0 %v7078
        %v7101 = vpop.xlane.xlu0 %7100
        %7102 = vadd.xlane.f32.xlu0 %v7079
        %v7103 = vpop.xlane.xlu0 %7102
        %7104 = vadd.xlane.f32.xlu0 %v7080
        %v7105 = vpop.xlane.xlu0 %7104
        %7106 = vadd.xlane.f32.xlu0 %v7081
        %v7107 = vpop.xlane.xlu0 %7106
        %7108 = vadd.xlane.f32.xlu0 %v7082
        %v7109 = vpop.xlane.xlu0 %7108
        %7110 = vadd.xlane.f32.xlu0 %v7083
        %v7111 = vpop.xlane.xlu0 %7110
        %7112 = vadd.xlane.f32.xlu0 %v7084
        %v7113 = vpop.xlane.xlu0 %7112
        %7114 = vadd.xlane.f32.xlu0 %v7085
        %v7115 = vpop.xlane.xlu0 %7114
        %7116 = vadd.xlane.f32.xlu0 %v7086
        %v7117 = vpop.xlane.xlu0 %7116
        %7118 = vadd.xlane.f32.xlu0 %v7087
        %v7119 = vpop.xlane.xlu0 %7118
        %v7120 = vrcp.pop 128.0
        %v7121 = vmul.f32 %v7089, %v7120
        %v7122 = vmul.f32 %v7091, %v7120
        %v7123 = vmul.f32 %v7093, %v7120
        %v7124 = vmul.f32 %v7095, %v7120
        %v7125 = vmul.f32 %v7097, %v7120
        %v7126 = vmul.f32 %v7099, %v7120
        %v7127 = vmul.f32 %v7101, %v7120
        %v7128 = vmul.f32 %v7103, %v7120
        %v7129 = vmul.f32 %v7105, %v7120
        %v7130 = vmul.f32 %v7107, %v7120
        %v7131 = vmul.f32 %v7109, %v7120
        %v7132 = vmul.f32 %v7111, %v7120
        %v7133 = vmul.f32 %v7113, %v7120
        %v7134 = vmul.f32 %v7115, %v7120
        %v7135 = vmul.f32 %v7117, %v7120
        %v7136 = vmul.f32 %v7119, %v7120
        %v7137 = vsub.f32 %v7072, %v7121
        %v7138 = vsub.f32 %v7073, %v7122
        %v7139 = vsub.f32 %v7074, %v7123
        %v7140 = vsub.f32 %v7075, %v7124
        %v7141 = vsub.f32 %v7076, %v7125
        %v7142 = vsub.f32 %v7077, %v7126
        %v7143 = vsub.f32 %v7078, %v7127
        %v7144 = vsub.f32 %v7079, %v7128
        %v7145 = vsub.f32 %v7080, %v7129
        %v7146 = vsub.f32 %v7081, %v7130
        %v7147 = vsub.f32 %v7082, %v7131
        %v7148 = vsub.f32 %v7083, %v7132
        %v7149 = vsub.f32 %v7084, %v7133
        %v7150 = vsub.f32 %v7085, %v7134
        %v7151 = vsub.f32 %v7086, %v7135
        %v7152 = vsub.f32 %v7087, %v7136
        %v7153 = vmul.f32 %v7137, %v7137
        %v7154 = vmul.f32 %v7138, %v7138
        %v7155 = vmul.f32 %v7139, %v7139
        %v7156 = vmul.f32 %v7140, %v7140
        %v7157 = vmul.f32 %v7141, %v7141
        %v7158 = vmul.f32 %v7142, %v7142
        %v7159 = vmul.f32 %v7143, %v7143
        %v7160 = vmul.f32 %v7144, %v7144
        %v7161 = vmul.f32 %v7145, %v7145
        %v7162 = vmul.f32 %v7146, %v7146
        %v7163 = vmul.f32 %v7147, %v7147
        %v7164 = vmul.f32 %v7148, %v7148
        %v7165 = vmul.f32 %v7149, %v7149
        %v7166 = vmul.f32 %v7150, %v7150
        %v7167 = vmul.f32 %v7151, %v7151
        %v7168 = vmul.f32 %v7152, %v7152
        %7169 = vadd.xlane.f32.xlu0 %v7153
        %v7170 = vpop.xlane.xlu0 %7169
        %7171 = vadd.xlane.f32.xlu0 %v7154
        %v7172 = vpop.xlane.xlu0 %7171
        %7173 = vadd.xlane.f32.xlu0 %v7155
        %v7174 = vpop.xlane.xlu0 %7173
        %7175 = vadd.xlane.f32.xlu0 %v7156
        %v7176 = vpop.xlane.xlu0 %7175
        %7177 = vadd.xlane.f32.xlu0 %v7157
        %v7178 = vpop.xlane.xlu0 %7177
        %7179 = vadd.xlane.f32.xlu0 %v7158
        %v7180 = vpop.xlane.xlu0 %7179
        %7181 = vadd.xlane.f32.xlu0 %v7159
        %v7182 = vpop.xlane.xlu0 %7181
        %7183 = vadd.xlane.f32.xlu0 %v7160
        %v7184 = vpop.xlane.xlu0 %7183
        %7185 = vadd.xlane.f32.xlu0 %v7161
        %v7186 = vpop.xlane.xlu0 %7185
        %7187 = vadd.xlane.f32.xlu0 %v7162
        %v7188 = vpop.xlane.xlu0 %7187
        %7189 = vadd.xlane.f32.xlu0 %v7163
        %v7190 = vpop.xlane.xlu0 %7189
        %7191 = vadd.xlane.f32.xlu0 %v7164
        %v7192 = vpop.xlane.xlu0 %7191
        %7193 = vadd.xlane.f32.xlu0 %v7165
        %v7194 = vpop.xlane.xlu0 %7193
        %7195 = vadd.xlane.f32.xlu0 %v7166
        %v7196 = vpop.xlane.xlu0 %7195
        %7197 = vadd.xlane.f32.xlu0 %v7167
        %v7198 = vpop.xlane.xlu0 %7197
        %7199 = vadd.xlane.f32.xlu0 %v7168
        %v7200 = vpop.xlane.xlu0 %7199
        %v7201 = vmul.f32 %v7170, %v7120
        %v7202 = vmul.f32 %v7172, %v7120
        %v7203 = vmul.f32 %v7174, %v7120
        %v7204 = vmul.f32 %v7176, %v7120
        %v7205 = vmul.f32 %v7178, %v7120
        %v7206 = vmul.f32 %v7180, %v7120
        %v7207 = vmul.f32 %v7182, %v7120
        %v7208 = vmul.f32 %v7184, %v7120
        %v7209 = vmul.f32 %v7186, %v7120
        %v7210 = vmul.f32 %v7188, %v7120
        %v7211 = vmul.f32 %v7190, %v7120
        %v7212 = vmul.f32 %v7192, %v7120
        %v7213 = vmul.f32 %v7194, %v7120
        %v7214 = vmul.f32 %v7196, %v7120
        %v7215 = vmul.f32 %v7198, %v7120
        %v7216 = vmul.f32 %v7200, %v7120
        %v7217 = vadd.f32 %v7201, 1e-05
        %v7218 = vadd.f32 %v7202, 1e-05
        %v7219 = vadd.f32 %v7203, 1e-05
        %v7220 = vadd.f32 %v7204, 1e-05
        %v7221 = vadd.f32 %v7205, 1e-05
        %v7222 = vadd.f32 %v7206, 1e-05
        %v7223 = vadd.f32 %v7207, 1e-05
        %v7224 = vadd.f32 %v7208, 1e-05
        %v7225 = vadd.f32 %v7209, 1e-05
        %v7226 = vadd.f32 %v7210, 1e-05
        %v7227 = vadd.f32 %v7211, 1e-05
        %v7228 = vadd.f32 %v7212, 1e-05
        %v7229 = vadd.f32 %v7213, 1e-05
        %v7230 = vadd.f32 %v7214, 1e-05
        %v7231 = vadd.f32 %v7215, 1e-05
        %v7232 = vadd.f32 %v7216, 1e-05
        %v7233 = vrsqrt.pop %v7217
        %v7234 = vrsqrt.pop %v7218
        %v7235 = vrsqrt.pop %v7219
        %v7236 = vrsqrt.pop %v7220
        %v7237 = vrsqrt.pop %v7221
        %v7238 = vrsqrt.pop %v7222
        %v7239 = vrsqrt.pop %v7223
        %v7240 = vrsqrt.pop %v7224
        %v7241 = vrsqrt.pop %v7225
        %v7242 = vrsqrt.pop %v7226
        %v7243 = vrsqrt.pop %v7227
        %v7244 = vrsqrt.pop %v7228
        %v7245 = vrsqrt.pop %v7229
        %v7246 = vrsqrt.pop %v7230
        %v7247 = vrsqrt.pop %v7231
        %v7248 = vrsqrt.pop %v7232
        %v7249 = vmul.f32 %v7137, %v7233
        %v7250 = vmul.f32 %v7138, %v7234
        %v7251 = vmul.f32 %v7139, %v7235
        %v7252 = vmul.f32 %v7140, %v7236
        %v7253 = vmul.f32 %v7141, %v7237
        %v7254 = vmul.f32 %v7142, %v7238
        %v7255 = vmul.f32 %v7143, %v7239
        %v7256 = vmul.f32 %v7144, %v7240
        %v7257 = vmul.f32 %v7145, %v7241
        %v7258 = vmul.f32 %v7146, %v7242
        %v7259 = vmul.f32 %v7147, %v7243
        %v7260 = vmul.f32 %v7148, %v7244
        %v7261 = vmul.f32 %v7149, %v7245
        %v7262 = vmul.f32 %v7150, %v7246
        %v7263 = vmul.f32 %v7151, %v7247
        %v7264 = vmul.f32 %v7152, %v7248
        %v7265 = vld [vmem:[%s14] sm:$0x1]
        %v7267 = vlaneseq
        %v7268 = vshrl.u32 %v7267, 7
        %v7269 = vsub.s32 0, %v7268
        %v7270 = vrot.slane %v7265, %v7269
        %v7272 = vmul.f32 %v7249, %v7270
        %v7273 = vmul.f32 %v7250, %v7270
        %v7274 = vmul.f32 %v7251, %v7270
        %v7275 = vmul.f32 %v7252, %v7270
        %v7276 = vmul.f32 %v7253, %v7270
        %v7277 = vmul.f32 %v7254, %v7270
        %v7278 = vmul.f32 %v7255, %v7270
        %v7279 = vmul.f32 %v7256, %v7270
        %v7280 = vmul.f32 %v7257, %v7270
        %v7281 = vmul.f32 %v7258, %v7270
        %v7282 = vmul.f32 %v7259, %v7270
        %v7283 = vmul.f32 %v7260, %v7270
        %v7284 = vmul.f32 %v7261, %v7270
        %v7285 = vmul.f32 %v7262, %v7270
        %v7286 = vmul.f32 %v7263, %v7270
        %v7287 = vmul.f32 %v7264, %v7270
        %v7288 = vld [vmem:[%s15] sm:$0x1]
        %v7290 = vlaneseq
        %v7291 = vshrl.u32 %v7290, 7
        %v7292 = vsub.s32 0, %v7291
        %v7293 = vrot.slane %v7288, %v7292
        %v7295 = vadd.f32 %v7272, %v7293
        %v7296 = vadd.f32 %v7273, %v7293
        %v7297 = vadd.f32 %v7274, %v7293
        %v7298 = vadd.f32 %v7275, %v7293
        %v7299 = vadd.f32 %v7276, %v7293
        %v7300 = vadd.f32 %v7277, %v7293
        %v7301 = vadd.f32 %v7278, %v7293
        %v7302 = vadd.f32 %v7279, %v7293
        %v7303 = vadd.f32 %v7280, %v7293
        %v7304 = vadd.f32 %v7281, %v7293
        %v7305 = vadd.f32 %v7282, %v7293
        %v7306 = vadd.f32 %v7283, %v7293
        %v7307 = vadd.f32 %v7284, %v7293
        %v7308 = vadd.f32 %v7285, %v7293
        %v7309 = vadd.f32 %v7286, %v7293
        %v7310 = vadd.f32 %v7287, %v7293
        %v7311 = vpack.c.bf16 %v7296, %v7295
        %v7312 = vpack.c.bf16 %v7298, %v7297
        %v7313 = vpack.c.bf16 %v7300, %v7299
        %v7314 = vpack.c.bf16 %v7302, %v7301
        %v7315 = vpack.c.bf16 %v7304, %v7303
        %v7316 = vpack.c.bf16 %v7306, %v7305
        %v7317 = vpack.c.bf16 %v7308, %v7307
        %v7318 = vpack.c.bf16 %v7310, %v7309
        %v7319 = vld [vmem:[%s10] sm:$0xff]
        %v7320 = vld [vmem:[%s10 + $0x8] sm:$0xff]
        %v7321 = vld [vmem:[%s10 + $0x10] sm:$0xff]
        %v7322 = vld [vmem:[%s10 + $0x18] sm:$0xff]
        %v7323 = vld [vmem:[%s10 + $0x20] sm:$0xff]
        %v7324 = vld [vmem:[%s10 + $0x28] sm:$0xff]
        %v7325 = vld [vmem:[%s10 + $0x30] sm:$0xff]
        %v7326 = vld [vmem:[%s10 + $0x38] sm:$0xff]
        %v7327 = vld [vmem:[%s10 + $0x40] sm:$0xff]
        %v7328 = vld [vmem:[%s10 + $0x48] sm:$0xff]
        %v7329 = vld [vmem:[%s10 + $0x50] sm:$0xff]
        %v7330 = vld [vmem:[%s10 + $0x58] sm:$0xff]
        %v7331 = vld [vmem:[%s10 + $0x60] sm:$0xff]
        %v7332 = vld [vmem:[%s10 + $0x68] sm:$0xff]
        %v7333 = vld [vmem:[%s10 + $0x70] sm:$0xff]
        %v7334 = vld [vmem:[%s10 + $0x78] sm:$0xff]
        %v7335 = vld [vmem:[%s11] sm:$0x3]
        %v7337 = vlaneseq
        %v7338 = vshrl.u32 %v7337, 7
        %v7339 = vsub.s32 0, %v7338
        %v7340 = vrot.slane %v7335, %v7339
        %v7341 = vlaneseq
        %v7342 = vshrl.u32 %v7341, 7
        %v7343 = vsub.s32 1, %v7342
        %v7344 = vrot.slane %v7335, %v7343
        %v7363 = vunpack.c.l.b16 %v7319
        %v7364 = vunpack.c.h.b16 %v7319
        %v7365 = vunpack.c.l.b16 %v7320
        %v7366 = vunpack.c.h.b16 %v7320
        %v7367 = vunpack.c.l.b16 %v7321
        %v7368 = vunpack.c.h.b16 %v7321
        %v7369 = vunpack.c.l.b16 %v7322
        %v7370 = vunpack.c.h.b16 %v7322
        %v7371 = vunpack.c.l.b16 %v7323
        %v7372 = vunpack.c.h.b16 %v7323
        %v7373 = vunpack.c.l.b16 %v7324
        %v7374 = vunpack.c.h.b16 %v7324
        %v7375 = vunpack.c.l.b16 %v7325
        %v7376 = vunpack.c.h.b16 %v7325
        %v7377 = vunpack.c.l.b16 %v7326
        %v7378 = vunpack.c.h.b16 %v7326
        %v7379 = vunpack.c.l.b16 %v7327
        %v7380 = vunpack.c.h.b16 %v7327
        %v7381 = vunpack.c.l.b16 %v7328
        %v7382 = vunpack.c.h.b16 %v7328
        %v7383 = vunpack.c.l.b16 %v7329
        %v7384 = vunpack.c.h.b16 %v7329
        %v7385 = vunpack.c.l.b16 %v7330
        %v7386 = vunpack.c.h.b16 %v7330
        %v7387 = vunpack.c.l.b16 %v7331
        %v7388 = vunpack.c.h.b16 %v7331
        %v7389 = vunpack.c.l.b16 %v7332
        %v7390 = vunpack.c.h.b16 %v7332
        %v7391 = vunpack.c.l.b16 %v7333
        %v7392 = vunpack.c.h.b16 %v7333
        %v7393 = vunpack.c.l.b16 %v7334
        %v7394 = vunpack.c.h.b16 %v7334
        %v7395 = vpack.c.b16 %v7365, %v7363
        %v7396 = vpack.c.b16 %v7366, %v7364
        %v7397 = vpack.c.b16 %v7369, %v7367
        %v7398 = vpack.c.b16 %v7370, %v7368
        %v7399 = vpack.c.b16 %v7373, %v7371
        %v7400 = vpack.c.b16 %v7374, %v7372
        %v7401 = vpack.c.b16 %v7377, %v7375
        %v7402 = vpack.c.b16 %v7378, %v7376
        %v7403 = vpack.c.b16 %v7381, %v7379
        %v7404 = vpack.c.b16 %v7382, %v7380
        %v7405 = vpack.c.b16 %v7385, %v7383
        %v7406 = vpack.c.b16 %v7386, %v7384
        %v7407 = vpack.c.b16 %v7389, %v7387
        %v7408 = vpack.c.b16 %v7390, %v7388
        %v7409 = vpack.c.b16 %v7393, %v7391
        %v7410 = vpack.c.b16 %v7394, %v7392
        %7427 = vmatprep.subr.bf16.mxu0 %v7396
        %7428 = vmatpush1.bf16.msra.mxu0 %v7395
        %7429 = vmatprep.subr.bf16.mxu0 %v7398
        %7430 = vmatpush1.bf16.msra.mxu0 %v7397
        %7431 = vmatprep.subr.bf16.mxu0 %v7400
        %7432 = vmatpush1.bf16.msra.mxu0 %v7399
        %7433 = vmatprep.subr.bf16.mxu0 %v7402
        %7434 = vmatpush1.bf16.msra.mxu0 %v7401
        %7435 = vmatprep.subr.bf16.mxu0 %v7404
        %7436 = vmatpush1.bf16.msra.mxu0 %v7403
        %7437 = vmatprep.subr.bf16.mxu0 %v7406
        %7438 = vmatpush1.bf16.msra.mxu0 %v7405
        %7439 = vmatprep.subr.bf16.mxu0 %v7408
        %7440 = vmatpush1.bf16.msra.mxu0 %v7407
        %7441 = vmatprep.subr.bf16.mxu0 %v7410
        %7442 = vmatpush1.bf16.msra.mxu0 %v7409
        %7443 = vmatprep.subr.bf16.mxu0 0
        %7444 = vmatpush1.bf16.msra.mxu0 0
        %7445 = vmatprep.subr.bf16.mxu0 0
        %7446 = vmatpush1.bf16.msra.mxu0 0
        %7447 = vmatprep.subr.bf16.mxu0 0
        %7448 = vmatpush1.bf16.msra.mxu0 0
        %7449 = vmatprep.subr.bf16.mxu0 0
        %7450 = vmatpush1.bf16.msra.mxu0 0
        %7451 = vmatprep.subr.bf16.mxu0 0
        %7452 = vmatpush1.bf16.msra.mxu0 0
        %7453 = vmatprep.subr.bf16.mxu0 0
        %7454 = vmatpush1.bf16.msra.mxu0 0
        %7455 = vmatprep.subr.bf16.mxu0 0
        %7456 = vmatpush1.bf16.msra.mxu0 0
        %7457 = vmatprep.subr.bf16.mxu0 0
        %7458 = vmatpush1.bf16.msra.mxu0 0
        %7459 = vmatprep.mubr.bf16.mxu0 0
        %7460 = vmatmul.mubr.bf16.gmra.mrb[0].mxu0 %v7311
        %v7461 = vpop.f32.mrb[0].mxu0
        %v7462 = vadd.f32 %v7340, %v7461
        %v7463 = vpop.f32.mrb[0].mxu0
        %v7464 = vadd.f32 %v7344, %v7463
        %v7465 = vpop.f32.mrb[0].mxu0
        %v7466 = vadd.f32 %v7340, %v7465
        %v7467 = vpop.f32.mrb[0].mxu0
        %v7468 = vadd.f32 %v7344, %v7467
        %7469 = vmatprep.mubr.bf16.mxu0 0
        %7470 = vmatmul.mubr.bf16.gmra.mrb[0].mxu0 %v7312
        %v7471 = vpop.f32.mrb[0].mxu0
        %v7472 = vadd.f32 %v7340, %v7471
        %v7473 = vpop.f32.mrb[0].mxu0
        %v7474 = vadd.f32 %v7344, %v7473
        %v7475 = vpop.f32.mrb[0].mxu0
        %v7476 = vadd.f32 %v7340, %v7475
        %v7477 = vpop.f32.mrb[0].mxu0
        %v7478 = vadd.f32 %v7344, %v7477
        %7479 = vmatprep.mubr.bf16.mxu0 0
        %7480 = vmatmul.mubr.bf16.gmra.mrb[0].mxu0 %v7313
        %v7481 = vpop.f32.mrb[0].mxu0
        %v7482 = vadd.f32 %v7340, %v7481
        %v7483 = vpop.f32.mrb[0].mxu0
        %v7484 = vadd.f32 %v7344, %v7483
        %v7485 = vpop.f32.mrb[0].mxu0
        %v7486 = vadd.f32 %v7340, %v7485
        %v7487 = vpop.f32.mrb[0].mxu0
        %v7488 = vadd.f32 %v7344, %v7487
        %7489 = vmatprep.mubr.bf16.mxu0 0
        %7490 = vmatmul.mubr.bf16.gmra.mrb[0].mxu0 %v7314
        %v7491 = vpop.f32.mrb[0].mxu0
        %v7492 = vadd.f32 %v7340, %v7491
        %v7493 = vpop.f32.mrb[0].mxu0
        %v7494 = vadd.f32 %v7344, %v7493
        %v7495 = vpop.f32.mrb[0].mxu0
        %v7496 = vadd.f32 %v7340, %v7495
        %v7497 = vpop.f32.mrb[0].mxu0
        %v7498 = vadd.f32 %v7344, %v7497
        %7499 = vmatprep.mubr.bf16.mxu0 0
        %7500 = vmatmul.mubr.bf16.gmra.mrb[0].mxu0 %v7315
        %v7501 = vpop.f32.mrb[0].mxu0
        %v7502 = vadd.f32 %v7340, %v7501
        %v7503 = vpop.f32.mrb[0].mxu0
        %v7504 = vadd.f32 %v7344, %v7503
        %v7505 = vpop.f32.mrb[0].mxu0
        %v7506 = vadd.f32 %v7340, %v7505
        %v7507 = vpop.f32.mrb[0].mxu0
        %v7508 = vadd.f32 %v7344, %v7507
        %7509 = vmatprep.mubr.bf16.mxu0 0
        %7510 = vmatmul.mubr.bf16.gmra.mrb[0].mxu0 %v7316
        %v7511 = vpop.f32.mrb[0].mxu0
        %v7512 = vadd.f32 %v7340, %v7511
        %v7513 = vpop.f32.mrb[0].mxu0
        %v7514 = vadd.f32 %v7344, %v7513
        %v7515 = vpop.f32.mrb[0].mxu0
        %v7516 = vadd.f32 %v7340, %v7515
        %v7517 = vpop.f32.mrb[0].mxu0
        %v7518 = vadd.f32 %v7344, %v7517
        %7519 = vmatprep.mubr.bf16.mxu0 0
        %7520 = vmatmul.mubr.bf16.gmra.mrb[0].mxu0 %v7317
        %v7521 = vpop.f32.mrb[0].mxu0
        %v7522 = vadd.f32 %v7340, %v7521
        %v7523 = vpop.f32.mrb[0].mxu0
        %v7524 = vadd.f32 %v7344, %v7523
        %v7525 = vpop.f32.mrb[0].mxu0
        %v7526 = vadd.f32 %v7340, %v7525
        %v7527 = vpop.f32.mrb[0].mxu0
        %v7528 = vadd.f32 %v7344, %v7527
        %7529 = vmatprep.mubr.bf16.mxu0 0
        %7530 = vmatmul.mubr.bf16.gmra.mrb[0].mxu0 %v7318
        %v7531 = vpop.f32.mrb[0].mxu0
        %v7532 = vadd.f32 %v7340, %v7531
        %v7533 = vpop.f32.mrb[0].mxu0
        %v7534 = vadd.f32 %v7344, %v7533
        %v7535 = vpop.f32.mrb[0].mxu0
        %v7536 = vadd.f32 %v7340, %v7535
        %v7537 = vpop.f32.mrb[0].mxu0
        %v7538 = vadd.f32 %v7344, %v7537
        %7539 = vdwg.mxu0
        %v7540 = vmax.f32 %v7462, 0.0
        %v7541 = vmax.f32 %v7464, 0.0
        %v7542 = vmax.f32 %v7466, 0.0
        %v7543 = vmax.f32 %v7468, 0.0
        %v7544 = vmax.f32 %v7472, 0.0
        %v7545 = vmax.f32 %v7474, 0.0
        %v7546 = vmax.f32 %v7476, 0.0
        %v7547 = vmax.f32 %v7478, 0.0
        %v7548 = vmax.f32 %v7482, 0.0
        %v7549 = vmax.f32 %v7484, 0.0
        %v7550 = vmax.f32 %v7486, 0.0
        %v7551 = vmax.f32 %v7488, 0.0
        %v7552 = vmax.f32 %v7492, 0.0
        %v7553 = vmax.f32 %v7494, 0.0
        %v7554 = vmax.f32 %v7496, 0.0
        %v7555 = vmax.f32 %v7498, 0.0
        %v7556 = vmax.f32 %v7502, 0.0
        %v7557 = vmax.f32 %v7504, 0.0
        %v7558 = vmax.f32 %v7506, 0.0
        %v7559 = vmax.f32 %v7508, 0.0
        %v7560 = vmax.f32 %v7512, 0.0
        %v7561 = vmax.f32 %v7514, 0.0
        %v7562 = vmax.f32 %v7516, 0.0
        %v7563 = vmax.f32 %v7518, 0.0
        %v7564 = vmax.f32 %v7522, 0.0
        %v7565 = vmax.f32 %v7524, 0.0
        %v7566 = vmax.f32 %v7526, 0.0
        %v7567 = vmax.f32 %v7528, 0.0
        %v7568 = vmax.f32 %v7532, 0.0
        %v7569 = vmax.f32 %v7534, 0.0
        %v7570 = vmax.f32 %v7536, 0.0
        %v7571 = vmax.f32 %v7538, 0.0
        %v7572 = vpack.c.bf16 %v7542, %v7540
        %v7573 = vpack.c.bf16 %v7543, %v7541
        %v7574 = vpack.c.bf16 %v7546, %v7544
        %v7575 = vpack.c.bf16 %v7547, %v7545
        %v7576 = vpack.c.bf16 %v7550, %v7548
        %v7577 = vpack.c.bf16 %v7551, %v7549
        %v7578 = vpack.c.bf16 %v7554, %v7552
        %v7579 = vpack.c.bf16 %v7555, %v7553
        %v7580 = vpack.c.bf16 %v7558, %v7556
        %v7581 = vpack.c.bf16 %v7559, %v7557
        %v7582 = vpack.c.bf16 %v7562, %v7560
        %v7583 = vpack.c.bf16 %v7563, %v7561
        %v7584 = vpack.c.bf16 %v7566, %v7564
        %v7585 = vpack.c.bf16 %v7567, %v7565
        %v7586 = vpack.c.bf16 %v7570, %v7568
        %v7587 = vpack.c.bf16 %v7571, %v7569
        %v7588 = vld [vmem:[%s12] sm:$0xf]
        %v7589 = vld [vmem:[%s12 + $0x4] sm:$0xf]
        %v7590 = vld [vmem:[%s12 + $0x8] sm:$0xf]
        %v7591 = vld [vmem:[%s12 + $0xc] sm:$0xf]
        %v7592 = vld [vmem:[%s12 + $0x10] sm:$0xf]
        %v7593 = vld [vmem:[%s12 + $0x14] sm:$0xf]
        %v7594 = vld [vmem:[%s12 + $0x18] sm:$0xf]
        %v7595 = vld [vmem:[%s12 + $0x1c] sm:$0xf]
        %v7596 = vld [vmem:[%s12 + $0x20] sm:$0xf]
        %v7597 = vld [vmem:[%s12 + $0x24] sm:$0xf]
        %v7598 = vld [vmem:[%s12 + $0x28] sm:$0xf]
        %v7599 = vld [vmem:[%s12 + $0x2c] sm:$0xf]
        %v7600 = vld [vmem:[%s12 + $0x30] sm:$0xf]
        %v7601 = vld [vmem:[%s12 + $0x34] sm:$0xf]
        %v7602 = vld [vmem:[%s12 + $0x38] sm:$0xf]
        %v7603 = vld [vmem:[%s12 + $0x3c] sm:$0xf]
        %v7604 = vld [vmem:[%s12 + $0x40] sm:$0xf]
        %v7605 = vld [vmem:[%s12 + $0x44] sm:$0xf]
        %v7606 = vld [vmem:[%s12 + $0x48] sm:$0xf]
        %v7607 = vld [vmem:[%s12 + $0x4c] sm:$0xf]
        %v7608 = vld [vmem:[%s12 + $0x50] sm:$0xf]
        %v7609 = vld [vmem:[%s12 + $0x54] sm:$0xf]
        %v7610 = vld [vmem:[%s12 + $0x58] sm:$0xf]
        %v7611 = vld [vmem:[%s12 + $0x5c] sm:$0xf]
        %v7612 = vld [vmem:[%s12 + $0x60] sm:$0xf]
        %v7613 = vld [vmem:[%s12 + $0x64] sm:$0xf]
        %v7614 = vld [vmem:[%s12 + $0x68] sm:$0xf]
        %v7615 = vld [vmem:[%s12 + $0x6c] sm:$0xf]
        %v7616 = vld [vmem:[%s12 + $0x70] sm:$0xf]
        %v7617 = vld [vmem:[%s12 + $0x74] sm:$0xf]
        %v7618 = vld [vmem:[%s12 + $0x78] sm:$0xf]
        %v7619 = vld [vmem:[%s12 + $0x7c] sm:$0xf]
        %v7620 = vld [vmem:[%s13] sm:$0x1]
        %v7622 = vlaneseq
        %v7623 = vshrl.u32 %v7622, 7
        %v7624 = vsub.s32 0, %v7623
        %v7625 = vrot.slane %v7620, %v7624
        %v7659 = vunpack.c.l.b16 %v7588
        %v7660 = vunpack.c.l.b16 %v7589
        %v7661 = vunpack.c.l.b16 %v7590
        %v7662 = vunpack.c.l.b16 %v7591
        %v7663 = vunpack.c.l.b16 %v7592
        %v7664 = vunpack.c.l.b16 %v7593
        %v7665 = vunpack.c.l.b16 %v7594
        %v7666 = vunpack.c.l.b16 %v7595
        %v7667 = vunpack.c.l.b16 %v7596
        %v7668 = vunpack.c.l.b16 %v7597
        %v7669 = vunpack.c.l.b16 %v7598
        %v7670 = vunpack.c.l.b16 %v7599
        %v7671 = vunpack.c.l.b16 %v7600
        %v7672 = vunpack.c.l.b16 %v7601
        %v7673 = vunpack.c.l.b16 %v7602
        %v7674 = vunpack.c.l.b16 %v7603
        %v7675 = vunpack.c.l.b16 %v7604
        %v7676 = vunpack.c.l.b16 %v7605
        %v7677 = vunpack.c.l.b16 %v7606
        %v7678 = vunpack.c.l.b16 %v7607
        %v7679 = vunpack.c.l.b16 %v7608
        %v7680 = vunpack.c.l.b16 %v7609
        %v7681 = vunpack.c.l.b16 %v7610
        %v7682 = vunpack.c.l.b16 %v7611
        %v7683 = vunpack.c.l.b16 %v7612
        %v7684 = vunpack.c.l.b16 %v7613
        %v7685 = vunpack.c.l.b16 %v7614
        %v7686 = vunpack.c.l.b16 %v7615
        %v7687 = vunpack.c.l.b16 %v7616
        %v7688 = vunpack.c.l.b16 %v7617
        %v7689 = vunpack.c.l.b16 %v7618
        %v7690 = vunpack.c.l.b16 %v7619
        %v7691 = vpack.c.b16 %v7660, %v7659
        %v7692 = vpack.c.b16 %v7662, %v7661
        %v7693 = vpack.c.b16 %v7664, %v7663
        %v7694 = vpack.c.b16 %v7666, %v7665
        %v7695 = vpack.c.b16 %v7668, %v7667
        %v7696 = vpack.c.b16 %v7670, %v7669
        %v7697 = vpack.c.b16 %v7672, %v7671
        %v7698 = vpack.c.b16 %v7674, %v7673
        %v7699 = vpack.c.b16 %v7676, %v7675
        %v7700 = vpack.c.b16 %v7678, %v7677
        %v7701 = vpack.c.b16 %v7680, %v7679
        %v7702 = vpack.c.b16 %v7682, %v7681
        %v7703 = vpack.c.b16 %v7684, %v7683
        %v7704 = vpack.c.b16 %v7686, %v7685
        %v7705 = vpack.c.b16 %v7688, %v7687
        %v7706 = vpack.c.b16 %v7690, %v7689
        %7723 = vmatprep.subr.bf16.mxu0 0
        %7724 = vmatpush1.bf16.msra.mxu0 %v7691
        %7725 = vmatprep.subr.bf16.mxu0 0
        %7726 = vmatpush1.bf16.msra.mxu0 %v7692
        %7727 = vmatprep.subr.bf16.mxu0 0
        %7728 = vmatpush1.bf16.msra.mxu0 %v7693
        %7729 = vmatprep.subr.bf16.mxu0 0
        %7730 = vmatpush1.bf16.msra.mxu0 %v7694
        %7731 = vmatprep.subr.bf16.mxu0 0
        %7732 = vmatpush1.bf16.msra.mxu0 %v7695
        %7733 = vmatprep.subr.bf16.mxu0 0
        %7734 = vmatpush1.bf16.msra.mxu0 %v7696
        %7735 = vmatprep.subr.bf16.mxu0 0
        %7736 = vmatpush1.bf16.msra.mxu0 %v7697
        %7737 = vmatprep.subr.bf16.mxu0 0
        %7738 = vmatpush1.bf16.msra.mxu0 %v7698
        %7739 = vmatprep.subr.bf16.mxu0 0
        %7740 = vmatpush1.bf16.msra.mxu0 %v7699
        %7741 = vmatprep.subr.bf16.mxu0 0
        %7742 = vmatpush1.bf16.msra.mxu0 %v7700
        %7743 = vmatprep.subr.bf16.mxu0 0
        %7744 = vmatpush1.bf16.msra.mxu0 %v7701
        %7745 = vmatprep.subr.bf16.mxu0 0
        %7746 = vmatpush1.bf16.msra.mxu0 %v7702
        %7747 = vmatprep.subr.bf16.mxu0 0
        %7748 = vmatpush1.bf16.msra.mxu0 %v7703
        %7749 = vmatprep.subr.bf16.mxu0 0
        %7750 = vmatpush1.bf16.msra.mxu0 %v7704
        %7751 = vmatprep.subr.bf16.mxu0 0
        %7752 = vmatpush1.bf16.msra.mxu0 %v7705
        %7753 = vmatprep.subr.bf16.mxu0 0
        %7754 = vmatpush1.bf16.msra.mxu0 %v7706
        %7755 = vmatprep.mubr.bf16.mxu0 %v7573
        %7756 = vmatmul.mubr.bf16.gmra.mrb[0].mxu0 %v7572
        %v7757 = vpop.f32.mrb[0].mxu0
        %v7758 = vadd.f32 %v7625, %v7757
        %v7759 = vpop.f32.mrb[0].mxu0
        %v7760 = vpop.f32.mrb[0].mxu0
        %v7761 = vadd.f32 %v7625, %v7760
        %v7762 = vpop.f32.mrb[0].mxu0
        %7763 = vmatprep.mubr.bf16.mxu0 %v7575
        %7764 = vmatmul.mubr.bf16.gmra.mrb[0].mxu0 %v7574
        %v7765 = vpop.f32.mrb[0].mxu0
        %v7766 = vadd.f32 %v7625, %v7765
        %v7767 = vpop.f32.mrb[0].mxu0
        %v7768 = vpop.f32.mrb[0].mxu0
        %v7769 = vadd.f32 %v7625, %v7768
        %v7770 = vpop.f32.mrb[0].mxu0
        %7771 = vmatprep.mubr.bf16.mxu0 %v7577
        %7772 = vmatmul.mubr.bf16.gmra.mrb[0].mxu0 %v7576
        %v7773 = vpop.f32.mrb[0].mxu0
        %v7774 = vadd.f32 %v7625, %v7773
        %v7775 = vpop.f32.mrb[0].mxu0
        %v7776 = vpop.f32.mrb[0].mxu0
        %v7777 = vadd.f32 %v7625, %v7776
        %v7778 = vpop.f32.mrb[0].mxu0
        %7779 = vmatprep.mubr.bf16.mxu0 %v7579
        %7780 = vmatmul.mubr.bf16.gmra.mrb[0].mxu0 %v7578
        %v7781 = vpop.f32.mrb[0].mxu0
        %v7782 = vadd.f32 %v7625, %v7781
        %v7783 = vpop.f32.mrb[0].mxu0
        %v7784 = vpop.f32.mrb[0].mxu0
        %v7785 = vadd.f32 %v7625, %v7784
        %v7786 = vpop.f32.mrb[0].mxu0
        %7787 = vmatprep.mubr.bf16.mxu0 %v7581
        %7788 = vmatmul.mubr.bf16.gmra.mrb[0].mxu0 %v7580
        %v7789 = vpop.f32.mrb[0].mxu0
        %v7790 = vadd.f32 %v7625, %v7789
        %v7791 = vpop.f32.mrb[0].mxu0
        %v7792 = vpop.f32.mrb[0].mxu0
        %v7793 = vadd.f32 %v7625, %v7792
        %v7794 = vpop.f32.mrb[0].mxu0
        %7795 = vmatprep.mubr.bf16.mxu0 %v7583
        %7796 = vmatmul.mubr.bf16.gmra.mrb[0].mxu0 %v7582
        %v7797 = vpop.f32.mrb[0].mxu0
        %v7798 = vadd.f32 %v7625, %v7797
        %v7799 = vpop.f32.mrb[0].mxu0
        %v7800 = vpop.f32.mrb[0].mxu0
        %v7801 = vadd.f32 %v7625, %v7800
        %v7802 = vpop.f32.mrb[0].mxu0
        %7803 = vmatprep.mubr.bf16.mxu0 %v7585
        %7804 = vmatmul.mubr.bf16.gmra.mrb[0].mxu0 %v7584
        %v7805 = vpop.f32.mrb[0].mxu0
        %v7806 = vadd.f32 %v7625, %v7805
        %v7807 = vpop.f32.mrb[0].mxu0
        %v7808 = vpop.f32.mrb[0].mxu0
        %v7809 = vadd.f32 %v7625, %v7808
        %v7810 = vpop.f32.mrb[0].mxu0
        %7811 = vmatprep.mubr.bf16.mxu0 %v7587
        %7812 = vmatmul.mubr.bf16.gmra.mrb[0].mxu0 %v7586
        %v7813 = vpop.f32.mrb[0].mxu0
        %v7814 = vadd.f32 %v7625, %v7813
        %v7815 = vpop.f32.mrb[0].mxu0
        %v7816 = vpop.f32.mrb[0].mxu0
        %v7817 = vadd.f32 %v7625, %v7816
        %v7818 = vpop.f32.mrb[0].mxu0
        %7819 = vdwg.mxu0
        %v7820 = vadd.f32 %v7295, %v7758
        %v7821 = vadd.f32 %v7296, %v7761
        %v7822 = vadd.f32 %v7297, %v7766
        %v7823 = vadd.f32 %v7298, %v7769
        %v7824 = vadd.f32 %v7299, %v7774
        %v7825 = vadd.f32 %v7300, %v7777
        %v7826 = vadd.f32 %v7301, %v7782
        %v7827 = vadd.f32 %v7302, %v7785
        %v7828 = vadd.f32 %v7303, %v7790
        %v7829 = vadd.f32 %v7304, %v7793
        %v7830 = vadd.f32 %v7305, %v7798
        %v7831 = vadd.f32 %v7306, %v7801
        %v7832 = vadd.f32 %v7307, %v7806
        %v7833 = vadd.f32 %v7308, %v7809
        %v7834 = vadd.f32 %v7309, %v7814
        %v7835 = vadd.f32 %v7310, %v7817
        %7836 = vadd.xlane.f32.xlu0 %v7820
        %v7837 = vpop.xlane.xlu0 %7836
        %7838 = vadd.xlane.f32.xlu0 %v7821
        %v7839 = vpop.xlane.xlu0 %7838
        %7840 = vadd.xlane.f32.xlu0 %v7822
        %v7841 = vpop.xlane.xlu0 %7840
        %7842 = vadd.xlane.f32.xlu0 %v7823
        %v7843 = vpop.xlane.xlu0 %7842
        %7844 = vadd.xlane.f32.xlu0 %v7824
        %v7845 = vpop.xlane.xlu0 %7844
        %7846 = vadd.xlane.f32.xlu0 %v7825
        %v7847 = vpop.xlane.xlu0 %7846
        %7848 = vadd.xlane.f32.xlu0 %v7826
        %v7849 = vpop.xlane.xlu0 %7848
        %7850 = vadd.xlane.f32.xlu0 %v7827
        %v7851 = vpop.xlane.xlu0 %7850
        %7852 = vadd.xlane.f32.xlu0 %v7828
        %v7853 = vpop.xlane.xlu0 %7852
        %7854 = vadd.xlane.f32.xlu0 %v7829
        %v7855 = vpop.xlane.xlu0 %7854
        %7856 = vadd.xlane.f32.xlu0 %v7830
        %v7857 = vpop.xlane.xlu0 %7856
        %7858 = vadd.xlane.f32.xlu0 %v7831
        %v7859 = vpop.xlane.xlu0 %7858
        %7860 = vadd.xlane.f32.xlu0 %v7832
        %v7861 = vpop.xlane.xlu0 %7860
        %7862 = vadd.xlane.f32.xlu0 %v7833
        %v7863 = vpop.xlane.xlu0 %7862
        %7864 = vadd.xlane.f32.xlu0 %v7834
        %v7865 = vpop.xlane.xlu0 %7864
        %7866 = vadd.xlane.f32.xlu0 %v7835
        %v7867 = vpop.xlane.xlu0 %7866
        %v7868 = vmul.f32 %v7837, %v7120
        %v7869 = vmul.f32 %v7839, %v7120
        %v7870 = vmul.f32 %v7841, %v7120
        %v7871 = vmul.f32 %v7843, %v7120
        %v7872 = vmul.f32 %v7845, %v7120
        %v7873 = vmul.f32 %v7847, %v7120
        %v7874 = vmul.f32 %v7849, %v7120
        %v7875 = vmul.f32 %v7851, %v7120
        %v7876 = vmul.f32 %v7853, %v7120
        %v7877 = vmul.f32 %v7855, %v7120
        %v7878 = vmul.f32 %v7857, %v7120
        %v7879 = vmul.f32 %v7859, %v7120
        %v7880 = vmul.f32 %v7861, %v7120
        %v7881 = vmul.f32 %v7863, %v7120
        %v7882 = vmul.f32 %v7865, %v7120
        %v7883 = vmul.f32 %v7867, %v7120
        %v7884 = vsub.f32 %v7820, %v7868
        %v7885 = vsub.f32 %v7821, %v7869
        %v7886 = vsub.f32 %v7822, %v7870
        %v7887 = vsub.f32 %v7823, %v7871
        %v7888 = vsub.f32 %v7824, %v7872
        %v7889 = vsub.f32 %v7825, %v7873
        %v7890 = vsub.f32 %v7826, %v7874
        %v7891 = vsub.f32 %v7827, %v7875
        %v7892 = vsub.f32 %v7828, %v7876
        %v7893 = vsub.f32 %v7829, %v7877
        %v7894 = vsub.f32 %v7830, %v7878
        %v7895 = vsub.f32 %v7831, %v7879
        %v7896 = vsub.f32 %v7832, %v7880
        %v7897 = vsub.f32 %v7833, %v7881
        %v7898 = vsub.f32 %v7834, %v7882
        %v7899 = vsub.f32 %v7835, %v7883
        %v7900 = vmul.f32 %v7884, %v7884
        %v7901 = vmul.f32 %v7885, %v7885
        %v7902 = vmul.f32 %v7886, %v7886
        %v7903 = vmul.f32 %v7887, %v7887
        %v7904 = vmul.f32 %v7888, %v7888
        %v7905 = vmul.f32 %v7889, %v7889
        %v7906 = vmul.f32 %v7890, %v7890
        %v7907 = vmul.f32 %v7891, %v7891
        %v7908 = vmul.f32 %v7892, %v7892
        %v7909 = vmul.f32 %v7893, %v7893
        %v7910 = vmul.f32 %v7894, %v7894
        %v7911 = vmul.f32 %v7895, %v7895
        %v7912 = vmul.f32 %v7896, %v7896
        %v7913 = vmul.f32 %v7897, %v7897
        %v7914 = vmul.f32 %v7898, %v7898
        %v7915 = vmul.f32 %v7899, %v7899
        %7916 = vadd.xlane.f32.xlu0 %v7900
        %v7917 = vpop.xlane.xlu0 %7916
        %7918 = vadd.xlane.f32.xlu0 %v7901
        %v7919 = vpop.xlane.xlu0 %7918
        %7920 = vadd.xlane.f32.xlu0 %v7902
        %v7921 = vpop.xlane.xlu0 %7920
        %7922 = vadd.xlane.f32.xlu0 %v7903
        %v7923 = vpop.xlane.xlu0 %7922
        %7924 = vadd.xlane.f32.xlu0 %v7904
        %v7925 = vpop.xlane.xlu0 %7924
        %7926 = vadd.xlane.f32.xlu0 %v7905
        %v7927 = vpop.xlane.xlu0 %7926
        %7928 = vadd.xlane.f32.xlu0 %v7906
        %v7929 = vpop.xlane.xlu0 %7928
        %7930 = vadd.xlane.f32.xlu0 %v7907
        %v7931 = vpop.xlane.xlu0 %7930
        %7932 = vadd.xlane.f32.xlu0 %v7908
        %v7933 = vpop.xlane.xlu0 %7932
        %7934 = vadd.xlane.f32.xlu0 %v7909
        %v7935 = vpop.xlane.xlu0 %7934
        %7936 = vadd.xlane.f32.xlu0 %v7910
        %v7937 = vpop.xlane.xlu0 %7936
        %7938 = vadd.xlane.f32.xlu0 %v7911
        %v7939 = vpop.xlane.xlu0 %7938
        %7940 = vadd.xlane.f32.xlu0 %v7912
        %v7941 = vpop.xlane.xlu0 %7940
        %7942 = vadd.xlane.f32.xlu0 %v7913
        %v7943 = vpop.xlane.xlu0 %7942
        %7944 = vadd.xlane.f32.xlu0 %v7914
        %v7945 = vpop.xlane.xlu0 %7944
        %7946 = vadd.xlane.f32.xlu0 %v7915
        %v7947 = vpop.xlane.xlu0 %7946
        %v7948 = vmul.f32 %v7917, %v7120
        %v7949 = vmul.f32 %v7919, %v7120
        %v7950 = vmul.f32 %v7921, %v7120
        %v7951 = vmul.f32 %v7923, %v7120
        %v7952 = vmul.f32 %v7925, %v7120
        %v7953 = vmul.f32 %v7927, %v7120
        %v7954 = vmul.f32 %v7929, %v7120
        %v7955 = vmul.f32 %v7931, %v7120
        %v7956 = vmul.f32 %v7933, %v7120
        %v7957 = vmul.f32 %v7935, %v7120
        %v7958 = vmul.f32 %v7937, %v7120
        %v7959 = vmul.f32 %v7939, %v7120
        %v7960 = vmul.f32 %v7941, %v7120
        %v7961 = vmul.f32 %v7943, %v7120
        %v7962 = vmul.f32 %v7945, %v7120
        %v7963 = vmul.f32 %v7947, %v7120
        %v7964 = vadd.f32 %v7948, 1e-05
        %v7965 = vadd.f32 %v7949, 1e-05
        %v7966 = vadd.f32 %v7950, 1e-05
        %v7967 = vadd.f32 %v7951, 1e-05
        %v7968 = vadd.f32 %v7952, 1e-05
        %v7969 = vadd.f32 %v7953, 1e-05
        %v7970 = vadd.f32 %v7954, 1e-05
        %v7971 = vadd.f32 %v7955, 1e-05
        %v7972 = vadd.f32 %v7956, 1e-05
        %v7973 = vadd.f32 %v7957, 1e-05
        %v7974 = vadd.f32 %v7958, 1e-05
        %v7975 = vadd.f32 %v7959, 1e-05
        %v7976 = vadd.f32 %v7960, 1e-05
        %v7977 = vadd.f32 %v7961, 1e-05
        %v7978 = vadd.f32 %v7962, 1e-05
        %v7979 = vadd.f32 %v7963, 1e-05
        %v7980 = vrsqrt.pop %v7964
        %v7981 = vrsqrt.pop %v7965
        %v7982 = vrsqrt.pop %v7966
        %v7983 = vrsqrt.pop %v7967
        %v7984 = vrsqrt.pop %v7968
        %v7985 = vrsqrt.pop %v7969
        %v7986 = vrsqrt.pop %v7970
        %v7987 = vrsqrt.pop %v7971
        %v7988 = vrsqrt.pop %v7972
        %v7989 = vrsqrt.pop %v7973
        %v7990 = vrsqrt.pop %v7974
        %v7991 = vrsqrt.pop %v7975
        %v7992 = vrsqrt.pop %v7976
        %v7993 = vrsqrt.pop %v7977
        %v7994 = vrsqrt.pop %v7978
        %v7995 = vrsqrt.pop %v7979
        %v7996 = vmul.f32 %v7884, %v7980
        %v7997 = vmul.f32 %v7885, %v7981
        %v7998 = vmul.f32 %v7886, %v7982
        %v7999 = vmul.f32 %v7887, %v7983
        %v8000 = vmul.f32 %v7888, %v7984
        %v8001 = vmul.f32 %v7889, %v7985
        %v8002 = vmul.f32 %v7890, %v7986
        %v8003 = vmul.f32 %v7891, %v7987
        %v8004 = vmul.f32 %v7892, %v7988
        %v8005 = vmul.f32 %v7893, %v7989
        %v8006 = vmul.f32 %v7894, %v7990
        %v8007 = vmul.f32 %v7895, %v7991
        %v8008 = vmul.f32 %v7896, %v7992
        %v8009 = vmul.f32 %v7897, %v7993
        %v8010 = vmul.f32 %v7898, %v7994
        %v8011 = vmul.f32 %v7899, %v7995
        %v8012 = vld [vmem:[%s16] sm:$0x1]
        %v8014 = vlaneseq
        %v8015 = vshrl.u32 %v8014, 7
        %v8016 = vsub.s32 0, %v8015
        %v8017 = vrot.slane %v8012, %v8016
        %v8019 = vmul.f32 %v7996, %v8017
        %v8020 = vmul.f32 %v7997, %v8017
        %v8021 = vmul.f32 %v7998, %v8017
        %v8022 = vmul.f32 %v7999, %v8017
        %v8023 = vmul.f32 %v8000, %v8017
        %v8024 = vmul.f32 %v8001, %v8017
        %v8025 = vmul.f32 %v8002, %v8017
        %v8026 = vmul.f32 %v8003, %v8017
        %v8027 = vmul.f32 %v8004, %v8017
        %v8028 = vmul.f32 %v8005, %v8017
        %v8029 = vmul.f32 %v8006, %v8017
        %v8030 = vmul.f32 %v8007, %v8017
        %v8031 = vmul.f32 %v8008, %v8017
        %v8032 = vmul.f32 %v8009, %v8017
        %v8033 = vmul.f32 %v8010, %v8017
        %v8034 = vmul.f32 %v8011, %v8017
        %v8035 = vld [vmem:[%s17] sm:$0x1]
        %v8037 = vlaneseq
        %v8038 = vshrl.u32 %v8037, 7
        %v8039 = vsub.s32 0, %v8038
        %v8040 = vrot.slane %v8035, %v8039
        %v8042 = vadd.f32 %v8019, %v8040
        %v8043 = vadd.f32 %v8020, %v8040
        %v8044 = vadd.f32 %v8021, %v8040
        %v8045 = vadd.f32 %v8022, %v8040
        %v8046 = vadd.f32 %v8023, %v8040
        %v8047 = vadd.f32 %v8024, %v8040
        %v8048 = vadd.f32 %v8025, %v8040
        %v8049 = vadd.f32 %v8026, %v8040
        %v8050 = vadd.f32 %v8027, %v8040
        %v8051 = vadd.f32 %v8028, %v8040
        %v8052 = vadd.f32 %v8029, %v8040
        %v8053 = vadd.f32 %v8030, %v8040
        %v8054 = vadd.f32 %v8031, %v8040
        %v8055 = vadd.f32 %v8032, %v8040
        %v8056 = vadd.f32 %v8033, %v8040
        %v8057 = vadd.f32 %v8034, %v8040
        %8058 = vst [vmem:[%s589] sm:$0xff] %v8042
        %8059 = vst [vmem:[%s589 + $0x8] sm:$0xff] %v8043
        %8060 = vst [vmem:[%s589 + $0x10] sm:$0xff] %v8044
        %8061 = vst [vmem:[%s589 + $0x18] sm:$0xff] %v8045
        %8062 = vst [vmem:[%s589 + $0x20] sm:$0xff] %v8046
        %8063 = vst [vmem:[%s589 + $0x28] sm:$0xff] %v8047
        %8064 = vst [vmem:[%s589 + $0x30] sm:$0xff] %v8048
        %8065 = vst [vmem:[%s589 + $0x38] sm:$0xff] %v8049
        %8066 = vst [vmem:[%s589 + $0x40] sm:$0xff] %v8050
        %8067 = vst [vmem:[%s589 + $0x48] sm:$0xff] %v8051
        %8068 = vst [vmem:[%s589 + $0x50] sm:$0xff] %v8052
        %8069 = vst [vmem:[%s589 + $0x58] sm:$0xff] %v8053
        %8070 = vst [vmem:[%s589 + $0x60] sm:$0xff] %v8054
        %8071 = vst [vmem:[%s589 + $0x68] sm:$0xff] %v8055
        %8072 = vst [vmem:[%s589 + $0x70] sm:$0xff] %v8056
        %8073 = vst [vmem:[%s589 + $0x78] sm:$0xff] %v8057
        %s8074 = sand.u32 %s428, 1
        %s8075 = scalar_lea.sflag [#allocation3], %s8074
        %s8076 = sand.u32 %s428, 1
        %s8077 = smul.addr %s8076, 128
        %s8078 = scalar_lea.vmem [#allocation2], %s8077
        // Predicated region
        $region93: #{tpu_custom_call.1} parent=91 // pred_check
          %p8079 = pneg %p438
        $region94: #{tpu_custom_call.1} parent=91 // pred_check_branch
          %8081 = sbr.rel (%p8079) target = $region96
        $region95: #{tpu_custom_call.1} parent=91 // pred_region
          %s8082 = smul.u32 8, %s32
          %s8084 = ssub.s32 2048, 2048
          %8085 = vsyncadd %s8075, %s8084
          %s8086 = smul.addr %s8082, 2
          %s8087 = smul.addr %s8086, 128
          %s8088 = scalar_lea.hbm %s18, %s8087
          %s8089 = sshll.u32 %s8078, 4
          %s8090 = int_to_ptr.vmem [resolvable:$true] %s8089
          %8095 = dma.vmem_to_hbm [thread:$0]  %s8090, 2048, %s8088, %s8075, 128, 128, 8
        $region96: #{tpu_custom_call.1} parent=91 // pred_fallthru
          _
      $region92: #{tpu_custom_call.1} parent=5 // pred_fallthru
        _
      %p8096 = scmp.le.s32.totalorder 2, %s27
      // Predicated region
      $region97: #{tpu_custom_call.1} parent=5 // pred_check
        %p8097 = pneg %p8096
      $region98: #{tpu_custom_call.1} parent=5 // pred_check_branch
        %8099 = sbr.rel (%p8097) target = $region100
      $region99: #{tpu_custom_call.1} parent=5 // pred_region
        %s8100 = ssub.s32 %s27, 2
        // Predicated region
        $region101: #{tpu_custom_call.1} parent=99 // pred_check
          %p8101 = pneg %p444
        $region102: #{tpu_custom_call.1} parent=99 // pred_check_branch
          %8103 = sbr.rel (%p8101) target = $region104
        $region103: #{tpu_custom_call.1} parent=99 // pred_region
          %s8104 = sand.u32 %s429, 1
          %s8105 = scalar_lea.sflag [#allocation3], %s8104
          %s8106 = sand.u32 %s429, 1
          %s8107 = smul.addr %s8106, 128
          %s8108 = scalar_lea.vmem [#allocation2], %s8107
          %8109 = dma.done %s8105, 2048
        $region104: #{tpu_custom_call.1} parent=99 // pred_fallthru
          _
      $region100: #{tpu_custom_call.1} parent=5 // pred_fallthru
        _
    $region6: #{tpu_custom_call.1} parent=1 // loop_footer
      %s31 = sadd.s32 1, %s27
    $region7: #{tpu_custom_call.1} parent=1 // loop_footer_branch
      %26 = sbr.rel target = $region3
    $region8: #{tpu_custom_call.1} parent=1 // loop_exit
      _
    %8110 = vsyncpa [#allocation3], 1
    %s8111 = scalar_lea.sflag [#allocation3], 1
    %8112 = vsyncpa %s8111, 1

</llo_original>
